<compile_context>
chip_gen: v6e
topology: v6e:2x2x1
jax: 0.10.0
libtpu: 0.0.40
codegen_flags: <defaults>
</compile_context>

<pallas_src>
import jax
import jax.numpy as jnp
from jax.experimental import pallas as pl
from jax.experimental.pallas import tpu as pltpu

# module-consistent small shapes (image_size=32 so MaxPool(16,16) -> 2x2 spatial)
H = W = 32
CIN = 3
N1 = 8            # conv out channels (module default 32; kept small)
POOL = 16         # MaxPool2d(kernel_size=16, stride=16)
HP = H // POOL
WP = W // POOL
LANE = 128


def _round_up(x, m):
    return ((x + m - 1) // m) * m


def _pick_batch_tile(n):
    bt = min(n, 64)
    if n > 1 and -(-n // bt) < 2:          # keep >=2 grid steps for v7x's 2 TensorCores
        bt = max(1, (n + 1) // 2)
    return bt


def net3_kernel(x_ref, w_ref, scale_ref, shift_ref, w1_ref, b1_ref, w2_ref, b2_ref, out_ref):
    # x_ref:     (1, BT, H+2, W+2, CIN)  zero-padded NHWC batch tile
    # w_ref:     (9, CIN, N1)            conv taps, tap t = dy*3 + dx
    # scale_ref: (1, N1)  shift_ref: (1, N1)   fused conv-bias + BatchNorm(eval) affine
    # w1_ref:    (HP*WP*N1, N2P)         fc1, rows permuted to (Hp,Wp,C) order, cols zero-padded
    # b1_ref:    (1, N2P)
    # w2_ref:    (N2P, NCP)              fc2, zero-padded to 128 lanes
    # b2_ref:    (1, NCP)
    # out_ref:   (1, BT, NCP)            lane-dense single store
    bt = x_ref.shape[1]
    x = x_ref[0]                                          # (BT, H+2, W+2, CIN)

    # 3x3 "same" conv: 9 MXU dots, batch+spatial folded into the M dim.
    acc = None
    for t in range(9):
        dy, dx = t // 3, t % 3
        patch = x[:, dy:dy + H, dx:dx + W, :].reshape(bt * H * W, CIN)
        d = jnp.dot(patch, w_ref[t], preferred_element_type=jnp.float32)
        acc = d if acc is None else acc + d               # (BT*H*W, N1)

    # fused conv-bias + BatchNorm(eval) affine, then ReLU
    acc = jnp.maximum(acc * scale_ref[...] + shift_ref[...], 0.0)
    acc = acc.reshape(bt, H, W, N1)

    # MaxPool2d(16,16) fused with fc1: each pool window is one sublane max-reduce feeding
    # one (BT,N1)x(N1,N2P) dot; the PyTorch flatten-order permutation lives in w1.
    h = None
    for p in range(HP * WP):
        ph, pw = p // WP, p % WP
        win = acc[:, ph * POOL:(ph + 1) * POOL, pw * POOL:(pw + 1) * POOL, :]
        m = jnp.max(win.reshape(bt, POOL * POOL, N1), axis=1)          # (BT, N1)
        d = jnp.dot(m, w1_ref[p * N1:(p + 1) * N1, :], preferred_element_type=jnp.float32)
        h = d if h is None else h + d                                  # (BT, N2P)

    # TODO(synk): nn.Dropout(0.5) train-mode masking not implemented (eval-mode identity).
    h = jnp.maximum(h + b1_ref[...], 0.0)
    y = jnp.dot(h, w2_ref[...], preferred_element_type=jnp.float32) + b2_ref[...]
    out_ref[0] = y.astype(out_ref.dtype)


def net3_forward(x_nchw, params, batch_tile=None):
    n = x_nchw.shape[0]
    n2 = params["fc1_w"].shape[0]
    n_class = params["fc2_w"].shape[0]
    n2p = max(LANE, _round_up(n2, LANE))
    ncp = max(LANE, _round_up(n_class, LANE))

    bt = batch_tile if batch_tile is not None else _pick_batch_tile(n)
    n_pad = _round_up(n, bt)
    g = n_pad // bt

    # NCHW -> NHWC + spatial zero-pad for the "same" 3x3 conv (one fused XLA copy), then
    # view the batch as (grid, tile) so the output block's trailing dims stay (BT, NCP).
    x = jnp.transpose(x_nchw, (0, 2, 3, 1)).astype(jnp.float32)
    x = jnp.pad(x, ((0, n_pad - n), (1, 1), (1, 1), (0, 0)))
    x = x.reshape(g, bt, H + 2, W + 2, CIN)

    # one-time host-side weight prep (layout plumbing, not on the per-step critical path)
    w_taps = jnp.transpose(params["conv_w"], (2, 3, 1, 0)).reshape(9, CIN, N1).astype(jnp.float32)
    eps = 1e-5
    scale = (params["bn_gamma"] / jnp.sqrt(params["bn_var"] + eps)).astype(jnp.float32)
    shift = (params["bn_beta"] - params["bn_mean"] * scale
             + params["conv_b"] * scale).astype(jnp.float32)
    scale2 = scale.reshape(1, N1)
    shift2 = shift.reshape(1, N1)

    # fc1: permute rows from PyTorch (C,Hp,Wp) flatten order to kernel-natural (Hp,Wp,C)
    w1 = params["fc1_w"].reshape(n2, N1, HP * WP)
    w1 = jnp.transpose(w1, (2, 1, 0)).reshape(HP * WP * N1, n2)
    w1 = jnp.pad(w1, ((0, 0), (0, n2p - n2))).astype(jnp.float32)
    b1 = jnp.pad(params["fc1_b"], (0, n2p - n2)).reshape(1, n2p).astype(jnp.float32)
    w2 = jnp.pad(params["fc2_w"].T, ((0, n2p - n2), (0, ncp - n_class))).astype(jnp.float32)
    b2 = jnp.pad(params["fc2_b"], (0, ncp - n_class)).reshape(1, ncp).astype(jnp.float32)

    y = pl.pallas_call(
        net3_kernel,
        out_shape=jax.ShapeDtypeStruct((g, bt, ncp), jnp.float32),
        grid_spec=pltpu.PrefetchScalarGridSpec(
            num_scalar_prefetch=0,
            grid=(g,),
            in_specs=[
                pl.BlockSpec((1, bt, H + 2, W + 2, CIN), lambda i: (i, 0, 0, 0, 0)),
                pl.BlockSpec((9, CIN, N1), lambda i: (0, 0, 0)),
                pl.BlockSpec((1, N1), lambda i: (0, 0)),
                pl.BlockSpec((1, N1), lambda i: (0, 0)),
                pl.BlockSpec((HP * WP * N1, n2p), lambda i: (0, 0)),
                pl.BlockSpec((1, n2p), lambda i: (0, 0)),
                pl.BlockSpec((n2p, ncp), lambda i: (0, 0)),
                pl.BlockSpec((1, ncp), lambda i: (0, 0)),
            ],
            out_specs=pl.BlockSpec((1, bt, ncp), lambda i: (i, 0, 0)),
        ),
        compiler_params=pltpu.CompilerParams(dimension_semantics=("parallel",)),
    )(x, w_taps, scale2, shift2, w1, b1, w2, b2)

    return y.reshape(n_pad, ncp)[:n, :n_class]


def net3_reference(x_nchw, params):
    """Pure-XLA reference with PyTorch eval-mode semantics (correctness check only)."""
    eps = 1e-5
    y = jax.lax.conv_general_dilated(
        x_nchw, params["conv_w"], window_strides=(1, 1), padding=((1, 1), (1, 1)),
        dimension_numbers=("NCHW", "OIHW", "NCHW"),
        precision=jax.lax.Precision.HIGHEST)
    y = y + params["conv_b"][None, :, None, None]
    scale = params["bn_gamma"] / jnp.sqrt(params["bn_var"] + eps)
    y = (y - params["bn_mean"][None, :, None, None]) * scale[None, :, None, None] \
        + params["bn_beta"][None, :, None, None]
    y = jnp.maximum(y, 0.0)
    n, c, hh, ww = y.shape
    y = y.reshape(n, c, hh // POOL, POOL, ww // POOL, POOL).max(axis=(3, 5))
    z = y.reshape(n, -1)
    h = jnp.maximum(jnp.dot(z, params["fc1_w"].T, precision=jax.lax.Precision.HIGHEST)
                    + params["fc1_b"], 0.0)
    return jnp.dot(h, params["fc2_w"].T, precision=jax.lax.Precision.HIGHEST) + params["fc2_b"]


if __name__ == "__main__":
    key = jax.random.PRNGKey(0)
    ks = jax.random.split(key, 10)

    n_batch = 2
    n2, n_class = 32, 10
    F = N1 * HP * WP  # = 32

    x = jax.random.normal(ks[0], (n_batch, CIN, H, W), jnp.float32)

    params = dict(
        conv_w=0.1 * jax.random.normal(ks[1], (N1, CIN, 3, 3), jnp.float32),
        conv_b=0.1 * jax.random.normal(ks[2], (N1,), jnp.float32),
        bn_gamma=1.0 + 0.1 * jax.random.normal(ks[3], (N1,), jnp.float32),
        bn_beta=0.1 * jax.random.normal(ks[4], (N1,), jnp.float32),
        bn_mean=0.1 * jax.random.normal(ks[5], (N1,), jnp.float32),
        bn_var=1.0 + 0.5 * jax.random.uniform(ks[6], (N1,), jnp.float32),
        fc1_w=0.1 * jax.random.normal(ks[7], (n2, F), jnp.float32),
        fc1_b=0.1 * jax.random.normal(ks[8], (n2,), jnp.float32),
        fc2_w=0.1 * jax.random.normal(ks[9], (n_class, n2), jnp.float32),
        fc2_b=jnp.zeros((n_class,), jnp.float32),
    )

    y = jax.jit(net3_forward)(x, params)
    jax.block_until_ready(y)
    assert y.shape == (n_batch, n_class)
    assert y.dtype == jnp.float32

    y_ref = net3_reference(x, params)
    err = float(jnp.max(jnp.abs(y - y_ref)))
    assert jnp.allclose(y, y_ref, rtol=5e-2, atol=5e-2), err
    print("KERNEL_OK")
</pallas_src>

<mosaic_0001>
module attributes {stable_mosaic.version = 11 : i64} {
  func.func @net3_kernel(%arg0: i32, %arg1: memref<1x1x34x34x3xf32, #tpu.memory_space<vmem>>, %arg2: memref<9x3x8xf32, #tpu.memory_space<vmem>>, %arg3: memref<1x8xf32, #tpu.memory_space<vmem>>, %arg4: memref<1x8xf32, #tpu.memory_space<vmem>>, %arg5: memref<32x128xf32, #tpu.memory_space<vmem>>, %arg6: memref<1x128xf32, #tpu.memory_space<vmem>>, %arg7: memref<128x128xf32, #tpu.memory_space<vmem>>, %arg8: memref<1x128xf32, #tpu.memory_space<vmem>>, %arg9: memref<1x1x128xf32, #tpu.memory_space<vmem>>) attributes {dimension_semantics = [#tpu.dimension_semantics<parallel>], iteration_bounds = array<i64: 2>, scalar_prefetch = 0 : i64, scratch_operands = 0 : i64, tpu.core_type = #tpu.core_type<tc>, window_params = [{transform_indices = @transform_0, window_bounds = array<i64: 1, 1, 34, 34, 3>}, {pipeline_mode = #tpu.pipeline_mode<synchronous>, transform_indices = @transform_1, window_bounds = array<i64: 9, 3, 8>}, {pipeline_mode = #tpu.pipeline_mode<synchronous>, transform_indices = @transform_2, window_bounds = array<i64: 1, 8>}, {pipeline_mode = #tpu.pipeline_mode<synchronous>, transform_indices = @transform_3, window_bounds = array<i64: 1, 8>}, {pipeline_mode = #tpu.pipeline_mode<synchronous>, transform_indices = @transform_4, window_bounds = array<i64: 32, 128>}, {pipeline_mode = #tpu.pipeline_mode<synchronous>, transform_indices = @transform_5, window_bounds = array<i64: 1, 128>}, {pipeline_mode = #tpu.pipeline_mode<synchronous>, transform_indices = @transform_6, window_bounds = array<i64: 128, 128>}, {pipeline_mode = #tpu.pipeline_mode<synchronous>, transform_indices = @transform_7, window_bounds = array<i64: 1, 128>}, {transform_indices = @transform_8, window_bounds = array<i64: 1, 1, 128>}]} {
    %c0 = arith.constant 0 : index
    %c0_0 = arith.constant 0 : index
    %c0_1 = arith.constant 0 : index
    %c0_2 = arith.constant 0 : index
    %c0_3 = arith.constant 0 : index
    %0 = vector.load %arg1[%c0, %c0_0, %c0_1, %c0_2, %c0_3] : memref<1x1x34x34x3xf32, #tpu.memory_space<vmem>>, vector<1x1x34x34x3xf32>
    %1 = vector.shape_cast %0 : vector<1x1x34x34x3xf32> to vector<1x34x34x3xf32>
    %2 = vector.extract_strided_slice %1 {offsets = [0, 0, 0, 0], sizes = [1, 32, 32, 3], strides = [1, 1, 1, 1]} : vector<1x34x34x3xf32> to vector<1x32x32x3xf32>
    %3 = vector.shape_cast %2 : vector<1x32x32x3xf32> to vector<1024x3xf32>
    %c0_4 = arith.constant 0 : index
    %c0_5 = arith.constant 0 : index
    %c0_6 = arith.constant 0 : index
    %4 = vector.load %arg2[%c0_4, %c0_5, %c0_6] : memref<9x3x8xf32, #tpu.memory_space<vmem>>, vector<1x3x8xf32>
    %5 = vector.shape_cast %4 : vector<1x3x8xf32> to vector<3x8xf32>
    %cst = arith.constant dense<0.000000e+00> : vector<1024x8xf32>
    %6 = tpu.matmul %3, %5, %cst {dimension_numbers = #tpu.dot_dimension_numbers<[1], [0], [0], [1], [0, 0, 1, 1], [], []>} : vector<1024x3xf32>, vector<3x8xf32>, vector<1024x8xf32> -> vector<1024x8xf32>
    %7 = vector.extract_strided_slice %1 {offsets = [0, 0, 1, 0], sizes = [1, 32, 32, 3], strides = [1, 1, 1, 1]} : vector<1x34x34x3xf32> to vector<1x32x32x3xf32>
    %8 = vector.shape_cast %7 : vector<1x32x32x3xf32> to vector<1024x3xf32>
    %c1 = arith.constant 1 : index
    %c0_7 = arith.constant 0 : index
    %c0_8 = arith.constant 0 : index
    %9 = vector.load %arg2[%c1, %c0_7, %c0_8] : memref<9x3x8xf32, #tpu.memory_space<vmem>>, vector<1x3x8xf32>
    %10 = vector.shape_cast %9 : vector<1x3x8xf32> to vector<3x8xf32>
    %cst_9 = arith.constant dense<0.000000e+00> : vector<1024x8xf32>
    %11 = tpu.matmul %8, %10, %cst_9 {dimension_numbers = #tpu.dot_dimension_numbers<[1], [0], [0], [1], [0, 0, 1, 1], [], []>} : vector<1024x3xf32>, vector<3x8xf32>, vector<1024x8xf32> -> vector<1024x8xf32>
    %12 = arith.addf %6, %11 : vector<1024x8xf32>
    %13 = vector.extract_strided_slice %1 {offsets = [0, 0, 2, 0], sizes = [1, 32, 32, 3], strides = [1, 1, 1, 1]} : vector<1x34x34x3xf32> to vector<1x32x32x3xf32>
    %14 = vector.shape_cast %13 : vector<1x32x32x3xf32> to vector<1024x3xf32>
    %c2 = arith.constant 2 : index
    %c0_10 = arith.constant 0 : index
    %c0_11 = arith.constant 0 : index
    %15 = vector.load %arg2[%c2, %c0_10, %c0_11] : memref<9x3x8xf32, #tpu.memory_space<vmem>>, vector<1x3x8xf32>
    %16 = vector.shape_cast %15 : vector<1x3x8xf32> to vector<3x8xf32>
    %cst_12 = arith.constant dense<0.000000e+00> : vector<1024x8xf32>
    %17 = tpu.matmul %14, %16, %cst_12 {dimension_numbers = #tpu.dot_dimension_numbers<[1], [0], [0], [1], [0, 0, 1, 1], [], []>} : vector<1024x3xf32>, vector<3x8xf32>, vector<1024x8xf32> -> vector<1024x8xf32>
    %18 = arith.addf %12, %17 : vector<1024x8xf32>
    %19 = vector.extract_strided_slice %1 {offsets = [0, 1, 0, 0], sizes = [1, 32, 32, 3], strides = [1, 1, 1, 1]} : vector<1x34x34x3xf32> to vector<1x32x32x3xf32>
    %20 = vector.shape_cast %19 : vector<1x32x32x3xf32> to vector<1024x3xf32>
    %c3 = arith.constant 3 : index
    %c0_13 = arith.constant 0 : index
    %c0_14 = arith.constant 0 : index
    %21 = vector.load %arg2[%c3, %c0_13, %c0_14] : memref<9x3x8xf32, #tpu.memory_space<vmem>>, vector<1x3x8xf32>
    %22 = vector.shape_cast %21 : vector<1x3x8xf32> to vector<3x8xf32>
    %cst_15 = arith.constant dense<0.000000e+00> : vector<1024x8xf32>
    %23 = tpu.matmul %20, %22, %cst_15 {dimension_numbers = #tpu.dot_dimension_numbers<[1], [0], [0], [1], [0, 0, 1, 1], [], []>} : vector<1024x3xf32>, vector<3x8xf32>, vector<1024x8xf32> -> vector<1024x8xf32>
    %24 = arith.addf %18, %23 : vector<1024x8xf32>
    %25 = vector.extract_strided_slice %1 {offsets = [0, 1, 1, 0], sizes = [1, 32, 32, 3], strides = [1, 1, 1, 1]} : vector<1x34x34x3xf32> to vector<1x32x32x3xf32>
    %26 = vector.shape_cast %25 : vector<1x32x32x3xf32> to vector<1024x3xf32>
    %c4 = arith.constant 4 : index
    %c0_16 = arith.constant 0 : index
    %c0_17 = arith.constant 0 : index
    %27 = vector.load %arg2[%c4, %c0_16, %c0_17] : memref<9x3x8xf32, #tpu.memory_space<vmem>>, vector<1x3x8xf32>
    %28 = vector.shape_cast %27 : vector<1x3x8xf32> to vector<3x8xf32>
    %cst_18 = arith.constant dense<0.000000e+00> : vector<1024x8xf32>
    %29 = tpu.matmul %26, %28, %cst_18 {dimension_numbers = #tpu.dot_dimension_numbers<[1], [0], [0], [1], [0, 0, 1, 1], [], []>} : vector<1024x3xf32>, vector<3x8xf32>, vector<1024x8xf32> -> vector<1024x8xf32>
    %30 = arith.addf %24, %29 : vector<1024x8xf32>
    %31 = vector.extract_strided_slice %1 {offsets = [0, 1, 2, 0], sizes = [1, 32, 32, 3], strides = [1, 1, 1, 1]} : vector<1x34x34x3xf32> to vector<1x32x32x3xf32>
    %32 = vector.shape_cast %31 : vector<1x32x32x3xf32> to vector<1024x3xf32>
    %c5 = arith.constant 5 : index
    %c0_19 = arith.constant 0 : index
    %c0_20 = arith.constant 0 : index
    %33 = vector.load %arg2[%c5, %c0_19, %c0_20] : memref<9x3x8xf32, #tpu.memory_space<vmem>>, vector<1x3x8xf32>
    %34 = vector.shape_cast %33 : vector<1x3x8xf32> to vector<3x8xf32>
    %cst_21 = arith.constant dense<0.000000e+00> : vector<1024x8xf32>
    %35 = tpu.matmul %32, %34, %cst_21 {dimension_numbers = #tpu.dot_dimension_numbers<[1], [0], [0], [1], [0, 0, 1, 1], [], []>} : vector<1024x3xf32>, vector<3x8xf32>, vector<1024x8xf32> -> vector<1024x8xf32>
    %36 = arith.addf %30, %35 : vector<1024x8xf32>
    %37 = vector.extract_strided_slice %1 {offsets = [0, 2, 0, 0], sizes = [1, 32, 32, 3], strides = [1, 1, 1, 1]} : vector<1x34x34x3xf32> to vector<1x32x32x3xf32>
    %38 = vector.shape_cast %37 : vector<1x32x32x3xf32> to vector<1024x3xf32>
    %c6 = arith.constant 6 : index
    %c0_22 = arith.constant 0 : index
    %c0_23 = arith.constant 0 : index
    %39 = vector.load %arg2[%c6, %c0_22, %c0_23] : memref<9x3x8xf32, #tpu.memory_space<vmem>>, vector<1x3x8xf32>
    %40 = vector.shape_cast %39 : vector<1x3x8xf32> to vector<3x8xf32>
    %cst_24 = arith.constant dense<0.000000e+00> : vector<1024x8xf32>
    %41 = tpu.matmul %38, %40, %cst_24 {dimension_numbers = #tpu.dot_dimension_numbers<[1], [0], [0], [1], [0, 0, 1, 1], [], []>} : vector<1024x3xf32>, vector<3x8xf32>, vector<1024x8xf32> -> vector<1024x8xf32>
    %42 = arith.addf %36, %41 : vector<1024x8xf32>
    %43 = vector.extract_strided_slice %1 {offsets = [0, 2, 1, 0], sizes = [1, 32, 32, 3], strides = [1, 1, 1, 1]} : vector<1x34x34x3xf32> to vector<1x32x32x3xf32>
    %44 = vector.shape_cast %43 : vector<1x32x32x3xf32> to vector<1024x3xf32>
    %c7 = arith.constant 7 : index
    %c0_25 = arith.constant 0 : index
    %c0_26 = arith.constant 0 : index
    %45 = vector.load %arg2[%c7, %c0_25, %c0_26] : memref<9x3x8xf32, #tpu.memory_space<vmem>>, vector<1x3x8xf32>
    %46 = vector.shape_cast %45 : vector<1x3x8xf32> to vector<3x8xf32>
    %cst_27 = arith.constant dense<0.000000e+00> : vector<1024x8xf32>
    %47 = tpu.matmul %44, %46, %cst_27 {dimension_numbers = #tpu.dot_dimension_numbers<[1], [0], [0], [1], [0, 0, 1, 1], [], []>} : vector<1024x3xf32>, vector<3x8xf32>, vector<1024x8xf32> -> vector<1024x8xf32>
    %48 = arith.addf %42, %47 : vector<1024x8xf32>
    %49 = vector.extract_strided_slice %1 {offsets = [0, 2, 2, 0], sizes = [1, 32, 32, 3], strides = [1, 1, 1, 1]} : vector<1x34x34x3xf32> to vector<1x32x32x3xf32>
    %50 = vector.shape_cast %49 : vector<1x32x32x3xf32> to vector<1024x3xf32>
    %c8 = arith.constant 8 : index
    %c0_28 = arith.constant 0 : index
    %c0_29 = arith.constant 0 : index
    %51 = vector.load %arg2[%c8, %c0_28, %c0_29] : memref<9x3x8xf32, #tpu.memory_space<vmem>>, vector<1x3x8xf32>
    %52 = vector.shape_cast %51 : vector<1x3x8xf32> to vector<3x8xf32>
    %cst_30 = arith.constant dense<0.000000e+00> : vector<1024x8xf32>
    %53 = tpu.matmul %50, %52, %cst_30 {dimension_numbers = #tpu.dot_dimension_numbers<[1], [0], [0], [1], [0, 0, 1, 1], [], []>} : vector<1024x3xf32>, vector<3x8xf32>, vector<1024x8xf32> -> vector<1024x8xf32>
    %54 = arith.addf %48, %53 : vector<1024x8xf32>
    %c0_31 = arith.constant 0 : index
    %c0_32 = arith.constant 0 : index
    %55 = vector.load %arg3[%c0_31, %c0_32] : memref<1x8xf32, #tpu.memory_space<vmem>>, vector<1x8xf32>
    %56 = vector.broadcast %55 : vector<1x8xf32> to vector<1024x8xf32>
    %57 = arith.mulf %54, %56 : vector<1024x8xf32>
    %c0_33 = arith.constant 0 : index
    %c0_34 = arith.constant 0 : index
    %58 = vector.load %arg4[%c0_33, %c0_34] : memref<1x8xf32, #tpu.memory_space<vmem>>, vector<1x8xf32>
    %59 = vector.broadcast %58 : vector<1x8xf32> to vector<1024x8xf32>
    %60 = arith.addf %57, %59 : vector<1024x8xf32>
    %cst_35 = arith.constant 0.000000e+00 : f32
    %61 = vector.broadcast %cst_35 : f32 to vector<1024x8xf32>
    %62 = arith.maximumf %60, %61 : vector<1024x8xf32>
    %63 = vector.shape_cast %62 : vector<1024x8xf32> to vector<1x32x32x8xf32>
    %64 = vector.extract_strided_slice %63 {offsets = [0, 0, 0, 0], sizes = [1, 16, 16, 8], strides = [1, 1, 1, 1]} : vector<1x32x32x8xf32> to vector<1x16x16x8xf32>
    %65 = vector.shape_cast %64 : vector<1x16x16x8xf32> to vector<1x256x8xf32>
    %cst_36 = arith.constant dense<0xFF800000> : vector<1x8xf32>
    %66 = vector.multi_reduction <maximumf>, %65, %cst_36 [1] : vector<1x256x8xf32> to vector<1x8xf32>
    %c0_37 = arith.constant 0 : index
    %c0_38 = arith.constant 0 : index
    %67 = vector.load %arg5[%c0_37, %c0_38] : memref<32x128xf32, #tpu.memory_space<vmem>>, vector<8x128xf32>
    %cst_39 = arith.constant dense<0.000000e+00> : vector<1x128xf32>
    %68 = tpu.matmul %66, %67, %cst_39 {dimension_numbers = #tpu.dot_dimension_numbers<[1], [0], [0], [1], [0, 0, 1, 1], [], []>} : vector<1x8xf32>, vector<8x128xf32>, vector<1x128xf32> -> vector<1x128xf32>
    %69 = vector.extract_strided_slice %63 {offsets = [0, 0, 16, 0], sizes = [1, 16, 16, 8], strides = [1, 1, 1, 1]} : vector<1x32x32x8xf32> to vector<1x16x16x8xf32>
    %70 = vector.shape_cast %69 : vector<1x16x16x8xf32> to vector<1x256x8xf32>
    %cst_40 = arith.constant dense<0xFF800000> : vector<1x8xf32>
    %71 = vector.multi_reduction <maximumf>, %70, %cst_40 [1] : vector<1x256x8xf32> to vector<1x8xf32>
    %c8_41 = arith.constant 8 : index
    %c0_42 = arith.constant 0 : index
    %72 = vector.load %arg5[%c8_41, %c0_42] : memref<32x128xf32, #tpu.memory_space<vmem>>, vector<8x128xf32>
    %cst_43 = arith.constant dense<0.000000e+00> : vector<1x128xf32>
    %73 = tpu.matmul %71, %72, %cst_43 {dimension_numbers = #tpu.dot_dimension_numbers<[1], [0], [0], [1], [0, 0, 1, 1], [], []>} : vector<1x8xf32>, vector<8x128xf32>, vector<1x128xf32> -> vector<1x128xf32>
    %74 = arith.addf %68, %73 : vector<1x128xf32>
    %75 = vector.extract_strided_slice %63 {offsets = [0, 16, 0, 0], sizes = [1, 16, 16, 8], strides = [1, 1, 1, 1]} : vector<1x32x32x8xf32> to vector<1x16x16x8xf32>
    %76 = vector.shape_cast %75 : vector<1x16x16x8xf32> to vector<1x256x8xf32>
    %cst_44 = arith.constant dense<0xFF800000> : vector<1x8xf32>
    %77 = vector.multi_reduction <maximumf>, %76, %cst_44 [1] : vector<1x256x8xf32> to vector<1x8xf32>
    %c16 = arith.constant 16 : index
    %c0_45 = arith.constant 0 : index
    %78 = vector.load %arg5[%c16, %c0_45] : memref<32x128xf32, #tpu.memory_space<vmem>>, vector<8x128xf32>
    %cst_46 = arith.constant dense<0.000000e+00> : vector<1x128xf32>
    %79 = tpu.matmul %77, %78, %cst_46 {dimension_numbers = #tpu.dot_dimension_numbers<[1], [0], [0], [1], [0, 0, 1, 1], [], []>} : vector<1x8xf32>, vector<8x128xf32>, vector<1x128xf32> -> vector<1x128xf32>
    %80 = arith.addf %74, %79 : vector<1x128xf32>
    %81 = vector.extract_strided_slice %63 {offsets = [0, 16, 16, 0], sizes = [1, 16, 16, 8], strides = [1, 1, 1, 1]} : vector<1x32x32x8xf32> to vector<1x16x16x8xf32>
    %82 = vector.shape_cast %81 : vector<1x16x16x8xf32> to vector<1x256x8xf32>
    %cst_47 = arith.constant dense<0xFF800000> : vector<1x8xf32>
    %83 = vector.multi_reduction <maximumf>, %82, %cst_47 [1] : vector<1x256x8xf32> to vector<1x8xf32>
    %c24 = arith.constant 24 : index
    %c0_48 = arith.constant 0 : index
    %84 = vector.load %arg5[%c24, %c0_48] : memref<32x128xf32, #tpu.memory_space<vmem>>, vector<8x128xf32>
    %cst_49 = arith.constant dense<0.000000e+00> : vector<1x128xf32>
    %85 = tpu.matmul %83, %84, %cst_49 {dimension_numbers = #tpu.dot_dimension_numbers<[1], [0], [0], [1], [0, 0, 1, 1], [], []>} : vector<1x8xf32>, vector<8x128xf32>, vector<1x128xf32> -> vector<1x128xf32>
    %86 = arith.addf %80, %85 : vector<1x128xf32>
    %c0_50 = arith.constant 0 : index
    %c0_51 = arith.constant 0 : index
    %87 = vector.load %arg6[%c0_50, %c0_51] : memref<1x128xf32, #tpu.memory_space<vmem>>, vector<1x128xf32>
    %88 = arith.addf %86, %87 : vector<1x128xf32>
    %cst_52 = arith.constant 0.000000e+00 : f32
    %89 = vector.broadcast %cst_52 : f32 to vector<1x128xf32>
    %90 = arith.maximumf %88, %89 : vector<1x128xf32>
    %c0_53 = arith.constant 0 : index
    %c0_54 = arith.constant 0 : index
    %91 = vector.load %arg7[%c0_53, %c0_54] : memref<128x128xf32, #tpu.memory_space<vmem>>, vector<128x128xf32>
    %cst_55 = arith.constant dense<0.000000e+00> : vector<1x128xf32>
    %92 = tpu.matmul %90, %91, %cst_55 {dimension_numbers = #tpu.dot_dimension_numbers<[1], [0], [0], [1], [0, 0, 1, 1], [], []>} : vector<1x128xf32>, vector<128x128xf32>, vector<1x128xf32> -> vector<1x128xf32>
    %c0_56 = arith.constant 0 : index
    %c0_57 = arith.constant 0 : index
    %93 = vector.load %arg8[%c0_56, %c0_57] : memref<1x128xf32, #tpu.memory_space<vmem>>, vector<1x128xf32>
    %94 = arith.addf %92, %93 : vector<1x128xf32>
    %c0_58 = arith.constant 0 : index
    %c0_59 = arith.constant 0 : index
    %c0_60 = arith.constant 0 : index
    %95 = vector.load %arg9[%c0_58, %c0_59, %c0_60] : memref<1x1x128xf32, #tpu.memory_space<vmem>>, vector<1x1x128xf32>
    %96 = vector.shape_cast %95 : vector<1x1x128xf32> to vector<1x128xf32>
    %97 = vector.shape_cast %94 : vector<1x128xf32> to vector<1x1x128xf32>
    tpu.vector_store %arg9[%c0_58, %c0_59, %c0_60], %97 {strides = array<i32>} : memref<1x1x128xf32, #tpu.memory_space<vmem>>, vector<1x1x128xf32>,
    return
  }
  func.func @transform_0(%arg0: i32) -> (i32, i32, i32, i32, i32) {
    %c0_i32 = arith.constant 0 : i32
    %c0_i32_0 = arith.constant 0 : i32
    %c0_i32_1 = arith.constant 0 : i32
    %c0_i32_2 = arith.constant 0 : i32
    %c0_i32_3 = arith.constant 0 : i32
    return %arg0, %c0_i32, %c0_i32_0, %c0_i32_1, %c0_i32_2 : i32, i32, i32, i32, i32
  }
  func.func @transform_1(%arg0: i32) -> (i32, i32, i32) {
    %c0_i32 = arith.constant 0 : i32
    %c0_i32_0 = arith.constant 0 : i32
    %c0_i32_1 = arith.constant 0 : i32
    %c0_i32_2 = arith.constant 0 : i32
    return %c0_i32, %c0_i32_0, %c0_i32_1 : i32, i32, i32
  }
  func.func @transform_2(%arg0: i32) -> (i32, i32) {
    %c0_i32 = arith.constant 0 : i32
    %c0_i32_0 = arith.constant 0 : i32
    %c0_i32_1 = arith.constant 0 : i32
    return %c0_i32, %c0_i32_0 : i32, i32
  }
  func.func @transform_3(%arg0: i32) -> (i32, i32) {
    %c0_i32 = arith.constant 0 : i32
    %c0_i32_0 = arith.constant 0 : i32
    %c0_i32_1 = arith.constant 0 : i32
    return %c0_i32, %c0_i32_0 : i32, i32
  }
  func.func @transform_4(%arg0: i32) -> (i32, i32) {
    %c0_i32 = arith.constant 0 : i32
    %c0_i32_0 = arith.constant 0 : i32
    %c0_i32_1 = arith.constant 0 : i32
    return %c0_i32, %c0_i32_0 : i32, i32
  }
  func.func @transform_5(%arg0: i32) -> (i32, i32) {
    %c0_i32 = arith.constant 0 : i32
    %c0_i32_0 = arith.constant 0 : i32
    %c0_i32_1 = arith.constant 0 : i32
    return %c0_i32, %c0_i32_0 : i32, i32
  }
  func.func @transform_6(%arg0: i32) -> (i32, i32) {
    %c0_i32 = arith.constant 0 : i32
    %c0_i32_0 = arith.constant 0 : i32
    %c0_i32_1 = arith.constant 0 : i32
    return %c0_i32, %c0_i32_0 : i32, i32
  }
  func.func @transform_7(%arg0: i32) -> (i32, i32) {
    %c0_i32 = arith.constant 0 : i32
    %c0_i32_0 = arith.constant 0 : i32
    %c0_i32_1 = arith.constant 0 : i32
    return %c0_i32, %c0_i32_0 : i32, i32
  }
  func.func @transform_8(%arg0: i32) -> (i32, i32, i32) {
    %c0_i32 = arith.constant 0 : i32
    %c0_i32_0 = arith.constant 0 : i32
    %c0_i32_1 = arith.constant 0 : i32
    return %arg0, %c0_i32, %c0_i32_0 : i32, i32, i32
  }
}

</mosaic_0001>

<llo_original>
// kernel: net3_forward.1
$region0: #{net3_forward.1}
  #allocation0 [shape = 'u32[]', space=smem, size = 0x4, offset = 0x4, fixed_abs, tag = 'smem constant byte address 0x4 - core index']
  #allocation1 [shape = 'u32[144,128]{1,0:T(1,128)}', space=vmem, size = 0x12000, scoped, tag = 'internal scratch']
  %s0 = inlined_call_operand.vmem [shape: f32[2,1,34,34,3], index: 0, kind: input, shape index: {}]
  %s1 = inlined_call_operand.vmem [shape: f32[9,3,8], index: 1, kind: input, shape index: {}]
  %s2 = inlined_call_operand.vmem [shape: f32[1,8], index: 2, kind: input, shape index: {}]
  %s3 = inlined_call_operand.vmem [shape: f32[1,8], index: 3, kind: input, shape index: {}]
  %s4 = inlined_call_operand.vmem [shape: f32[32,128], index: 4, kind: input, shape index: {}]
  %s5 = inlined_call_operand.vmem [shape: f32[1,128], index: 5, kind: input, shape index: {}]
  %s6 = inlined_call_operand.vmem [shape: f32[128,128], index: 6, kind: input, shape index: {}]
  %s7 = inlined_call_operand.vmem [shape: f32[1,128], index: 7, kind: input, shape index: {}]
  %s8 = inlined_call_operand.hbm [shape: f32[2,1,128], index: 8, kind: output, shape index: {}]
  %s9 = sld [smem:[#allocation0]]
  $region65: #{net3_forward.1} parent=0
    _
  %s11 = ssub.s32 1, %s9
  %s12 = scalar_select 0, %s11, %s9
  $region1: #{net3_forward.1} parent=0
    #allocation2 [shape = 'u8[1024]{0}', space=vmem, size = 0x400, scoped, tag = 'output window, operand 0']
    #allocation3 [shape = 's32[2]{0}', space=sflag, size = 0x8, scoped, tag = 'scoped memory for net3_forward.1']
    %13 = vsyncpa [#allocation3], 0
    %s14 = scalar_lea.sflag [#allocation3], 1
    %15 = vsyncpa %s14, 0
    loop: start=0, step=1, limit=4
    $region2: #{net3_forward.1} parent=1 // loop_pre_header
      _
    $region3: #{net3_forward.1} parent=1 // loop_header
      %s17 = sphi 0, %s21
      %p18 = scmp.ge.s32.totalorder %s17, 4
      %s27 = sphi 0, %s29
      %s30 = sphi 0, %s27
      %s31 = sphi 0, %s30
      %s47 = sphi 0, %s31
      %s51 = sphi 0, %s51
      %s53 = sphi 0, %s51
      %s54 = sphi 0, %s53
      %s68 = sphi 0, %s54
      %s72 = sphi 0, %s72
      %s74 = sphi 0, %s72
      %s75 = sphi 0, %s74
      %s89 = sphi 0, %s75
      %s93 = sphi 0, %s93
      %s95 = sphi 0, %s93
      %s96 = sphi 0, %s95
      %s110 = sphi 0, %s96
      %s114 = sphi 0, %s114
      %s116 = sphi 0, %s114
      %s117 = sphi 0, %s116
      %s131 = sphi 0, %s117
      %s135 = sphi 0, %s135
      %s137 = sphi 0, %s135
      %s138 = sphi 0, %s137
      %s152 = sphi 0, %s138
      %s156 = sphi 0, %s156
      %s158 = sphi 0, %s156
      %s159 = sphi 0, %s158
      %s173 = sphi 0, %s159
      %s177 = sphi 0, %s177
      %s179 = sphi 0, %s177
      %s180 = sphi 0, %s179
      %s194 = sphi 0, %s180
      %s200 = sphi 0, %s202
      %s203 = sphi 0, %s200
      %s204 = sphi 0, %s203
      %s220 = sphi 0, %s204
    $region4: #{net3_forward.1} parent=1 // loop_header_branch
      %20 = sbr.rel (%p18) target = $region8
    $region5: #{net3_forward.1} parent=1 // loop_body
      %s22 = ssub.s32 %s17, 1
      %s23 = ssub.s32 %s17, 2
      %s24 = sadd.s32 %s17, 1
      %s25 = ssub.s32 %s17, %s24
      %p26 = scmp.eq.s32.totalorder %s25, 0
      %s28 = sadd.s32 %s27, 1
      %s29 = scalar_select %p26, %s27, %s28
      %p32 = pneg %p26
      %p33 = scmp.eq.s32.totalorder %s17, 1
      %p34 = por %p32, %p33
      %p35 = scmp.ne.s32.totalorder %s27, %s30
      %p36 = scmp.eq.s32.totalorder %s17, 0
      %p37 = por %p35, %p36
      %p38 = scmp.ne.s32.totalorder %s27, %s30
      %p39 = scmp.eq.s32.totalorder %s22, 1
      %p40 = por %p38, %p39
      %p41 = scmp.ne.s32.totalorder %s30, %s31
      %p42 = scmp.eq.s32.totalorder %s22, 0
      %p43 = por %p41, %p42
      %p44 = scmp.ne.s32.totalorder %s30, %s31
      %p45 = scmp.eq.s32.totalorder %s23, 1
      %p46 = por %p44, %p45
      %p48 = scmp.ne.s32.totalorder %s31, %s47
      %p49 = scmp.eq.s32.totalorder %s23, 0
      %p50 = por %p48, %p49
      %s52 = sadd.s32 %s51, 1
      %p55 = scmp.eq.s32.totalorder %s17, 1
      %p56 = scmp.ne.s32.totalorder %s51, %s53
      %p57 = scmp.eq.s32.totalorder %s17, 0
      %p58 = por %p56, %p57
      %p59 = scmp.ne.s32.totalorder %s51, %s53
      %p60 = scmp.eq.s32.totalorder %s22, 1
      %p61 = por %p59, %p60
      %p62 = scmp.ne.s32.totalorder %s53, %s54
      %p63 = scmp.eq.s32.totalorder %s22, 0
      %p64 = por %p62, %p63
      %p65 = scmp.ne.s32.totalorder %s53, %s54
      %p66 = scmp.eq.s32.totalorder %s23, 1
      %p67 = por %p65, %p66
      %p69 = scmp.ne.s32.totalorder %s54, %s68
      %p70 = scmp.eq.s32.totalorder %s23, 0
      %p71 = por %p69, %p70
      %s73 = sadd.s32 %s72, 1
      %p76 = scmp.eq.s32.totalorder %s17, 1
      %p77 = scmp.ne.s32.totalorder %s72, %s74
      %p78 = scmp.eq.s32.totalorder %s17, 0
      %p79 = por %p77, %p78
      %p80 = scmp.ne.s32.totalorder %s72, %s74
      %p81 = scmp.eq.s32.totalorder %s22, 1
      %p82 = por %p80, %p81
      %p83 = scmp.ne.s32.totalorder %s74, %s75
      %p84 = scmp.eq.s32.totalorder %s22, 0
      %p85 = por %p83, %p84
      %p86 = scmp.ne.s32.totalorder %s74, %s75
      %p87 = scmp.eq.s32.totalorder %s23, 1
      %p88 = por %p86, %p87
      %p90 = scmp.ne.s32.totalorder %s75, %s89
      %p91 = scmp.eq.s32.totalorder %s23, 0
      %p92 = por %p90, %p91
      %s94 = sadd.s32 %s93, 1
      %p97 = scmp.eq.s32.totalorder %s17, 1
      %p98 = scmp.ne.s32.totalorder %s93, %s95
      %p99 = scmp.eq.s32.totalorder %s17, 0
      %p100 = por %p98, %p99
      %p101 = scmp.ne.s32.totalorder %s93, %s95
      %p102 = scmp.eq.s32.totalorder %s22, 1
      %p103 = por %p101, %p102
      %p104 = scmp.ne.s32.totalorder %s95, %s96
      %p105 = scmp.eq.s32.totalorder %s22, 0
      %p106 = por %p104, %p105
      %p107 = scmp.ne.s32.totalorder %s95, %s96
      %p108 = scmp.eq.s32.totalorder %s23, 1
      %p109 = por %p107, %p108
      %p111 = scmp.ne.s32.totalorder %s96, %s110
      %p112 = scmp.eq.s32.totalorder %s23, 0
      %p113 = por %p111, %p112
      %s115 = sadd.s32 %s114, 1
      %p118 = scmp.eq.s32.totalorder %s17, 1
      %p119 = scmp.ne.s32.totalorder %s114, %s116
      %p120 = scmp.eq.s32.totalorder %s17, 0
      %p121 = por %p119, %p120
      %p122 = scmp.ne.s32.totalorder %s114, %s116
      %p123 = scmp.eq.s32.totalorder %s22, 1
      %p124 = por %p122, %p123
      %p125 = scmp.ne.s32.totalorder %s116, %s117
      %p126 = scmp.eq.s32.totalorder %s22, 0
      %p127 = por %p125, %p126
      %p128 = scmp.ne.s32.totalorder %s116, %s117
      %p129 = scmp.eq.s32.totalorder %s23, 1
      %p130 = por %p128, %p129
      %p132 = scmp.ne.s32.totalorder %s117, %s131
      %p133 = scmp.eq.s32.totalorder %s23, 0
      %p134 = por %p132, %p133
      %s136 = sadd.s32 %s135, 1
      %p139 = scmp.eq.s32.totalorder %s17, 1
      %p140 = scmp.ne.s32.totalorder %s135, %s137
      %p141 = scmp.eq.s32.totalorder %s17, 0
      %p142 = por %p140, %p141
      %p143 = scmp.ne.s32.totalorder %s135, %s137
      %p144 = scmp.eq.s32.totalorder %s22, 1
      %p145 = por %p143, %p144
      %p146 = scmp.ne.s32.totalorder %s137, %s138
      %p147 = scmp.eq.s32.totalorder %s22, 0
      %p148 = por %p146, %p147
      %p149 = scmp.ne.s32.totalorder %s137, %s138
      %p150 = scmp.eq.s32.totalorder %s23, 1
      %p151 = por %p149, %p150
      %p153 = scmp.ne.s32.totalorder %s138, %s152
      %p154 = scmp.eq.s32.totalorder %s23, 0
      %p155 = por %p153, %p154
      %s157 = sadd.s32 %s156, 1
      %p160 = scmp.eq.s32.totalorder %s17, 1
      %p161 = scmp.ne.s32.totalorder %s156, %s158
      %p162 = scmp.eq.s32.totalorder %s17, 0
      %p163 = por %p161, %p162
      %p164 = scmp.ne.s32.totalorder %s156, %s158
      %p165 = scmp.eq.s32.totalorder %s22, 1
      %p166 = por %p164, %p165
      %p167 = scmp.ne.s32.totalorder %s158, %s159
      %p168 = scmp.eq.s32.totalorder %s22, 0
      %p169 = por %p167, %p168
      %p170 = scmp.ne.s32.totalorder %s158, %s159
      %p171 = scmp.eq.s32.totalorder %s23, 1
      %p172 = por %p170, %p171
      %p174 = scmp.ne.s32.totalorder %s159, %s173
      %p175 = scmp.eq.s32.totalorder %s23, 0
      %p176 = por %p174, %p175
      %s178 = sadd.s32 %s177, 1
      %p181 = scmp.eq.s32.totalorder %s17, 1
      %p182 = scmp.ne.s32.totalorder %s177, %s179
      %p183 = scmp.eq.s32.totalorder %s17, 0
      %p184 = por %p182, %p183
      %p185 = scmp.ne.s32.totalorder %s177, %s179
      %p186 = scmp.eq.s32.totalorder %s22, 1
      %p187 = por %p185, %p186
      %p188 = scmp.ne.s32.totalorder %s179, %s180
      %p189 = scmp.eq.s32.totalorder %s22, 0
      %p190 = por %p188, %p189
      %p191 = scmp.ne.s32.totalorder %s179, %s180
      %p192 = scmp.eq.s32.totalorder %s23, 1
      %p193 = por %p191, %p192
      %p195 = scmp.ne.s32.totalorder %s180, %s194
      %p196 = scmp.eq.s32.totalorder %s23, 0
      %p197 = por %p195, %p196
      %s198 = ssub.s32 %s17, %s24
      %p199 = scmp.eq.s32.totalorder %s198, 0
      %s201 = sadd.s32 %s200, 1
      %s202 = scalar_select %p199, %s200, %s201
      %p205 = pneg %p199
      %p206 = scmp.eq.s32.totalorder %s17, 1
      %p207 = por %p205, %p206
      %p208 = scmp.ne.s32.totalorder %s200, %s203
      %p209 = scmp.eq.s32.totalorder %s17, 0
      %p210 = por %p208, %p209
      %p211 = scmp.ne.s32.totalorder %s200, %s203
      %p212 = scmp.eq.s32.totalorder %s22, 1
      %p213 = por %p211, %p212
      %p214 = scmp.ne.s32.totalorder %s203, %s204
      %p215 = scmp.eq.s32.totalorder %s22, 0
      %p216 = por %p214, %p215
      %p217 = scmp.ne.s32.totalorder %s203, %s204
      %p218 = scmp.eq.s32.totalorder %s23, 1
      %p219 = por %p217, %p218
      %p221 = scmp.ne.s32.totalorder %s204, %s220
      %p222 = scmp.eq.s32.totalorder %s23, 0
      %p223 = por %p221, %p222
      %p224 = scmp.le.s32.totalorder 1, %s17
      %p225 = scmp.lt.s32.totalorder %s17, 3
      %p226 = pnand %p224, %p225
      %p227 = pneg %p226
      // Predicated region
      $region9: #{net3_forward.1} parent=5 // pred_check
        _
      $region10: #{net3_forward.1} parent=5 // pred_check_branch
        %229 = sbr.rel (%p226) target = $region12
      $region11: #{net3_forward.1} parent=5 // pred_region
        %s230 = ssub.s32 %s17, 1
        // Predicated region
        $region13: #{net3_forward.1} parent=11 // pred_check
          %p231 = pneg %p64
        $region14: #{net3_forward.1} parent=11 // pred_check_branch
          %233 = sbr.rel (%p231) target = $region16
        $region15: #{net3_forward.1} parent=11 // pred_region
          _
        $region16: #{net3_forward.1} parent=11 // pred_fallthru
          _
        // Predicated region
        $region17: #{net3_forward.1} parent=11 // pred_check
          %p234 = pneg %p85
        $region18: #{net3_forward.1} parent=11 // pred_check_branch
          %236 = sbr.rel (%p234) target = $region20
        $region19: #{net3_forward.1} parent=11 // pred_region
          _
        $region20: #{net3_forward.1} parent=11 // pred_fallthru
          _
        // Predicated region
        $region21: #{net3_forward.1} parent=11 // pred_check
          %p237 = pneg %p106
        $region22: #{net3_forward.1} parent=11 // pred_check_branch
          %239 = sbr.rel (%p237) target = $region24
        $region23: #{net3_forward.1} parent=11 // pred_region
          _
        $region24: #{net3_forward.1} parent=11 // pred_fallthru
          _
        // Predicated region
        $region25: #{net3_forward.1} parent=11 // pred_check
          %p240 = pneg %p127
        $region26: #{net3_forward.1} parent=11 // pred_check_branch
          %242 = sbr.rel (%p240) target = $region28
        $region27: #{net3_forward.1} parent=11 // pred_region
          _
        $region28: #{net3_forward.1} parent=11 // pred_fallthru
          _
        // Predicated region
        $region29: #{net3_forward.1} parent=11 // pred_check
          %p243 = pneg %p148
        $region30: #{net3_forward.1} parent=11 // pred_check_branch
          %245 = sbr.rel (%p243) target = $region32
        $region31: #{net3_forward.1} parent=11 // pred_region
          _
        $region32: #{net3_forward.1} parent=11 // pred_fallthru
          _
        // Predicated region
        $region33: #{net3_forward.1} parent=11 // pred_check
          %p246 = pneg %p169
        $region34: #{net3_forward.1} parent=11 // pred_check_branch
          %248 = sbr.rel (%p246) target = $region36
        $region35: #{net3_forward.1} parent=11 // pred_region
          _
        $region36: #{net3_forward.1} parent=11 // pred_fallthru
          _
        // Predicated region
        $region37: #{net3_forward.1} parent=11 // pred_check
          %p249 = pneg %p190
        $region38: #{net3_forward.1} parent=11 // pred_check_branch
          %251 = sbr.rel (%p249) target = $region40
        $region39: #{net3_forward.1} parent=11 // pred_region
          _
        $region40: #{net3_forward.1} parent=11 // pred_fallthru
          _
      $region12: #{net3_forward.1} parent=5 // pred_fallthru
        _
      %p252 = scmp.lt.s32.totalorder %s17, 2
      // Predicated region
      $region41: #{net3_forward.1} parent=5 // pred_check
        %p253 = pneg %p252
      $region42: #{net3_forward.1} parent=5 // pred_check_branch
        %255 = sbr.rel (%p253) target = $region44
      $region43: #{net3_forward.1} parent=5 // pred_region
        // Predicated region
        $region45: #{net3_forward.1} parent=43 // pred_check
          %p256 = pneg %p37
        $region46: #{net3_forward.1} parent=43 // pred_check_branch
          %258 = sbr.rel (%p256) target = $region48
        $region47: #{net3_forward.1} parent=43 // pred_region
          %p259 = scmp.lt.s32.totalorder %s17, 1
          %s260 = scalar_select %p259, %s17, 1
          %s261 = smul.addr %s260, 170
          %s262 = smul.addr %s261, 8
          %s263 = scalar_lea.vmem %s0, %s262
        $region48: #{net3_forward.1} parent=43 // pred_fallthru
          _
      $region44: #{net3_forward.1} parent=5 // pred_fallthru
        _
      %p264 = scmp.le.s32.totalorder 1, %s17
      %p265 = scmp.lt.s32.totalorder %s17, 3
      %p266 = pnand %p264, %p265
      %p267 = pneg %p266
      // Predicated region
      $region49: #{net3_forward.1} parent=5 // pred_check
        _
      $region50: #{net3_forward.1} parent=5 // pred_check_branch
        %269 = sbr.rel (%p266) target = $region52
      $region51: #{net3_forward.1} parent=5 // pred_region
        %s270 = ssub.s32 %s17, 1
        %p271 = scmp.lt.s32.totalorder %s22, 1
        %s272 = scalar_select %p271, %s22, 1
        %s273 = smul.addr %s272, 170
        %s274 = smul.addr %s273, 8
        %s275 = scalar_lea.vmem %s0, %s274
        %p276 = pneg %p43
        %p277 = pneg %p40
        %p278 = pneg %p64
        %p279 = pneg %p61
        %p280 = pneg %p85
        %p281 = pneg %p82
        %p282 = pneg %p106
        %p283 = pneg %p103
        %p284 = pneg %p127
        %p285 = pneg %p124
        %p286 = pneg %p148
        %p287 = pneg %p145
        %p288 = pneg %p169
        %p289 = pneg %p166
        %p290 = pneg %p190
        %p291 = pneg %p187
        %p292 = pneg %p216
        %p293 = pneg %p213
        %s294 = sand.u32 %s203, 1
        %s295 = scalar_lea.sflag [#allocation3], %s294
        %s296 = sand.u32 %s203, 1
        %s297 = scalar_lea.vmem [#allocation2], %s296
        %p298 = scmp.lt.s32.totalorder %s22, 1
        %s299 = scalar_select %p298, %s22, 1
        %s300 = smul.addr %s299, 170
        %s301 = smul.addr %s300, 8
        %s302 = scalar_lea.vmem %s0, %s301
        %v303 = vld [vmem:[%s302] sm:$0xff]
        %v304 = vld [vmem:[%s302 + $0x8] sm:$0xff]
        %v305 = vld [vmem:[%s302 + $0x10] sm:$0xff]
        %v306 = vld [vmem:[%s302 + $0x18] sm:$0xff]
        %v307 = vld [vmem:[%s302 + $0x20] sm:$0x3]
        %v308 = vld [vmem:[%s302 + $0x28] sm:$0xff]
        %v309 = vld [vmem:[%s302 + $0x30] sm:$0xff]
        %v310 = vld [vmem:[%s302 + $0x38] sm:$0xff]
        %v311 = vld [vmem:[%s302 + $0x40] sm:$0xff]
        %v312 = vld [vmem:[%s302 + $0x48] sm:$0x3]
        %v313 = vld [vmem:[%s302 + $0x50] sm:$0xff]
        %v314 = vld [vmem:[%s302 + $0x58] sm:$0xff]
        %v315 = vld [vmem:[%s302 + $0x60] sm:$0xff]
        %v316 = vld [vmem:[%s302 + $0x68] sm:$0xff]
        %v317 = vld [vmem:[%s302 + $0x70] sm:$0x3]
        %v318 = vld [vmem:[%s302 + $0x78] sm:$0xff]
        %v319 = vld [vmem:[%s302 + $0x80] sm:$0xff]
        %v320 = vld [vmem:[%s302 + $0x88] sm:$0xff]
        %v321 = vld [vmem:[%s302 + $0x90] sm:$0xff]
        %v322 = vld [vmem:[%s302 + $0x98] sm:$0x3]
        %v323 = vld [vmem:[%s302 + $0xa0] sm:$0xff]
        %v324 = vld [vmem:[%s302 + $0xa8] sm:$0xff]
        %v325 = vld [vmem:[%s302 + $0xb0] sm:$0xff]
        %v326 = vld [vmem:[%s302 + $0xb8] sm:$0xff]
        %v327 = vld [vmem:[%s302 + $0xc0] sm:$0x3]
        %v328 = vld [vmem:[%s302 + $0xc8] sm:$0xff]
        %v329 = vld [vmem:[%s302 + $0xd0] sm:$0xff]
        %v330 = vld [vmem:[%s302 + $0xd8] sm:$0xff]
        %v331 = vld [vmem:[%s302 + $0xe0] sm:$0xff]
        %v332 = vld [vmem:[%s302 + $0xe8] sm:$0x3]
        %v333 = vld [vmem:[%s302 + $0xf0] sm:$0xff]
        %v334 = vld [vmem:[%s302 + $0xf8] sm:$0xff]
        %v335 = vld [vmem:[%s302 + $0x100] sm:$0xff]
        %v336 = vld [vmem:[%s302 + $0x108] sm:$0xff]
        %v337 = vld [vmem:[%s302 + $0x110] sm:$0x3]
        %v338 = vld [vmem:[%s302 + $0x118] sm:$0xff]
        %v339 = vld [vmem:[%s302 + $0x120] sm:$0xff]
        %v340 = vld [vmem:[%s302 + $0x128] sm:$0xff]
        %v341 = vld [vmem:[%s302 + $0x130] sm:$0xff]
        %v342 = vld [vmem:[%s302 + $0x138] sm:$0x3]
        %v343 = vld [vmem:[%s302 + $0x140] sm:$0xff]
        %v344 = vld [vmem:[%s302 + $0x148] sm:$0xff]
        %v345 = vld [vmem:[%s302 + $0x150] sm:$0xff]
        %v346 = vld [vmem:[%s302 + $0x158] sm:$0xff]
        %v347 = vld [vmem:[%s302 + $0x160] sm:$0x3]
        %v348 = vld [vmem:[%s302 + $0x168] sm:$0xff]
        %v349 = vld [vmem:[%s302 + $0x170] sm:$0xff]
        %v350 = vld [vmem:[%s302 + $0x178] sm:$0xff]
        %v351 = vld [vmem:[%s302 + $0x180] sm:$0xff]
        %v352 = vld [vmem:[%s302 + $0x188] sm:$0x3]
        %v353 = vld [vmem:[%s302 + $0x190] sm:$0xff]
        %v354 = vld [vmem:[%s302 + $0x198] sm:$0xff]
        %v355 = vld [vmem:[%s302 + $0x1a0] sm:$0xff]
        %v356 = vld [vmem:[%s302 + $0x1a8] sm:$0xff]
        %v357 = vld [vmem:[%s302 + $0x1b0] sm:$0x3]
        %v358 = vld [vmem:[%s302 + $0x1b8] sm:$0xff]
        %v359 = vld [vmem:[%s302 + $0x1c0] sm:$0xff]
        %v360 = vld [vmem:[%s302 + $0x1c8] sm:$0xff]
        %v361 = vld [vmem:[%s302 + $0x1d0] sm:$0xff]
        %v362 = vld [vmem:[%s302 + $0x1d8] sm:$0x3]
        %v363 = vld [vmem:[%s302 + $0x1e0] sm:$0xff]
        %v364 = vld [vmem:[%s302 + $0x1e8] sm:$0xff]
        %v365 = vld [vmem:[%s302 + $0x1f0] sm:$0xff]
        %v366 = vld [vmem:[%s302 + $0x1f8] sm:$0xff]
        %v367 = vld [vmem:[%s302 + $0x200] sm:$0x3]
        %v368 = vld [vmem:[%s302 + $0x208] sm:$0xff]
        %v369 = vld [vmem:[%s302 + $0x210] sm:$0xff]
        %v370 = vld [vmem:[%s302 + $0x218] sm:$0xff]
        %v371 = vld [vmem:[%s302 + $0x220] sm:$0xff]
        %v372 = vld [vmem:[%s302 + $0x228] sm:$0x3]
        %v373 = vld [vmem:[%s302 + $0x230] sm:$0xff]
        %v374 = vld [vmem:[%s302 + $0x238] sm:$0xff]
        %v375 = vld [vmem:[%s302 + $0x240] sm:$0xff]
        %v376 = vld [vmem:[%s302 + $0x248] sm:$0xff]
        %v377 = vld [vmem:[%s302 + $0x250] sm:$0x3]
        %v378 = vld [vmem:[%s302 + $0x258] sm:$0xff]
        %v379 = vld [vmem:[%s302 + $0x260] sm:$0xff]
        %v380 = vld [vmem:[%s302 + $0x268] sm:$0xff]
        %v381 = vld [vmem:[%s302 + $0x270] sm:$0xff]
        %v382 = vld [vmem:[%s302 + $0x278] sm:$0x3]
        %v383 = vld [vmem:[%s302 + $0x280] sm:$0xff]
        %v384 = vld [vmem:[%s302 + $0x288] sm:$0xff]
        %v385 = vld [vmem:[%s302 + $0x290] sm:$0xff]
        %v386 = vld [vmem:[%s302 + $0x298] sm:$0xff]
        %v387 = vld [vmem:[%s302 + $0x2a0] sm:$0x3]
        %v388 = vld [vmem:[%s302 + $0x2a8] sm:$0xff]
        %v389 = vld [vmem:[%s302 + $0x2b0] sm:$0xff]
        %v390 = vld [vmem:[%s302 + $0x2b8] sm:$0xff]
        %v391 = vld [vmem:[%s302 + $0x2c0] sm:$0xff]
        %v392 = vld [vmem:[%s302 + $0x2c8] sm:$0x3]
        %v393 = vld [vmem:[%s302 + $0x2d0] sm:$0xff]
        %v394 = vld [vmem:[%s302 + $0x2d8] sm:$0xff]
        %v395 = vld [vmem:[%s302 + $0x2e0] sm:$0xff]
        %v396 = vld [vmem:[%s302 + $0x2e8] sm:$0xff]
        %v397 = vld [vmem:[%s302 + $0x2f0] sm:$0x3]
        %v398 = vld [vmem:[%s302 + $0x2f8] sm:$0xff]
        %v399 = vld [vmem:[%s302 + $0x300] sm:$0xff]
        %v400 = vld [vmem:[%s302 + $0x308] sm:$0xff]
        %v401 = vld [vmem:[%s302 + $0x310] sm:$0xff]
        %v402 = vld [vmem:[%s302 + $0x318] sm:$0x3]
        %v403 = vld [vmem:[%s302 + $0x320] sm:$0xff]
        %v404 = vld [vmem:[%s302 + $0x328] sm:$0xff]
        %v405 = vld [vmem:[%s302 + $0x330] sm:$0xff]
        %v406 = vld [vmem:[%s302 + $0x338] sm:$0xff]
        %v407 = vld [vmem:[%s302 + $0x340] sm:$0x3]
        %v408 = vld [vmem:[%s302 + $0x348] sm:$0xff]
        %v409 = vld [vmem:[%s302 + $0x350] sm:$0xff]
        %v410 = vld [vmem:[%s302 + $0x358] sm:$0xff]
        %v411 = vld [vmem:[%s302 + $0x360] sm:$0xff]
        %v412 = vld [vmem:[%s302 + $0x368] sm:$0x3]
        %v413 = vld [vmem:[%s302 + $0x370] sm:$0xff]
        %v414 = vld [vmem:[%s302 + $0x378] sm:$0xff]
        %v415 = vld [vmem:[%s302 + $0x380] sm:$0xff]
        %v416 = vld [vmem:[%s302 + $0x388] sm:$0xff]
        %v417 = vld [vmem:[%s302 + $0x390] sm:$0x3]
        %v418 = vld [vmem:[%s302 + $0x398] sm:$0xff]
        %v419 = vld [vmem:[%s302 + $0x3a0] sm:$0xff]
        %v420 = vld [vmem:[%s302 + $0x3a8] sm:$0xff]
        %v421 = vld [vmem:[%s302 + $0x3b0] sm:$0xff]
        %v422 = vld [vmem:[%s302 + $0x3b8] sm:$0x3]
        %v423 = vld [vmem:[%s302 + $0x3c0] sm:$0xff]
        %v424 = vld [vmem:[%s302 + $0x3c8] sm:$0xff]
        %v425 = vld [vmem:[%s302 + $0x3d0] sm:$0xff]
        %v426 = vld [vmem:[%s302 + $0x3d8] sm:$0xff]
        %v427 = vld [vmem:[%s302 + $0x3e0] sm:$0x3]
        %v428 = vld [vmem:[%s302 + $0x3e8] sm:$0xff]
        %v429 = vld [vmem:[%s302 + $0x3f0] sm:$0xff]
        %v430 = vld [vmem:[%s302 + $0x3f8] sm:$0xff]
        %v431 = vld [vmem:[%s302 + $0x400] sm:$0xff]
        %v432 = vld [vmem:[%s302 + $0x408] sm:$0x3]
        %v433 = vld [vmem:[%s302 + $0x410] sm:$0xff]
        %v434 = vld [vmem:[%s302 + $0x418] sm:$0xff]
        %v435 = vld [vmem:[%s302 + $0x420] sm:$0xff]
        %v436 = vld [vmem:[%s302 + $0x428] sm:$0xff]
        %v437 = vld [vmem:[%s302 + $0x430] sm:$0x3]
        %v438 = vld [vmem:[%s302 + $0x438] sm:$0xff]
        %v439 = vld [vmem:[%s302 + $0x440] sm:$0xff]
        %v440 = vld [vmem:[%s302 + $0x448] sm:$0xff]
        %v441 = vld [vmem:[%s302 + $0x450] sm:$0xff]
        %v442 = vld [vmem:[%s302 + $0x458] sm:$0x3]
        %v443 = vld [vmem:[%s302 + $0x460] sm:$0xff]
        %v444 = vld [vmem:[%s302 + $0x468] sm:$0xff]
        %v445 = vld [vmem:[%s302 + $0x470] sm:$0xff]
        %v446 = vld [vmem:[%s302 + $0x478] sm:$0xff]
        %v447 = vld [vmem:[%s302 + $0x480] sm:$0x3]
        %v448 = vld [vmem:[%s302 + $0x488] sm:$0xff]
        %v449 = vld [vmem:[%s302 + $0x490] sm:$0xff]
        %v450 = vld [vmem:[%s302 + $0x498] sm:$0xff]
        %v451 = vld [vmem:[%s302 + $0x4a0] sm:$0xff]
        %v452 = vld [vmem:[%s302 + $0x4a8] sm:$0x3]
        %v453 = vld [vmem:[%s302 + $0x4b0] sm:$0xff]
        %v454 = vld [vmem:[%s302 + $0x4b8] sm:$0xff]
        %v455 = vld [vmem:[%s302 + $0x4c0] sm:$0xff]
        %v456 = vld [vmem:[%s302 + $0x4c8] sm:$0xff]
        %v457 = vld [vmem:[%s302 + $0x4d0] sm:$0x3]
        %v458 = vld [vmem:[%s302 + $0x4d8] sm:$0xff]
        %v459 = vld [vmem:[%s302 + $0x4e0] sm:$0xff]
        %v460 = vld [vmem:[%s302 + $0x4e8] sm:$0xff]
        %v461 = vld [vmem:[%s302 + $0x4f0] sm:$0xff]
        %v462 = vld [vmem:[%s302 + $0x4f8] sm:$0x3]
        %v463 = vld [vmem:[%s302 + $0x500] sm:$0xff]
        %v464 = vld [vmem:[%s302 + $0x508] sm:$0xff]
        %v465 = vld [vmem:[%s302 + $0x510] sm:$0xff]
        %v466 = vld [vmem:[%s302 + $0x518] sm:$0xff]
        %v467 = vld [vmem:[%s302 + $0x520] sm:$0x3]
        %v468 = vld [vmem:[%s302 + $0x528] sm:$0xff]
        %v469 = vld [vmem:[%s302 + $0x530] sm:$0xff]
        %v470 = vld [vmem:[%s302 + $0x538] sm:$0xff]
        %v471 = vld [vmem:[%s302 + $0x540] sm:$0xff]
        %v472 = vld [vmem:[%s302 + $0x548] sm:$0x3]
        %v473 = vld [vmem:[%s1] sm:$0x7]
        %vm634 = vcmask 1046528
        %v635 = vrot.slane %v303, 1
        %v636 = vrot.slane %v304, 1
        %v637 = vsel %vm634, %v635, %v636
        %v638 = vrot.slane %v305, 1
        %v639 = vsel %vm634, %v636, %v638
        %v640 = vrot.slane %v306, 1
        %v641 = vsel %vm634, %v638, %v640
        %v642 = vrot.slane %v307, 1
        %v643 = vsel %vm634, %v640, %v642
        %v644 = vrot.slane %v308, 1
        %v645 = vrot.slane %v309, 1
        %v646 = vsel %vm634, %v644, %v645
        %v647 = vrot.slane %v310, 1
        %v648 = vsel %vm634, %v645, %v647
        %v649 = vrot.slane %v311, 1
        %v650 = vsel %vm634, %v647, %v649
        %v651 = vrot.slane %v312, 1
        %v652 = vsel %vm634, %v649, %v651
        %v653 = vrot.slane %v313, 1
        %v654 = vrot.slane %v314, 1
        %v655 = vsel %vm634, %v653, %v654
        %v656 = vrot.slane %v315, 1
        %v657 = vsel %vm634, %v654, %v656
        %v658 = vrot.slane %v316, 1
        %v659 = vsel %vm634, %v656, %v658
        %v660 = vrot.slane %v317, 1
        %v661 = vsel %vm634, %v658, %v660
        %v662 = vrot.slane %v318, 1
        %v663 = vrot.slane %v319, 1
        %v664 = vsel %vm634, %v662, %v663
        %v665 = vrot.slane %v320, 1
        %v666 = vsel %vm634, %v663, %v665
        %v667 = vrot.slane %v321, 1
        %v668 = vsel %vm634, %v665, %v667
        %v669 = vrot.slane %v322, 1
        %v670 = vsel %vm634, %v667, %v669
        %v671 = vrot.slane %v323, 1
        %v672 = vrot.slane %v324, 1
        %v673 = vsel %vm634, %v671, %v672
        %v674 = vrot.slane %v325, 1
        %v675 = vsel %vm634, %v672, %v674
        %v676 = vrot.slane %v326, 1
        %v677 = vsel %vm634, %v674, %v676
        %v678 = vrot.slane %v327, 1
        %v679 = vsel %vm634, %v676, %v678
        %v680 = vrot.slane %v328, 1
        %v681 = vrot.slane %v329, 1
        %v682 = vsel %vm634, %v680, %v681
        %v683 = vrot.slane %v330, 1
        %v684 = vsel %vm634, %v681, %v683
        %v685 = vrot.slane %v331, 1
        %v686 = vsel %vm634, %v683, %v685
        %v687 = vrot.slane %v332, 1
        %v688 = vsel %vm634, %v685, %v687
        %v689 = vrot.slane %v333, 1
        %v690 = vrot.slane %v334, 1
        %v691 = vsel %vm634, %v689, %v690
        %v692 = vrot.slane %v335, 1
        %v693 = vsel %vm634, %v690, %v692
        %v694 = vrot.slane %v336, 1
        %v695 = vsel %vm634, %v692, %v694
        %v696 = vrot.slane %v337, 1
        %v697 = vsel %vm634, %v694, %v696
        %v698 = vrot.slane %v338, 1
        %v699 = vrot.slane %v339, 1
        %v700 = vsel %vm634, %v698, %v699
        %v701 = vrot.slane %v340, 1
        %v702 = vsel %vm634, %v699, %v701
        %v703 = vrot.slane %v341, 1
        %v704 = vsel %vm634, %v701, %v703
        %v705 = vrot.slane %v342, 1
        %v706 = vsel %vm634, %v703, %v705
        %v707 = vrot.slane %v343, 1
        %v708 = vrot.slane %v344, 1
        %v709 = vsel %vm634, %v707, %v708
        %v710 = vrot.slane %v345, 1
        %v711 = vsel %vm634, %v708, %v710
        %v712 = vrot.slane %v346, 1
        %v713 = vsel %vm634, %v710, %v712
        %v714 = vrot.slane %v347, 1
        %v715 = vsel %vm634, %v712, %v714
        %v716 = vrot.slane %v348, 1
        %v717 = vrot.slane %v349, 1
        %v718 = vsel %vm634, %v716, %v717
        %v719 = vrot.slane %v350, 1
        %v720 = vsel %vm634, %v717, %v719
        %v721 = vrot.slane %v351, 1
        %v722 = vsel %vm634, %v719, %v721
        %v723 = vrot.slane %v352, 1
        %v724 = vsel %vm634, %v721, %v723
        %v725 = vrot.slane %v353, 1
        %v726 = vrot.slane %v354, 1
        %v727 = vsel %vm634, %v725, %v726
        %v728 = vrot.slane %v355, 1
        %v729 = vsel %vm634, %v726, %v728
        %v730 = vrot.slane %v356, 1
        %v731 = vsel %vm634, %v728, %v730
        %v732 = vrot.slane %v357, 1
        %v733 = vsel %vm634, %v730, %v732
        %v734 = vrot.slane %v358, 1
        %v735 = vrot.slane %v359, 1
        %v736 = vsel %vm634, %v734, %v735
        %v737 = vrot.slane %v360, 1
        %v738 = vsel %vm634, %v735, %v737
        %v739 = vrot.slane %v361, 1
        %v740 = vsel %vm634, %v737, %v739
        %v741 = vrot.slane %v362, 1
        %v742 = vsel %vm634, %v739, %v741
        %v743 = vrot.slane %v363, 1
        %v744 = vrot.slane %v364, 1
        %v745 = vsel %vm634, %v743, %v744
        %v746 = vrot.slane %v365, 1
        %v747 = vsel %vm634, %v744, %v746
        %v748 = vrot.slane %v366, 1
        %v749 = vsel %vm634, %v746, %v748
        %v750 = vrot.slane %v367, 1
        %v751 = vsel %vm634, %v748, %v750
        %v752 = vrot.slane %v368, 1
        %v753 = vrot.slane %v369, 1
        %v754 = vsel %vm634, %v752, %v753
        %v755 = vrot.slane %v370, 1
        %v756 = vsel %vm634, %v753, %v755
        %v757 = vrot.slane %v371, 1
        %v758 = vsel %vm634, %v755, %v757
        %v759 = vrot.slane %v372, 1
        %v760 = vsel %vm634, %v757, %v759
        %v761 = vrot.slane %v373, 1
        %v762 = vrot.slane %v374, 1
        %v763 = vsel %vm634, %v761, %v762
        %v764 = vrot.slane %v375, 1
        %v765 = vsel %vm634, %v762, %v764
        %v766 = vrot.slane %v376, 1
        %v767 = vsel %vm634, %v764, %v766
        %v768 = vrot.slane %v377, 1
        %v769 = vsel %vm634, %v766, %v768
        %v770 = vrot.slane %v378, 1
        %v771 = vrot.slane %v379, 1
        %v772 = vsel %vm634, %v770, %v771
        %v773 = vrot.slane %v380, 1
        %v774 = vsel %vm634, %v771, %v773
        %v775 = vrot.slane %v381, 1
        %v776 = vsel %vm634, %v773, %v775
        %v777 = vrot.slane %v382, 1
        %v778 = vsel %vm634, %v775, %v777
        %v779 = vrot.slane %v383, 1
        %v780 = vrot.slane %v384, 1
        %v781 = vsel %vm634, %v779, %v780
        %v782 = vrot.slane %v385, 1
        %v783 = vsel %vm634, %v780, %v782
        %v784 = vrot.slane %v386, 1
        %v785 = vsel %vm634, %v782, %v784
        %v786 = vrot.slane %v387, 1
        %v787 = vsel %vm634, %v784, %v786
        %v788 = vrot.slane %v388, 1
        %v789 = vrot.slane %v389, 1
        %v790 = vsel %vm634, %v788, %v789
        %v791 = vrot.slane %v390, 1
        %v792 = vsel %vm634, %v789, %v791
        %v793 = vrot.slane %v391, 1
        %v794 = vsel %vm634, %v791, %v793
        %v795 = vrot.slane %v392, 1
        %v796 = vsel %vm634, %v793, %v795
        %v797 = vrot.slane %v393, 1
        %v798 = vrot.slane %v394, 1
        %v799 = vsel %vm634, %v797, %v798
        %v800 = vrot.slane %v395, 1
        %v801 = vsel %vm634, %v798, %v800
        %v802 = vrot.slane %v396, 1
        %v803 = vsel %vm634, %v800, %v802
        %v804 = vrot.slane %v397, 1
        %v805 = vsel %vm634, %v802, %v804
        %v806 = vrot.slane %v398, 1
        %v807 = vrot.slane %v399, 1
        %v808 = vsel %vm634, %v806, %v807
        %v809 = vrot.slane %v400, 1
        %v810 = vsel %vm634, %v807, %v809
        %v811 = vrot.slane %v401, 1
        %v812 = vsel %vm634, %v809, %v811
        %v813 = vrot.slane %v402, 1
        %v814 = vsel %vm634, %v811, %v813
        %v815 = vrot.slane %v403, 1
        %v816 = vrot.slane %v404, 1
        %v817 = vsel %vm634, %v815, %v816
        %v818 = vrot.slane %v405, 1
        %v819 = vsel %vm634, %v816, %v818
        %v820 = vrot.slane %v406, 1
        %v821 = vsel %vm634, %v818, %v820
        %v822 = vrot.slane %v407, 1
        %v823 = vsel %vm634, %v820, %v822
        %v824 = vrot.slane %v408, 1
        %v825 = vrot.slane %v409, 1
        %v826 = vsel %vm634, %v824, %v825
        %v827 = vrot.slane %v410, 1
        %v828 = vsel %vm634, %v825, %v827
        %v829 = vrot.slane %v411, 1
        %v830 = vsel %vm634, %v827, %v829
        %v831 = vrot.slane %v412, 1
        %v832 = vsel %vm634, %v829, %v831
        %v833 = vrot.slane %v413, 1
        %v834 = vrot.slane %v414, 1
        %v835 = vsel %vm634, %v833, %v834
        %v836 = vrot.slane %v415, 1
        %v837 = vsel %vm634, %v834, %v836
        %v838 = vrot.slane %v416, 1
        %v839 = vsel %vm634, %v836, %v838
        %v840 = vrot.slane %v417, 1
        %v841 = vsel %vm634, %v838, %v840
        %v842 = vrot.slane %v418, 1
        %v843 = vrot.slane %v419, 1
        %v844 = vsel %vm634, %v842, %v843
        %v845 = vrot.slane %v420, 1
        %v846 = vsel %vm634, %v843, %v845
        %v847 = vrot.slane %v421, 1
        %v848 = vsel %vm634, %v845, %v847
        %v849 = vrot.slane %v422, 1
        %v850 = vsel %vm634, %v847, %v849
        %v851 = vrot.slane %v423, 1
        %v852 = vrot.slane %v424, 1
        %v853 = vsel %vm634, %v851, %v852
        %v854 = vrot.slane %v425, 1
        %v855 = vsel %vm634, %v852, %v854
        %v856 = vrot.slane %v426, 1
        %v857 = vsel %vm634, %v854, %v856
        %v858 = vrot.slane %v427, 1
        %v859 = vsel %vm634, %v856, %v858
        %v860 = vrot.slane %v428, 1
        %v861 = vrot.slane %v429, 1
        %v862 = vsel %vm634, %v860, %v861
        %v863 = vrot.slane %v430, 1
        %v864 = vsel %vm634, %v861, %v863
        %v865 = vrot.slane %v431, 1
        %v866 = vsel %vm634, %v863, %v865
        %v867 = vrot.slane %v432, 1
        %v868 = vsel %vm634, %v865, %v867
        %v869 = vrot.slane %v433, 1
        %v870 = vrot.slane %v434, 1
        %v871 = vsel %vm634, %v869, %v870
        %v872 = vrot.slane %v435, 1
        %v873 = vsel %vm634, %v870, %v872
        %v874 = vrot.slane %v436, 1
        %v875 = vsel %vm634, %v872, %v874
        %v876 = vrot.slane %v437, 1
        %v877 = vsel %vm634, %v874, %v876
        %v878 = vrot.slane %v438, 1
        %v879 = vrot.slane %v439, 1
        %v880 = vsel %vm634, %v878, %v879
        %v881 = vrot.slane %v440, 1
        %v882 = vsel %vm634, %v879, %v881
        %v883 = vrot.slane %v441, 1
        %v884 = vsel %vm634, %v881, %v883
        %v885 = vrot.slane %v442, 1
        %v886 = vsel %vm634, %v883, %v885
        %v887 = vrot.slane %v443, 1
        %v888 = vrot.slane %v444, 1
        %v889 = vsel %vm634, %v887, %v888
        %v890 = vrot.slane %v445, 1
        %v891 = vsel %vm634, %v888, %v890
        %v892 = vrot.slane %v446, 1
        %v893 = vsel %vm634, %v890, %v892
        %v894 = vrot.slane %v447, 1
        %v895 = vsel %vm634, %v892, %v894
        %v896 = vrot.slane %v448, 1
        %v897 = vrot.slane %v449, 1
        %v898 = vsel %vm634, %v896, %v897
        %v899 = vrot.slane %v450, 1
        %v900 = vsel %vm634, %v897, %v899
        %v901 = vrot.slane %v451, 1
        %v902 = vsel %vm634, %v899, %v901
        %v903 = vrot.slane %v452, 1
        %v904 = vsel %vm634, %v901, %v903
        %v905 = vrot.slane %v453, 1
        %v906 = vrot.slane %v454, 1
        %v907 = vsel %vm634, %v905, %v906
        %v908 = vrot.slane %v455, 1
        %v909 = vsel %vm634, %v906, %v908
        %v910 = vrot.slane %v456, 1
        %v911 = vsel %vm634, %v908, %v910
        %v912 = vrot.slane %v457, 1
        %v913 = vsel %vm634, %v910, %v912
        %v914 = vrot.slane %v458, 1
        %v915 = vrot.slane %v459, 1
        %v916 = vsel %vm634, %v914, %v915
        %v917 = vrot.slane %v460, 1
        %v918 = vsel %vm634, %v915, %v917
        %v919 = vrot.slane %v461, 1
        %v920 = vsel %vm634, %v917, %v919
        %v921 = vrot.slane %v462, 1
        %v922 = vsel %vm634, %v919, %v921
        %s923 = scalar_lea.vmem %s1, 4
        %v924 = vld [vmem:[%s923] sm:$0x7]
        %vm925 = vcmask 23552
        %v926 = vsel %vm925, %v637, 0
        %v928 = vsel %vm925, %v639, 0
        %v930 = vsel %vm925, %v641, 0
        %v932 = vsel %vm925, %v643, 0
        %v934 = vsel %vm925, %v646, 0
        %v936 = vsel %vm925, %v648, 0
        %v938 = vsel %vm925, %v650, 0
        %v940 = vsel %vm925, %v652, 0
        %v942 = vsel %vm925, %v655, 0
        %v944 = vsel %vm925, %v657, 0
        %v946 = vsel %vm925, %v659, 0
        %v948 = vsel %vm925, %v661, 0
        %v950 = vsel %vm925, %v664, 0
        %v952 = vsel %vm925, %v666, 0
        %v954 = vsel %vm925, %v668, 0
        %v956 = vsel %vm925, %v670, 0
        %v958 = vsel %vm925, %v673, 0
        %v960 = vsel %vm925, %v675, 0
        %v962 = vsel %vm925, %v677, 0
        %v964 = vsel %vm925, %v679, 0
        %v966 = vsel %vm925, %v682, 0
        %v968 = vsel %vm925, %v684, 0
        %v970 = vsel %vm925, %v686, 0
        %v972 = vsel %vm925, %v688, 0
        %v974 = vsel %vm925, %v691, 0
        %v976 = vsel %vm925, %v693, 0
        %v978 = vsel %vm925, %v695, 0
        %v980 = vsel %vm925, %v697, 0
        %v982 = vsel %vm925, %v700, 0
        %v984 = vsel %vm925, %v702, 0
        %v986 = vsel %vm925, %v704, 0
        %v988 = vsel %vm925, %v706, 0
        %v990 = vsel %vm925, %v709, 0
        %v992 = vsel %vm925, %v711, 0
        %v994 = vsel %vm925, %v713, 0
        %v996 = vsel %vm925, %v715, 0
        %v998 = vsel %vm925, %v718, 0
        %v1000 = vsel %vm925, %v720, 0
        %v1002 = vsel %vm925, %v722, 0
        %v1004 = vsel %vm925, %v724, 0
        %v1006 = vsel %vm925, %v727, 0
        %v1008 = vsel %vm925, %v729, 0
        %v1010 = vsel %vm925, %v731, 0
        %v1012 = vsel %vm925, %v733, 0
        %v1014 = vsel %vm925, %v736, 0
        %v1016 = vsel %vm925, %v738, 0
        %v1018 = vsel %vm925, %v740, 0
        %v1020 = vsel %vm925, %v742, 0
        %v1022 = vsel %vm925, %v745, 0
        %v1024 = vsel %vm925, %v747, 0
        %v1026 = vsel %vm925, %v749, 0
        %v1028 = vsel %vm925, %v751, 0
        %v1030 = vsel %vm925, %v754, 0
        %v1032 = vsel %vm925, %v756, 0
        %v1034 = vsel %vm925, %v758, 0
        %v1036 = vsel %vm925, %v760, 0
        %v1038 = vsel %vm925, %v763, 0
        %v1040 = vsel %vm925, %v765, 0
        %v1042 = vsel %vm925, %v767, 0
        %v1044 = vsel %vm925, %v769, 0
        %v1046 = vsel %vm925, %v772, 0
        %v1048 = vsel %vm925, %v774, 0
        %v1050 = vsel %vm925, %v776, 0
        %v1052 = vsel %vm925, %v778, 0
        %v1054 = vsel %vm925, %v781, 0
        %v1056 = vsel %vm925, %v783, 0
        %v1058 = vsel %vm925, %v785, 0
        %v1060 = vsel %vm925, %v787, 0
        %v1062 = vsel %vm925, %v790, 0
        %v1064 = vsel %vm925, %v792, 0
        %v1066 = vsel %vm925, %v794, 0
        %v1068 = vsel %vm925, %v796, 0
        %v1070 = vsel %vm925, %v799, 0
        %v1072 = vsel %vm925, %v801, 0
        %v1074 = vsel %vm925, %v803, 0
        %v1076 = vsel %vm925, %v805, 0
        %v1078 = vsel %vm925, %v808, 0
        %v1080 = vsel %vm925, %v810, 0
        %v1082 = vsel %vm925, %v812, 0
        %v1084 = vsel %vm925, %v814, 0
        %v1086 = vsel %vm925, %v817, 0
        %v1088 = vsel %vm925, %v819, 0
        %v1090 = vsel %vm925, %v821, 0
        %v1092 = vsel %vm925, %v823, 0
        %v1094 = vsel %vm925, %v826, 0
        %v1096 = vsel %vm925, %v828, 0
        %v1098 = vsel %vm925, %v830, 0
        %v1100 = vsel %vm925, %v832, 0
        %v1102 = vsel %vm925, %v835, 0
        %v1104 = vsel %vm925, %v837, 0
        %v1106 = vsel %vm925, %v839, 0
        %v1108 = vsel %vm925, %v841, 0
        %v1110 = vsel %vm925, %v844, 0
        %v1112 = vsel %vm925, %v846, 0
        %v1114 = vsel %vm925, %v848, 0
        %v1116 = vsel %vm925, %v850, 0
        %v1118 = vsel %vm925, %v853, 0
        %v1120 = vsel %vm925, %v855, 0
        %v1122 = vsel %vm925, %v857, 0
        %v1124 = vsel %vm925, %v859, 0
        %v1126 = vsel %vm925, %v862, 0
        %v1128 = vsel %vm925, %v864, 0
        %v1130 = vsel %vm925, %v866, 0
        %v1132 = vsel %vm925, %v868, 0
        %v1134 = vsel %vm925, %v871, 0
        %v1136 = vsel %vm925, %v873, 0
        %v1138 = vsel %vm925, %v875, 0
        %v1140 = vsel %vm925, %v877, 0
        %v1142 = vsel %vm925, %v880, 0
        %v1144 = vsel %vm925, %v882, 0
        %v1146 = vsel %vm925, %v884, 0
        %v1148 = vsel %vm925, %v886, 0
        %v1150 = vsel %vm925, %v889, 0
        %v1152 = vsel %vm925, %v891, 0
        %v1154 = vsel %vm925, %v893, 0
        %v1156 = vsel %vm925, %v895, 0
        %v1158 = vsel %vm925, %v898, 0
        %v1160 = vsel %vm925, %v900, 0
        %v1162 = vsel %vm925, %v902, 0
        %v1164 = vsel %vm925, %v904, 0
        %v1166 = vsel %vm925, %v907, 0
        %v1168 = vsel %vm925, %v909, 0
        %v1170 = vsel %vm925, %v911, 0
        %v1172 = vsel %vm925, %v913, 0
        %v1174 = vsel %vm925, %v916, 0
        %v1176 = vsel %vm925, %v918, 0
        %v1178 = vsel %vm925, %v920, 0
        %v1180 = vsel %vm925, %v922, 0
        %vm1182 = vcmask 1042432
        %v1184 = vsel %vm1182, %v924, 0
        %1186 = vmatprep.subr.mxu0 0.0
        %1187 = vmatpush1.msra.mxu0 0.0
        %1188 = vmatprep.subr.mxu0 0.0
        %1189 = vmatpush1.msra.mxu0 0.0
        %1190 = vmatprep.subr.mxu0 0.0
        %1191 = vmatpush1.msra.mxu0 0.0
        %1192 = vmatprep.subr.mxu0 0.0
        %1193 = vmatpush1.msra.mxu0 0.0
        %1194 = vmatprep.subr.mxu0 0.0
        %1195 = vmatpush1.msra.mxu0 0.0
        %1196 = vmatprep.subr.mxu0 0.0
        %1197 = vmatpush1.msra.mxu0 0.0
        %1198 = vmatprep.subr.mxu0 0.0
        %1199 = vmatpush1.msra.mxu0 0.0
        %1200 = vmatprep.subr.mxu0 0.0
        %1201 = vmatpush1.msra.mxu0 0.0
        %1202 = vmatprep.subr.mxu0 0.0
        %1203 = vmatpush1.msra.mxu0 0.0
        %1204 = vmatprep.subr.mxu0 0.0
        %1205 = vmatpush1.msra.mxu0 0.0
        %1206 = vmatprep.subr.mxu0 0.0
        %1207 = vmatpush1.msra.mxu0 0.0
        %1208 = vmatprep.subr.mxu0 0.0
        %1209 = vmatpush1.msra.mxu0 0.0
        %1210 = vmatprep.subr.mxu0 0.0
        %1211 = vmatpush1.msra.mxu0 0.0
        %1212 = vmatprep.subr.mxu0 0.0
        %1213 = vmatpush1.msra.mxu0 0.0
        %1214 = vmatprep.subr.mxu0 0.0
        %1215 = vmatpush1.msra.mxu0 0.0
        %1216 = vmatprep.subr.mxu0 0.0
        %1217 = vmatpush1.msra.mxu0 %v1184
        %1218 = vmatprep.subr.mxu0 0.0
        %1219 = vmatpush2.msra.mxu0 0.0
        %1220 = vmatprep.subr.mxu0 0.0
        %1221 = vmatpush2.msra.mxu0 0.0
        %1222 = vmatprep.subr.mxu0 0.0
        %1223 = vmatpush2.msra.mxu0 0.0
        %1224 = vmatprep.subr.mxu0 0.0
        %1225 = vmatpush2.msra.mxu0 0.0
        %1226 = vmatprep.subr.mxu0 0.0
        %1227 = vmatpush2.msra.mxu0 0.0
        %1228 = vmatprep.subr.mxu0 0.0
        %1229 = vmatpush2.msra.mxu0 0.0
        %1230 = vmatprep.subr.mxu0 0.0
        %1231 = vmatpush2.msra.mxu0 0.0
        %1232 = vmatprep.subr.mxu0 0.0
        %1233 = vmatpush2.msra.mxu0 0.0
        %1234 = vmatprep.subr.mxu0 0.0
        %1235 = vmatpush2.msra.mxu0 0.0
        %1236 = vmatprep.subr.mxu0 0.0
        %1237 = vmatpush2.msra.mxu0 0.0
        %1238 = vmatprep.subr.mxu0 0.0
        %1239 = vmatpush2.msra.mxu0 0.0
        %1240 = vmatprep.subr.mxu0 0.0
        %1241 = vmatpush2.msra.mxu0 0.0
        %1242 = vmatprep.subr.mxu0 0.0
        %1243 = vmatpush2.msra.mxu0 0.0
        %1244 = vmatprep.subr.mxu0 0.0
        %1245 = vmatpush2.msra.mxu0 0.0
        %1246 = vmatprep.subr.mxu0 0.0
        %1247 = vmatpush2.msra.mxu0 0.0
        %1248 = vmatprep.subr.mxu0 0.0
        %1249 = vmatpush2.msra.mxu0 0.0
        %1250 = vmatprep.mubr.f32.mxu0 0.0
        %1251 = vmatmul.mubr.f32.gmra.mxu0 %v926
        %v1252 = vpop.f32.mrf.mxu0
        %v1253 = vadd.f32 0.0, %v1252
        %v1254 = vpop.f32.mrf.mxu0
        %1255 = vmatprep.mubr.f32.mxu0 0.0
        %1256 = vmatmul.mubr.f32.gmra.mxu0 %v928
        %v1257 = vpop.f32.mrf.mxu0
        %v1258 = vadd.f32 0.0, %v1257
        %v1259 = vpop.f32.mrf.mxu0
        %1260 = vmatprep.mubr.f32.mxu0 0.0
        %1261 = vmatmul.mubr.f32.gmra.mxu0 %v930
        %v1262 = vpop.f32.mrf.mxu0
        %v1263 = vadd.f32 0.0, %v1262
        %v1264 = vpop.f32.mrf.mxu0
        %1265 = vmatprep.mubr.f32.mxu0 0.0
        %1266 = vmatmul.mubr.f32.gmra.mxu0 %v932
        %v1267 = vpop.f32.mrf.mxu0
        %v1268 = vadd.f32 0.0, %v1267
        %v1269 = vpop.f32.mrf.mxu0
        %1270 = vmatprep.mubr.f32.mxu0 0.0
        %1271 = vmatmul.mubr.f32.gmra.mxu0 %v934
        %v1272 = vpop.f32.mrf.mxu0
        %v1273 = vadd.f32 0.0, %v1272
        %v1274 = vpop.f32.mrf.mxu0
        %1275 = vmatprep.mubr.f32.mxu0 0.0
        %1276 = vmatmul.mubr.f32.gmra.mxu0 %v936
        %v1277 = vpop.f32.mrf.mxu0
        %v1278 = vadd.f32 0.0, %v1277
        %v1279 = vpop.f32.mrf.mxu0
        %1280 = vmatprep.mubr.f32.mxu0 0.0
        %1281 = vmatmul.mubr.f32.gmra.mxu0 %v938
        %v1282 = vpop.f32.mrf.mxu0
        %v1283 = vadd.f32 0.0, %v1282
        %v1284 = vpop.f32.mrf.mxu0
        %1285 = vmatprep.mubr.f32.mxu0 0.0
        %1286 = vmatmul.mubr.f32.gmra.mxu0 %v940
        %v1287 = vpop.f32.mrf.mxu0
        %v1288 = vadd.f32 0.0, %v1287
        %v1289 = vpop.f32.mrf.mxu0
        %1290 = vmatprep.mubr.f32.mxu0 0.0
        %1291 = vmatmul.mubr.f32.gmra.mxu0 %v942
        %v1292 = vpop.f32.mrf.mxu0
        %v1293 = vadd.f32 0.0, %v1292
        %v1294 = vpop.f32.mrf.mxu0
        %1295 = vmatprep.mubr.f32.mxu0 0.0
        %1296 = vmatmul.mubr.f32.gmra.mxu0 %v944
        %v1297 = vpop.f32.mrf.mxu0
        %v1298 = vadd.f32 0.0, %v1297
        %v1299 = vpop.f32.mrf.mxu0
        %1300 = vmatprep.mubr.f32.mxu0 0.0
        %1301 = vmatmul.mubr.f32.gmra.mxu0 %v946
        %v1302 = vpop.f32.mrf.mxu0
        %v1303 = vadd.f32 0.0, %v1302
        %v1304 = vpop.f32.mrf.mxu0
        %1305 = vmatprep.mubr.f32.mxu0 0.0
        %1306 = vmatmul.mubr.f32.gmra.mxu0 %v948
        %v1307 = vpop.f32.mrf.mxu0
        %v1308 = vadd.f32 0.0, %v1307
        %v1309 = vpop.f32.mrf.mxu0
        %1310 = vmatprep.mubr.f32.mxu0 0.0
        %1311 = vmatmul.mubr.f32.gmra.mxu0 %v950
        %v1312 = vpop.f32.mrf.mxu0
        %v1313 = vadd.f32 0.0, %v1312
        %v1314 = vpop.f32.mrf.mxu0
        %1315 = vmatprep.mubr.f32.mxu0 0.0
        %1316 = vmatmul.mubr.f32.gmra.mxu0 %v952
        %v1317 = vpop.f32.mrf.mxu0
        %v1318 = vadd.f32 0.0, %v1317
        %v1319 = vpop.f32.mrf.mxu0
        %1320 = vmatprep.mubr.f32.mxu0 0.0
        %1321 = vmatmul.mubr.f32.gmra.mxu0 %v954
        %v1322 = vpop.f32.mrf.mxu0
        %v1323 = vadd.f32 0.0, %v1322
        %v1324 = vpop.f32.mrf.mxu0
        %1325 = vmatprep.mubr.f32.mxu0 0.0
        %1326 = vmatmul.mubr.f32.gmra.mxu0 %v956
        %v1327 = vpop.f32.mrf.mxu0
        %v1328 = vadd.f32 0.0, %v1327
        %v1329 = vpop.f32.mrf.mxu0
        %1330 = vmatprep.mubr.f32.mxu0 0.0
        %1331 = vmatmul.mubr.f32.gmra.mxu0 %v958
        %v1332 = vpop.f32.mrf.mxu0
        %v1333 = vadd.f32 0.0, %v1332
        %v1334 = vpop.f32.mrf.mxu0
        %1335 = vmatprep.mubr.f32.mxu0 0.0
        %1336 = vmatmul.mubr.f32.gmra.mxu0 %v960
        %v1337 = vpop.f32.mrf.mxu0
        %v1338 = vadd.f32 0.0, %v1337
        %v1339 = vpop.f32.mrf.mxu0
        %1340 = vmatprep.mubr.f32.mxu0 0.0
        %1341 = vmatmul.mubr.f32.gmra.mxu0 %v962
        %v1342 = vpop.f32.mrf.mxu0
        %v1343 = vadd.f32 0.0, %v1342
        %v1344 = vpop.f32.mrf.mxu0
        %1345 = vmatprep.mubr.f32.mxu0 0.0
        %1346 = vmatmul.mubr.f32.gmra.mxu0 %v964
        %v1347 = vpop.f32.mrf.mxu0
        %v1348 = vadd.f32 0.0, %v1347
        %v1349 = vpop.f32.mrf.mxu0
        %1350 = vmatprep.mubr.f32.mxu0 0.0
        %1351 = vmatmul.mubr.f32.gmra.mxu0 %v966
        %v1352 = vpop.f32.mrf.mxu0
        %v1353 = vadd.f32 0.0, %v1352
        %v1354 = vpop.f32.mrf.mxu0
        %1355 = vmatprep.mubr.f32.mxu0 0.0
        %1356 = vmatmul.mubr.f32.gmra.mxu0 %v968
        %v1357 = vpop.f32.mrf.mxu0
        %v1358 = vadd.f32 0.0, %v1357
        %v1359 = vpop.f32.mrf.mxu0
        %1360 = vmatprep.mubr.f32.mxu0 0.0
        %1361 = vmatmul.mubr.f32.gmra.mxu0 %v970
        %v1362 = vpop.f32.mrf.mxu0
        %v1363 = vadd.f32 0.0, %v1362
        %v1364 = vpop.f32.mrf.mxu0
        %1365 = vmatprep.mubr.f32.mxu0 0.0
        %1366 = vmatmul.mubr.f32.gmra.mxu0 %v972
        %v1367 = vpop.f32.mrf.mxu0
        %v1368 = vadd.f32 0.0, %v1367
        %v1369 = vpop.f32.mrf.mxu0
        %1370 = vmatprep.mubr.f32.mxu0 0.0
        %1371 = vmatmul.mubr.f32.gmra.mxu0 %v974
        %v1372 = vpop.f32.mrf.mxu0
        %v1373 = vadd.f32 0.0, %v1372
        %v1374 = vpop.f32.mrf.mxu0
        %1375 = vmatprep.mubr.f32.mxu0 0.0
        %1376 = vmatmul.mubr.f32.gmra.mxu0 %v976
        %v1377 = vpop.f32.mrf.mxu0
        %v1378 = vadd.f32 0.0, %v1377
        %v1379 = vpop.f32.mrf.mxu0
        %1380 = vmatprep.mubr.f32.mxu0 0.0
        %1381 = vmatmul.mubr.f32.gmra.mxu0 %v978
        %v1382 = vpop.f32.mrf.mxu0
        %v1383 = vadd.f32 0.0, %v1382
        %v1384 = vpop.f32.mrf.mxu0
        %1385 = vmatprep.mubr.f32.mxu0 0.0
        %1386 = vmatmul.mubr.f32.gmra.mxu0 %v980
        %v1387 = vpop.f32.mrf.mxu0
        %v1388 = vadd.f32 0.0, %v1387
        %v1389 = vpop.f32.mrf.mxu0
        %1390 = vmatprep.mubr.f32.mxu0 0.0
        %1391 = vmatmul.mubr.f32.gmra.mxu0 %v982
        %v1392 = vpop.f32.mrf.mxu0
        %v1393 = vadd.f32 0.0, %v1392
        %v1394 = vpop.f32.mrf.mxu0
        %1395 = vmatprep.mubr.f32.mxu0 0.0
        %1396 = vmatmul.mubr.f32.gmra.mxu0 %v984
        %v1397 = vpop.f32.mrf.mxu0
        %v1398 = vadd.f32 0.0, %v1397
        %v1399 = vpop.f32.mrf.mxu0
        %1400 = vmatprep.mubr.f32.mxu0 0.0
        %1401 = vmatmul.mubr.f32.gmra.mxu0 %v986
        %v1402 = vpop.f32.mrf.mxu0
        %v1403 = vadd.f32 0.0, %v1402
        %v1404 = vpop.f32.mrf.mxu0
        %1405 = vmatprep.mubr.f32.mxu0 0.0
        %1406 = vmatmul.mubr.f32.gmra.mxu0 %v988
        %v1407 = vpop.f32.mrf.mxu0
        %v1408 = vadd.f32 0.0, %v1407
        %v1409 = vpop.f32.mrf.mxu0
        %1410 = vmatprep.mubr.f32.mxu0 0.0
        %1411 = vmatmul.mubr.f32.gmra.mxu0 %v990
        %v1412 = vpop.f32.mrf.mxu0
        %v1413 = vadd.f32 0.0, %v1412
        %v1414 = vpop.f32.mrf.mxu0
        %1415 = vmatprep.mubr.f32.mxu0 0.0
        %1416 = vmatmul.mubr.f32.gmra.mxu0 %v992
        %v1417 = vpop.f32.mrf.mxu0
        %v1418 = vadd.f32 0.0, %v1417
        %v1419 = vpop.f32.mrf.mxu0
        %1420 = vmatprep.mubr.f32.mxu0 0.0
        %1421 = vmatmul.mubr.f32.gmra.mxu0 %v994
        %v1422 = vpop.f32.mrf.mxu0
        %v1423 = vadd.f32 0.0, %v1422
        %v1424 = vpop.f32.mrf.mxu0
        %1425 = vmatprep.mubr.f32.mxu0 0.0
        %1426 = vmatmul.mubr.f32.gmra.mxu0 %v996
        %v1427 = vpop.f32.mrf.mxu0
        %v1428 = vadd.f32 0.0, %v1427
        %v1429 = vpop.f32.mrf.mxu0
        %1430 = vmatprep.mubr.f32.mxu0 0.0
        %1431 = vmatmul.mubr.f32.gmra.mxu0 %v998
        %v1432 = vpop.f32.mrf.mxu0
        %v1433 = vadd.f32 0.0, %v1432
        %v1434 = vpop.f32.mrf.mxu0
        %1435 = vmatprep.mubr.f32.mxu0 0.0
        %1436 = vmatmul.mubr.f32.gmra.mxu0 %v1000
        %v1437 = vpop.f32.mrf.mxu0
        %v1438 = vadd.f32 0.0, %v1437
        %v1439 = vpop.f32.mrf.mxu0
        %1440 = vmatprep.mubr.f32.mxu0 0.0
        %1441 = vmatmul.mubr.f32.gmra.mxu0 %v1002
        %v1442 = vpop.f32.mrf.mxu0
        %v1443 = vadd.f32 0.0, %v1442
        %v1444 = vpop.f32.mrf.mxu0
        %1445 = vmatprep.mubr.f32.mxu0 0.0
        %1446 = vmatmul.mubr.f32.gmra.mxu0 %v1004
        %v1447 = vpop.f32.mrf.mxu0
        %v1448 = vadd.f32 0.0, %v1447
        %v1449 = vpop.f32.mrf.mxu0
        %1450 = vmatprep.mubr.f32.mxu0 0.0
        %1451 = vmatmul.mubr.f32.gmra.mxu0 %v1006
        %v1452 = vpop.f32.mrf.mxu0
        %v1453 = vadd.f32 0.0, %v1452
        %v1454 = vpop.f32.mrf.mxu0
        %1455 = vmatprep.mubr.f32.mxu0 0.0
        %1456 = vmatmul.mubr.f32.gmra.mxu0 %v1008
        %v1457 = vpop.f32.mrf.mxu0
        %v1458 = vadd.f32 0.0, %v1457
        %v1459 = vpop.f32.mrf.mxu0
        %1460 = vmatprep.mubr.f32.mxu0 0.0
        %1461 = vmatmul.mubr.f32.gmra.mxu0 %v1010
        %v1462 = vpop.f32.mrf.mxu0
        %v1463 = vadd.f32 0.0, %v1462
        %v1464 = vpop.f32.mrf.mxu0
        %1465 = vmatprep.mubr.f32.mxu0 0.0
        %1466 = vmatmul.mubr.f32.gmra.mxu0 %v1012
        %v1467 = vpop.f32.mrf.mxu0
        %v1468 = vadd.f32 0.0, %v1467
        %v1469 = vpop.f32.mrf.mxu0
        %1470 = vmatprep.mubr.f32.mxu0 0.0
        %1471 = vmatmul.mubr.f32.gmra.mxu0 %v1014
        %v1472 = vpop.f32.mrf.mxu0
        %v1473 = vadd.f32 0.0, %v1472
        %v1474 = vpop.f32.mrf.mxu0
        %1475 = vmatprep.mubr.f32.mxu0 0.0
        %1476 = vmatmul.mubr.f32.gmra.mxu0 %v1016
        %v1477 = vpop.f32.mrf.mxu0
        %v1478 = vadd.f32 0.0, %v1477
        %v1479 = vpop.f32.mrf.mxu0
        %1480 = vmatprep.mubr.f32.mxu0 0.0
        %1481 = vmatmul.mubr.f32.gmra.mxu0 %v1018
        %v1482 = vpop.f32.mrf.mxu0
        %v1483 = vadd.f32 0.0, %v1482
        %v1484 = vpop.f32.mrf.mxu0
        %1485 = vmatprep.mubr.f32.mxu0 0.0
        %1486 = vmatmul.mubr.f32.gmra.mxu0 %v1020
        %v1487 = vpop.f32.mrf.mxu0
        %v1488 = vadd.f32 0.0, %v1487
        %v1489 = vpop.f32.mrf.mxu0
        %1490 = vmatprep.mubr.f32.mxu0 0.0
        %1491 = vmatmul.mubr.f32.gmra.mxu0 %v1022
        %v1492 = vpop.f32.mrf.mxu0
        %v1493 = vadd.f32 0.0, %v1492
        %v1494 = vpop.f32.mrf.mxu0
        %1495 = vmatprep.mubr.f32.mxu0 0.0
        %1496 = vmatmul.mubr.f32.gmra.mxu0 %v1024
        %v1497 = vpop.f32.mrf.mxu0
        %v1498 = vadd.f32 0.0, %v1497
        %v1499 = vpop.f32.mrf.mxu0
        %1500 = vmatprep.mubr.f32.mxu0 0.0
        %1501 = vmatmul.mubr.f32.gmra.mxu0 %v1026
        %v1502 = vpop.f32.mrf.mxu0
        %v1503 = vadd.f32 0.0, %v1502
        %v1504 = vpop.f32.mrf.mxu0
        %1505 = vmatprep.mubr.f32.mxu0 0.0
        %1506 = vmatmul.mubr.f32.gmra.mxu0 %v1028
        %v1507 = vpop.f32.mrf.mxu0
        %v1508 = vadd.f32 0.0, %v1507
        %v1509 = vpop.f32.mrf.mxu0
        %1510 = vmatprep.mubr.f32.mxu0 0.0
        %1511 = vmatmul.mubr.f32.gmra.mxu0 %v1030
        %v1512 = vpop.f32.mrf.mxu0
        %v1513 = vadd.f32 0.0, %v1512
        %v1514 = vpop.f32.mrf.mxu0
        %1515 = vmatprep.mubr.f32.mxu0 0.0
        %1516 = vmatmul.mubr.f32.gmra.mxu0 %v1032
        %v1517 = vpop.f32.mrf.mxu0
        %v1518 = vadd.f32 0.0, %v1517
        %v1519 = vpop.f32.mrf.mxu0
        %1520 = vmatprep.mubr.f32.mxu0 0.0
        %1521 = vmatmul.mubr.f32.gmra.mxu0 %v1034
        %v1522 = vpop.f32.mrf.mxu0
        %v1523 = vadd.f32 0.0, %v1522
        %v1524 = vpop.f32.mrf.mxu0
        %1525 = vmatprep.mubr.f32.mxu0 0.0
        %1526 = vmatmul.mubr.f32.gmra.mxu0 %v1036
        %v1527 = vpop.f32.mrf.mxu0
        %v1528 = vadd.f32 0.0, %v1527
        %v1529 = vpop.f32.mrf.mxu0
        %1530 = vmatprep.mubr.f32.mxu0 0.0
        %1531 = vmatmul.mubr.f32.gmra.mxu0 %v1038
        %v1532 = vpop.f32.mrf.mxu0
        %v1533 = vadd.f32 0.0, %v1532
        %v1534 = vpop.f32.mrf.mxu0
        %1535 = vmatprep.mubr.f32.mxu0 0.0
        %1536 = vmatmul.mubr.f32.gmra.mxu0 %v1040
        %v1537 = vpop.f32.mrf.mxu0
        %v1538 = vadd.f32 0.0, %v1537
        %v1539 = vpop.f32.mrf.mxu0
        %1540 = vmatprep.mubr.f32.mxu0 0.0
        %1541 = vmatmul.mubr.f32.gmra.mxu0 %v1042
        %v1542 = vpop.f32.mrf.mxu0
        %v1543 = vadd.f32 0.0, %v1542
        %v1544 = vpop.f32.mrf.mxu0
        %1545 = vmatprep.mubr.f32.mxu0 0.0
        %1546 = vmatmul.mubr.f32.gmra.mxu0 %v1044
        %v1547 = vpop.f32.mrf.mxu0
        %v1548 = vadd.f32 0.0, %v1547
        %v1549 = vpop.f32.mrf.mxu0
        %1550 = vmatprep.mubr.f32.mxu0 0.0
        %1551 = vmatmul.mubr.f32.gmra.mxu0 %v1046
        %v1552 = vpop.f32.mrf.mxu0
        %v1553 = vadd.f32 0.0, %v1552
        %v1554 = vpop.f32.mrf.mxu0
        %1555 = vmatprep.mubr.f32.mxu0 0.0
        %1556 = vmatmul.mubr.f32.gmra.mxu0 %v1048
        %v1557 = vpop.f32.mrf.mxu0
        %v1558 = vadd.f32 0.0, %v1557
        %v1559 = vpop.f32.mrf.mxu0
        %1560 = vmatprep.mubr.f32.mxu0 0.0
        %1561 = vmatmul.mubr.f32.gmra.mxu0 %v1050
        %v1562 = vpop.f32.mrf.mxu0
        %v1563 = vadd.f32 0.0, %v1562
        %v1564 = vpop.f32.mrf.mxu0
        %1565 = vmatprep.mubr.f32.mxu0 0.0
        %1566 = vmatmul.mubr.f32.gmra.mxu0 %v1052
        %v1567 = vpop.f32.mrf.mxu0
        %v1568 = vadd.f32 0.0, %v1567
        %v1569 = vpop.f32.mrf.mxu0
        %1570 = vmatprep.mubr.f32.mxu0 0.0
        %1571 = vmatmul.mubr.f32.gmra.mxu0 %v1054
        %v1572 = vpop.f32.mrf.mxu0
        %v1573 = vadd.f32 0.0, %v1572
        %v1574 = vpop.f32.mrf.mxu0
        %1575 = vmatprep.mubr.f32.mxu0 0.0
        %1576 = vmatmul.mubr.f32.gmra.mxu0 %v1056
        %v1577 = vpop.f32.mrf.mxu0
        %v1578 = vadd.f32 0.0, %v1577
        %v1579 = vpop.f32.mrf.mxu0
        %1580 = vmatprep.mubr.f32.mxu0 0.0
        %1581 = vmatmul.mubr.f32.gmra.mxu0 %v1058
        %v1582 = vpop.f32.mrf.mxu0
        %v1583 = vadd.f32 0.0, %v1582
        %v1584 = vpop.f32.mrf.mxu0
        %1585 = vmatprep.mubr.f32.mxu0 0.0
        %1586 = vmatmul.mubr.f32.gmra.mxu0 %v1060
        %v1587 = vpop.f32.mrf.mxu0
        %v1588 = vadd.f32 0.0, %v1587
        %v1589 = vpop.f32.mrf.mxu0
        %1590 = vmatprep.mubr.f32.mxu0 0.0
        %1591 = vmatmul.mubr.f32.gmra.mxu0 %v1062
        %v1592 = vpop.f32.mrf.mxu0
        %v1593 = vadd.f32 0.0, %v1592
        %v1594 = vpop.f32.mrf.mxu0
        %1595 = vmatprep.mubr.f32.mxu0 0.0
        %1596 = vmatmul.mubr.f32.gmra.mxu0 %v1064
        %v1597 = vpop.f32.mrf.mxu0
        %v1598 = vadd.f32 0.0, %v1597
        %v1599 = vpop.f32.mrf.mxu0
        %1600 = vmatprep.mubr.f32.mxu0 0.0
        %1601 = vmatmul.mubr.f32.gmra.mxu0 %v1066
        %v1602 = vpop.f32.mrf.mxu0
        %v1603 = vadd.f32 0.0, %v1602
        %v1604 = vpop.f32.mrf.mxu0
        %1605 = vmatprep.mubr.f32.mxu0 0.0
        %1606 = vmatmul.mubr.f32.gmra.mxu0 %v1068
        %v1607 = vpop.f32.mrf.mxu0
        %v1608 = vadd.f32 0.0, %v1607
        %v1609 = vpop.f32.mrf.mxu0
        %1610 = vmatprep.mubr.f32.mxu0 0.0
        %1611 = vmatmul.mubr.f32.gmra.mxu0 %v1070
        %v1612 = vpop.f32.mrf.mxu0
        %v1613 = vadd.f32 0.0, %v1612
        %v1614 = vpop.f32.mrf.mxu0
        %1615 = vmatprep.mubr.f32.mxu0 0.0
        %1616 = vmatmul.mubr.f32.gmra.mxu0 %v1072
        %v1617 = vpop.f32.mrf.mxu0
        %v1618 = vadd.f32 0.0, %v1617
        %v1619 = vpop.f32.mrf.mxu0
        %1620 = vmatprep.mubr.f32.mxu0 0.0
        %1621 = vmatmul.mubr.f32.gmra.mxu0 %v1074
        %v1622 = vpop.f32.mrf.mxu0
        %v1623 = vadd.f32 0.0, %v1622
        %v1624 = vpop.f32.mrf.mxu0
        %1625 = vmatprep.mubr.f32.mxu0 0.0
        %1626 = vmatmul.mubr.f32.gmra.mxu0 %v1076
        %v1627 = vpop.f32.mrf.mxu0
        %v1628 = vadd.f32 0.0, %v1627
        %v1629 = vpop.f32.mrf.mxu0
        %1630 = vmatprep.mubr.f32.mxu0 0.0
        %1631 = vmatmul.mubr.f32.gmra.mxu0 %v1078
        %v1632 = vpop.f32.mrf.mxu0
        %v1633 = vadd.f32 0.0, %v1632
        %v1634 = vpop.f32.mrf.mxu0
        %1635 = vmatprep.mubr.f32.mxu0 0.0
        %1636 = vmatmul.mubr.f32.gmra.mxu0 %v1080
        %v1637 = vpop.f32.mrf.mxu0
        %v1638 = vadd.f32 0.0, %v1637
        %v1639 = vpop.f32.mrf.mxu0
        %1640 = vmatprep.mubr.f32.mxu0 0.0
        %1641 = vmatmul.mubr.f32.gmra.mxu0 %v1082
        %v1642 = vpop.f32.mrf.mxu0
        %v1643 = vadd.f32 0.0, %v1642
        %v1644 = vpop.f32.mrf.mxu0
        %1645 = vmatprep.mubr.f32.mxu0 0.0
        %1646 = vmatmul.mubr.f32.gmra.mxu0 %v1084
        %v1647 = vpop.f32.mrf.mxu0
        %v1648 = vadd.f32 0.0, %v1647
        %v1649 = vpop.f32.mrf.mxu0
        %1650 = vmatprep.mubr.f32.mxu0 0.0
        %1651 = vmatmul.mubr.f32.gmra.mxu0 %v1086
        %v1652 = vpop.f32.mrf.mxu0
        %v1653 = vadd.f32 0.0, %v1652
        %v1654 = vpop.f32.mrf.mxu0
        %1655 = vmatprep.mubr.f32.mxu0 0.0
        %1656 = vmatmul.mubr.f32.gmra.mxu0 %v1088
        %v1657 = vpop.f32.mrf.mxu0
        %v1658 = vadd.f32 0.0, %v1657
        %v1659 = vpop.f32.mrf.mxu0
        %1660 = vmatprep.mubr.f32.mxu0 0.0
        %1661 = vmatmul.mubr.f32.gmra.mxu0 %v1090
        %v1662 = vpop.f32.mrf.mxu0
        %v1663 = vadd.f32 0.0, %v1662
        %v1664 = vpop.f32.mrf.mxu0
        %1665 = vmatprep.mubr.f32.mxu0 0.0
        %1666 = vmatmul.mubr.f32.gmra.mxu0 %v1092
        %v1667 = vpop.f32.mrf.mxu0
        %v1668 = vadd.f32 0.0, %v1667
        %v1669 = vpop.f32.mrf.mxu0
        %1670 = vmatprep.mubr.f32.mxu0 0.0
        %1671 = vmatmul.mubr.f32.gmra.mxu0 %v1094
        %v1672 = vpop.f32.mrf.mxu0
        %v1673 = vadd.f32 0.0, %v1672
        %v1674 = vpop.f32.mrf.mxu0
        %1675 = vmatprep.mubr.f32.mxu0 0.0
        %1676 = vmatmul.mubr.f32.gmra.mxu0 %v1096
        %v1677 = vpop.f32.mrf.mxu0
        %v1678 = vadd.f32 0.0, %v1677
        %v1679 = vpop.f32.mrf.mxu0
        %1680 = vmatprep.mubr.f32.mxu0 0.0
        %1681 = vmatmul.mubr.f32.gmra.mxu0 %v1098
        %v1682 = vpop.f32.mrf.mxu0
        %v1683 = vadd.f32 0.0, %v1682
        %v1684 = vpop.f32.mrf.mxu0
        %1685 = vmatprep.mubr.f32.mxu0 0.0
        %1686 = vmatmul.mubr.f32.gmra.mxu0 %v1100
        %v1687 = vpop.f32.mrf.mxu0
        %v1688 = vadd.f32 0.0, %v1687
        %v1689 = vpop.f32.mrf.mxu0
        %1690 = vmatprep.mubr.f32.mxu0 0.0
        %1691 = vmatmul.mubr.f32.gmra.mxu0 %v1102
        %v1692 = vpop.f32.mrf.mxu0
        %v1693 = vadd.f32 0.0, %v1692
        %v1694 = vpop.f32.mrf.mxu0
        %1695 = vmatprep.mubr.f32.mxu0 0.0
        %1696 = vmatmul.mubr.f32.gmra.mxu0 %v1104
        %v1697 = vpop.f32.mrf.mxu0
        %v1698 = vadd.f32 0.0, %v1697
        %v1699 = vpop.f32.mrf.mxu0
        %1700 = vmatprep.mubr.f32.mxu0 0.0
        %1701 = vmatmul.mubr.f32.gmra.mxu0 %v1106
        %v1702 = vpop.f32.mrf.mxu0
        %v1703 = vadd.f32 0.0, %v1702
        %v1704 = vpop.f32.mrf.mxu0
        %1705 = vmatprep.mubr.f32.mxu0 0.0
        %1706 = vmatmul.mubr.f32.gmra.mxu0 %v1108
        %v1707 = vpop.f32.mrf.mxu0
        %v1708 = vadd.f32 0.0, %v1707
        %v1709 = vpop.f32.mrf.mxu0
        %1710 = vmatprep.mubr.f32.mxu0 0.0
        %1711 = vmatmul.mubr.f32.gmra.mxu0 %v1110
        %v1712 = vpop.f32.mrf.mxu0
        %v1713 = vadd.f32 0.0, %v1712
        %v1714 = vpop.f32.mrf.mxu0
        %1715 = vmatprep.mubr.f32.mxu0 0.0
        %1716 = vmatmul.mubr.f32.gmra.mxu0 %v1112
        %v1717 = vpop.f32.mrf.mxu0
        %v1718 = vadd.f32 0.0, %v1717
        %v1719 = vpop.f32.mrf.mxu0
        %1720 = vmatprep.mubr.f32.mxu0 0.0
        %1721 = vmatmul.mubr.f32.gmra.mxu0 %v1114
        %v1722 = vpop.f32.mrf.mxu0
        %v1723 = vadd.f32 0.0, %v1722
        %v1724 = vpop.f32.mrf.mxu0
        %1725 = vmatprep.mubr.f32.mxu0 0.0
        %1726 = vmatmul.mubr.f32.gmra.mxu0 %v1116
        %v1727 = vpop.f32.mrf.mxu0
        %v1728 = vadd.f32 0.0, %v1727
        %v1729 = vpop.f32.mrf.mxu0
        %1730 = vmatprep.mubr.f32.mxu0 0.0
        %1731 = vmatmul.mubr.f32.gmra.mxu0 %v1118
        %v1732 = vpop.f32.mrf.mxu0
        %v1733 = vadd.f32 0.0, %v1732
        %v1734 = vpop.f32.mrf.mxu0
        %1735 = vmatprep.mubr.f32.mxu0 0.0
        %1736 = vmatmul.mubr.f32.gmra.mxu0 %v1120
        %v1737 = vpop.f32.mrf.mxu0
        %v1738 = vadd.f32 0.0, %v1737
        %v1739 = vpop.f32.mrf.mxu0
        %1740 = vmatprep.mubr.f32.mxu0 0.0
        %1741 = vmatmul.mubr.f32.gmra.mxu0 %v1122
        %v1742 = vpop.f32.mrf.mxu0
        %v1743 = vadd.f32 0.0, %v1742
        %v1744 = vpop.f32.mrf.mxu0
        %1745 = vmatprep.mubr.f32.mxu0 0.0
        %1746 = vmatmul.mubr.f32.gmra.mxu0 %v1124
        %v1747 = vpop.f32.mrf.mxu0
        %v1748 = vadd.f32 0.0, %v1747
        %v1749 = vpop.f32.mrf.mxu0
        %1750 = vmatprep.mubr.f32.mxu0 0.0
        %1751 = vmatmul.mubr.f32.gmra.mxu0 %v1126
        %v1752 = vpop.f32.mrf.mxu0
        %v1753 = vadd.f32 0.0, %v1752
        %v1754 = vpop.f32.mrf.mxu0
        %1755 = vmatprep.mubr.f32.mxu0 0.0
        %1756 = vmatmul.mubr.f32.gmra.mxu0 %v1128
        %v1757 = vpop.f32.mrf.mxu0
        %v1758 = vadd.f32 0.0, %v1757
        %v1759 = vpop.f32.mrf.mxu0
        %1760 = vmatprep.mubr.f32.mxu0 0.0
        %1761 = vmatmul.mubr.f32.gmra.mxu0 %v1130
        %v1762 = vpop.f32.mrf.mxu0
        %v1763 = vadd.f32 0.0, %v1762
        %v1764 = vpop.f32.mrf.mxu0
        %1765 = vmatprep.mubr.f32.mxu0 0.0
        %1766 = vmatmul.mubr.f32.gmra.mxu0 %v1132
        %v1767 = vpop.f32.mrf.mxu0
        %v1768 = vadd.f32 0.0, %v1767
        %v1769 = vpop.f32.mrf.mxu0
        %1770 = vmatprep.mubr.f32.mxu0 0.0
        %1771 = vmatmul.mubr.f32.gmra.mxu0 %v1134
        %v1772 = vpop.f32.mrf.mxu0
        %v1773 = vadd.f32 0.0, %v1772
        %v1774 = vpop.f32.mrf.mxu0
        %1775 = vmatprep.mubr.f32.mxu0 0.0
        %1776 = vmatmul.mubr.f32.gmra.mxu0 %v1136
        %v1777 = vpop.f32.mrf.mxu0
        %v1778 = vadd.f32 0.0, %v1777
        %v1779 = vpop.f32.mrf.mxu0
        %1780 = vmatprep.mubr.f32.mxu0 0.0
        %1781 = vmatmul.mubr.f32.gmra.mxu0 %v1138
        %v1782 = vpop.f32.mrf.mxu0
        %v1783 = vadd.f32 0.0, %v1782
        %v1784 = vpop.f32.mrf.mxu0
        %1785 = vmatprep.mubr.f32.mxu0 0.0
        %1786 = vmatmul.mubr.f32.gmra.mxu0 %v1140
        %v1787 = vpop.f32.mrf.mxu0
        %v1788 = vadd.f32 0.0, %v1787
        %v1789 = vpop.f32.mrf.mxu0
        %1790 = vmatprep.mubr.f32.mxu0 0.0
        %1791 = vmatmul.mubr.f32.gmra.mxu0 %v1142
        %v1792 = vpop.f32.mrf.mxu0
        %v1793 = vadd.f32 0.0, %v1792
        %v1794 = vpop.f32.mrf.mxu0
        %1795 = vmatprep.mubr.f32.mxu0 0.0
        %1796 = vmatmul.mubr.f32.gmra.mxu0 %v1144
        %v1797 = vpop.f32.mrf.mxu0
        %v1798 = vadd.f32 0.0, %v1797
        %v1799 = vpop.f32.mrf.mxu0
        %1800 = vmatprep.mubr.f32.mxu0 0.0
        %1801 = vmatmul.mubr.f32.gmra.mxu0 %v1146
        %v1802 = vpop.f32.mrf.mxu0
        %v1803 = vadd.f32 0.0, %v1802
        %v1804 = vpop.f32.mrf.mxu0
        %1805 = vmatprep.mubr.f32.mxu0 0.0
        %1806 = vmatmul.mubr.f32.gmra.mxu0 %v1148
        %v1807 = vpop.f32.mrf.mxu0
        %v1808 = vadd.f32 0.0, %v1807
        %v1809 = vpop.f32.mrf.mxu0
        %1810 = vmatprep.mubr.f32.mxu0 0.0
        %1811 = vmatmul.mubr.f32.gmra.mxu0 %v1150
        %v1812 = vpop.f32.mrf.mxu0
        %v1813 = vadd.f32 0.0, %v1812
        %v1814 = vpop.f32.mrf.mxu0
        %1815 = vmatprep.mubr.f32.mxu0 0.0
        %1816 = vmatmul.mubr.f32.gmra.mxu0 %v1152
        %v1817 = vpop.f32.mrf.mxu0
        %v1818 = vadd.f32 0.0, %v1817
        %v1819 = vpop.f32.mrf.mxu0
        %1820 = vmatprep.mubr.f32.mxu0 0.0
        %1821 = vmatmul.mubr.f32.gmra.mxu0 %v1154
        %v1822 = vpop.f32.mrf.mxu0
        %v1823 = vadd.f32 0.0, %v1822
        %v1824 = vpop.f32.mrf.mxu0
        %1825 = vmatprep.mubr.f32.mxu0 0.0
        %1826 = vmatmul.mubr.f32.gmra.mxu0 %v1156
        %v1827 = vpop.f32.mrf.mxu0
        %v1828 = vadd.f32 0.0, %v1827
        %v1829 = vpop.f32.mrf.mxu0
        %1830 = vmatprep.mubr.f32.mxu0 0.0
        %1831 = vmatmul.mubr.f32.gmra.mxu0 %v1158
        %v1832 = vpop.f32.mrf.mxu0
        %v1833 = vadd.f32 0.0, %v1832
        %v1834 = vpop.f32.mrf.mxu0
        %1835 = vmatprep.mubr.f32.mxu0 0.0
        %1836 = vmatmul.mubr.f32.gmra.mxu0 %v1160
        %v1837 = vpop.f32.mrf.mxu0
        %v1838 = vadd.f32 0.0, %v1837
        %v1839 = vpop.f32.mrf.mxu0
        %1840 = vmatprep.mubr.f32.mxu0 0.0
        %1841 = vmatmul.mubr.f32.gmra.mxu0 %v1162
        %v1842 = vpop.f32.mrf.mxu0
        %v1843 = vadd.f32 0.0, %v1842
        %v1844 = vpop.f32.mrf.mxu0
        %1845 = vmatprep.mubr.f32.mxu0 0.0
        %1846 = vmatmul.mubr.f32.gmra.mxu0 %v1164
        %v1847 = vpop.f32.mrf.mxu0
        %v1848 = vadd.f32 0.0, %v1847
        %v1849 = vpop.f32.mrf.mxu0
        %1850 = vmatprep.mubr.f32.mxu0 0.0
        %1851 = vmatmul.mubr.f32.gmra.mxu0 %v1166
        %v1852 = vpop.f32.mrf.mxu0
        %v1853 = vadd.f32 0.0, %v1852
        %v1854 = vpop.f32.mrf.mxu0
        %1855 = vmatprep.mubr.f32.mxu0 0.0
        %1856 = vmatmul.mubr.f32.gmra.mxu0 %v1168
        %v1857 = vpop.f32.mrf.mxu0
        %v1858 = vadd.f32 0.0, %v1857
        %v1859 = vpop.f32.mrf.mxu0
        %1860 = vmatprep.mubr.f32.mxu0 0.0
        %1861 = vmatmul.mubr.f32.gmra.mxu0 %v1170
        %v1862 = vpop.f32.mrf.mxu0
        %v1863 = vadd.f32 0.0, %v1862
        %v1864 = vpop.f32.mrf.mxu0
        %1865 = vmatprep.mubr.f32.mxu0 0.0
        %1866 = vmatmul.mubr.f32.gmra.mxu0 %v1172
        %v1867 = vpop.f32.mrf.mxu0
        %v1868 = vadd.f32 0.0, %v1867
        %v1869 = vpop.f32.mrf.mxu0
        %1870 = vmatprep.mubr.f32.mxu0 0.0
        %1871 = vmatmul.mubr.f32.gmra.mxu0 %v1174
        %v1872 = vpop.f32.mrf.mxu0
        %v1873 = vadd.f32 0.0, %v1872
        %v1874 = vpop.f32.mrf.mxu0
        %1875 = vmatprep.mubr.f32.mxu0 0.0
        %1876 = vmatmul.mubr.f32.gmra.mxu0 %v1176
        %v1877 = vpop.f32.mrf.mxu0
        %v1878 = vadd.f32 0.0, %v1877
        %v1879 = vpop.f32.mrf.mxu0
        %1880 = vmatprep.mubr.f32.mxu0 0.0
        %1881 = vmatmul.mubr.f32.gmra.mxu0 %v1178
        %v1882 = vpop.f32.mrf.mxu0
        %v1883 = vadd.f32 0.0, %v1882
        %v1884 = vpop.f32.mrf.mxu0
        %1885 = vmatprep.mubr.f32.mxu0 0.0
        %1886 = vmatmul.mubr.f32.gmra.mxu0 %v1180
        %v1887 = vpop.f32.mrf.mxu0
        %v1888 = vadd.f32 0.0, %v1887
        %v1889 = vpop.f32.mrf.mxu0
        %1890 = vdwg.mxu0
        %v1891 = vsel %vm925, %v303, 0
        %v1893 = vsel %vm925, %v304, 0
        %v1895 = vsel %vm925, %v305, 0
        %v1897 = vsel %vm925, %v306, 0
        %v1899 = vsel %vm925, %v308, 0
        %v1901 = vsel %vm925, %v309, 0
        %v1903 = vsel %vm925, %v310, 0
        %v1905 = vsel %vm925, %v311, 0
        %v1907 = vsel %vm925, %v313, 0
        %v1909 = vsel %vm925, %v314, 0
        %v1911 = vsel %vm925, %v315, 0
        %v1913 = vsel %vm925, %v316, 0
        %v1915 = vsel %vm925, %v318, 0
        %v1917 = vsel %vm925, %v319, 0
        %v1919 = vsel %vm925, %v320, 0
        %v1921 = vsel %vm925, %v321, 0
        %v1923 = vsel %vm925, %v323, 0
        %v1925 = vsel %vm925, %v324, 0
        %v1927 = vsel %vm925, %v325, 0
        %v1929 = vsel %vm925, %v326, 0
        %v1931 = vsel %vm925, %v328, 0
        %v1933 = vsel %vm925, %v329, 0
        %v1935 = vsel %vm925, %v330, 0
        %v1937 = vsel %vm925, %v331, 0
        %v1939 = vsel %vm925, %v333, 0
        %v1941 = vsel %vm925, %v334, 0
        %v1943 = vsel %vm925, %v335, 0
        %v1945 = vsel %vm925, %v336, 0
        %v1947 = vsel %vm925, %v338, 0
        %v1949 = vsel %vm925, %v339, 0
        %v1951 = vsel %vm925, %v340, 0
        %v1953 = vsel %vm925, %v341, 0
        %v1955 = vsel %vm925, %v343, 0
        %v1957 = vsel %vm925, %v344, 0
        %v1959 = vsel %vm925, %v345, 0
        %v1961 = vsel %vm925, %v346, 0
        %v1963 = vsel %vm925, %v348, 0
        %v1965 = vsel %vm925, %v349, 0
        %v1967 = vsel %vm925, %v350, 0
        %v1969 = vsel %vm925, %v351, 0
        %v1971 = vsel %vm925, %v353, 0
        %v1973 = vsel %vm925, %v354, 0
        %v1975 = vsel %vm925, %v355, 0
        %v1977 = vsel %vm925, %v356, 0
        %v1979 = vsel %vm925, %v358, 0
        %v1981 = vsel %vm925, %v359, 0
        %v1983 = vsel %vm925, %v360, 0
        %v1985 = vsel %vm925, %v361, 0
        %v1987 = vsel %vm925, %v363, 0
        %v1989 = vsel %vm925, %v364, 0
        %v1991 = vsel %vm925, %v365, 0
        %v1993 = vsel %vm925, %v366, 0
        %v1995 = vsel %vm925, %v368, 0
        %v1997 = vsel %vm925, %v369, 0
        %v1999 = vsel %vm925, %v370, 0
        %v2001 = vsel %vm925, %v371, 0
        %v2003 = vsel %vm925, %v373, 0
        %v2005 = vsel %vm925, %v374, 0
        %v2007 = vsel %vm925, %v375, 0
        %v2009 = vsel %vm925, %v376, 0
        %v2011 = vsel %vm925, %v378, 0
        %v2013 = vsel %vm925, %v379, 0
        %v2015 = vsel %vm925, %v380, 0
        %v2017 = vsel %vm925, %v381, 0
        %v2019 = vsel %vm925, %v383, 0
        %v2021 = vsel %vm925, %v384, 0
        %v2023 = vsel %vm925, %v385, 0
        %v2025 = vsel %vm925, %v386, 0
        %v2027 = vsel %vm925, %v388, 0
        %v2029 = vsel %vm925, %v389, 0
        %v2031 = vsel %vm925, %v390, 0
        %v2033 = vsel %vm925, %v391, 0
        %v2035 = vsel %vm925, %v393, 0
        %v2037 = vsel %vm925, %v394, 0
        %v2039 = vsel %vm925, %v395, 0
        %v2041 = vsel %vm925, %v396, 0
        %v2043 = vsel %vm925, %v398, 0
        %v2045 = vsel %vm925, %v399, 0
        %v2047 = vsel %vm925, %v400, 0
        %v2049 = vsel %vm925, %v401, 0
        %v2051 = vsel %vm925, %v403, 0
        %v2053 = vsel %vm925, %v404, 0
        %v2055 = vsel %vm925, %v405, 0
        %v2057 = vsel %vm925, %v406, 0
        %v2059 = vsel %vm925, %v408, 0
        %v2061 = vsel %vm925, %v409, 0
        %v2063 = vsel %vm925, %v410, 0
        %v2065 = vsel %vm925, %v411, 0
        %v2067 = vsel %vm925, %v413, 0
        %v2069 = vsel %vm925, %v414, 0
        %v2071 = vsel %vm925, %v415, 0
        %v2073 = vsel %vm925, %v416, 0
        %v2075 = vsel %vm925, %v418, 0
        %v2077 = vsel %vm925, %v419, 0
        %v2079 = vsel %vm925, %v420, 0
        %v2081 = vsel %vm925, %v421, 0
        %v2083 = vsel %vm925, %v423, 0
        %v2085 = vsel %vm925, %v424, 0
        %v2087 = vsel %vm925, %v425, 0
        %v2089 = vsel %vm925, %v426, 0
        %v2091 = vsel %vm925, %v428, 0
        %v2093 = vsel %vm925, %v429, 0
        %v2095 = vsel %vm925, %v430, 0
        %v2097 = vsel %vm925, %v431, 0
        %v2099 = vsel %vm925, %v433, 0
        %v2101 = vsel %vm925, %v434, 0
        %v2103 = vsel %vm925, %v435, 0
        %v2105 = vsel %vm925, %v436, 0
        %v2107 = vsel %vm925, %v438, 0
        %v2109 = vsel %vm925, %v439, 0
        %v2111 = vsel %vm925, %v440, 0
        %v2113 = vsel %vm925, %v441, 0
        %v2115 = vsel %vm925, %v443, 0
        %v2117 = vsel %vm925, %v444, 0
        %v2119 = vsel %vm925, %v445, 0
        %v2121 = vsel %vm925, %v446, 0
        %v2123 = vsel %vm925, %v448, 0
        %v2125 = vsel %vm925, %v449, 0
        %v2127 = vsel %vm925, %v450, 0
        %v2129 = vsel %vm925, %v451, 0
        %v2131 = vsel %vm925, %v453, 0
        %v2133 = vsel %vm925, %v454, 0
        %v2135 = vsel %vm925, %v455, 0
        %v2137 = vsel %vm925, %v456, 0
        %v2139 = vsel %vm925, %v458, 0
        %v2141 = vsel %vm925, %v459, 0
        %v2143 = vsel %vm925, %v460, 0
        %v2145 = vsel %vm925, %v461, 0
        %v2148 = vsel %vm1182, %v473, 0
        %2150 = vmatprep.subr.mxu0 0.0
        %2151 = vmatpush1.msra.mxu0 0.0
        %2152 = vmatprep.subr.mxu0 0.0
        %2153 = vmatpush1.msra.mxu0 0.0
        %2154 = vmatprep.subr.mxu0 0.0
        %2155 = vmatpush1.msra.mxu0 0.0
        %2156 = vmatprep.subr.mxu0 0.0
        %2157 = vmatpush1.msra.mxu0 0.0
        %2158 = vmatprep.subr.mxu0 0.0
        %2159 = vmatpush1.msra.mxu0 0.0
        %2160 = vmatprep.subr.mxu0 0.0
        %2161 = vmatpush1.msra.mxu0 0.0
        %2162 = vmatprep.subr.mxu0 0.0
        %2163 = vmatpush1.msra.mxu0 0.0
        %2164 = vmatprep.subr.mxu0 0.0
        %2165 = vmatpush1.msra.mxu0 0.0
        %2166 = vmatprep.subr.mxu0 0.0
        %2167 = vmatpush1.msra.mxu0 0.0
        %2168 = vmatprep.subr.mxu0 0.0
        %2169 = vmatpush1.msra.mxu0 0.0
        %2170 = vmatprep.subr.mxu0 0.0
        %2171 = vmatpush1.msra.mxu0 0.0
        %2172 = vmatprep.subr.mxu0 0.0
        %2173 = vmatpush1.msra.mxu0 0.0
        %2174 = vmatprep.subr.mxu0 0.0
        %2175 = vmatpush1.msra.mxu0 0.0
        %2176 = vmatprep.subr.mxu0 0.0
        %2177 = vmatpush1.msra.mxu0 0.0
        %2178 = vmatprep.subr.mxu0 0.0
        %2179 = vmatpush1.msra.mxu0 0.0
        %2180 = vmatprep.subr.mxu0 0.0
        %2181 = vmatpush1.msra.mxu0 %v2148
        %2182 = vmatprep.subr.mxu0 0.0
        %2183 = vmatpush2.msra.mxu0 0.0
        %2184 = vmatprep.subr.mxu0 0.0
        %2185 = vmatpush2.msra.mxu0 0.0
        %2186 = vmatprep.subr.mxu0 0.0
        %2187 = vmatpush2.msra.mxu0 0.0
        %2188 = vmatprep.subr.mxu0 0.0
        %2189 = vmatpush2.msra.mxu0 0.0
        %2190 = vmatprep.subr.mxu0 0.0
        %2191 = vmatpush2.msra.mxu0 0.0
        %2192 = vmatprep.subr.mxu0 0.0
        %2193 = vmatpush2.msra.mxu0 0.0
        %2194 = vmatprep.subr.mxu0 0.0
        %2195 = vmatpush2.msra.mxu0 0.0
        %2196 = vmatprep.subr.mxu0 0.0
        %2197 = vmatpush2.msra.mxu0 0.0
        %2198 = vmatprep.subr.mxu0 0.0
        %2199 = vmatpush2.msra.mxu0 0.0
        %2200 = vmatprep.subr.mxu0 0.0
        %2201 = vmatpush2.msra.mxu0 0.0
        %2202 = vmatprep.subr.mxu0 0.0
        %2203 = vmatpush2.msra.mxu0 0.0
        %2204 = vmatprep.subr.mxu0 0.0
        %2205 = vmatpush2.msra.mxu0 0.0
        %2206 = vmatprep.subr.mxu0 0.0
        %2207 = vmatpush2.msra.mxu0 0.0
        %2208 = vmatprep.subr.mxu0 0.0
        %2209 = vmatpush2.msra.mxu0 0.0
        %2210 = vmatprep.subr.mxu0 0.0
        %2211 = vmatpush2.msra.mxu0 0.0
        %2212 = vmatprep.subr.mxu0 0.0
        %2213 = vmatpush2.msra.mxu0 0.0
        %2214 = vmatprep.mubr.f32.mxu0 0.0
        %2215 = vmatmul.mubr.f32.gmra.mxu0 %v1891
        %v2216 = vpop.f32.mrf.mxu0
        %v2217 = vadd.f32 %v1253, %v2216
        %v2218 = vpop.f32.mrf.mxu0
        %2219 = vmatprep.mubr.f32.mxu0 0.0
        %2220 = vmatmul.mubr.f32.gmra.mxu0 %v1893
        %v2221 = vpop.f32.mrf.mxu0
        %v2222 = vadd.f32 %v1258, %v2221
        %v2223 = vpop.f32.mrf.mxu0
        %2224 = vmatprep.mubr.f32.mxu0 0.0
        %2225 = vmatmul.mubr.f32.gmra.mxu0 %v1895
        %v2226 = vpop.f32.mrf.mxu0
        %v2227 = vadd.f32 %v1263, %v2226
        %v2228 = vpop.f32.mrf.mxu0
        %2229 = vmatprep.mubr.f32.mxu0 0.0
        %2230 = vmatmul.mubr.f32.gmra.mxu0 %v1897
        %v2231 = vpop.f32.mrf.mxu0
        %v2232 = vadd.f32 %v1268, %v2231
        %v2233 = vpop.f32.mrf.mxu0
        %2234 = vmatprep.mubr.f32.mxu0 0.0
        %2235 = vmatmul.mubr.f32.gmra.mxu0 %v1899
        %v2236 = vpop.f32.mrf.mxu0
        %v2237 = vadd.f32 %v1273, %v2236
        %v2238 = vpop.f32.mrf.mxu0
        %2239 = vmatprep.mubr.f32.mxu0 0.0
        %2240 = vmatmul.mubr.f32.gmra.mxu0 %v1901
        %v2241 = vpop.f32.mrf.mxu0
        %v2242 = vadd.f32 %v1278, %v2241
        %v2243 = vpop.f32.mrf.mxu0
        %2244 = vmatprep.mubr.f32.mxu0 0.0
        %2245 = vmatmul.mubr.f32.gmra.mxu0 %v1903
        %v2246 = vpop.f32.mrf.mxu0
        %v2247 = vadd.f32 %v1283, %v2246
        %v2248 = vpop.f32.mrf.mxu0
        %2249 = vmatprep.mubr.f32.mxu0 0.0
        %2250 = vmatmul.mubr.f32.gmra.mxu0 %v1905
        %v2251 = vpop.f32.mrf.mxu0
        %v2252 = vadd.f32 %v1288, %v2251
        %v2253 = vpop.f32.mrf.mxu0
        %2254 = vmatprep.mubr.f32.mxu0 0.0
        %2255 = vmatmul.mubr.f32.gmra.mxu0 %v1907
        %v2256 = vpop.f32.mrf.mxu0
        %v2257 = vadd.f32 %v1293, %v2256
        %v2258 = vpop.f32.mrf.mxu0
        %2259 = vmatprep.mubr.f32.mxu0 0.0
        %2260 = vmatmul.mubr.f32.gmra.mxu0 %v1909
        %v2261 = vpop.f32.mrf.mxu0
        %v2262 = vadd.f32 %v1298, %v2261
        %v2263 = vpop.f32.mrf.mxu0
        %2264 = vmatprep.mubr.f32.mxu0 0.0
        %2265 = vmatmul.mubr.f32.gmra.mxu0 %v1911
        %v2266 = vpop.f32.mrf.mxu0
        %v2267 = vadd.f32 %v1303, %v2266
        %v2268 = vpop.f32.mrf.mxu0
        %2269 = vmatprep.mubr.f32.mxu0 0.0
        %2270 = vmatmul.mubr.f32.gmra.mxu0 %v1913
        %v2271 = vpop.f32.mrf.mxu0
        %v2272 = vadd.f32 %v1308, %v2271
        %v2273 = vpop.f32.mrf.mxu0
        %2274 = vmatprep.mubr.f32.mxu0 0.0
        %2275 = vmatmul.mubr.f32.gmra.mxu0 %v1915
        %v2276 = vpop.f32.mrf.mxu0
        %v2277 = vadd.f32 %v1313, %v2276
        %v2278 = vpop.f32.mrf.mxu0
        %2279 = vmatprep.mubr.f32.mxu0 0.0
        %2280 = vmatmul.mubr.f32.gmra.mxu0 %v1917
        %v2281 = vpop.f32.mrf.mxu0
        %v2282 = vadd.f32 %v1318, %v2281
        %v2283 = vpop.f32.mrf.mxu0
        %2284 = vmatprep.mubr.f32.mxu0 0.0
        %2285 = vmatmul.mubr.f32.gmra.mxu0 %v1919
        %v2286 = vpop.f32.mrf.mxu0
        %v2287 = vadd.f32 %v1323, %v2286
        %v2288 = vpop.f32.mrf.mxu0
        %2289 = vmatprep.mubr.f32.mxu0 0.0
        %2290 = vmatmul.mubr.f32.gmra.mxu0 %v1921
        %v2291 = vpop.f32.mrf.mxu0
        %v2292 = vadd.f32 %v1328, %v2291
        %v2293 = vpop.f32.mrf.mxu0
        %2294 = vmatprep.mubr.f32.mxu0 0.0
        %2295 = vmatmul.mubr.f32.gmra.mxu0 %v1923
        %v2296 = vpop.f32.mrf.mxu0
        %v2297 = vadd.f32 %v1333, %v2296
        %v2298 = vpop.f32.mrf.mxu0
        %2299 = vmatprep.mubr.f32.mxu0 0.0
        %2300 = vmatmul.mubr.f32.gmra.mxu0 %v1925
        %v2301 = vpop.f32.mrf.mxu0
        %v2302 = vadd.f32 %v1338, %v2301
        %v2303 = vpop.f32.mrf.mxu0
        %2304 = vmatprep.mubr.f32.mxu0 0.0
        %2305 = vmatmul.mubr.f32.gmra.mxu0 %v1927
        %v2306 = vpop.f32.mrf.mxu0
        %v2307 = vadd.f32 %v1343, %v2306
        %v2308 = vpop.f32.mrf.mxu0
        %2309 = vmatprep.mubr.f32.mxu0 0.0
        %2310 = vmatmul.mubr.f32.gmra.mxu0 %v1929
        %v2311 = vpop.f32.mrf.mxu0
        %v2312 = vadd.f32 %v1348, %v2311
        %v2313 = vpop.f32.mrf.mxu0
        %2314 = vmatprep.mubr.f32.mxu0 0.0
        %2315 = vmatmul.mubr.f32.gmra.mxu0 %v1931
        %v2316 = vpop.f32.mrf.mxu0
        %v2317 = vadd.f32 %v1353, %v2316
        %v2318 = vpop.f32.mrf.mxu0
        %2319 = vmatprep.mubr.f32.mxu0 0.0
        %2320 = vmatmul.mubr.f32.gmra.mxu0 %v1933
        %v2321 = vpop.f32.mrf.mxu0
        %v2322 = vadd.f32 %v1358, %v2321
        %v2323 = vpop.f32.mrf.mxu0
        %2324 = vmatprep.mubr.f32.mxu0 0.0
        %2325 = vmatmul.mubr.f32.gmra.mxu0 %v1935
        %v2326 = vpop.f32.mrf.mxu0
        %v2327 = vadd.f32 %v1363, %v2326
        %v2328 = vpop.f32.mrf.mxu0
        %2329 = vmatprep.mubr.f32.mxu0 0.0
        %2330 = vmatmul.mubr.f32.gmra.mxu0 %v1937
        %v2331 = vpop.f32.mrf.mxu0
        %v2332 = vadd.f32 %v1368, %v2331
        %v2333 = vpop.f32.mrf.mxu0
        %2334 = vmatprep.mubr.f32.mxu0 0.0
        %2335 = vmatmul.mubr.f32.gmra.mxu0 %v1939
        %v2336 = vpop.f32.mrf.mxu0
        %v2337 = vadd.f32 %v1373, %v2336
        %v2338 = vpop.f32.mrf.mxu0
        %2339 = vmatprep.mubr.f32.mxu0 0.0
        %2340 = vmatmul.mubr.f32.gmra.mxu0 %v1941
        %v2341 = vpop.f32.mrf.mxu0
        %v2342 = vadd.f32 %v1378, %v2341
        %v2343 = vpop.f32.mrf.mxu0
        %2344 = vmatprep.mubr.f32.mxu0 0.0
        %2345 = vmatmul.mubr.f32.gmra.mxu0 %v1943
        %v2346 = vpop.f32.mrf.mxu0
        %v2347 = vadd.f32 %v1383, %v2346
        %v2348 = vpop.f32.mrf.mxu0
        %2349 = vmatprep.mubr.f32.mxu0 0.0
        %2350 = vmatmul.mubr.f32.gmra.mxu0 %v1945
        %v2351 = vpop.f32.mrf.mxu0
        %v2352 = vadd.f32 %v1388, %v2351
        %v2353 = vpop.f32.mrf.mxu0
        %2354 = vmatprep.mubr.f32.mxu0 0.0
        %2355 = vmatmul.mubr.f32.gmra.mxu0 %v1947
        %v2356 = vpop.f32.mrf.mxu0
        %v2357 = vadd.f32 %v1393, %v2356
        %v2358 = vpop.f32.mrf.mxu0
        %2359 = vmatprep.mubr.f32.mxu0 0.0
        %2360 = vmatmul.mubr.f32.gmra.mxu0 %v1949
        %v2361 = vpop.f32.mrf.mxu0
        %v2362 = vadd.f32 %v1398, %v2361
        %v2363 = vpop.f32.mrf.mxu0
        %2364 = vmatprep.mubr.f32.mxu0 0.0
        %2365 = vmatmul.mubr.f32.gmra.mxu0 %v1951
        %v2366 = vpop.f32.mrf.mxu0
        %v2367 = vadd.f32 %v1403, %v2366
        %v2368 = vpop.f32.mrf.mxu0
        %2369 = vmatprep.mubr.f32.mxu0 0.0
        %2370 = vmatmul.mubr.f32.gmra.mxu0 %v1953
        %v2371 = vpop.f32.mrf.mxu0
        %v2372 = vadd.f32 %v1408, %v2371
        %v2373 = vpop.f32.mrf.mxu0
        %2374 = vmatprep.mubr.f32.mxu0 0.0
        %2375 = vmatmul.mubr.f32.gmra.mxu0 %v1955
        %v2376 = vpop.f32.mrf.mxu0
        %v2377 = vadd.f32 %v1413, %v2376
        %v2378 = vpop.f32.mrf.mxu0
        %2379 = vmatprep.mubr.f32.mxu0 0.0
        %2380 = vmatmul.mubr.f32.gmra.mxu0 %v1957
        %v2381 = vpop.f32.mrf.mxu0
        %v2382 = vadd.f32 %v1418, %v2381
        %v2383 = vpop.f32.mrf.mxu0
        %2384 = vmatprep.mubr.f32.mxu0 0.0
        %2385 = vmatmul.mubr.f32.gmra.mxu0 %v1959
        %v2386 = vpop.f32.mrf.mxu0
        %v2387 = vadd.f32 %v1423, %v2386
        %v2388 = vpop.f32.mrf.mxu0
        %2389 = vmatprep.mubr.f32.mxu0 0.0
        %2390 = vmatmul.mubr.f32.gmra.mxu0 %v1961
        %v2391 = vpop.f32.mrf.mxu0
        %v2392 = vadd.f32 %v1428, %v2391
        %v2393 = vpop.f32.mrf.mxu0
        %2394 = vmatprep.mubr.f32.mxu0 0.0
        %2395 = vmatmul.mubr.f32.gmra.mxu0 %v1963
        %v2396 = vpop.f32.mrf.mxu0
        %v2397 = vadd.f32 %v1433, %v2396
        %v2398 = vpop.f32.mrf.mxu0
        %2399 = vmatprep.mubr.f32.mxu0 0.0
        %2400 = vmatmul.mubr.f32.gmra.mxu0 %v1965
        %v2401 = vpop.f32.mrf.mxu0
        %v2402 = vadd.f32 %v1438, %v2401
        %v2403 = vpop.f32.mrf.mxu0
        %2404 = vmatprep.mubr.f32.mxu0 0.0
        %2405 = vmatmul.mubr.f32.gmra.mxu0 %v1967
        %v2406 = vpop.f32.mrf.mxu0
        %v2407 = vadd.f32 %v1443, %v2406
        %v2408 = vpop.f32.mrf.mxu0
        %2409 = vmatprep.mubr.f32.mxu0 0.0
        %2410 = vmatmul.mubr.f32.gmra.mxu0 %v1969
        %v2411 = vpop.f32.mrf.mxu0
        %v2412 = vadd.f32 %v1448, %v2411
        %v2413 = vpop.f32.mrf.mxu0
        %2414 = vmatprep.mubr.f32.mxu0 0.0
        %2415 = vmatmul.mubr.f32.gmra.mxu0 %v1971
        %v2416 = vpop.f32.mrf.mxu0
        %v2417 = vadd.f32 %v1453, %v2416
        %v2418 = vpop.f32.mrf.mxu0
        %2419 = vmatprep.mubr.f32.mxu0 0.0
        %2420 = vmatmul.mubr.f32.gmra.mxu0 %v1973
        %v2421 = vpop.f32.mrf.mxu0
        %v2422 = vadd.f32 %v1458, %v2421
        %v2423 = vpop.f32.mrf.mxu0
        %2424 = vmatprep.mubr.f32.mxu0 0.0
        %2425 = vmatmul.mubr.f32.gmra.mxu0 %v1975
        %v2426 = vpop.f32.mrf.mxu0
        %v2427 = vadd.f32 %v1463, %v2426
        %v2428 = vpop.f32.mrf.mxu0
        %2429 = vmatprep.mubr.f32.mxu0 0.0
        %2430 = vmatmul.mubr.f32.gmra.mxu0 %v1977
        %v2431 = vpop.f32.mrf.mxu0
        %v2432 = vadd.f32 %v1468, %v2431
        %v2433 = vpop.f32.mrf.mxu0
        %2434 = vmatprep.mubr.f32.mxu0 0.0
        %2435 = vmatmul.mubr.f32.gmra.mxu0 %v1979
        %v2436 = vpop.f32.mrf.mxu0
        %v2437 = vadd.f32 %v1473, %v2436
        %v2438 = vpop.f32.mrf.mxu0
        %2439 = vmatprep.mubr.f32.mxu0 0.0
        %2440 = vmatmul.mubr.f32.gmra.mxu0 %v1981
        %v2441 = vpop.f32.mrf.mxu0
        %v2442 = vadd.f32 %v1478, %v2441
        %v2443 = vpop.f32.mrf.mxu0
        %2444 = vmatprep.mubr.f32.mxu0 0.0
        %2445 = vmatmul.mubr.f32.gmra.mxu0 %v1983
        %v2446 = vpop.f32.mrf.mxu0
        %v2447 = vadd.f32 %v1483, %v2446
        %v2448 = vpop.f32.mrf.mxu0
        %2449 = vmatprep.mubr.f32.mxu0 0.0
        %2450 = vmatmul.mubr.f32.gmra.mxu0 %v1985
        %v2451 = vpop.f32.mrf.mxu0
        %v2452 = vadd.f32 %v1488, %v2451
        %v2453 = vpop.f32.mrf.mxu0
        %2454 = vmatprep.mubr.f32.mxu0 0.0
        %2455 = vmatmul.mubr.f32.gmra.mxu0 %v1987
        %v2456 = vpop.f32.mrf.mxu0
        %v2457 = vadd.f32 %v1493, %v2456
        %v2458 = vpop.f32.mrf.mxu0
        %2459 = vmatprep.mubr.f32.mxu0 0.0
        %2460 = vmatmul.mubr.f32.gmra.mxu0 %v1989
        %v2461 = vpop.f32.mrf.mxu0
        %v2462 = vadd.f32 %v1498, %v2461
        %v2463 = vpop.f32.mrf.mxu0
        %2464 = vmatprep.mubr.f32.mxu0 0.0
        %2465 = vmatmul.mubr.f32.gmra.mxu0 %v1991
        %v2466 = vpop.f32.mrf.mxu0
        %v2467 = vadd.f32 %v1503, %v2466
        %v2468 = vpop.f32.mrf.mxu0
        %2469 = vmatprep.mubr.f32.mxu0 0.0
        %2470 = vmatmul.mubr.f32.gmra.mxu0 %v1993
        %v2471 = vpop.f32.mrf.mxu0
        %v2472 = vadd.f32 %v1508, %v2471
        %v2473 = vpop.f32.mrf.mxu0
        %2474 = vmatprep.mubr.f32.mxu0 0.0
        %2475 = vmatmul.mubr.f32.gmra.mxu0 %v1995
        %v2476 = vpop.f32.mrf.mxu0
        %v2477 = vadd.f32 %v1513, %v2476
        %v2478 = vpop.f32.mrf.mxu0
        %2479 = vmatprep.mubr.f32.mxu0 0.0
        %2480 = vmatmul.mubr.f32.gmra.mxu0 %v1997
        %v2481 = vpop.f32.mrf.mxu0
        %v2482 = vadd.f32 %v1518, %v2481
        %v2483 = vpop.f32.mrf.mxu0
        %2484 = vmatprep.mubr.f32.mxu0 0.0
        %2485 = vmatmul.mubr.f32.gmra.mxu0 %v1999
        %v2486 = vpop.f32.mrf.mxu0
        %v2487 = vadd.f32 %v1523, %v2486
        %v2488 = vpop.f32.mrf.mxu0
        %2489 = vmatprep.mubr.f32.mxu0 0.0
        %2490 = vmatmul.mubr.f32.gmra.mxu0 %v2001
        %v2491 = vpop.f32.mrf.mxu0
        %v2492 = vadd.f32 %v1528, %v2491
        %v2493 = vpop.f32.mrf.mxu0
        %2494 = vmatprep.mubr.f32.mxu0 0.0
        %2495 = vmatmul.mubr.f32.gmra.mxu0 %v2003
        %v2496 = vpop.f32.mrf.mxu0
        %v2497 = vadd.f32 %v1533, %v2496
        %v2498 = vpop.f32.mrf.mxu0
        %2499 = vmatprep.mubr.f32.mxu0 0.0
        %2500 = vmatmul.mubr.f32.gmra.mxu0 %v2005
        %v2501 = vpop.f32.mrf.mxu0
        %v2502 = vadd.f32 %v1538, %v2501
        %v2503 = vpop.f32.mrf.mxu0
        %2504 = vmatprep.mubr.f32.mxu0 0.0
        %2505 = vmatmul.mubr.f32.gmra.mxu0 %v2007
        %v2506 = vpop.f32.mrf.mxu0
        %v2507 = vadd.f32 %v1543, %v2506
        %v2508 = vpop.f32.mrf.mxu0
        %2509 = vmatprep.mubr.f32.mxu0 0.0
        %2510 = vmatmul.mubr.f32.gmra.mxu0 %v2009
        %v2511 = vpop.f32.mrf.mxu0
        %v2512 = vadd.f32 %v1548, %v2511
        %v2513 = vpop.f32.mrf.mxu0
        %2514 = vmatprep.mubr.f32.mxu0 0.0
        %2515 = vmatmul.mubr.f32.gmra.mxu0 %v2011
        %v2516 = vpop.f32.mrf.mxu0
        %v2517 = vadd.f32 %v1553, %v2516
        %v2518 = vpop.f32.mrf.mxu0
        %2519 = vmatprep.mubr.f32.mxu0 0.0
        %2520 = vmatmul.mubr.f32.gmra.mxu0 %v2013
        %v2521 = vpop.f32.mrf.mxu0
        %v2522 = vadd.f32 %v1558, %v2521
        %v2523 = vpop.f32.mrf.mxu0
        %2524 = vmatprep.mubr.f32.mxu0 0.0
        %2525 = vmatmul.mubr.f32.gmra.mxu0 %v2015
        %v2526 = vpop.f32.mrf.mxu0
        %v2527 = vadd.f32 %v1563, %v2526
        %v2528 = vpop.f32.mrf.mxu0
        %2529 = vmatprep.mubr.f32.mxu0 0.0
        %2530 = vmatmul.mubr.f32.gmra.mxu0 %v2017
        %v2531 = vpop.f32.mrf.mxu0
        %v2532 = vadd.f32 %v1568, %v2531
        %v2533 = vpop.f32.mrf.mxu0
        %2534 = vmatprep.mubr.f32.mxu0 0.0
        %2535 = vmatmul.mubr.f32.gmra.mxu0 %v2019
        %v2536 = vpop.f32.mrf.mxu0
        %v2537 = vadd.f32 %v1573, %v2536
        %v2538 = vpop.f32.mrf.mxu0
        %2539 = vmatprep.mubr.f32.mxu0 0.0
        %2540 = vmatmul.mubr.f32.gmra.mxu0 %v2021
        %v2541 = vpop.f32.mrf.mxu0
        %v2542 = vadd.f32 %v1578, %v2541
        %v2543 = vpop.f32.mrf.mxu0
        %2544 = vmatprep.mubr.f32.mxu0 0.0
        %2545 = vmatmul.mubr.f32.gmra.mxu0 %v2023
        %v2546 = vpop.f32.mrf.mxu0
        %v2547 = vadd.f32 %v1583, %v2546
        %v2548 = vpop.f32.mrf.mxu0
        %2549 = vmatprep.mubr.f32.mxu0 0.0
        %2550 = vmatmul.mubr.f32.gmra.mxu0 %v2025
        %v2551 = vpop.f32.mrf.mxu0
        %v2552 = vadd.f32 %v1588, %v2551
        %v2553 = vpop.f32.mrf.mxu0
        %2554 = vmatprep.mubr.f32.mxu0 0.0
        %2555 = vmatmul.mubr.f32.gmra.mxu0 %v2027
        %v2556 = vpop.f32.mrf.mxu0
        %v2557 = vadd.f32 %v1593, %v2556
        %v2558 = vpop.f32.mrf.mxu0
        %2559 = vmatprep.mubr.f32.mxu0 0.0
        %2560 = vmatmul.mubr.f32.gmra.mxu0 %v2029
        %v2561 = vpop.f32.mrf.mxu0
        %v2562 = vadd.f32 %v1598, %v2561
        %v2563 = vpop.f32.mrf.mxu0
        %2564 = vmatprep.mubr.f32.mxu0 0.0
        %2565 = vmatmul.mubr.f32.gmra.mxu0 %v2031
        %v2566 = vpop.f32.mrf.mxu0
        %v2567 = vadd.f32 %v1603, %v2566
        %v2568 = vpop.f32.mrf.mxu0
        %2569 = vmatprep.mubr.f32.mxu0 0.0
        %2570 = vmatmul.mubr.f32.gmra.mxu0 %v2033
        %v2571 = vpop.f32.mrf.mxu0
        %v2572 = vadd.f32 %v1608, %v2571
        %v2573 = vpop.f32.mrf.mxu0
        %2574 = vmatprep.mubr.f32.mxu0 0.0
        %2575 = vmatmul.mubr.f32.gmra.mxu0 %v2035
        %v2576 = vpop.f32.mrf.mxu0
        %v2577 = vadd.f32 %v1613, %v2576
        %v2578 = vpop.f32.mrf.mxu0
        %2579 = vmatprep.mubr.f32.mxu0 0.0
        %2580 = vmatmul.mubr.f32.gmra.mxu0 %v2037
        %v2581 = vpop.f32.mrf.mxu0
        %v2582 = vadd.f32 %v1618, %v2581
        %v2583 = vpop.f32.mrf.mxu0
        %2584 = vmatprep.mubr.f32.mxu0 0.0
        %2585 = vmatmul.mubr.f32.gmra.mxu0 %v2039
        %v2586 = vpop.f32.mrf.mxu0
        %v2587 = vadd.f32 %v1623, %v2586
        %v2588 = vpop.f32.mrf.mxu0
        %2589 = vmatprep.mubr.f32.mxu0 0.0
        %2590 = vmatmul.mubr.f32.gmra.mxu0 %v2041
        %v2591 = vpop.f32.mrf.mxu0
        %v2592 = vadd.f32 %v1628, %v2591
        %v2593 = vpop.f32.mrf.mxu0
        %2594 = vmatprep.mubr.f32.mxu0 0.0
        %2595 = vmatmul.mubr.f32.gmra.mxu0 %v2043
        %v2596 = vpop.f32.mrf.mxu0
        %v2597 = vadd.f32 %v1633, %v2596
        %v2598 = vpop.f32.mrf.mxu0
        %2599 = vmatprep.mubr.f32.mxu0 0.0
        %2600 = vmatmul.mubr.f32.gmra.mxu0 %v2045
        %v2601 = vpop.f32.mrf.mxu0
        %v2602 = vadd.f32 %v1638, %v2601
        %v2603 = vpop.f32.mrf.mxu0
        %2604 = vmatprep.mubr.f32.mxu0 0.0
        %2605 = vmatmul.mubr.f32.gmra.mxu0 %v2047
        %v2606 = vpop.f32.mrf.mxu0
        %v2607 = vadd.f32 %v1643, %v2606
        %v2608 = vpop.f32.mrf.mxu0
        %2609 = vmatprep.mubr.f32.mxu0 0.0
        %2610 = vmatmul.mubr.f32.gmra.mxu0 %v2049
        %v2611 = vpop.f32.mrf.mxu0
        %v2612 = vadd.f32 %v1648, %v2611
        %v2613 = vpop.f32.mrf.mxu0
        %2614 = vmatprep.mubr.f32.mxu0 0.0
        %2615 = vmatmul.mubr.f32.gmra.mxu0 %v2051
        %v2616 = vpop.f32.mrf.mxu0
        %v2617 = vadd.f32 %v1653, %v2616
        %v2618 = vpop.f32.mrf.mxu0
        %2619 = vmatprep.mubr.f32.mxu0 0.0
        %2620 = vmatmul.mubr.f32.gmra.mxu0 %v2053
        %v2621 = vpop.f32.mrf.mxu0
        %v2622 = vadd.f32 %v1658, %v2621
        %v2623 = vpop.f32.mrf.mxu0
        %2624 = vmatprep.mubr.f32.mxu0 0.0
        %2625 = vmatmul.mubr.f32.gmra.mxu0 %v2055
        %v2626 = vpop.f32.mrf.mxu0
        %v2627 = vadd.f32 %v1663, %v2626
        %v2628 = vpop.f32.mrf.mxu0
        %2629 = vmatprep.mubr.f32.mxu0 0.0
        %2630 = vmatmul.mubr.f32.gmra.mxu0 %v2057
        %v2631 = vpop.f32.mrf.mxu0
        %v2632 = vadd.f32 %v1668, %v2631
        %v2633 = vpop.f32.mrf.mxu0
        %2634 = vmatprep.mubr.f32.mxu0 0.0
        %2635 = vmatmul.mubr.f32.gmra.mxu0 %v2059
        %v2636 = vpop.f32.mrf.mxu0
        %v2637 = vadd.f32 %v1673, %v2636
        %v2638 = vpop.f32.mrf.mxu0
        %2639 = vmatprep.mubr.f32.mxu0 0.0
        %2640 = vmatmul.mubr.f32.gmra.mxu0 %v2061
        %v2641 = vpop.f32.mrf.mxu0
        %v2642 = vadd.f32 %v1678, %v2641
        %v2643 = vpop.f32.mrf.mxu0
        %2644 = vmatprep.mubr.f32.mxu0 0.0
        %2645 = vmatmul.mubr.f32.gmra.mxu0 %v2063
        %v2646 = vpop.f32.mrf.mxu0
        %v2647 = vadd.f32 %v1683, %v2646
        %v2648 = vpop.f32.mrf.mxu0
        %2649 = vmatprep.mubr.f32.mxu0 0.0
        %2650 = vmatmul.mubr.f32.gmra.mxu0 %v2065
        %v2651 = vpop.f32.mrf.mxu0
        %v2652 = vadd.f32 %v1688, %v2651
        %v2653 = vpop.f32.mrf.mxu0
        %2654 = vmatprep.mubr.f32.mxu0 0.0
        %2655 = vmatmul.mubr.f32.gmra.mxu0 %v2067
        %v2656 = vpop.f32.mrf.mxu0
        %v2657 = vadd.f32 %v1693, %v2656
        %v2658 = vpop.f32.mrf.mxu0
        %2659 = vmatprep.mubr.f32.mxu0 0.0
        %2660 = vmatmul.mubr.f32.gmra.mxu0 %v2069
        %v2661 = vpop.f32.mrf.mxu0
        %v2662 = vadd.f32 %v1698, %v2661
        %v2663 = vpop.f32.mrf.mxu0
        %2664 = vmatprep.mubr.f32.mxu0 0.0
        %2665 = vmatmul.mubr.f32.gmra.mxu0 %v2071
        %v2666 = vpop.f32.mrf.mxu0
        %v2667 = vadd.f32 %v1703, %v2666
        %v2668 = vpop.f32.mrf.mxu0
        %2669 = vmatprep.mubr.f32.mxu0 0.0
        %2670 = vmatmul.mubr.f32.gmra.mxu0 %v2073
        %v2671 = vpop.f32.mrf.mxu0
        %v2672 = vadd.f32 %v1708, %v2671
        %v2673 = vpop.f32.mrf.mxu0
        %2674 = vmatprep.mubr.f32.mxu0 0.0
        %2675 = vmatmul.mubr.f32.gmra.mxu0 %v2075
        %v2676 = vpop.f32.mrf.mxu0
        %v2677 = vadd.f32 %v1713, %v2676
        %v2678 = vpop.f32.mrf.mxu0
        %2679 = vmatprep.mubr.f32.mxu0 0.0
        %2680 = vmatmul.mubr.f32.gmra.mxu0 %v2077
        %v2681 = vpop.f32.mrf.mxu0
        %v2682 = vadd.f32 %v1718, %v2681
        %v2683 = vpop.f32.mrf.mxu0
        %2684 = vmatprep.mubr.f32.mxu0 0.0
        %2685 = vmatmul.mubr.f32.gmra.mxu0 %v2079
        %v2686 = vpop.f32.mrf.mxu0
        %v2687 = vadd.f32 %v1723, %v2686
        %v2688 = vpop.f32.mrf.mxu0
        %2689 = vmatprep.mubr.f32.mxu0 0.0
        %2690 = vmatmul.mubr.f32.gmra.mxu0 %v2081
        %v2691 = vpop.f32.mrf.mxu0
        %v2692 = vadd.f32 %v1728, %v2691
        %v2693 = vpop.f32.mrf.mxu0
        %2694 = vmatprep.mubr.f32.mxu0 0.0
        %2695 = vmatmul.mubr.f32.gmra.mxu0 %v2083
        %v2696 = vpop.f32.mrf.mxu0
        %v2697 = vadd.f32 %v1733, %v2696
        %v2698 = vpop.f32.mrf.mxu0
        %2699 = vmatprep.mubr.f32.mxu0 0.0
        %2700 = vmatmul.mubr.f32.gmra.mxu0 %v2085
        %v2701 = vpop.f32.mrf.mxu0
        %v2702 = vadd.f32 %v1738, %v2701
        %v2703 = vpop.f32.mrf.mxu0
        %2704 = vmatprep.mubr.f32.mxu0 0.0
        %2705 = vmatmul.mubr.f32.gmra.mxu0 %v2087
        %v2706 = vpop.f32.mrf.mxu0
        %v2707 = vadd.f32 %v1743, %v2706
        %v2708 = vpop.f32.mrf.mxu0
        %2709 = vmatprep.mubr.f32.mxu0 0.0
        %2710 = vmatmul.mubr.f32.gmra.mxu0 %v2089
        %v2711 = vpop.f32.mrf.mxu0
        %v2712 = vadd.f32 %v1748, %v2711
        %v2713 = vpop.f32.mrf.mxu0
        %2714 = vmatprep.mubr.f32.mxu0 0.0
        %2715 = vmatmul.mubr.f32.gmra.mxu0 %v2091
        %v2716 = vpop.f32.mrf.mxu0
        %v2717 = vadd.f32 %v1753, %v2716
        %v2718 = vpop.f32.mrf.mxu0
        %2719 = vmatprep.mubr.f32.mxu0 0.0
        %2720 = vmatmul.mubr.f32.gmra.mxu0 %v2093
        %v2721 = vpop.f32.mrf.mxu0
        %v2722 = vadd.f32 %v1758, %v2721
        %v2723 = vpop.f32.mrf.mxu0
        %2724 = vmatprep.mubr.f32.mxu0 0.0
        %2725 = vmatmul.mubr.f32.gmra.mxu0 %v2095
        %v2726 = vpop.f32.mrf.mxu0
        %v2727 = vadd.f32 %v1763, %v2726
        %v2728 = vpop.f32.mrf.mxu0
        %2729 = vmatprep.mubr.f32.mxu0 0.0
        %2730 = vmatmul.mubr.f32.gmra.mxu0 %v2097
        %v2731 = vpop.f32.mrf.mxu0
        %v2732 = vadd.f32 %v1768, %v2731
        %v2733 = vpop.f32.mrf.mxu0
        %2734 = vmatprep.mubr.f32.mxu0 0.0
        %2735 = vmatmul.mubr.f32.gmra.mxu0 %v2099
        %v2736 = vpop.f32.mrf.mxu0
        %v2737 = vadd.f32 %v1773, %v2736
        %v2738 = vpop.f32.mrf.mxu0
        %2739 = vmatprep.mubr.f32.mxu0 0.0
        %2740 = vmatmul.mubr.f32.gmra.mxu0 %v2101
        %v2741 = vpop.f32.mrf.mxu0
        %v2742 = vadd.f32 %v1778, %v2741
        %v2743 = vpop.f32.mrf.mxu0
        %2744 = vmatprep.mubr.f32.mxu0 0.0
        %2745 = vmatmul.mubr.f32.gmra.mxu0 %v2103
        %v2746 = vpop.f32.mrf.mxu0
        %v2747 = vadd.f32 %v1783, %v2746
        %v2748 = vpop.f32.mrf.mxu0
        %2749 = vmatprep.mubr.f32.mxu0 0.0
        %2750 = vmatmul.mubr.f32.gmra.mxu0 %v2105
        %v2751 = vpop.f32.mrf.mxu0
        %v2752 = vadd.f32 %v1788, %v2751
        %v2753 = vpop.f32.mrf.mxu0
        %2754 = vmatprep.mubr.f32.mxu0 0.0
        %2755 = vmatmul.mubr.f32.gmra.mxu0 %v2107
        %v2756 = vpop.f32.mrf.mxu0
        %v2757 = vadd.f32 %v1793, %v2756
        %v2758 = vpop.f32.mrf.mxu0
        %2759 = vmatprep.mubr.f32.mxu0 0.0
        %2760 = vmatmul.mubr.f32.gmra.mxu0 %v2109
        %v2761 = vpop.f32.mrf.mxu0
        %v2762 = vadd.f32 %v1798, %v2761
        %v2763 = vpop.f32.mrf.mxu0
        %2764 = vmatprep.mubr.f32.mxu0 0.0
        %2765 = vmatmul.mubr.f32.gmra.mxu0 %v2111
        %v2766 = vpop.f32.mrf.mxu0
        %v2767 = vadd.f32 %v1803, %v2766
        %v2768 = vpop.f32.mrf.mxu0
        %2769 = vmatprep.mubr.f32.mxu0 0.0
        %2770 = vmatmul.mubr.f32.gmra.mxu0 %v2113
        %v2771 = vpop.f32.mrf.mxu0
        %v2772 = vadd.f32 %v1808, %v2771
        %v2773 = vpop.f32.mrf.mxu0
        %2774 = vmatprep.mubr.f32.mxu0 0.0
        %2775 = vmatmul.mubr.f32.gmra.mxu0 %v2115
        %v2776 = vpop.f32.mrf.mxu0
        %v2777 = vadd.f32 %v1813, %v2776
        %v2778 = vpop.f32.mrf.mxu0
        %2779 = vmatprep.mubr.f32.mxu0 0.0
        %2780 = vmatmul.mubr.f32.gmra.mxu0 %v2117
        %v2781 = vpop.f32.mrf.mxu0
        %v2782 = vadd.f32 %v1818, %v2781
        %v2783 = vpop.f32.mrf.mxu0
        %2784 = vmatprep.mubr.f32.mxu0 0.0
        %2785 = vmatmul.mubr.f32.gmra.mxu0 %v2119
        %v2786 = vpop.f32.mrf.mxu0
        %v2787 = vadd.f32 %v1823, %v2786
        %v2788 = vpop.f32.mrf.mxu0
        %2789 = vmatprep.mubr.f32.mxu0 0.0
        %2790 = vmatmul.mubr.f32.gmra.mxu0 %v2121
        %v2791 = vpop.f32.mrf.mxu0
        %v2792 = vadd.f32 %v1828, %v2791
        %v2793 = vpop.f32.mrf.mxu0
        %2794 = vmatprep.mubr.f32.mxu0 0.0
        %2795 = vmatmul.mubr.f32.gmra.mxu0 %v2123
        %v2796 = vpop.f32.mrf.mxu0
        %v2797 = vadd.f32 %v1833, %v2796
        %v2798 = vpop.f32.mrf.mxu0
        %2799 = vmatprep.mubr.f32.mxu0 0.0
        %2800 = vmatmul.mubr.f32.gmra.mxu0 %v2125
        %v2801 = vpop.f32.mrf.mxu0
        %v2802 = vadd.f32 %v1838, %v2801
        %v2803 = vpop.f32.mrf.mxu0
        %2804 = vmatprep.mubr.f32.mxu0 0.0
        %2805 = vmatmul.mubr.f32.gmra.mxu0 %v2127
        %v2806 = vpop.f32.mrf.mxu0
        %v2807 = vadd.f32 %v1843, %v2806
        %v2808 = vpop.f32.mrf.mxu0
        %2809 = vmatprep.mubr.f32.mxu0 0.0
        %2810 = vmatmul.mubr.f32.gmra.mxu0 %v2129
        %v2811 = vpop.f32.mrf.mxu0
        %v2812 = vadd.f32 %v1848, %v2811
        %v2813 = vpop.f32.mrf.mxu0
        %2814 = vmatprep.mubr.f32.mxu0 0.0
        %2815 = vmatmul.mubr.f32.gmra.mxu0 %v2131
        %v2816 = vpop.f32.mrf.mxu0
        %v2817 = vadd.f32 %v1853, %v2816
        %v2818 = vpop.f32.mrf.mxu0
        %2819 = vmatprep.mubr.f32.mxu0 0.0
        %2820 = vmatmul.mubr.f32.gmra.mxu0 %v2133
        %v2821 = vpop.f32.mrf.mxu0
        %v2822 = vadd.f32 %v1858, %v2821
        %v2823 = vpop.f32.mrf.mxu0
        %2824 = vmatprep.mubr.f32.mxu0 0.0
        %2825 = vmatmul.mubr.f32.gmra.mxu0 %v2135
        %v2826 = vpop.f32.mrf.mxu0
        %v2827 = vadd.f32 %v1863, %v2826
        %v2828 = vpop.f32.mrf.mxu0
        %2829 = vmatprep.mubr.f32.mxu0 0.0
        %2830 = vmatmul.mubr.f32.gmra.mxu0 %v2137
        %v2831 = vpop.f32.mrf.mxu0
        %v2832 = vadd.f32 %v1868, %v2831
        %v2833 = vpop.f32.mrf.mxu0
        %2834 = vmatprep.mubr.f32.mxu0 0.0
        %2835 = vmatmul.mubr.f32.gmra.mxu0 %v2139
        %v2836 = vpop.f32.mrf.mxu0
        %v2837 = vadd.f32 %v1873, %v2836
        %v2838 = vpop.f32.mrf.mxu0
        %2839 = vmatprep.mubr.f32.mxu0 0.0
        %2840 = vmatmul.mubr.f32.gmra.mxu0 %v2141
        %v2841 = vpop.f32.mrf.mxu0
        %v2842 = vadd.f32 %v1878, %v2841
        %v2843 = vpop.f32.mrf.mxu0
        %2844 = vmatprep.mubr.f32.mxu0 0.0
        %2845 = vmatmul.mubr.f32.gmra.mxu0 %v2143
        %v2846 = vpop.f32.mrf.mxu0
        %v2847 = vadd.f32 %v1883, %v2846
        %v2848 = vpop.f32.mrf.mxu0
        %2849 = vmatprep.mubr.f32.mxu0 0.0
        %2850 = vmatmul.mubr.f32.gmra.mxu0 %v2145
        %v2851 = vpop.f32.mrf.mxu0
        %v2852 = vadd.f32 %v1888, %v2851
        %v2853 = vpop.f32.mrf.mxu0
        %2854 = vdwg.mxu0
        %vm2855 = vcmask 1045504
        %v2856 = vrot.slane %v303, 2
        %v2857 = vrot.slane %v304, 2
        %v2858 = vsel %vm2855, %v2856, %v2857
        %v2859 = vrot.slane %v305, 2
        %v2860 = vsel %vm2855, %v2857, %v2859
        %v2861 = vrot.slane %v306, 2
        %v2862 = vsel %vm2855, %v2859, %v2861
        %v2863 = vrot.slane %v307, 2
        %v2864 = vsel %vm2855, %v2861, %v2863
        %v2865 = vrot.slane %v308, 2
        %v2866 = vrot.slane %v309, 2
        %v2867 = vsel %vm2855, %v2865, %v2866
        %v2868 = vrot.slane %v310, 2
        %v2869 = vsel %vm2855, %v2866, %v2868
        %v2870 = vrot.slane %v311, 2
        %v2871 = vsel %vm2855, %v2868, %v2870
        %v2872 = vrot.slane %v312, 2
        %v2873 = vsel %vm2855, %v2870, %v2872
        %v2874 = vrot.slane %v313, 2
        %v2875 = vrot.slane %v314, 2
        %v2876 = vsel %vm2855, %v2874, %v2875
        %v2877 = vrot.slane %v315, 2
        %v2878 = vsel %vm2855, %v2875, %v2877
        %v2879 = vrot.slane %v316, 2
        %v2880 = vsel %vm2855, %v2877, %v2879
        %v2881 = vrot.slane %v317, 2
        %v2882 = vsel %vm2855, %v2879, %v2881
        %v2883 = vrot.slane %v318, 2
        %v2884 = vrot.slane %v319, 2
        %v2885 = vsel %vm2855, %v2883, %v2884
        %v2886 = vrot.slane %v320, 2
        %v2887 = vsel %vm2855, %v2884, %v2886
        %v2888 = vrot.slane %v321, 2
        %v2889 = vsel %vm2855, %v2886, %v2888
        %v2890 = vrot.slane %v322, 2
        %v2891 = vsel %vm2855, %v2888, %v2890
        %v2892 = vrot.slane %v323, 2
        %v2893 = vrot.slane %v324, 2
        %v2894 = vsel %vm2855, %v2892, %v2893
        %v2895 = vrot.slane %v325, 2
        %v2896 = vsel %vm2855, %v2893, %v2895
        %v2897 = vrot.slane %v326, 2
        %v2898 = vsel %vm2855, %v2895, %v2897
        %v2899 = vrot.slane %v327, 2
        %v2900 = vsel %vm2855, %v2897, %v2899
        %v2901 = vrot.slane %v328, 2
        %v2902 = vrot.slane %v329, 2
        %v2903 = vsel %vm2855, %v2901, %v2902
        %v2904 = vrot.slane %v330, 2
        %v2905 = vsel %vm2855, %v2902, %v2904
        %v2906 = vrot.slane %v331, 2
        %v2907 = vsel %vm2855, %v2904, %v2906
        %v2908 = vrot.slane %v332, 2
        %v2909 = vsel %vm2855, %v2906, %v2908
        %v2910 = vrot.slane %v333, 2
        %v2911 = vrot.slane %v334, 2
        %v2912 = vsel %vm2855, %v2910, %v2911
        %v2913 = vrot.slane %v335, 2
        %v2914 = vsel %vm2855, %v2911, %v2913
        %v2915 = vrot.slane %v336, 2
        %v2916 = vsel %vm2855, %v2913, %v2915
        %v2917 = vrot.slane %v337, 2
        %v2918 = vsel %vm2855, %v2915, %v2917
        %v2919 = vrot.slane %v338, 2
        %v2920 = vrot.slane %v339, 2
        %v2921 = vsel %vm2855, %v2919, %v2920
        %v2922 = vrot.slane %v340, 2
        %v2923 = vsel %vm2855, %v2920, %v2922
        %v2924 = vrot.slane %v341, 2
        %v2925 = vsel %vm2855, %v2922, %v2924
        %v2926 = vrot.slane %v342, 2
        %v2927 = vsel %vm2855, %v2924, %v2926
        %v2928 = vrot.slane %v343, 2
        %v2929 = vrot.slane %v344, 2
        %v2930 = vsel %vm2855, %v2928, %v2929
        %v2931 = vrot.slane %v345, 2
        %v2932 = vsel %vm2855, %v2929, %v2931
        %v2933 = vrot.slane %v346, 2
        %v2934 = vsel %vm2855, %v2931, %v2933
        %v2935 = vrot.slane %v347, 2
        %v2936 = vsel %vm2855, %v2933, %v2935
        %v2937 = vrot.slane %v348, 2
        %v2938 = vrot.slane %v349, 2
        %v2939 = vsel %vm2855, %v2937, %v2938
        %v2940 = vrot.slane %v350, 2
        %v2941 = vsel %vm2855, %v2938, %v2940
        %v2942 = vrot.slane %v351, 2
        %v2943 = vsel %vm2855, %v2940, %v2942
        %v2944 = vrot.slane %v352, 2
        %v2945 = vsel %vm2855, %v2942, %v2944
        %v2946 = vrot.slane %v353, 2
        %v2947 = vrot.slane %v354, 2
        %v2948 = vsel %vm2855, %v2946, %v2947
        %v2949 = vrot.slane %v355, 2
        %v2950 = vsel %vm2855, %v2947, %v2949
        %v2951 = vrot.slane %v356, 2
        %v2952 = vsel %vm2855, %v2949, %v2951
        %v2953 = vrot.slane %v357, 2
        %v2954 = vsel %vm2855, %v2951, %v2953
        %v2955 = vrot.slane %v358, 2
        %v2956 = vrot.slane %v359, 2
        %v2957 = vsel %vm2855, %v2955, %v2956
        %v2958 = vrot.slane %v360, 2
        %v2959 = vsel %vm2855, %v2956, %v2958
        %v2960 = vrot.slane %v361, 2
        %v2961 = vsel %vm2855, %v2958, %v2960
        %v2962 = vrot.slane %v362, 2
        %v2963 = vsel %vm2855, %v2960, %v2962
        %v2964 = vrot.slane %v363, 2
        %v2965 = vrot.slane %v364, 2
        %v2966 = vsel %vm2855, %v2964, %v2965
        %v2967 = vrot.slane %v365, 2
        %v2968 = vsel %vm2855, %v2965, %v2967
        %v2969 = vrot.slane %v366, 2
        %v2970 = vsel %vm2855, %v2967, %v2969
        %v2971 = vrot.slane %v367, 2
        %v2972 = vsel %vm2855, %v2969, %v2971
        %v2973 = vrot.slane %v368, 2
        %v2974 = vrot.slane %v369, 2
        %v2975 = vsel %vm2855, %v2973, %v2974
        %v2976 = vrot.slane %v370, 2
        %v2977 = vsel %vm2855, %v2974, %v2976
        %v2978 = vrot.slane %v371, 2
        %v2979 = vsel %vm2855, %v2976, %v2978
        %v2980 = vrot.slane %v372, 2
        %v2981 = vsel %vm2855, %v2978, %v2980
        %v2982 = vrot.slane %v373, 2
        %v2983 = vrot.slane %v374, 2
        %v2984 = vsel %vm2855, %v2982, %v2983
        %v2985 = vrot.slane %v375, 2
        %v2986 = vsel %vm2855, %v2983, %v2985
        %v2987 = vrot.slane %v376, 2
        %v2988 = vsel %vm2855, %v2985, %v2987
        %v2989 = vrot.slane %v377, 2
        %v2990 = vsel %vm2855, %v2987, %v2989
        %v2991 = vrot.slane %v378, 2
        %v2992 = vrot.slane %v379, 2
        %v2993 = vsel %vm2855, %v2991, %v2992
        %v2994 = vrot.slane %v380, 2
        %v2995 = vsel %vm2855, %v2992, %v2994
        %v2996 = vrot.slane %v381, 2
        %v2997 = vsel %vm2855, %v2994, %v2996
        %v2998 = vrot.slane %v382, 2
        %v2999 = vsel %vm2855, %v2996, %v2998
        %v3000 = vrot.slane %v383, 2
        %v3001 = vrot.slane %v384, 2
        %v3002 = vsel %vm2855, %v3000, %v3001
        %v3003 = vrot.slane %v385, 2
        %v3004 = vsel %vm2855, %v3001, %v3003
        %v3005 = vrot.slane %v386, 2
        %v3006 = vsel %vm2855, %v3003, %v3005
        %v3007 = vrot.slane %v387, 2
        %v3008 = vsel %vm2855, %v3005, %v3007
        %v3009 = vrot.slane %v388, 2
        %v3010 = vrot.slane %v389, 2
        %v3011 = vsel %vm2855, %v3009, %v3010
        %v3012 = vrot.slane %v390, 2
        %v3013 = vsel %vm2855, %v3010, %v3012
        %v3014 = vrot.slane %v391, 2
        %v3015 = vsel %vm2855, %v3012, %v3014
        %v3016 = vrot.slane %v392, 2
        %v3017 = vsel %vm2855, %v3014, %v3016
        %v3018 = vrot.slane %v393, 2
        %v3019 = vrot.slane %v394, 2
        %v3020 = vsel %vm2855, %v3018, %v3019
        %v3021 = vrot.slane %v395, 2
        %v3022 = vsel %vm2855, %v3019, %v3021
        %v3023 = vrot.slane %v396, 2
        %v3024 = vsel %vm2855, %v3021, %v3023
        %v3025 = vrot.slane %v397, 2
        %v3026 = vsel %vm2855, %v3023, %v3025
        %v3027 = vrot.slane %v398, 2
        %v3028 = vrot.slane %v399, 2
        %v3029 = vsel %vm2855, %v3027, %v3028
        %v3030 = vrot.slane %v400, 2
        %v3031 = vsel %vm2855, %v3028, %v3030
        %v3032 = vrot.slane %v401, 2
        %v3033 = vsel %vm2855, %v3030, %v3032
        %v3034 = vrot.slane %v402, 2
        %v3035 = vsel %vm2855, %v3032, %v3034
        %v3036 = vrot.slane %v403, 2
        %v3037 = vrot.slane %v404, 2
        %v3038 = vsel %vm2855, %v3036, %v3037
        %v3039 = vrot.slane %v405, 2
        %v3040 = vsel %vm2855, %v3037, %v3039
        %v3041 = vrot.slane %v406, 2
        %v3042 = vsel %vm2855, %v3039, %v3041
        %v3043 = vrot.slane %v407, 2
        %v3044 = vsel %vm2855, %v3041, %v3043
        %v3045 = vrot.slane %v408, 2
        %v3046 = vrot.slane %v409, 2
        %v3047 = vsel %vm2855, %v3045, %v3046
        %v3048 = vrot.slane %v410, 2
        %v3049 = vsel %vm2855, %v3046, %v3048
        %v3050 = vrot.slane %v411, 2
        %v3051 = vsel %vm2855, %v3048, %v3050
        %v3052 = vrot.slane %v412, 2
        %v3053 = vsel %vm2855, %v3050, %v3052
        %v3054 = vrot.slane %v413, 2
        %v3055 = vrot.slane %v414, 2
        %v3056 = vsel %vm2855, %v3054, %v3055
        %v3057 = vrot.slane %v415, 2
        %v3058 = vsel %vm2855, %v3055, %v3057
        %v3059 = vrot.slane %v416, 2
        %v3060 = vsel %vm2855, %v3057, %v3059
        %v3061 = vrot.slane %v417, 2
        %v3062 = vsel %vm2855, %v3059, %v3061
        %v3063 = vrot.slane %v418, 2
        %v3064 = vrot.slane %v419, 2
        %v3065 = vsel %vm2855, %v3063, %v3064
        %v3066 = vrot.slane %v420, 2
        %v3067 = vsel %vm2855, %v3064, %v3066
        %v3068 = vrot.slane %v421, 2
        %v3069 = vsel %vm2855, %v3066, %v3068
        %v3070 = vrot.slane %v422, 2
        %v3071 = vsel %vm2855, %v3068, %v3070
        %v3072 = vrot.slane %v423, 2
        %v3073 = vrot.slane %v424, 2
        %v3074 = vsel %vm2855, %v3072, %v3073
        %v3075 = vrot.slane %v425, 2
        %v3076 = vsel %vm2855, %v3073, %v3075
        %v3077 = vrot.slane %v426, 2
        %v3078 = vsel %vm2855, %v3075, %v3077
        %v3079 = vrot.slane %v427, 2
        %v3080 = vsel %vm2855, %v3077, %v3079
        %v3081 = vrot.slane %v428, 2
        %v3082 = vrot.slane %v429, 2
        %v3083 = vsel %vm2855, %v3081, %v3082
        %v3084 = vrot.slane %v430, 2
        %v3085 = vsel %vm2855, %v3082, %v3084
        %v3086 = vrot.slane %v431, 2
        %v3087 = vsel %vm2855, %v3084, %v3086
        %v3088 = vrot.slane %v432, 2
        %v3089 = vsel %vm2855, %v3086, %v3088
        %v3090 = vrot.slane %v433, 2
        %v3091 = vrot.slane %v434, 2
        %v3092 = vsel %vm2855, %v3090, %v3091
        %v3093 = vrot.slane %v435, 2
        %v3094 = vsel %vm2855, %v3091, %v3093
        %v3095 = vrot.slane %v436, 2
        %v3096 = vsel %vm2855, %v3093, %v3095
        %v3097 = vrot.slane %v437, 2
        %v3098 = vsel %vm2855, %v3095, %v3097
        %v3099 = vrot.slane %v438, 2
        %v3100 = vrot.slane %v439, 2
        %v3101 = vsel %vm2855, %v3099, %v3100
        %v3102 = vrot.slane %v440, 2
        %v3103 = vsel %vm2855, %v3100, %v3102
        %v3104 = vrot.slane %v441, 2
        %v3105 = vsel %vm2855, %v3102, %v3104
        %v3106 = vrot.slane %v442, 2
        %v3107 = vsel %vm2855, %v3104, %v3106
        %v3108 = vrot.slane %v443, 2
        %v3109 = vrot.slane %v444, 2
        %v3110 = vsel %vm2855, %v3108, %v3109
        %v3111 = vrot.slane %v445, 2
        %v3112 = vsel %vm2855, %v3109, %v3111
        %v3113 = vrot.slane %v446, 2
        %v3114 = vsel %vm2855, %v3111, %v3113
        %v3115 = vrot.slane %v447, 2
        %v3116 = vsel %vm2855, %v3113, %v3115
        %v3117 = vrot.slane %v448, 2
        %v3118 = vrot.slane %v449, 2
        %v3119 = vsel %vm2855, %v3117, %v3118
        %v3120 = vrot.slane %v450, 2
        %v3121 = vsel %vm2855, %v3118, %v3120
        %v3122 = vrot.slane %v451, 2
        %v3123 = vsel %vm2855, %v3120, %v3122
        %v3124 = vrot.slane %v452, 2
        %v3125 = vsel %vm2855, %v3122, %v3124
        %v3126 = vrot.slane %v453, 2
        %v3127 = vrot.slane %v454, 2
        %v3128 = vsel %vm2855, %v3126, %v3127
        %v3129 = vrot.slane %v455, 2
        %v3130 = vsel %vm2855, %v3127, %v3129
        %v3131 = vrot.slane %v456, 2
        %v3132 = vsel %vm2855, %v3129, %v3131
        %v3133 = vrot.slane %v457, 2
        %v3134 = vsel %vm2855, %v3131, %v3133
        %v3135 = vrot.slane %v458, 2
        %v3136 = vrot.slane %v459, 2
        %v3137 = vsel %vm2855, %v3135, %v3136
        %v3138 = vrot.slane %v460, 2
        %v3139 = vsel %vm2855, %v3136, %v3138
        %v3140 = vrot.slane %v461, 2
        %v3141 = vsel %vm2855, %v3138, %v3140
        %v3142 = vrot.slane %v462, 2
        %v3143 = vsel %vm2855, %v3140, %v3142
        %s3144 = scalar_lea.vmem %s1, 8
        %v3145 = vld [vmem:[%s3144] sm:$0x7]
        %v3146 = vsel %vm925, %v2858, 0
        %v3148 = vsel %vm925, %v2860, 0
        %v3150 = vsel %vm925, %v2862, 0
        %v3152 = vsel %vm925, %v2864, 0
        %v3154 = vsel %vm925, %v2867, 0
        %v3156 = vsel %vm925, %v2869, 0
        %v3158 = vsel %vm925, %v2871, 0
        %v3160 = vsel %vm925, %v2873, 0
        %v3162 = vsel %vm925, %v2876, 0
        %v3164 = vsel %vm925, %v2878, 0
        %v3166 = vsel %vm925, %v2880, 0
        %v3168 = vsel %vm925, %v2882, 0
        %v3170 = vsel %vm925, %v2885, 0
        %v3172 = vsel %vm925, %v2887, 0
        %v3174 = vsel %vm925, %v2889, 0
        %v3176 = vsel %vm925, %v2891, 0
        %v3178 = vsel %vm925, %v2894, 0
        %v3180 = vsel %vm925, %v2896, 0
        %v3182 = vsel %vm925, %v2898, 0
        %v3184 = vsel %vm925, %v2900, 0
        %v3186 = vsel %vm925, %v2903, 0
        %v3188 = vsel %vm925, %v2905, 0
        %v3190 = vsel %vm925, %v2907, 0
        %v3192 = vsel %vm925, %v2909, 0
        %v3194 = vsel %vm925, %v2912, 0
        %v3196 = vsel %vm925, %v2914, 0
        %v3198 = vsel %vm925, %v2916, 0
        %v3200 = vsel %vm925, %v2918, 0
        %v3202 = vsel %vm925, %v2921, 0
        %v3204 = vsel %vm925, %v2923, 0
        %v3206 = vsel %vm925, %v2925, 0
        %v3208 = vsel %vm925, %v2927, 0
        %v3210 = vsel %vm925, %v2930, 0
        %v3212 = vsel %vm925, %v2932, 0
        %v3214 = vsel %vm925, %v2934, 0
        %v3216 = vsel %vm925, %v2936, 0
        %v3218 = vsel %vm925, %v2939, 0
        %v3220 = vsel %vm925, %v2941, 0
        %v3222 = vsel %vm925, %v2943, 0
        %v3224 = vsel %vm925, %v2945, 0
        %v3226 = vsel %vm925, %v2948, 0
        %v3228 = vsel %vm925, %v2950, 0
        %v3230 = vsel %vm925, %v2952, 0
        %v3232 = vsel %vm925, %v2954, 0
        %v3234 = vsel %vm925, %v2957, 0
        %v3236 = vsel %vm925, %v2959, 0
        %v3238 = vsel %vm925, %v2961, 0
        %v3240 = vsel %vm925, %v2963, 0
        %v3242 = vsel %vm925, %v2966, 0
        %v3244 = vsel %vm925, %v2968, 0
        %v3246 = vsel %vm925, %v2970, 0
        %v3248 = vsel %vm925, %v2972, 0
        %v3250 = vsel %vm925, %v2975, 0
        %v3252 = vsel %vm925, %v2977, 0
        %v3254 = vsel %vm925, %v2979, 0
        %v3256 = vsel %vm925, %v2981, 0
        %v3258 = vsel %vm925, %v2984, 0
        %v3260 = vsel %vm925, %v2986, 0
        %v3262 = vsel %vm925, %v2988, 0
        %v3264 = vsel %vm925, %v2990, 0
        %v3266 = vsel %vm925, %v2993, 0
        %v3268 = vsel %vm925, %v2995, 0
        %v3270 = vsel %vm925, %v2997, 0
        %v3272 = vsel %vm925, %v2999, 0
        %v3274 = vsel %vm925, %v3002, 0
        %v3276 = vsel %vm925, %v3004, 0
        %v3278 = vsel %vm925, %v3006, 0
        %v3280 = vsel %vm925, %v3008, 0
        %v3282 = vsel %vm925, %v3011, 0
        %v3284 = vsel %vm925, %v3013, 0
        %v3286 = vsel %vm925, %v3015, 0
        %v3288 = vsel %vm925, %v3017, 0
        %v3290 = vsel %vm925, %v3020, 0
        %v3292 = vsel %vm925, %v3022, 0
        %v3294 = vsel %vm925, %v3024, 0
        %v3296 = vsel %vm925, %v3026, 0
        %v3298 = vsel %vm925, %v3029, 0
        %v3300 = vsel %vm925, %v3031, 0
        %v3302 = vsel %vm925, %v3033, 0
        %v3304 = vsel %vm925, %v3035, 0
        %v3306 = vsel %vm925, %v3038, 0
        %v3308 = vsel %vm925, %v3040, 0
        %v3310 = vsel %vm925, %v3042, 0
        %v3312 = vsel %vm925, %v3044, 0
        %v3314 = vsel %vm925, %v3047, 0
        %v3316 = vsel %vm925, %v3049, 0
        %v3318 = vsel %vm925, %v3051, 0
        %v3320 = vsel %vm925, %v3053, 0
        %v3322 = vsel %vm925, %v3056, 0
        %v3324 = vsel %vm925, %v3058, 0
        %v3326 = vsel %vm925, %v3060, 0
        %v3328 = vsel %vm925, %v3062, 0
        %v3330 = vsel %vm925, %v3065, 0
        %v3332 = vsel %vm925, %v3067, 0
        %v3334 = vsel %vm925, %v3069, 0
        %v3336 = vsel %vm925, %v3071, 0
        %v3338 = vsel %vm925, %v3074, 0
        %v3340 = vsel %vm925, %v3076, 0
        %v3342 = vsel %vm925, %v3078, 0
        %v3344 = vsel %vm925, %v3080, 0
        %v3346 = vsel %vm925, %v3083, 0
        %v3348 = vsel %vm925, %v3085, 0
        %v3350 = vsel %vm925, %v3087, 0
        %v3352 = vsel %vm925, %v3089, 0
        %v3354 = vsel %vm925, %v3092, 0
        %v3356 = vsel %vm925, %v3094, 0
        %v3358 = vsel %vm925, %v3096, 0
        %v3360 = vsel %vm925, %v3098, 0
        %v3362 = vsel %vm925, %v3101, 0
        %v3364 = vsel %vm925, %v3103, 0
        %v3366 = vsel %vm925, %v3105, 0
        %v3368 = vsel %vm925, %v3107, 0
        %v3370 = vsel %vm925, %v3110, 0
        %v3372 = vsel %vm925, %v3112, 0
        %v3374 = vsel %vm925, %v3114, 0
        %v3376 = vsel %vm925, %v3116, 0
        %v3378 = vsel %vm925, %v3119, 0
        %v3380 = vsel %vm925, %v3121, 0
        %v3382 = vsel %vm925, %v3123, 0
        %v3384 = vsel %vm925, %v3125, 0
        %v3386 = vsel %vm925, %v3128, 0
        %v3388 = vsel %vm925, %v3130, 0
        %v3390 = vsel %vm925, %v3132, 0
        %v3392 = vsel %vm925, %v3134, 0
        %v3394 = vsel %vm925, %v3137, 0
        %v3396 = vsel %vm925, %v3139, 0
        %v3398 = vsel %vm925, %v3141, 0
        %v3400 = vsel %vm925, %v3143, 0
        %v3403 = vsel %vm1182, %v3145, 0
        %3405 = vmatprep.subr.mxu0 0.0
        %3406 = vmatpush1.msra.mxu0 0.0
        %3407 = vmatprep.subr.mxu0 0.0
        %3408 = vmatpush1.msra.mxu0 0.0
        %3409 = vmatprep.subr.mxu0 0.0
        %3410 = vmatpush1.msra.mxu0 0.0
        %3411 = vmatprep.subr.mxu0 0.0
        %3412 = vmatpush1.msra.mxu0 0.0
        %3413 = vmatprep.subr.mxu0 0.0
        %3414 = vmatpush1.msra.mxu0 0.0
        %3415 = vmatprep.subr.mxu0 0.0
        %3416 = vmatpush1.msra.mxu0 0.0
        %3417 = vmatprep.subr.mxu0 0.0
        %3418 = vmatpush1.msra.mxu0 0.0
        %3419 = vmatprep.subr.mxu0 0.0
        %3420 = vmatpush1.msra.mxu0 0.0
        %3421 = vmatprep.subr.mxu0 0.0
        %3422 = vmatpush1.msra.mxu0 0.0
        %3423 = vmatprep.subr.mxu0 0.0
        %3424 = vmatpush1.msra.mxu0 0.0
        %3425 = vmatprep.subr.mxu0 0.0
        %3426 = vmatpush1.msra.mxu0 0.0
        %3427 = vmatprep.subr.mxu0 0.0
        %3428 = vmatpush1.msra.mxu0 0.0
        %3429 = vmatprep.subr.mxu0 0.0
        %3430 = vmatpush1.msra.mxu0 0.0
        %3431 = vmatprep.subr.mxu0 0.0
        %3432 = vmatpush1.msra.mxu0 0.0
        %3433 = vmatprep.subr.mxu0 0.0
        %3434 = vmatpush1.msra.mxu0 0.0
        %3435 = vmatprep.subr.mxu0 0.0
        %3436 = vmatpush1.msra.mxu0 %v3403
        %3437 = vmatprep.subr.mxu0 0.0
        %3438 = vmatpush2.msra.mxu0 0.0
        %3439 = vmatprep.subr.mxu0 0.0
        %3440 = vmatpush2.msra.mxu0 0.0
        %3441 = vmatprep.subr.mxu0 0.0
        %3442 = vmatpush2.msra.mxu0 0.0
        %3443 = vmatprep.subr.mxu0 0.0
        %3444 = vmatpush2.msra.mxu0 0.0
        %3445 = vmatprep.subr.mxu0 0.0
        %3446 = vmatpush2.msra.mxu0 0.0
        %3447 = vmatprep.subr.mxu0 0.0
        %3448 = vmatpush2.msra.mxu0 0.0
        %3449 = vmatprep.subr.mxu0 0.0
        %3450 = vmatpush2.msra.mxu0 0.0
        %3451 = vmatprep.subr.mxu0 0.0
        %3452 = vmatpush2.msra.mxu0 0.0
        %3453 = vmatprep.subr.mxu0 0.0
        %3454 = vmatpush2.msra.mxu0 0.0
        %3455 = vmatprep.subr.mxu0 0.0
        %3456 = vmatpush2.msra.mxu0 0.0
        %3457 = vmatprep.subr.mxu0 0.0
        %3458 = vmatpush2.msra.mxu0 0.0
        %3459 = vmatprep.subr.mxu0 0.0
        %3460 = vmatpush2.msra.mxu0 0.0
        %3461 = vmatprep.subr.mxu0 0.0
        %3462 = vmatpush2.msra.mxu0 0.0
        %3463 = vmatprep.subr.mxu0 0.0
        %3464 = vmatpush2.msra.mxu0 0.0
        %3465 = vmatprep.subr.mxu0 0.0
        %3466 = vmatpush2.msra.mxu0 0.0
        %3467 = vmatprep.subr.mxu0 0.0
        %3468 = vmatpush2.msra.mxu0 0.0
        %3469 = vmatprep.mubr.f32.mxu0 0.0
        %3470 = vmatmul.mubr.f32.gmra.mxu0 %v3146
        %v3471 = vpop.f32.mrf.mxu0
        %v3472 = vadd.f32 0.0, %v3471
        %v3473 = vpop.f32.mrf.mxu0
        %3474 = vmatprep.mubr.f32.mxu0 0.0
        %3475 = vmatmul.mubr.f32.gmra.mxu0 %v3148
        %v3476 = vpop.f32.mrf.mxu0
        %v3477 = vadd.f32 0.0, %v3476
        %v3478 = vpop.f32.mrf.mxu0
        %3479 = vmatprep.mubr.f32.mxu0 0.0
        %3480 = vmatmul.mubr.f32.gmra.mxu0 %v3150
        %v3481 = vpop.f32.mrf.mxu0
        %v3482 = vadd.f32 0.0, %v3481
        %v3483 = vpop.f32.mrf.mxu0
        %3484 = vmatprep.mubr.f32.mxu0 0.0
        %3485 = vmatmul.mubr.f32.gmra.mxu0 %v3152
        %v3486 = vpop.f32.mrf.mxu0
        %v3487 = vadd.f32 0.0, %v3486
        %v3488 = vpop.f32.mrf.mxu0
        %3489 = vmatprep.mubr.f32.mxu0 0.0
        %3490 = vmatmul.mubr.f32.gmra.mxu0 %v3154
        %v3491 = vpop.f32.mrf.mxu0
        %v3492 = vadd.f32 0.0, %v3491
        %v3493 = vpop.f32.mrf.mxu0
        %3494 = vmatprep.mubr.f32.mxu0 0.0
        %3495 = vmatmul.mubr.f32.gmra.mxu0 %v3156
        %v3496 = vpop.f32.mrf.mxu0
        %v3497 = vadd.f32 0.0, %v3496
        %v3498 = vpop.f32.mrf.mxu0
        %3499 = vmatprep.mubr.f32.mxu0 0.0
        %3500 = vmatmul.mubr.f32.gmra.mxu0 %v3158
        %v3501 = vpop.f32.mrf.mxu0
        %v3502 = vadd.f32 0.0, %v3501
        %v3503 = vpop.f32.mrf.mxu0
        %3504 = vmatprep.mubr.f32.mxu0 0.0
        %3505 = vmatmul.mubr.f32.gmra.mxu0 %v3160
        %v3506 = vpop.f32.mrf.mxu0
        %v3507 = vadd.f32 0.0, %v3506
        %v3508 = vpop.f32.mrf.mxu0
        %3509 = vmatprep.mubr.f32.mxu0 0.0
        %3510 = vmatmul.mubr.f32.gmra.mxu0 %v3162
        %v3511 = vpop.f32.mrf.mxu0
        %v3512 = vadd.f32 0.0, %v3511
        %v3513 = vpop.f32.mrf.mxu0
        %3514 = vmatprep.mubr.f32.mxu0 0.0
        %3515 = vmatmul.mubr.f32.gmra.mxu0 %v3164
        %v3516 = vpop.f32.mrf.mxu0
        %v3517 = vadd.f32 0.0, %v3516
        %v3518 = vpop.f32.mrf.mxu0
        %3519 = vmatprep.mubr.f32.mxu0 0.0
        %3520 = vmatmul.mubr.f32.gmra.mxu0 %v3166
        %v3521 = vpop.f32.mrf.mxu0
        %v3522 = vadd.f32 0.0, %v3521
        %v3523 = vpop.f32.mrf.mxu0
        %3524 = vmatprep.mubr.f32.mxu0 0.0
        %3525 = vmatmul.mubr.f32.gmra.mxu0 %v3168
        %v3526 = vpop.f32.mrf.mxu0
        %v3527 = vadd.f32 0.0, %v3526
        %v3528 = vpop.f32.mrf.mxu0
        %3529 = vmatprep.mubr.f32.mxu0 0.0
        %3530 = vmatmul.mubr.f32.gmra.mxu0 %v3170
        %v3531 = vpop.f32.mrf.mxu0
        %v3532 = vadd.f32 0.0, %v3531
        %v3533 = vpop.f32.mrf.mxu0
        %3534 = vmatprep.mubr.f32.mxu0 0.0
        %3535 = vmatmul.mubr.f32.gmra.mxu0 %v3172
        %v3536 = vpop.f32.mrf.mxu0
        %v3537 = vadd.f32 0.0, %v3536
        %v3538 = vpop.f32.mrf.mxu0
        %3539 = vmatprep.mubr.f32.mxu0 0.0
        %3540 = vmatmul.mubr.f32.gmra.mxu0 %v3174
        %v3541 = vpop.f32.mrf.mxu0
        %v3542 = vadd.f32 0.0, %v3541
        %v3543 = vpop.f32.mrf.mxu0
        %3544 = vmatprep.mubr.f32.mxu0 0.0
        %3545 = vmatmul.mubr.f32.gmra.mxu0 %v3176
        %v3546 = vpop.f32.mrf.mxu0
        %v3547 = vadd.f32 0.0, %v3546
        %v3548 = vpop.f32.mrf.mxu0
        %3549 = vmatprep.mubr.f32.mxu0 0.0
        %3550 = vmatmul.mubr.f32.gmra.mxu0 %v3178
        %v3551 = vpop.f32.mrf.mxu0
        %v3552 = vadd.f32 0.0, %v3551
        %v3553 = vpop.f32.mrf.mxu0
        %3554 = vmatprep.mubr.f32.mxu0 0.0
        %3555 = vmatmul.mubr.f32.gmra.mxu0 %v3180
        %v3556 = vpop.f32.mrf.mxu0
        %v3557 = vadd.f32 0.0, %v3556
        %v3558 = vpop.f32.mrf.mxu0
        %3559 = vmatprep.mubr.f32.mxu0 0.0
        %3560 = vmatmul.mubr.f32.gmra.mxu0 %v3182
        %v3561 = vpop.f32.mrf.mxu0
        %v3562 = vadd.f32 0.0, %v3561
        %v3563 = vpop.f32.mrf.mxu0
        %3564 = vmatprep.mubr.f32.mxu0 0.0
        %3565 = vmatmul.mubr.f32.gmra.mxu0 %v3184
        %v3566 = vpop.f32.mrf.mxu0
        %v3567 = vadd.f32 0.0, %v3566
        %v3568 = vpop.f32.mrf.mxu0
        %3569 = vmatprep.mubr.f32.mxu0 0.0
        %3570 = vmatmul.mubr.f32.gmra.mxu0 %v3186
        %v3571 = vpop.f32.mrf.mxu0
        %v3572 = vadd.f32 0.0, %v3571
        %v3573 = vpop.f32.mrf.mxu0
        %3574 = vmatprep.mubr.f32.mxu0 0.0
        %3575 = vmatmul.mubr.f32.gmra.mxu0 %v3188
        %v3576 = vpop.f32.mrf.mxu0
        %v3577 = vadd.f32 0.0, %v3576
        %v3578 = vpop.f32.mrf.mxu0
        %3579 = vmatprep.mubr.f32.mxu0 0.0
        %3580 = vmatmul.mubr.f32.gmra.mxu0 %v3190
        %v3581 = vpop.f32.mrf.mxu0
        %v3582 = vadd.f32 0.0, %v3581
        %v3583 = vpop.f32.mrf.mxu0
        %3584 = vmatprep.mubr.f32.mxu0 0.0
        %3585 = vmatmul.mubr.f32.gmra.mxu0 %v3192
        %v3586 = vpop.f32.mrf.mxu0
        %v3587 = vadd.f32 0.0, %v3586
        %v3588 = vpop.f32.mrf.mxu0
        %3589 = vmatprep.mubr.f32.mxu0 0.0
        %3590 = vmatmul.mubr.f32.gmra.mxu0 %v3194
        %v3591 = vpop.f32.mrf.mxu0
        %v3592 = vadd.f32 0.0, %v3591
        %v3593 = vpop.f32.mrf.mxu0
        %3594 = vmatprep.mubr.f32.mxu0 0.0
        %3595 = vmatmul.mubr.f32.gmra.mxu0 %v3196
        %v3596 = vpop.f32.mrf.mxu0
        %v3597 = vadd.f32 0.0, %v3596
        %v3598 = vpop.f32.mrf.mxu0
        %3599 = vmatprep.mubr.f32.mxu0 0.0
        %3600 = vmatmul.mubr.f32.gmra.mxu0 %v3198
        %v3601 = vpop.f32.mrf.mxu0
        %v3602 = vadd.f32 0.0, %v3601
        %v3603 = vpop.f32.mrf.mxu0
        %3604 = vmatprep.mubr.f32.mxu0 0.0
        %3605 = vmatmul.mubr.f32.gmra.mxu0 %v3200
        %v3606 = vpop.f32.mrf.mxu0
        %v3607 = vadd.f32 0.0, %v3606
        %v3608 = vpop.f32.mrf.mxu0
        %3609 = vmatprep.mubr.f32.mxu0 0.0
        %3610 = vmatmul.mubr.f32.gmra.mxu0 %v3202
        %v3611 = vpop.f32.mrf.mxu0
        %v3612 = vadd.f32 0.0, %v3611
        %v3613 = vpop.f32.mrf.mxu0
        %3614 = vmatprep.mubr.f32.mxu0 0.0
        %3615 = vmatmul.mubr.f32.gmra.mxu0 %v3204
        %v3616 = vpop.f32.mrf.mxu0
        %v3617 = vadd.f32 0.0, %v3616
        %v3618 = vpop.f32.mrf.mxu0
        %3619 = vmatprep.mubr.f32.mxu0 0.0
        %3620 = vmatmul.mubr.f32.gmra.mxu0 %v3206
        %v3621 = vpop.f32.mrf.mxu0
        %v3622 = vadd.f32 0.0, %v3621
        %v3623 = vpop.f32.mrf.mxu0
        %3624 = vmatprep.mubr.f32.mxu0 0.0
        %3625 = vmatmul.mubr.f32.gmra.mxu0 %v3208
        %v3626 = vpop.f32.mrf.mxu0
        %v3627 = vadd.f32 0.0, %v3626
        %v3628 = vpop.f32.mrf.mxu0
        %3629 = vmatprep.mubr.f32.mxu0 0.0
        %3630 = vmatmul.mubr.f32.gmra.mxu0 %v3210
        %v3631 = vpop.f32.mrf.mxu0
        %v3632 = vadd.f32 0.0, %v3631
        %v3633 = vpop.f32.mrf.mxu0
        %3634 = vmatprep.mubr.f32.mxu0 0.0
        %3635 = vmatmul.mubr.f32.gmra.mxu0 %v3212
        %v3636 = vpop.f32.mrf.mxu0
        %v3637 = vadd.f32 0.0, %v3636
        %v3638 = vpop.f32.mrf.mxu0
        %3639 = vmatprep.mubr.f32.mxu0 0.0
        %3640 = vmatmul.mubr.f32.gmra.mxu0 %v3214
        %v3641 = vpop.f32.mrf.mxu0
        %v3642 = vadd.f32 0.0, %v3641
        %v3643 = vpop.f32.mrf.mxu0
        %3644 = vmatprep.mubr.f32.mxu0 0.0
        %3645 = vmatmul.mubr.f32.gmra.mxu0 %v3216
        %v3646 = vpop.f32.mrf.mxu0
        %v3647 = vadd.f32 0.0, %v3646
        %v3648 = vpop.f32.mrf.mxu0
        %3649 = vmatprep.mubr.f32.mxu0 0.0
        %3650 = vmatmul.mubr.f32.gmra.mxu0 %v3218
        %v3651 = vpop.f32.mrf.mxu0
        %v3652 = vadd.f32 0.0, %v3651
        %v3653 = vpop.f32.mrf.mxu0
        %3654 = vmatprep.mubr.f32.mxu0 0.0
        %3655 = vmatmul.mubr.f32.gmra.mxu0 %v3220
        %v3656 = vpop.f32.mrf.mxu0
        %v3657 = vadd.f32 0.0, %v3656
        %v3658 = vpop.f32.mrf.mxu0
        %3659 = vmatprep.mubr.f32.mxu0 0.0
        %3660 = vmatmul.mubr.f32.gmra.mxu0 %v3222
        %v3661 = vpop.f32.mrf.mxu0
        %v3662 = vadd.f32 0.0, %v3661
        %v3663 = vpop.f32.mrf.mxu0
        %3664 = vmatprep.mubr.f32.mxu0 0.0
        %3665 = vmatmul.mubr.f32.gmra.mxu0 %v3224
        %v3666 = vpop.f32.mrf.mxu0
        %v3667 = vadd.f32 0.0, %v3666
        %v3668 = vpop.f32.mrf.mxu0
        %3669 = vmatprep.mubr.f32.mxu0 0.0
        %3670 = vmatmul.mubr.f32.gmra.mxu0 %v3226
        %v3671 = vpop.f32.mrf.mxu0
        %v3672 = vadd.f32 0.0, %v3671
        %v3673 = vpop.f32.mrf.mxu0
        %3674 = vmatprep.mubr.f32.mxu0 0.0
        %3675 = vmatmul.mubr.f32.gmra.mxu0 %v3228
        %v3676 = vpop.f32.mrf.mxu0
        %v3677 = vadd.f32 0.0, %v3676
        %v3678 = vpop.f32.mrf.mxu0
        %3679 = vmatprep.mubr.f32.mxu0 0.0
        %3680 = vmatmul.mubr.f32.gmra.mxu0 %v3230
        %v3681 = vpop.f32.mrf.mxu0
        %v3682 = vadd.f32 0.0, %v3681
        %v3683 = vpop.f32.mrf.mxu0
        %3684 = vmatprep.mubr.f32.mxu0 0.0
        %3685 = vmatmul.mubr.f32.gmra.mxu0 %v3232
        %v3686 = vpop.f32.mrf.mxu0
        %v3687 = vadd.f32 0.0, %v3686
        %v3688 = vpop.f32.mrf.mxu0
        %3689 = vmatprep.mubr.f32.mxu0 0.0
        %3690 = vmatmul.mubr.f32.gmra.mxu0 %v3234
        %v3691 = vpop.f32.mrf.mxu0
        %v3692 = vadd.f32 0.0, %v3691
        %v3693 = vpop.f32.mrf.mxu0
        %3694 = vmatprep.mubr.f32.mxu0 0.0
        %3695 = vmatmul.mubr.f32.gmra.mxu0 %v3236
        %v3696 = vpop.f32.mrf.mxu0
        %v3697 = vadd.f32 0.0, %v3696
        %v3698 = vpop.f32.mrf.mxu0
        %3699 = vmatprep.mubr.f32.mxu0 0.0
        %3700 = vmatmul.mubr.f32.gmra.mxu0 %v3238
        %v3701 = vpop.f32.mrf.mxu0
        %v3702 = vadd.f32 0.0, %v3701
        %v3703 = vpop.f32.mrf.mxu0
        %3704 = vmatprep.mubr.f32.mxu0 0.0
        %3705 = vmatmul.mubr.f32.gmra.mxu0 %v3240
        %v3706 = vpop.f32.mrf.mxu0
        %v3707 = vadd.f32 0.0, %v3706
        %v3708 = vpop.f32.mrf.mxu0
        %3709 = vmatprep.mubr.f32.mxu0 0.0
        %3710 = vmatmul.mubr.f32.gmra.mxu0 %v3242
        %v3711 = vpop.f32.mrf.mxu0
        %v3712 = vadd.f32 0.0, %v3711
        %v3713 = vpop.f32.mrf.mxu0
        %3714 = vmatprep.mubr.f32.mxu0 0.0
        %3715 = vmatmul.mubr.f32.gmra.mxu0 %v3244
        %v3716 = vpop.f32.mrf.mxu0
        %v3717 = vadd.f32 0.0, %v3716
        %v3718 = vpop.f32.mrf.mxu0
        %3719 = vmatprep.mubr.f32.mxu0 0.0
        %3720 = vmatmul.mubr.f32.gmra.mxu0 %v3246
        %v3721 = vpop.f32.mrf.mxu0
        %v3722 = vadd.f32 0.0, %v3721
        %v3723 = vpop.f32.mrf.mxu0
        %3724 = vmatprep.mubr.f32.mxu0 0.0
        %3725 = vmatmul.mubr.f32.gmra.mxu0 %v3248
        %v3726 = vpop.f32.mrf.mxu0
        %v3727 = vadd.f32 0.0, %v3726
        %v3728 = vpop.f32.mrf.mxu0
        %3729 = vmatprep.mubr.f32.mxu0 0.0
        %3730 = vmatmul.mubr.f32.gmra.mxu0 %v3250
        %v3731 = vpop.f32.mrf.mxu0
        %v3732 = vadd.f32 0.0, %v3731
        %v3733 = vpop.f32.mrf.mxu0
        %3734 = vmatprep.mubr.f32.mxu0 0.0
        %3735 = vmatmul.mubr.f32.gmra.mxu0 %v3252
        %v3736 = vpop.f32.mrf.mxu0
        %v3737 = vadd.f32 0.0, %v3736
        %v3738 = vpop.f32.mrf.mxu0
        %3739 = vmatprep.mubr.f32.mxu0 0.0
        %3740 = vmatmul.mubr.f32.gmra.mxu0 %v3254
        %v3741 = vpop.f32.mrf.mxu0
        %v3742 = vadd.f32 0.0, %v3741
        %v3743 = vpop.f32.mrf.mxu0
        %3744 = vmatprep.mubr.f32.mxu0 0.0
        %3745 = vmatmul.mubr.f32.gmra.mxu0 %v3256
        %v3746 = vpop.f32.mrf.mxu0
        %v3747 = vadd.f32 0.0, %v3746
        %v3748 = vpop.f32.mrf.mxu0
        %3749 = vmatprep.mubr.f32.mxu0 0.0
        %3750 = vmatmul.mubr.f32.gmra.mxu0 %v3258
        %v3751 = vpop.f32.mrf.mxu0
        %v3752 = vadd.f32 0.0, %v3751
        %v3753 = vpop.f32.mrf.mxu0
        %3754 = vmatprep.mubr.f32.mxu0 0.0
        %3755 = vmatmul.mubr.f32.gmra.mxu0 %v3260
        %v3756 = vpop.f32.mrf.mxu0
        %v3757 = vadd.f32 0.0, %v3756
        %v3758 = vpop.f32.mrf.mxu0
        %3759 = vmatprep.mubr.f32.mxu0 0.0
        %3760 = vmatmul.mubr.f32.gmra.mxu0 %v3262
        %v3761 = vpop.f32.mrf.mxu0
        %v3762 = vadd.f32 0.0, %v3761
        %v3763 = vpop.f32.mrf.mxu0
        %3764 = vmatprep.mubr.f32.mxu0 0.0
        %3765 = vmatmul.mubr.f32.gmra.mxu0 %v3264
        %v3766 = vpop.f32.mrf.mxu0
        %v3767 = vadd.f32 0.0, %v3766
        %v3768 = vpop.f32.mrf.mxu0
        %3769 = vmatprep.mubr.f32.mxu0 0.0
        %3770 = vmatmul.mubr.f32.gmra.mxu0 %v3266
        %v3771 = vpop.f32.mrf.mxu0
        %v3772 = vadd.f32 0.0, %v3771
        %v3773 = vpop.f32.mrf.mxu0
        %3774 = vmatprep.mubr.f32.mxu0 0.0
        %3775 = vmatmul.mubr.f32.gmra.mxu0 %v3268
        %v3776 = vpop.f32.mrf.mxu0
        %v3777 = vadd.f32 0.0, %v3776
        %v3778 = vpop.f32.mrf.mxu0
        %3779 = vmatprep.mubr.f32.mxu0 0.0
        %3780 = vmatmul.mubr.f32.gmra.mxu0 %v3270
        %v3781 = vpop.f32.mrf.mxu0
        %v3782 = vadd.f32 0.0, %v3781
        %v3783 = vpop.f32.mrf.mxu0
        %3784 = vmatprep.mubr.f32.mxu0 0.0
        %3785 = vmatmul.mubr.f32.gmra.mxu0 %v3272
        %v3786 = vpop.f32.mrf.mxu0
        %v3787 = vadd.f32 0.0, %v3786
        %v3788 = vpop.f32.mrf.mxu0
        %3789 = vmatprep.mubr.f32.mxu0 0.0
        %3790 = vmatmul.mubr.f32.gmra.mxu0 %v3274
        %v3791 = vpop.f32.mrf.mxu0
        %v3792 = vadd.f32 0.0, %v3791
        %v3793 = vpop.f32.mrf.mxu0
        %3794 = vmatprep.mubr.f32.mxu0 0.0
        %3795 = vmatmul.mubr.f32.gmra.mxu0 %v3276
        %v3796 = vpop.f32.mrf.mxu0
        %v3797 = vadd.f32 0.0, %v3796
        %v3798 = vpop.f32.mrf.mxu0
        %3799 = vmatprep.mubr.f32.mxu0 0.0
        %3800 = vmatmul.mubr.f32.gmra.mxu0 %v3278
        %v3801 = vpop.f32.mrf.mxu0
        %v3802 = vadd.f32 0.0, %v3801
        %v3803 = vpop.f32.mrf.mxu0
        %3804 = vmatprep.mubr.f32.mxu0 0.0
        %3805 = vmatmul.mubr.f32.gmra.mxu0 %v3280
        %v3806 = vpop.f32.mrf.mxu0
        %v3807 = vadd.f32 0.0, %v3806
        %v3808 = vpop.f32.mrf.mxu0
        %3809 = vmatprep.mubr.f32.mxu0 0.0
        %3810 = vmatmul.mubr.f32.gmra.mxu0 %v3282
        %v3811 = vpop.f32.mrf.mxu0
        %v3812 = vadd.f32 0.0, %v3811
        %v3813 = vpop.f32.mrf.mxu0
        %3814 = vmatprep.mubr.f32.mxu0 0.0
        %3815 = vmatmul.mubr.f32.gmra.mxu0 %v3284
        %v3816 = vpop.f32.mrf.mxu0
        %v3817 = vadd.f32 0.0, %v3816
        %v3818 = vpop.f32.mrf.mxu0
        %3819 = vmatprep.mubr.f32.mxu0 0.0
        %3820 = vmatmul.mubr.f32.gmra.mxu0 %v3286
        %v3821 = vpop.f32.mrf.mxu0
        %v3822 = vadd.f32 0.0, %v3821
        %v3823 = vpop.f32.mrf.mxu0
        %3824 = vmatprep.mubr.f32.mxu0 0.0
        %3825 = vmatmul.mubr.f32.gmra.mxu0 %v3288
        %v3826 = vpop.f32.mrf.mxu0
        %v3827 = vadd.f32 0.0, %v3826
        %v3828 = vpop.f32.mrf.mxu0
        %3829 = vmatprep.mubr.f32.mxu0 0.0
        %3830 = vmatmul.mubr.f32.gmra.mxu0 %v3290
        %v3831 = vpop.f32.mrf.mxu0
        %v3832 = vadd.f32 0.0, %v3831
        %v3833 = vpop.f32.mrf.mxu0
        %3834 = vmatprep.mubr.f32.mxu0 0.0
        %3835 = vmatmul.mubr.f32.gmra.mxu0 %v3292
        %v3836 = vpop.f32.mrf.mxu0
        %v3837 = vadd.f32 0.0, %v3836
        %v3838 = vpop.f32.mrf.mxu0
        %3839 = vmatprep.mubr.f32.mxu0 0.0
        %3840 = vmatmul.mubr.f32.gmra.mxu0 %v3294
        %v3841 = vpop.f32.mrf.mxu0
        %v3842 = vadd.f32 0.0, %v3841
        %v3843 = vpop.f32.mrf.mxu0
        %3844 = vmatprep.mubr.f32.mxu0 0.0
        %3845 = vmatmul.mubr.f32.gmra.mxu0 %v3296
        %v3846 = vpop.f32.mrf.mxu0
        %v3847 = vadd.f32 0.0, %v3846
        %v3848 = vpop.f32.mrf.mxu0
        %3849 = vmatprep.mubr.f32.mxu0 0.0
        %3850 = vmatmul.mubr.f32.gmra.mxu0 %v3298
        %v3851 = vpop.f32.mrf.mxu0
        %v3852 = vadd.f32 0.0, %v3851
        %v3853 = vpop.f32.mrf.mxu0
        %3854 = vmatprep.mubr.f32.mxu0 0.0
        %3855 = vmatmul.mubr.f32.gmra.mxu0 %v3300
        %v3856 = vpop.f32.mrf.mxu0
        %v3857 = vadd.f32 0.0, %v3856
        %v3858 = vpop.f32.mrf.mxu0
        %3859 = vmatprep.mubr.f32.mxu0 0.0
        %3860 = vmatmul.mubr.f32.gmra.mxu0 %v3302
        %v3861 = vpop.f32.mrf.mxu0
        %v3862 = vadd.f32 0.0, %v3861
        %v3863 = vpop.f32.mrf.mxu0
        %3864 = vmatprep.mubr.f32.mxu0 0.0
        %3865 = vmatmul.mubr.f32.gmra.mxu0 %v3304
        %v3866 = vpop.f32.mrf.mxu0
        %v3867 = vadd.f32 0.0, %v3866
        %v3868 = vpop.f32.mrf.mxu0
        %3869 = vmatprep.mubr.f32.mxu0 0.0
        %3870 = vmatmul.mubr.f32.gmra.mxu0 %v3306
        %v3871 = vpop.f32.mrf.mxu0
        %v3872 = vadd.f32 0.0, %v3871
        %v3873 = vpop.f32.mrf.mxu0
        %3874 = vmatprep.mubr.f32.mxu0 0.0
        %3875 = vmatmul.mubr.f32.gmra.mxu0 %v3308
        %v3876 = vpop.f32.mrf.mxu0
        %v3877 = vadd.f32 0.0, %v3876
        %v3878 = vpop.f32.mrf.mxu0
        %3879 = vmatprep.mubr.f32.mxu0 0.0
        %3880 = vmatmul.mubr.f32.gmra.mxu0 %v3310
        %v3881 = vpop.f32.mrf.mxu0
        %v3882 = vadd.f32 0.0, %v3881
        %v3883 = vpop.f32.mrf.mxu0
        %3884 = vmatprep.mubr.f32.mxu0 0.0
        %3885 = vmatmul.mubr.f32.gmra.mxu0 %v3312
        %v3886 = vpop.f32.mrf.mxu0
        %v3887 = vadd.f32 0.0, %v3886
        %v3888 = vpop.f32.mrf.mxu0
        %3889 = vmatprep.mubr.f32.mxu0 0.0
        %3890 = vmatmul.mubr.f32.gmra.mxu0 %v3314
        %v3891 = vpop.f32.mrf.mxu0
        %v3892 = vadd.f32 0.0, %v3891
        %v3893 = vpop.f32.mrf.mxu0
        %3894 = vmatprep.mubr.f32.mxu0 0.0
        %3895 = vmatmul.mubr.f32.gmra.mxu0 %v3316
        %v3896 = vpop.f32.mrf.mxu0
        %v3897 = vadd.f32 0.0, %v3896
        %v3898 = vpop.f32.mrf.mxu0
        %3899 = vmatprep.mubr.f32.mxu0 0.0
        %3900 = vmatmul.mubr.f32.gmra.mxu0 %v3318
        %v3901 = vpop.f32.mrf.mxu0
        %v3902 = vadd.f32 0.0, %v3901
        %v3903 = vpop.f32.mrf.mxu0
        %3904 = vmatprep.mubr.f32.mxu0 0.0
        %3905 = vmatmul.mubr.f32.gmra.mxu0 %v3320
        %v3906 = vpop.f32.mrf.mxu0
        %v3907 = vadd.f32 0.0, %v3906
        %v3908 = vpop.f32.mrf.mxu0
        %3909 = vmatprep.mubr.f32.mxu0 0.0
        %3910 = vmatmul.mubr.f32.gmra.mxu0 %v3322
        %v3911 = vpop.f32.mrf.mxu0
        %v3912 = vadd.f32 0.0, %v3911
        %v3913 = vpop.f32.mrf.mxu0
        %3914 = vmatprep.mubr.f32.mxu0 0.0
        %3915 = vmatmul.mubr.f32.gmra.mxu0 %v3324
        %v3916 = vpop.f32.mrf.mxu0
        %v3917 = vadd.f32 0.0, %v3916
        %v3918 = vpop.f32.mrf.mxu0
        %3919 = vmatprep.mubr.f32.mxu0 0.0
        %3920 = vmatmul.mubr.f32.gmra.mxu0 %v3326
        %v3921 = vpop.f32.mrf.mxu0
        %v3922 = vadd.f32 0.0, %v3921
        %v3923 = vpop.f32.mrf.mxu0
        %3924 = vmatprep.mubr.f32.mxu0 0.0
        %3925 = vmatmul.mubr.f32.gmra.mxu0 %v3328
        %v3926 = vpop.f32.mrf.mxu0
        %v3927 = vadd.f32 0.0, %v3926
        %v3928 = vpop.f32.mrf.mxu0
        %3929 = vmatprep.mubr.f32.mxu0 0.0
        %3930 = vmatmul.mubr.f32.gmra.mxu0 %v3330
        %v3931 = vpop.f32.mrf.mxu0
        %v3932 = vadd.f32 0.0, %v3931
        %v3933 = vpop.f32.mrf.mxu0
        %3934 = vmatprep.mubr.f32.mxu0 0.0
        %3935 = vmatmul.mubr.f32.gmra.mxu0 %v3332
        %v3936 = vpop.f32.mrf.mxu0
        %v3937 = vadd.f32 0.0, %v3936
        %v3938 = vpop.f32.mrf.mxu0
        %3939 = vmatprep.mubr.f32.mxu0 0.0
        %3940 = vmatmul.mubr.f32.gmra.mxu0 %v3334
        %v3941 = vpop.f32.mrf.mxu0
        %v3942 = vadd.f32 0.0, %v3941
        %v3943 = vpop.f32.mrf.mxu0
        %3944 = vmatprep.mubr.f32.mxu0 0.0
        %3945 = vmatmul.mubr.f32.gmra.mxu0 %v3336
        %v3946 = vpop.f32.mrf.mxu0
        %v3947 = vadd.f32 0.0, %v3946
        %v3948 = vpop.f32.mrf.mxu0
        %3949 = vmatprep.mubr.f32.mxu0 0.0
        %3950 = vmatmul.mubr.f32.gmra.mxu0 %v3338
        %v3951 = vpop.f32.mrf.mxu0
        %v3952 = vadd.f32 0.0, %v3951
        %v3953 = vpop.f32.mrf.mxu0
        %3954 = vmatprep.mubr.f32.mxu0 0.0
        %3955 = vmatmul.mubr.f32.gmra.mxu0 %v3340
        %v3956 = vpop.f32.mrf.mxu0
        %v3957 = vadd.f32 0.0, %v3956
        %v3958 = vpop.f32.mrf.mxu0
        %3959 = vmatprep.mubr.f32.mxu0 0.0
        %3960 = vmatmul.mubr.f32.gmra.mxu0 %v3342
        %v3961 = vpop.f32.mrf.mxu0
        %v3962 = vadd.f32 0.0, %v3961
        %v3963 = vpop.f32.mrf.mxu0
        %3964 = vmatprep.mubr.f32.mxu0 0.0
        %3965 = vmatmul.mubr.f32.gmra.mxu0 %v3344
        %v3966 = vpop.f32.mrf.mxu0
        %v3967 = vadd.f32 0.0, %v3966
        %v3968 = vpop.f32.mrf.mxu0
        %3969 = vmatprep.mubr.f32.mxu0 0.0
        %3970 = vmatmul.mubr.f32.gmra.mxu0 %v3346
        %v3971 = vpop.f32.mrf.mxu0
        %v3972 = vadd.f32 0.0, %v3971
        %v3973 = vpop.f32.mrf.mxu0
        %3974 = vmatprep.mubr.f32.mxu0 0.0
        %3975 = vmatmul.mubr.f32.gmra.mxu0 %v3348
        %v3976 = vpop.f32.mrf.mxu0
        %v3977 = vadd.f32 0.0, %v3976
        %v3978 = vpop.f32.mrf.mxu0
        %3979 = vmatprep.mubr.f32.mxu0 0.0
        %3980 = vmatmul.mubr.f32.gmra.mxu0 %v3350
        %v3981 = vpop.f32.mrf.mxu0
        %v3982 = vadd.f32 0.0, %v3981
        %v3983 = vpop.f32.mrf.mxu0
        %3984 = vmatprep.mubr.f32.mxu0 0.0
        %3985 = vmatmul.mubr.f32.gmra.mxu0 %v3352
        %v3986 = vpop.f32.mrf.mxu0
        %v3987 = vadd.f32 0.0, %v3986
        %v3988 = vpop.f32.mrf.mxu0
        %3989 = vmatprep.mubr.f32.mxu0 0.0
        %3990 = vmatmul.mubr.f32.gmra.mxu0 %v3354
        %v3991 = vpop.f32.mrf.mxu0
        %v3992 = vadd.f32 0.0, %v3991
        %v3993 = vpop.f32.mrf.mxu0
        %3994 = vmatprep.mubr.f32.mxu0 0.0
        %3995 = vmatmul.mubr.f32.gmra.mxu0 %v3356
        %v3996 = vpop.f32.mrf.mxu0
        %v3997 = vadd.f32 0.0, %v3996
        %v3998 = vpop.f32.mrf.mxu0
        %3999 = vmatprep.mubr.f32.mxu0 0.0
        %4000 = vmatmul.mubr.f32.gmra.mxu0 %v3358
        %v4001 = vpop.f32.mrf.mxu0
        %v4002 = vadd.f32 0.0, %v4001
        %v4003 = vpop.f32.mrf.mxu0
        %4004 = vmatprep.mubr.f32.mxu0 0.0
        %4005 = vmatmul.mubr.f32.gmra.mxu0 %v3360
        %v4006 = vpop.f32.mrf.mxu0
        %v4007 = vadd.f32 0.0, %v4006
        %v4008 = vpop.f32.mrf.mxu0
        %4009 = vmatprep.mubr.f32.mxu0 0.0
        %4010 = vmatmul.mubr.f32.gmra.mxu0 %v3362
        %v4011 = vpop.f32.mrf.mxu0
        %v4012 = vadd.f32 0.0, %v4011
        %v4013 = vpop.f32.mrf.mxu0
        %4014 = vmatprep.mubr.f32.mxu0 0.0
        %4015 = vmatmul.mubr.f32.gmra.mxu0 %v3364
        %v4016 = vpop.f32.mrf.mxu0
        %v4017 = vadd.f32 0.0, %v4016
        %v4018 = vpop.f32.mrf.mxu0
        %4019 = vmatprep.mubr.f32.mxu0 0.0
        %4020 = vmatmul.mubr.f32.gmra.mxu0 %v3366
        %v4021 = vpop.f32.mrf.mxu0
        %v4022 = vadd.f32 0.0, %v4021
        %v4023 = vpop.f32.mrf.mxu0
        %4024 = vmatprep.mubr.f32.mxu0 0.0
        %4025 = vmatmul.mubr.f32.gmra.mxu0 %v3368
        %v4026 = vpop.f32.mrf.mxu0
        %v4027 = vadd.f32 0.0, %v4026
        %v4028 = vpop.f32.mrf.mxu0
        %4029 = vmatprep.mubr.f32.mxu0 0.0
        %4030 = vmatmul.mubr.f32.gmra.mxu0 %v3370
        %v4031 = vpop.f32.mrf.mxu0
        %v4032 = vadd.f32 0.0, %v4031
        %v4033 = vpop.f32.mrf.mxu0
        %4034 = vmatprep.mubr.f32.mxu0 0.0
        %4035 = vmatmul.mubr.f32.gmra.mxu0 %v3372
        %v4036 = vpop.f32.mrf.mxu0
        %v4037 = vadd.f32 0.0, %v4036
        %v4038 = vpop.f32.mrf.mxu0
        %4039 = vmatprep.mubr.f32.mxu0 0.0
        %4040 = vmatmul.mubr.f32.gmra.mxu0 %v3374
        %v4041 = vpop.f32.mrf.mxu0
        %v4042 = vadd.f32 0.0, %v4041
        %v4043 = vpop.f32.mrf.mxu0
        %4044 = vmatprep.mubr.f32.mxu0 0.0
        %4045 = vmatmul.mubr.f32.gmra.mxu0 %v3376
        %v4046 = vpop.f32.mrf.mxu0
        %v4047 = vadd.f32 0.0, %v4046
        %v4048 = vpop.f32.mrf.mxu0
        %4049 = vmatprep.mubr.f32.mxu0 0.0
        %4050 = vmatmul.mubr.f32.gmra.mxu0 %v3378
        %v4051 = vpop.f32.mrf.mxu0
        %v4052 = vadd.f32 0.0, %v4051
        %v4053 = vpop.f32.mrf.mxu0
        %4054 = vmatprep.mubr.f32.mxu0 0.0
        %4055 = vmatmul.mubr.f32.gmra.mxu0 %v3380
        %v4056 = vpop.f32.mrf.mxu0
        %v4057 = vadd.f32 0.0, %v4056
        %v4058 = vpop.f32.mrf.mxu0
        %4059 = vmatprep.mubr.f32.mxu0 0.0
        %4060 = vmatmul.mubr.f32.gmra.mxu0 %v3382
        %v4061 = vpop.f32.mrf.mxu0
        %v4062 = vadd.f32 0.0, %v4061
        %v4063 = vpop.f32.mrf.mxu0
        %4064 = vmatprep.mubr.f32.mxu0 0.0
        %4065 = vmatmul.mubr.f32.gmra.mxu0 %v3384
        %v4066 = vpop.f32.mrf.mxu0
        %v4067 = vadd.f32 0.0, %v4066
        %v4068 = vpop.f32.mrf.mxu0
        %4069 = vmatprep.mubr.f32.mxu0 0.0
        %4070 = vmatmul.mubr.f32.gmra.mxu0 %v3386
        %v4071 = vpop.f32.mrf.mxu0
        %v4072 = vadd.f32 0.0, %v4071
        %v4073 = vpop.f32.mrf.mxu0
        %4074 = vmatprep.mubr.f32.mxu0 0.0
        %4075 = vmatmul.mubr.f32.gmra.mxu0 %v3388
        %v4076 = vpop.f32.mrf.mxu0
        %v4077 = vadd.f32 0.0, %v4076
        %v4078 = vpop.f32.mrf.mxu0
        %4079 = vmatprep.mubr.f32.mxu0 0.0
        %4080 = vmatmul.mubr.f32.gmra.mxu0 %v3390
        %v4081 = vpop.f32.mrf.mxu0
        %v4082 = vadd.f32 0.0, %v4081
        %v4083 = vpop.f32.mrf.mxu0
        %4084 = vmatprep.mubr.f32.mxu0 0.0
        %4085 = vmatmul.mubr.f32.gmra.mxu0 %v3392
        %v4086 = vpop.f32.mrf.mxu0
        %v4087 = vadd.f32 0.0, %v4086
        %v4088 = vpop.f32.mrf.mxu0
        %4089 = vmatprep.mubr.f32.mxu0 0.0
        %4090 = vmatmul.mubr.f32.gmra.mxu0 %v3394
        %v4091 = vpop.f32.mrf.mxu0
        %v4092 = vadd.f32 0.0, %v4091
        %v4093 = vpop.f32.mrf.mxu0
        %4094 = vmatprep.mubr.f32.mxu0 0.0
        %4095 = vmatmul.mubr.f32.gmra.mxu0 %v3396
        %v4096 = vpop.f32.mrf.mxu0
        %v4097 = vadd.f32 0.0, %v4096
        %v4098 = vpop.f32.mrf.mxu0
        %4099 = vmatprep.mubr.f32.mxu0 0.0
        %4100 = vmatmul.mubr.f32.gmra.mxu0 %v3398
        %v4101 = vpop.f32.mrf.mxu0
        %v4102 = vadd.f32 0.0, %v4101
        %v4103 = vpop.f32.mrf.mxu0
        %4104 = vmatprep.mubr.f32.mxu0 0.0
        %4105 = vmatmul.mubr.f32.gmra.mxu0 %v3400
        %v4106 = vpop.f32.mrf.mxu0
        %v4107 = vadd.f32 0.0, %v4106
        %v4108 = vpop.f32.mrf.mxu0
        %4109 = vdwg.mxu0
        %v4110 = vadd.f32 %v2217, %v3472
        %v4111 = vadd.f32 %v2222, %v3477
        %v4112 = vadd.f32 %v2227, %v3482
        %v4113 = vadd.f32 %v2232, %v3487
        %v4114 = vadd.f32 %v2237, %v3492
        %v4115 = vadd.f32 %v2242, %v3497
        %v4116 = vadd.f32 %v2247, %v3502
        %v4117 = vadd.f32 %v2252, %v3507
        %v4118 = vadd.f32 %v2257, %v3512
        %v4119 = vadd.f32 %v2262, %v3517
        %v4120 = vadd.f32 %v2267, %v3522
        %v4121 = vadd.f32 %v2272, %v3527
        %v4122 = vadd.f32 %v2277, %v3532
        %v4123 = vadd.f32 %v2282, %v3537
        %v4124 = vadd.f32 %v2287, %v3542
        %v4125 = vadd.f32 %v2292, %v3547
        %v4126 = vadd.f32 %v2297, %v3552
        %v4127 = vadd.f32 %v2302, %v3557
        %v4128 = vadd.f32 %v2307, %v3562
        %v4129 = vadd.f32 %v2312, %v3567
        %v4130 = vadd.f32 %v2317, %v3572
        %v4131 = vadd.f32 %v2322, %v3577
        %v4132 = vadd.f32 %v2327, %v3582
        %v4133 = vadd.f32 %v2332, %v3587
        %v4134 = vadd.f32 %v2337, %v3592
        %v4135 = vadd.f32 %v2342, %v3597
        %v4136 = vadd.f32 %v2347, %v3602
        %v4137 = vadd.f32 %v2352, %v3607
        %v4138 = vadd.f32 %v2357, %v3612
        %v4139 = vadd.f32 %v2362, %v3617
        %v4140 = vadd.f32 %v2367, %v3622
        %v4141 = vadd.f32 %v2372, %v3627
        %v4142 = vadd.f32 %v2377, %v3632
        %v4143 = vadd.f32 %v2382, %v3637
        %v4144 = vadd.f32 %v2387, %v3642
        %v4145 = vadd.f32 %v2392, %v3647
        %v4146 = vadd.f32 %v2397, %v3652
        %v4147 = vadd.f32 %v2402, %v3657
        %v4148 = vadd.f32 %v2407, %v3662
        %v4149 = vadd.f32 %v2412, %v3667
        %v4150 = vadd.f32 %v2417, %v3672
        %v4151 = vadd.f32 %v2422, %v3677
        %v4152 = vadd.f32 %v2427, %v3682
        %v4153 = vadd.f32 %v2432, %v3687
        %v4154 = vadd.f32 %v2437, %v3692
        %v4155 = vadd.f32 %v2442, %v3697
        %v4156 = vadd.f32 %v2447, %v3702
        %v4157 = vadd.f32 %v2452, %v3707
        %v4158 = vadd.f32 %v2457, %v3712
        %v4159 = vadd.f32 %v2462, %v3717
        %v4160 = vadd.f32 %v2467, %v3722
        %v4161 = vadd.f32 %v2472, %v3727
        %v4162 = vadd.f32 %v2477, %v3732
        %v4163 = vadd.f32 %v2482, %v3737
        %v4164 = vadd.f32 %v2487, %v3742
        %v4165 = vadd.f32 %v2492, %v3747
        %v4166 = vadd.f32 %v2497, %v3752
        %v4167 = vadd.f32 %v2502, %v3757
        %v4168 = vadd.f32 %v2507, %v3762
        %v4169 = vadd.f32 %v2512, %v3767
        %v4170 = vadd.f32 %v2517, %v3772
        %v4171 = vadd.f32 %v2522, %v3777
        %v4172 = vadd.f32 %v2527, %v3782
        %v4173 = vadd.f32 %v2532, %v3787
        %v4174 = vadd.f32 %v2537, %v3792
        %v4175 = vadd.f32 %v2542, %v3797
        %v4176 = vadd.f32 %v2547, %v3802
        %v4177 = vadd.f32 %v2552, %v3807
        %v4178 = vadd.f32 %v2557, %v3812
        %v4179 = vadd.f32 %v2562, %v3817
        %v4180 = vadd.f32 %v2567, %v3822
        %v4181 = vadd.f32 %v2572, %v3827
        %v4182 = vadd.f32 %v2577, %v3832
        %v4183 = vadd.f32 %v2582, %v3837
        %v4184 = vadd.f32 %v2587, %v3842
        %v4185 = vadd.f32 %v2592, %v3847
        %v4186 = vadd.f32 %v2597, %v3852
        %v4187 = vadd.f32 %v2602, %v3857
        %v4188 = vadd.f32 %v2607, %v3862
        %v4189 = vadd.f32 %v2612, %v3867
        %v4190 = vadd.f32 %v2617, %v3872
        %v4191 = vadd.f32 %v2622, %v3877
        %v4192 = vadd.f32 %v2627, %v3882
        %v4193 = vadd.f32 %v2632, %v3887
        %v4194 = vadd.f32 %v2637, %v3892
        %v4195 = vadd.f32 %v2642, %v3897
        %v4196 = vadd.f32 %v2647, %v3902
        %v4197 = vadd.f32 %v2652, %v3907
        %v4198 = vadd.f32 %v2657, %v3912
        %v4199 = vadd.f32 %v2662, %v3917
        %v4200 = vadd.f32 %v2667, %v3922
        %v4201 = vadd.f32 %v2672, %v3927
        %v4202 = vadd.f32 %v2677, %v3932
        %v4203 = vadd.f32 %v2682, %v3937
        %v4204 = vadd.f32 %v2687, %v3942
        %v4205 = vadd.f32 %v2692, %v3947
        %v4206 = vadd.f32 %v2697, %v3952
        %v4207 = vadd.f32 %v2702, %v3957
        %v4208 = vadd.f32 %v2707, %v3962
        %v4209 = vadd.f32 %v2712, %v3967
        %v4210 = vadd.f32 %v2717, %v3972
        %v4211 = vadd.f32 %v2722, %v3977
        %v4212 = vadd.f32 %v2727, %v3982
        %v4213 = vadd.f32 %v2732, %v3987
        %v4214 = vadd.f32 %v2737, %v3992
        %v4215 = vadd.f32 %v2742, %v3997
        %v4216 = vadd.f32 %v2747, %v4002
        %v4217 = vadd.f32 %v2752, %v4007
        %v4218 = vadd.f32 %v2757, %v4012
        %v4219 = vadd.f32 %v2762, %v4017
        %v4220 = vadd.f32 %v2767, %v4022
        %v4221 = vadd.f32 %v2772, %v4027
        %v4222 = vadd.f32 %v2777, %v4032
        %v4223 = vadd.f32 %v2782, %v4037
        %v4224 = vadd.f32 %v2787, %v4042
        %v4225 = vadd.f32 %v2792, %v4047
        %v4226 = vadd.f32 %v2797, %v4052
        %v4227 = vadd.f32 %v2802, %v4057
        %v4228 = vadd.f32 %v2807, %v4062
        %v4229 = vadd.f32 %v2812, %v4067
        %v4230 = vadd.f32 %v2817, %v4072
        %v4231 = vadd.f32 %v2822, %v4077
        %v4232 = vadd.f32 %v2827, %v4082
        %v4233 = vadd.f32 %v2832, %v4087
        %v4234 = vadd.f32 %v2837, %v4092
        %v4235 = vadd.f32 %v2842, %v4097
        %v4236 = vadd.f32 %v2847, %v4102
        %v4237 = vadd.f32 %v2852, %v4107
        %s4238 = scalar_lea.vmem %s1, 12
        %v4239 = vld [vmem:[%s4238] sm:$0x7]
        %v4241 = vsel %vm925, %v463, 0
        %v4244 = vsel %vm925, %v464, 0
        %v4247 = vsel %vm925, %v465, 0
        %v4250 = vsel %vm925, %v466, 0
        %v4253 = vsel %vm1182, %v4239, 0
        %4255 = vmatprep.subr.mxu0 0.0
        %4256 = vmatpush1.msra.mxu0 0.0
        %4257 = vmatprep.subr.mxu0 0.0
        %4258 = vmatpush1.msra.mxu0 0.0
        %4259 = vmatprep.subr.mxu0 0.0
        %4260 = vmatpush1.msra.mxu0 0.0
        %4261 = vmatprep.subr.mxu0 0.0
        %4262 = vmatpush1.msra.mxu0 0.0
        %4263 = vmatprep.subr.mxu0 0.0
        %4264 = vmatpush1.msra.mxu0 0.0
        %4265 = vmatprep.subr.mxu0 0.0
        %4266 = vmatpush1.msra.mxu0 0.0
        %4267 = vmatprep.subr.mxu0 0.0
        %4268 = vmatpush1.msra.mxu0 0.0
        %4269 = vmatprep.subr.mxu0 0.0
        %4270 = vmatpush1.msra.mxu0 0.0
        %4271 = vmatprep.subr.mxu0 0.0
        %4272 = vmatpush1.msra.mxu0 0.0
        %4273 = vmatprep.subr.mxu0 0.0
        %4274 = vmatpush1.msra.mxu0 0.0
        %4275 = vmatprep.subr.mxu0 0.0
        %4276 = vmatpush1.msra.mxu0 0.0
        %4277 = vmatprep.subr.mxu0 0.0
        %4278 = vmatpush1.msra.mxu0 0.0
        %4279 = vmatprep.subr.mxu0 0.0
        %4280 = vmatpush1.msra.mxu0 0.0
        %4281 = vmatprep.subr.mxu0 0.0
        %4282 = vmatpush1.msra.mxu0 0.0
        %4283 = vmatprep.subr.mxu0 0.0
        %4284 = vmatpush1.msra.mxu0 0.0
        %4285 = vmatprep.subr.mxu0 0.0
        %4286 = vmatpush1.msra.mxu0 %v4253
        %4287 = vmatprep.subr.mxu0 0.0
        %4288 = vmatpush2.msra.mxu0 0.0
        %4289 = vmatprep.subr.mxu0 0.0
        %4290 = vmatpush2.msra.mxu0 0.0
        %4291 = vmatprep.subr.mxu0 0.0
        %4292 = vmatpush2.msra.mxu0 0.0
        %4293 = vmatprep.subr.mxu0 0.0
        %4294 = vmatpush2.msra.mxu0 0.0
        %4295 = vmatprep.subr.mxu0 0.0
        %4296 = vmatpush2.msra.mxu0 0.0
        %4297 = vmatprep.subr.mxu0 0.0
        %4298 = vmatpush2.msra.mxu0 0.0
        %4299 = vmatprep.subr.mxu0 0.0
        %4300 = vmatpush2.msra.mxu0 0.0
        %4301 = vmatprep.subr.mxu0 0.0
        %4302 = vmatpush2.msra.mxu0 0.0
        %4303 = vmatprep.subr.mxu0 0.0
        %4304 = vmatpush2.msra.mxu0 0.0
        %4305 = vmatprep.subr.mxu0 0.0
        %4306 = vmatpush2.msra.mxu0 0.0
        %4307 = vmatprep.subr.mxu0 0.0
        %4308 = vmatpush2.msra.mxu0 0.0
        %4309 = vmatprep.subr.mxu0 0.0
        %4310 = vmatpush2.msra.mxu0 0.0
        %4311 = vmatprep.subr.mxu0 0.0
        %4312 = vmatpush2.msra.mxu0 0.0
        %4313 = vmatprep.subr.mxu0 0.0
        %4314 = vmatpush2.msra.mxu0 0.0
        %4315 = vmatprep.subr.mxu0 0.0
        %4316 = vmatpush2.msra.mxu0 0.0
        %4317 = vmatprep.subr.mxu0 0.0
        %4318 = vmatpush2.msra.mxu0 0.0
        %4319 = vmatprep.mubr.f32.mxu0 0.0
        %4320 = vmatmul.mubr.f32.gmra.mxu0 %v1899
        %v4321 = vpop.f32.mrf.mxu0
        %v4322 = vadd.f32 0.0, %v4321
        %v4323 = vpop.f32.mrf.mxu0
        %4324 = vmatprep.mubr.f32.mxu0 0.0
        %4325 = vmatmul.mubr.f32.gmra.mxu0 %v1901
        %v4326 = vpop.f32.mrf.mxu0
        %v4327 = vadd.f32 0.0, %v4326
        %v4328 = vpop.f32.mrf.mxu0
        %4329 = vmatprep.mubr.f32.mxu0 0.0
        %4330 = vmatmul.mubr.f32.gmra.mxu0 %v1903
        %v4331 = vpop.f32.mrf.mxu0
        %v4332 = vadd.f32 0.0, %v4331
        %v4333 = vpop.f32.mrf.mxu0
        %4334 = vmatprep.mubr.f32.mxu0 0.0
        %4335 = vmatmul.mubr.f32.gmra.mxu0 %v1905
        %v4336 = vpop.f32.mrf.mxu0
        %v4337 = vadd.f32 0.0, %v4336
        %v4338 = vpop.f32.mrf.mxu0
        %4339 = vmatprep.mubr.f32.mxu0 0.0
        %4340 = vmatmul.mubr.f32.gmra.mxu0 %v1907
        %v4341 = vpop.f32.mrf.mxu0
        %v4342 = vadd.f32 0.0, %v4341
        %v4343 = vpop.f32.mrf.mxu0
        %4344 = vmatprep.mubr.f32.mxu0 0.0
        %4345 = vmatmul.mubr.f32.gmra.mxu0 %v1909
        %v4346 = vpop.f32.mrf.mxu0
        %v4347 = vadd.f32 0.0, %v4346
        %v4348 = vpop.f32.mrf.mxu0
        %4349 = vmatprep.mubr.f32.mxu0 0.0
        %4350 = vmatmul.mubr.f32.gmra.mxu0 %v1911
        %v4351 = vpop.f32.mrf.mxu0
        %v4352 = vadd.f32 0.0, %v4351
        %v4353 = vpop.f32.mrf.mxu0
        %4354 = vmatprep.mubr.f32.mxu0 0.0
        %4355 = vmatmul.mubr.f32.gmra.mxu0 %v1913
        %v4356 = vpop.f32.mrf.mxu0
        %v4357 = vadd.f32 0.0, %v4356
        %v4358 = vpop.f32.mrf.mxu0
        %4359 = vmatprep.mubr.f32.mxu0 0.0
        %4360 = vmatmul.mubr.f32.gmra.mxu0 %v1915
        %v4361 = vpop.f32.mrf.mxu0
        %v4362 = vadd.f32 0.0, %v4361
        %v4363 = vpop.f32.mrf.mxu0
        %4364 = vmatprep.mubr.f32.mxu0 0.0
        %4365 = vmatmul.mubr.f32.gmra.mxu0 %v1917
        %v4366 = vpop.f32.mrf.mxu0
        %v4367 = vadd.f32 0.0, %v4366
        %v4368 = vpop.f32.mrf.mxu0
        %4369 = vmatprep.mubr.f32.mxu0 0.0
        %4370 = vmatmul.mubr.f32.gmra.mxu0 %v1919
        %v4371 = vpop.f32.mrf.mxu0
        %v4372 = vadd.f32 0.0, %v4371
        %v4373 = vpop.f32.mrf.mxu0
        %4374 = vmatprep.mubr.f32.mxu0 0.0
        %4375 = vmatmul.mubr.f32.gmra.mxu0 %v1921
        %v4376 = vpop.f32.mrf.mxu0
        %v4377 = vadd.f32 0.0, %v4376
        %v4378 = vpop.f32.mrf.mxu0
        %4379 = vmatprep.mubr.f32.mxu0 0.0
        %4380 = vmatmul.mubr.f32.gmra.mxu0 %v1923
        %v4381 = vpop.f32.mrf.mxu0
        %v4382 = vadd.f32 0.0, %v4381
        %v4383 = vpop.f32.mrf.mxu0
        %4384 = vmatprep.mubr.f32.mxu0 0.0
        %4385 = vmatmul.mubr.f32.gmra.mxu0 %v1925
        %v4386 = vpop.f32.mrf.mxu0
        %v4387 = vadd.f32 0.0, %v4386
        %v4388 = vpop.f32.mrf.mxu0
        %4389 = vmatprep.mubr.f32.mxu0 0.0
        %4390 = vmatmul.mubr.f32.gmra.mxu0 %v1927
        %v4391 = vpop.f32.mrf.mxu0
        %v4392 = vadd.f32 0.0, %v4391
        %v4393 = vpop.f32.mrf.mxu0
        %4394 = vmatprep.mubr.f32.mxu0 0.0
        %4395 = vmatmul.mubr.f32.gmra.mxu0 %v1929
        %v4396 = vpop.f32.mrf.mxu0
        %v4397 = vadd.f32 0.0, %v4396
        %v4398 = vpop.f32.mrf.mxu0
        %4399 = vmatprep.mubr.f32.mxu0 0.0
        %4400 = vmatmul.mubr.f32.gmra.mxu0 %v1931
        %v4401 = vpop.f32.mrf.mxu0
        %v4402 = vadd.f32 0.0, %v4401
        %v4403 = vpop.f32.mrf.mxu0
        %4404 = vmatprep.mubr.f32.mxu0 0.0
        %4405 = vmatmul.mubr.f32.gmra.mxu0 %v1933
        %v4406 = vpop.f32.mrf.mxu0
        %v4407 = vadd.f32 0.0, %v4406
        %v4408 = vpop.f32.mrf.mxu0
        %4409 = vmatprep.mubr.f32.mxu0 0.0
        %4410 = vmatmul.mubr.f32.gmra.mxu0 %v1935
        %v4411 = vpop.f32.mrf.mxu0
        %v4412 = vadd.f32 0.0, %v4411
        %v4413 = vpop.f32.mrf.mxu0
        %4414 = vmatprep.mubr.f32.mxu0 0.0
        %4415 = vmatmul.mubr.f32.gmra.mxu0 %v1937
        %v4416 = vpop.f32.mrf.mxu0
        %v4417 = vadd.f32 0.0, %v4416
        %v4418 = vpop.f32.mrf.mxu0
        %4419 = vmatprep.mubr.f32.mxu0 0.0
        %4420 = vmatmul.mubr.f32.gmra.mxu0 %v1939
        %v4421 = vpop.f32.mrf.mxu0
        %v4422 = vadd.f32 0.0, %v4421
        %v4423 = vpop.f32.mrf.mxu0
        %4424 = vmatprep.mubr.f32.mxu0 0.0
        %4425 = vmatmul.mubr.f32.gmra.mxu0 %v1941
        %v4426 = vpop.f32.mrf.mxu0
        %v4427 = vadd.f32 0.0, %v4426
        %v4428 = vpop.f32.mrf.mxu0
        %4429 = vmatprep.mubr.f32.mxu0 0.0
        %4430 = vmatmul.mubr.f32.gmra.mxu0 %v1943
        %v4431 = vpop.f32.mrf.mxu0
        %v4432 = vadd.f32 0.0, %v4431
        %v4433 = vpop.f32.mrf.mxu0
        %4434 = vmatprep.mubr.f32.mxu0 0.0
        %4435 = vmatmul.mubr.f32.gmra.mxu0 %v1945
        %v4436 = vpop.f32.mrf.mxu0
        %v4437 = vadd.f32 0.0, %v4436
        %v4438 = vpop.f32.mrf.mxu0
        %4439 = vmatprep.mubr.f32.mxu0 0.0
        %4440 = vmatmul.mubr.f32.gmra.mxu0 %v1947
        %v4441 = vpop.f32.mrf.mxu0
        %v4442 = vadd.f32 0.0, %v4441
        %v4443 = vpop.f32.mrf.mxu0
        %4444 = vmatprep.mubr.f32.mxu0 0.0
        %4445 = vmatmul.mubr.f32.gmra.mxu0 %v1949
        %v4446 = vpop.f32.mrf.mxu0
        %v4447 = vadd.f32 0.0, %v4446
        %v4448 = vpop.f32.mrf.mxu0
        %4449 = vmatprep.mubr.f32.mxu0 0.0
        %4450 = vmatmul.mubr.f32.gmra.mxu0 %v1951
        %v4451 = vpop.f32.mrf.mxu0
        %v4452 = vadd.f32 0.0, %v4451
        %v4453 = vpop.f32.mrf.mxu0
        %4454 = vmatprep.mubr.f32.mxu0 0.0
        %4455 = vmatmul.mubr.f32.gmra.mxu0 %v1953
        %v4456 = vpop.f32.mrf.mxu0
        %v4457 = vadd.f32 0.0, %v4456
        %v4458 = vpop.f32.mrf.mxu0
        %4459 = vmatprep.mubr.f32.mxu0 0.0
        %4460 = vmatmul.mubr.f32.gmra.mxu0 %v1955
        %v4461 = vpop.f32.mrf.mxu0
        %v4462 = vadd.f32 0.0, %v4461
        %v4463 = vpop.f32.mrf.mxu0
        %4464 = vmatprep.mubr.f32.mxu0 0.0
        %4465 = vmatmul.mubr.f32.gmra.mxu0 %v1957
        %v4466 = vpop.f32.mrf.mxu0
        %v4467 = vadd.f32 0.0, %v4466
        %v4468 = vpop.f32.mrf.mxu0
        %4469 = vmatprep.mubr.f32.mxu0 0.0
        %4470 = vmatmul.mubr.f32.gmra.mxu0 %v1959
        %v4471 = vpop.f32.mrf.mxu0
        %v4472 = vadd.f32 0.0, %v4471
        %v4473 = vpop.f32.mrf.mxu0
        %4474 = vmatprep.mubr.f32.mxu0 0.0
        %4475 = vmatmul.mubr.f32.gmra.mxu0 %v1961
        %v4476 = vpop.f32.mrf.mxu0
        %v4477 = vadd.f32 0.0, %v4476
        %v4478 = vpop.f32.mrf.mxu0
        %4479 = vmatprep.mubr.f32.mxu0 0.0
        %4480 = vmatmul.mubr.f32.gmra.mxu0 %v1963
        %v4481 = vpop.f32.mrf.mxu0
        %v4482 = vadd.f32 0.0, %v4481
        %v4483 = vpop.f32.mrf.mxu0
        %4484 = vmatprep.mubr.f32.mxu0 0.0
        %4485 = vmatmul.mubr.f32.gmra.mxu0 %v1965
        %v4486 = vpop.f32.mrf.mxu0
        %v4487 = vadd.f32 0.0, %v4486
        %v4488 = vpop.f32.mrf.mxu0
        %4489 = vmatprep.mubr.f32.mxu0 0.0
        %4490 = vmatmul.mubr.f32.gmra.mxu0 %v1967
        %v4491 = vpop.f32.mrf.mxu0
        %v4492 = vadd.f32 0.0, %v4491
        %v4493 = vpop.f32.mrf.mxu0
        %4494 = vmatprep.mubr.f32.mxu0 0.0
        %4495 = vmatmul.mubr.f32.gmra.mxu0 %v1969
        %v4496 = vpop.f32.mrf.mxu0
        %v4497 = vadd.f32 0.0, %v4496
        %v4498 = vpop.f32.mrf.mxu0
        %4499 = vmatprep.mubr.f32.mxu0 0.0
        %4500 = vmatmul.mubr.f32.gmra.mxu0 %v1971
        %v4501 = vpop.f32.mrf.mxu0
        %v4502 = vadd.f32 0.0, %v4501
        %v4503 = vpop.f32.mrf.mxu0
        %4504 = vmatprep.mubr.f32.mxu0 0.0
        %4505 = vmatmul.mubr.f32.gmra.mxu0 %v1973
        %v4506 = vpop.f32.mrf.mxu0
        %v4507 = vadd.f32 0.0, %v4506
        %v4508 = vpop.f32.mrf.mxu0
        %4509 = vmatprep.mubr.f32.mxu0 0.0
        %4510 = vmatmul.mubr.f32.gmra.mxu0 %v1975
        %v4511 = vpop.f32.mrf.mxu0
        %v4512 = vadd.f32 0.0, %v4511
        %v4513 = vpop.f32.mrf.mxu0
        %4514 = vmatprep.mubr.f32.mxu0 0.0
        %4515 = vmatmul.mubr.f32.gmra.mxu0 %v1977
        %v4516 = vpop.f32.mrf.mxu0
        %v4517 = vadd.f32 0.0, %v4516
        %v4518 = vpop.f32.mrf.mxu0
        %4519 = vmatprep.mubr.f32.mxu0 0.0
        %4520 = vmatmul.mubr.f32.gmra.mxu0 %v1979
        %v4521 = vpop.f32.mrf.mxu0
        %v4522 = vadd.f32 0.0, %v4521
        %v4523 = vpop.f32.mrf.mxu0
        %4524 = vmatprep.mubr.f32.mxu0 0.0
        %4525 = vmatmul.mubr.f32.gmra.mxu0 %v1981
        %v4526 = vpop.f32.mrf.mxu0
        %v4527 = vadd.f32 0.0, %v4526
        %v4528 = vpop.f32.mrf.mxu0
        %4529 = vmatprep.mubr.f32.mxu0 0.0
        %4530 = vmatmul.mubr.f32.gmra.mxu0 %v1983
        %v4531 = vpop.f32.mrf.mxu0
        %v4532 = vadd.f32 0.0, %v4531
        %v4533 = vpop.f32.mrf.mxu0
        %4534 = vmatprep.mubr.f32.mxu0 0.0
        %4535 = vmatmul.mubr.f32.gmra.mxu0 %v1985
        %v4536 = vpop.f32.mrf.mxu0
        %v4537 = vadd.f32 0.0, %v4536
        %v4538 = vpop.f32.mrf.mxu0
        %4539 = vmatprep.mubr.f32.mxu0 0.0
        %4540 = vmatmul.mubr.f32.gmra.mxu0 %v1987
        %v4541 = vpop.f32.mrf.mxu0
        %v4542 = vadd.f32 0.0, %v4541
        %v4543 = vpop.f32.mrf.mxu0
        %4544 = vmatprep.mubr.f32.mxu0 0.0
        %4545 = vmatmul.mubr.f32.gmra.mxu0 %v1989
        %v4546 = vpop.f32.mrf.mxu0
        %v4547 = vadd.f32 0.0, %v4546
        %v4548 = vpop.f32.mrf.mxu0
        %4549 = vmatprep.mubr.f32.mxu0 0.0
        %4550 = vmatmul.mubr.f32.gmra.mxu0 %v1991
        %v4551 = vpop.f32.mrf.mxu0
        %v4552 = vadd.f32 0.0, %v4551
        %v4553 = vpop.f32.mrf.mxu0
        %4554 = vmatprep.mubr.f32.mxu0 0.0
        %4555 = vmatmul.mubr.f32.gmra.mxu0 %v1993
        %v4556 = vpop.f32.mrf.mxu0
        %v4557 = vadd.f32 0.0, %v4556
        %v4558 = vpop.f32.mrf.mxu0
        %4559 = vmatprep.mubr.f32.mxu0 0.0
        %4560 = vmatmul.mubr.f32.gmra.mxu0 %v1995
        %v4561 = vpop.f32.mrf.mxu0
        %v4562 = vadd.f32 0.0, %v4561
        %v4563 = vpop.f32.mrf.mxu0
        %4564 = vmatprep.mubr.f32.mxu0 0.0
        %4565 = vmatmul.mubr.f32.gmra.mxu0 %v1997
        %v4566 = vpop.f32.mrf.mxu0
        %v4567 = vadd.f32 0.0, %v4566
        %v4568 = vpop.f32.mrf.mxu0
        %4569 = vmatprep.mubr.f32.mxu0 0.0
        %4570 = vmatmul.mubr.f32.gmra.mxu0 %v1999
        %v4571 = vpop.f32.mrf.mxu0
        %v4572 = vadd.f32 0.0, %v4571
        %v4573 = vpop.f32.mrf.mxu0
        %4574 = vmatprep.mubr.f32.mxu0 0.0
        %4575 = vmatmul.mubr.f32.gmra.mxu0 %v2001
        %v4576 = vpop.f32.mrf.mxu0
        %v4577 = vadd.f32 0.0, %v4576
        %v4578 = vpop.f32.mrf.mxu0
        %4579 = vmatprep.mubr.f32.mxu0 0.0
        %4580 = vmatmul.mubr.f32.gmra.mxu0 %v2003
        %v4581 = vpop.f32.mrf.mxu0
        %v4582 = vadd.f32 0.0, %v4581
        %v4583 = vpop.f32.mrf.mxu0
        %4584 = vmatprep.mubr.f32.mxu0 0.0
        %4585 = vmatmul.mubr.f32.gmra.mxu0 %v2005
        %v4586 = vpop.f32.mrf.mxu0
        %v4587 = vadd.f32 0.0, %v4586
        %v4588 = vpop.f32.mrf.mxu0
        %4589 = vmatprep.mubr.f32.mxu0 0.0
        %4590 = vmatmul.mubr.f32.gmra.mxu0 %v2007
        %v4591 = vpop.f32.mrf.mxu0
        %v4592 = vadd.f32 0.0, %v4591
        %v4593 = vpop.f32.mrf.mxu0
        %4594 = vmatprep.mubr.f32.mxu0 0.0
        %4595 = vmatmul.mubr.f32.gmra.mxu0 %v2009
        %v4596 = vpop.f32.mrf.mxu0
        %v4597 = vadd.f32 0.0, %v4596
        %v4598 = vpop.f32.mrf.mxu0
        %4599 = vmatprep.mubr.f32.mxu0 0.0
        %4600 = vmatmul.mubr.f32.gmra.mxu0 %v2011
        %v4601 = vpop.f32.mrf.mxu0
        %v4602 = vadd.f32 0.0, %v4601
        %v4603 = vpop.f32.mrf.mxu0
        %4604 = vmatprep.mubr.f32.mxu0 0.0
        %4605 = vmatmul.mubr.f32.gmra.mxu0 %v2013
        %v4606 = vpop.f32.mrf.mxu0
        %v4607 = vadd.f32 0.0, %v4606
        %v4608 = vpop.f32.mrf.mxu0
        %4609 = vmatprep.mubr.f32.mxu0 0.0
        %4610 = vmatmul.mubr.f32.gmra.mxu0 %v2015
        %v4611 = vpop.f32.mrf.mxu0
        %v4612 = vadd.f32 0.0, %v4611
        %v4613 = vpop.f32.mrf.mxu0
        %4614 = vmatprep.mubr.f32.mxu0 0.0
        %4615 = vmatmul.mubr.f32.gmra.mxu0 %v2017
        %v4616 = vpop.f32.mrf.mxu0
        %v4617 = vadd.f32 0.0, %v4616
        %v4618 = vpop.f32.mrf.mxu0
        %4619 = vmatprep.mubr.f32.mxu0 0.0
        %4620 = vmatmul.mubr.f32.gmra.mxu0 %v2019
        %v4621 = vpop.f32.mrf.mxu0
        %v4622 = vadd.f32 0.0, %v4621
        %v4623 = vpop.f32.mrf.mxu0
        %4624 = vmatprep.mubr.f32.mxu0 0.0
        %4625 = vmatmul.mubr.f32.gmra.mxu0 %v2021
        %v4626 = vpop.f32.mrf.mxu0
        %v4627 = vadd.f32 0.0, %v4626
        %v4628 = vpop.f32.mrf.mxu0
        %4629 = vmatprep.mubr.f32.mxu0 0.0
        %4630 = vmatmul.mubr.f32.gmra.mxu0 %v2023
        %v4631 = vpop.f32.mrf.mxu0
        %v4632 = vadd.f32 0.0, %v4631
        %v4633 = vpop.f32.mrf.mxu0
        %4634 = vmatprep.mubr.f32.mxu0 0.0
        %4635 = vmatmul.mubr.f32.gmra.mxu0 %v2025
        %v4636 = vpop.f32.mrf.mxu0
        %v4637 = vadd.f32 0.0, %v4636
        %v4638 = vpop.f32.mrf.mxu0
        %4639 = vmatprep.mubr.f32.mxu0 0.0
        %4640 = vmatmul.mubr.f32.gmra.mxu0 %v2027
        %v4641 = vpop.f32.mrf.mxu0
        %v4642 = vadd.f32 0.0, %v4641
        %v4643 = vpop.f32.mrf.mxu0
        %4644 = vmatprep.mubr.f32.mxu0 0.0
        %4645 = vmatmul.mubr.f32.gmra.mxu0 %v2029
        %v4646 = vpop.f32.mrf.mxu0
        %v4647 = vadd.f32 0.0, %v4646
        %v4648 = vpop.f32.mrf.mxu0
        %4649 = vmatprep.mubr.f32.mxu0 0.0
        %4650 = vmatmul.mubr.f32.gmra.mxu0 %v2031
        %v4651 = vpop.f32.mrf.mxu0
        %v4652 = vadd.f32 0.0, %v4651
        %v4653 = vpop.f32.mrf.mxu0
        %4654 = vmatprep.mubr.f32.mxu0 0.0
        %4655 = vmatmul.mubr.f32.gmra.mxu0 %v2033
        %v4656 = vpop.f32.mrf.mxu0
        %v4657 = vadd.f32 0.0, %v4656
        %v4658 = vpop.f32.mrf.mxu0
        %4659 = vmatprep.mubr.f32.mxu0 0.0
        %4660 = vmatmul.mubr.f32.gmra.mxu0 %v2035
        %v4661 = vpop.f32.mrf.mxu0
        %v4662 = vadd.f32 0.0, %v4661
        %v4663 = vpop.f32.mrf.mxu0
        %4664 = vmatprep.mubr.f32.mxu0 0.0
        %4665 = vmatmul.mubr.f32.gmra.mxu0 %v2037
        %v4666 = vpop.f32.mrf.mxu0
        %v4667 = vadd.f32 0.0, %v4666
        %v4668 = vpop.f32.mrf.mxu0
        %4669 = vmatprep.mubr.f32.mxu0 0.0
        %4670 = vmatmul.mubr.f32.gmra.mxu0 %v2039
        %v4671 = vpop.f32.mrf.mxu0
        %v4672 = vadd.f32 0.0, %v4671
        %v4673 = vpop.f32.mrf.mxu0
        %4674 = vmatprep.mubr.f32.mxu0 0.0
        %4675 = vmatmul.mubr.f32.gmra.mxu0 %v2041
        %v4676 = vpop.f32.mrf.mxu0
        %v4677 = vadd.f32 0.0, %v4676
        %v4678 = vpop.f32.mrf.mxu0
        %4679 = vmatprep.mubr.f32.mxu0 0.0
        %4680 = vmatmul.mubr.f32.gmra.mxu0 %v2043
        %v4681 = vpop.f32.mrf.mxu0
        %v4682 = vadd.f32 0.0, %v4681
        %v4683 = vpop.f32.mrf.mxu0
        %4684 = vmatprep.mubr.f32.mxu0 0.0
        %4685 = vmatmul.mubr.f32.gmra.mxu0 %v2045
        %v4686 = vpop.f32.mrf.mxu0
        %v4687 = vadd.f32 0.0, %v4686
        %v4688 = vpop.f32.mrf.mxu0
        %4689 = vmatprep.mubr.f32.mxu0 0.0
        %4690 = vmatmul.mubr.f32.gmra.mxu0 %v2047
        %v4691 = vpop.f32.mrf.mxu0
        %v4692 = vadd.f32 0.0, %v4691
        %v4693 = vpop.f32.mrf.mxu0
        %4694 = vmatprep.mubr.f32.mxu0 0.0
        %4695 = vmatmul.mubr.f32.gmra.mxu0 %v2049
        %v4696 = vpop.f32.mrf.mxu0
        %v4697 = vadd.f32 0.0, %v4696
        %v4698 = vpop.f32.mrf.mxu0
        %4699 = vmatprep.mubr.f32.mxu0 0.0
        %4700 = vmatmul.mubr.f32.gmra.mxu0 %v2051
        %v4701 = vpop.f32.mrf.mxu0
        %v4702 = vadd.f32 0.0, %v4701
        %v4703 = vpop.f32.mrf.mxu0
        %4704 = vmatprep.mubr.f32.mxu0 0.0
        %4705 = vmatmul.mubr.f32.gmra.mxu0 %v2053
        %v4706 = vpop.f32.mrf.mxu0
        %v4707 = vadd.f32 0.0, %v4706
        %v4708 = vpop.f32.mrf.mxu0
        %4709 = vmatprep.mubr.f32.mxu0 0.0
        %4710 = vmatmul.mubr.f32.gmra.mxu0 %v2055
        %v4711 = vpop.f32.mrf.mxu0
        %v4712 = vadd.f32 0.0, %v4711
        %v4713 = vpop.f32.mrf.mxu0
        %4714 = vmatprep.mubr.f32.mxu0 0.0
        %4715 = vmatmul.mubr.f32.gmra.mxu0 %v2057
        %v4716 = vpop.f32.mrf.mxu0
        %v4717 = vadd.f32 0.0, %v4716
        %v4718 = vpop.f32.mrf.mxu0
        %4719 = vmatprep.mubr.f32.mxu0 0.0
        %4720 = vmatmul.mubr.f32.gmra.mxu0 %v2059
        %v4721 = vpop.f32.mrf.mxu0
        %v4722 = vadd.f32 0.0, %v4721
        %v4723 = vpop.f32.mrf.mxu0
        %4724 = vmatprep.mubr.f32.mxu0 0.0
        %4725 = vmatmul.mubr.f32.gmra.mxu0 %v2061
        %v4726 = vpop.f32.mrf.mxu0
        %v4727 = vadd.f32 0.0, %v4726
        %v4728 = vpop.f32.mrf.mxu0
        %4729 = vmatprep.mubr.f32.mxu0 0.0
        %4730 = vmatmul.mubr.f32.gmra.mxu0 %v2063
        %v4731 = vpop.f32.mrf.mxu0
        %v4732 = vadd.f32 0.0, %v4731
        %v4733 = vpop.f32.mrf.mxu0
        %4734 = vmatprep.mubr.f32.mxu0 0.0
        %4735 = vmatmul.mubr.f32.gmra.mxu0 %v2065
        %v4736 = vpop.f32.mrf.mxu0
        %v4737 = vadd.f32 0.0, %v4736
        %v4738 = vpop.f32.mrf.mxu0
        %4739 = vmatprep.mubr.f32.mxu0 0.0
        %4740 = vmatmul.mubr.f32.gmra.mxu0 %v2067
        %v4741 = vpop.f32.mrf.mxu0
        %v4742 = vadd.f32 0.0, %v4741
        %v4743 = vpop.f32.mrf.mxu0
        %4744 = vmatprep.mubr.f32.mxu0 0.0
        %4745 = vmatmul.mubr.f32.gmra.mxu0 %v2069
        %v4746 = vpop.f32.mrf.mxu0
        %v4747 = vadd.f32 0.0, %v4746
        %v4748 = vpop.f32.mrf.mxu0
        %4749 = vmatprep.mubr.f32.mxu0 0.0
        %4750 = vmatmul.mubr.f32.gmra.mxu0 %v2071
        %v4751 = vpop.f32.mrf.mxu0
        %v4752 = vadd.f32 0.0, %v4751
        %v4753 = vpop.f32.mrf.mxu0
        %4754 = vmatprep.mubr.f32.mxu0 0.0
        %4755 = vmatmul.mubr.f32.gmra.mxu0 %v2073
        %v4756 = vpop.f32.mrf.mxu0
        %v4757 = vadd.f32 0.0, %v4756
        %v4758 = vpop.f32.mrf.mxu0
        %4759 = vmatprep.mubr.f32.mxu0 0.0
        %4760 = vmatmul.mubr.f32.gmra.mxu0 %v2075
        %v4761 = vpop.f32.mrf.mxu0
        %v4762 = vadd.f32 0.0, %v4761
        %v4763 = vpop.f32.mrf.mxu0
        %4764 = vmatprep.mubr.f32.mxu0 0.0
        %4765 = vmatmul.mubr.f32.gmra.mxu0 %v2077
        %v4766 = vpop.f32.mrf.mxu0
        %v4767 = vadd.f32 0.0, %v4766
        %v4768 = vpop.f32.mrf.mxu0
        %4769 = vmatprep.mubr.f32.mxu0 0.0
        %4770 = vmatmul.mubr.f32.gmra.mxu0 %v2079
        %v4771 = vpop.f32.mrf.mxu0
        %v4772 = vadd.f32 0.0, %v4771
        %v4773 = vpop.f32.mrf.mxu0
        %4774 = vmatprep.mubr.f32.mxu0 0.0
        %4775 = vmatmul.mubr.f32.gmra.mxu0 %v2081
        %v4776 = vpop.f32.mrf.mxu0
        %v4777 = vadd.f32 0.0, %v4776
        %v4778 = vpop.f32.mrf.mxu0
        %4779 = vmatprep.mubr.f32.mxu0 0.0
        %4780 = vmatmul.mubr.f32.gmra.mxu0 %v2083
        %v4781 = vpop.f32.mrf.mxu0
        %v4782 = vadd.f32 0.0, %v4781
        %v4783 = vpop.f32.mrf.mxu0
        %4784 = vmatprep.mubr.f32.mxu0 0.0
        %4785 = vmatmul.mubr.f32.gmra.mxu0 %v2085
        %v4786 = vpop.f32.mrf.mxu0
        %v4787 = vadd.f32 0.0, %v4786
        %v4788 = vpop.f32.mrf.mxu0
        %4789 = vmatprep.mubr.f32.mxu0 0.0
        %4790 = vmatmul.mubr.f32.gmra.mxu0 %v2087
        %v4791 = vpop.f32.mrf.mxu0
        %v4792 = vadd.f32 0.0, %v4791
        %v4793 = vpop.f32.mrf.mxu0
        %4794 = vmatprep.mubr.f32.mxu0 0.0
        %4795 = vmatmul.mubr.f32.gmra.mxu0 %v2089
        %v4796 = vpop.f32.mrf.mxu0
        %v4797 = vadd.f32 0.0, %v4796
        %v4798 = vpop.f32.mrf.mxu0
        %4799 = vmatprep.mubr.f32.mxu0 0.0
        %4800 = vmatmul.mubr.f32.gmra.mxu0 %v2091
        %v4801 = vpop.f32.mrf.mxu0
        %v4802 = vadd.f32 0.0, %v4801
        %v4803 = vpop.f32.mrf.mxu0
        %4804 = vmatprep.mubr.f32.mxu0 0.0
        %4805 = vmatmul.mubr.f32.gmra.mxu0 %v2093
        %v4806 = vpop.f32.mrf.mxu0
        %v4807 = vadd.f32 0.0, %v4806
        %v4808 = vpop.f32.mrf.mxu0
        %4809 = vmatprep.mubr.f32.mxu0 0.0
        %4810 = vmatmul.mubr.f32.gmra.mxu0 %v2095
        %v4811 = vpop.f32.mrf.mxu0
        %v4812 = vadd.f32 0.0, %v4811
        %v4813 = vpop.f32.mrf.mxu0
        %4814 = vmatprep.mubr.f32.mxu0 0.0
        %4815 = vmatmul.mubr.f32.gmra.mxu0 %v2097
        %v4816 = vpop.f32.mrf.mxu0
        %v4817 = vadd.f32 0.0, %v4816
        %v4818 = vpop.f32.mrf.mxu0
        %4819 = vmatprep.mubr.f32.mxu0 0.0
        %4820 = vmatmul.mubr.f32.gmra.mxu0 %v2099
        %v4821 = vpop.f32.mrf.mxu0
        %v4822 = vadd.f32 0.0, %v4821
        %v4823 = vpop.f32.mrf.mxu0
        %4824 = vmatprep.mubr.f32.mxu0 0.0
        %4825 = vmatmul.mubr.f32.gmra.mxu0 %v2101
        %v4826 = vpop.f32.mrf.mxu0
        %v4827 = vadd.f32 0.0, %v4826
        %v4828 = vpop.f32.mrf.mxu0
        %4829 = vmatprep.mubr.f32.mxu0 0.0
        %4830 = vmatmul.mubr.f32.gmra.mxu0 %v2103
        %v4831 = vpop.f32.mrf.mxu0
        %v4832 = vadd.f32 0.0, %v4831
        %v4833 = vpop.f32.mrf.mxu0
        %4834 = vmatprep.mubr.f32.mxu0 0.0
        %4835 = vmatmul.mubr.f32.gmra.mxu0 %v2105
        %v4836 = vpop.f32.mrf.mxu0
        %v4837 = vadd.f32 0.0, %v4836
        %v4838 = vpop.f32.mrf.mxu0
        %4839 = vmatprep.mubr.f32.mxu0 0.0
        %4840 = vmatmul.mubr.f32.gmra.mxu0 %v2107
        %v4841 = vpop.f32.mrf.mxu0
        %v4842 = vadd.f32 0.0, %v4841
        %v4843 = vpop.f32.mrf.mxu0
        %4844 = vmatprep.mubr.f32.mxu0 0.0
        %4845 = vmatmul.mubr.f32.gmra.mxu0 %v2109
        %v4846 = vpop.f32.mrf.mxu0
        %v4847 = vadd.f32 0.0, %v4846
        %v4848 = vpop.f32.mrf.mxu0
        %4849 = vmatprep.mubr.f32.mxu0 0.0
        %4850 = vmatmul.mubr.f32.gmra.mxu0 %v2111
        %v4851 = vpop.f32.mrf.mxu0
        %v4852 = vadd.f32 0.0, %v4851
        %v4853 = vpop.f32.mrf.mxu0
        %4854 = vmatprep.mubr.f32.mxu0 0.0
        %4855 = vmatmul.mubr.f32.gmra.mxu0 %v2113
        %v4856 = vpop.f32.mrf.mxu0
        %v4857 = vadd.f32 0.0, %v4856
        %v4858 = vpop.f32.mrf.mxu0
        %4859 = vmatprep.mubr.f32.mxu0 0.0
        %4860 = vmatmul.mubr.f32.gmra.mxu0 %v2115
        %v4861 = vpop.f32.mrf.mxu0
        %v4862 = vadd.f32 0.0, %v4861
        %v4863 = vpop.f32.mrf.mxu0
        %4864 = vmatprep.mubr.f32.mxu0 0.0
        %4865 = vmatmul.mubr.f32.gmra.mxu0 %v2117
        %v4866 = vpop.f32.mrf.mxu0
        %v4867 = vadd.f32 0.0, %v4866
        %v4868 = vpop.f32.mrf.mxu0
        %4869 = vmatprep.mubr.f32.mxu0 0.0
        %4870 = vmatmul.mubr.f32.gmra.mxu0 %v2119
        %v4871 = vpop.f32.mrf.mxu0
        %v4872 = vadd.f32 0.0, %v4871
        %v4873 = vpop.f32.mrf.mxu0
        %4874 = vmatprep.mubr.f32.mxu0 0.0
        %4875 = vmatmul.mubr.f32.gmra.mxu0 %v2121
        %v4876 = vpop.f32.mrf.mxu0
        %v4877 = vadd.f32 0.0, %v4876
        %v4878 = vpop.f32.mrf.mxu0
        %4879 = vmatprep.mubr.f32.mxu0 0.0
        %4880 = vmatmul.mubr.f32.gmra.mxu0 %v2123
        %v4881 = vpop.f32.mrf.mxu0
        %v4882 = vadd.f32 0.0, %v4881
        %v4883 = vpop.f32.mrf.mxu0
        %4884 = vmatprep.mubr.f32.mxu0 0.0
        %4885 = vmatmul.mubr.f32.gmra.mxu0 %v2125
        %v4886 = vpop.f32.mrf.mxu0
        %v4887 = vadd.f32 0.0, %v4886
        %v4888 = vpop.f32.mrf.mxu0
        %4889 = vmatprep.mubr.f32.mxu0 0.0
        %4890 = vmatmul.mubr.f32.gmra.mxu0 %v2127
        %v4891 = vpop.f32.mrf.mxu0
        %v4892 = vadd.f32 0.0, %v4891
        %v4893 = vpop.f32.mrf.mxu0
        %4894 = vmatprep.mubr.f32.mxu0 0.0
        %4895 = vmatmul.mubr.f32.gmra.mxu0 %v2129
        %v4896 = vpop.f32.mrf.mxu0
        %v4897 = vadd.f32 0.0, %v4896
        %v4898 = vpop.f32.mrf.mxu0
        %4899 = vmatprep.mubr.f32.mxu0 0.0
        %4900 = vmatmul.mubr.f32.gmra.mxu0 %v2131
        %v4901 = vpop.f32.mrf.mxu0
        %v4902 = vadd.f32 0.0, %v4901
        %v4903 = vpop.f32.mrf.mxu0
        %4904 = vmatprep.mubr.f32.mxu0 0.0
        %4905 = vmatmul.mubr.f32.gmra.mxu0 %v2133
        %v4906 = vpop.f32.mrf.mxu0
        %v4907 = vadd.f32 0.0, %v4906
        %v4908 = vpop.f32.mrf.mxu0
        %4909 = vmatprep.mubr.f32.mxu0 0.0
        %4910 = vmatmul.mubr.f32.gmra.mxu0 %v2135
        %v4911 = vpop.f32.mrf.mxu0
        %v4912 = vadd.f32 0.0, %v4911
        %v4913 = vpop.f32.mrf.mxu0
        %4914 = vmatprep.mubr.f32.mxu0 0.0
        %4915 = vmatmul.mubr.f32.gmra.mxu0 %v2137
        %v4916 = vpop.f32.mrf.mxu0
        %v4917 = vadd.f32 0.0, %v4916
        %v4918 = vpop.f32.mrf.mxu0
        %4919 = vmatprep.mubr.f32.mxu0 0.0
        %4920 = vmatmul.mubr.f32.gmra.mxu0 %v2139
        %v4921 = vpop.f32.mrf.mxu0
        %v4922 = vadd.f32 0.0, %v4921
        %v4923 = vpop.f32.mrf.mxu0
        %4924 = vmatprep.mubr.f32.mxu0 0.0
        %4925 = vmatmul.mubr.f32.gmra.mxu0 %v2141
        %v4926 = vpop.f32.mrf.mxu0
        %v4927 = vadd.f32 0.0, %v4926
        %v4928 = vpop.f32.mrf.mxu0
        %4929 = vmatprep.mubr.f32.mxu0 0.0
        %4930 = vmatmul.mubr.f32.gmra.mxu0 %v2143
        %v4931 = vpop.f32.mrf.mxu0
        %v4932 = vadd.f32 0.0, %v4931
        %v4933 = vpop.f32.mrf.mxu0
        %4934 = vmatprep.mubr.f32.mxu0 0.0
        %4935 = vmatmul.mubr.f32.gmra.mxu0 %v2145
        %v4936 = vpop.f32.mrf.mxu0
        %v4937 = vadd.f32 0.0, %v4936
        %v4938 = vpop.f32.mrf.mxu0
        %4939 = vmatprep.mubr.f32.mxu0 0.0
        %4940 = vmatmul.mubr.f32.gmra.mxu0 %v4241
        %v4941 = vpop.f32.mrf.mxu0
        %v4942 = vadd.f32 0.0, %v4941
        %v4943 = vpop.f32.mrf.mxu0
        %4944 = vmatprep.mubr.f32.mxu0 0.0
        %4945 = vmatmul.mubr.f32.gmra.mxu0 %v4244
        %v4946 = vpop.f32.mrf.mxu0
        %v4947 = vadd.f32 0.0, %v4946
        %v4948 = vpop.f32.mrf.mxu0
        %4949 = vmatprep.mubr.f32.mxu0 0.0
        %4950 = vmatmul.mubr.f32.gmra.mxu0 %v4247
        %v4951 = vpop.f32.mrf.mxu0
        %v4952 = vadd.f32 0.0, %v4951
        %v4953 = vpop.f32.mrf.mxu0
        %4954 = vmatprep.mubr.f32.mxu0 0.0
        %4955 = vmatmul.mubr.f32.gmra.mxu0 %v4250
        %v4956 = vpop.f32.mrf.mxu0
        %v4957 = vadd.f32 0.0, %v4956
        %v4958 = vpop.f32.mrf.mxu0
        %4959 = vdwg.mxu0
        %v4960 = vadd.f32 %v4110, %v4322
        %v4961 = vadd.f32 %v4111, %v4327
        %v4962 = vadd.f32 %v4112, %v4332
        %v4963 = vadd.f32 %v4113, %v4337
        %v4964 = vadd.f32 %v4114, %v4342
        %v4965 = vadd.f32 %v4115, %v4347
        %v4966 = vadd.f32 %v4116, %v4352
        %v4967 = vadd.f32 %v4117, %v4357
        %v4968 = vadd.f32 %v4118, %v4362
        %v4969 = vadd.f32 %v4119, %v4367
        %v4970 = vadd.f32 %v4120, %v4372
        %v4971 = vadd.f32 %v4121, %v4377
        %v4972 = vadd.f32 %v4122, %v4382
        %v4973 = vadd.f32 %v4123, %v4387
        %v4974 = vadd.f32 %v4124, %v4392
        %v4975 = vadd.f32 %v4125, %v4397
        %v4976 = vadd.f32 %v4126, %v4402
        %v4977 = vadd.f32 %v4127, %v4407
        %v4978 = vadd.f32 %v4128, %v4412
        %v4979 = vadd.f32 %v4129, %v4417
        %v4980 = vadd.f32 %v4130, %v4422
        %v4981 = vadd.f32 %v4131, %v4427
        %v4982 = vadd.f32 %v4132, %v4432
        %v4983 = vadd.f32 %v4133, %v4437
        %v4984 = vadd.f32 %v4134, %v4442
        %v4985 = vadd.f32 %v4135, %v4447
        %v4986 = vadd.f32 %v4136, %v4452
        %v4987 = vadd.f32 %v4137, %v4457
        %v4988 = vadd.f32 %v4138, %v4462
        %v4989 = vadd.f32 %v4139, %v4467
        %v4990 = vadd.f32 %v4140, %v4472
        %v4991 = vadd.f32 %v4141, %v4477
        %v4992 = vadd.f32 %v4142, %v4482
        %v4993 = vadd.f32 %v4143, %v4487
        %v4994 = vadd.f32 %v4144, %v4492
        %v4995 = vadd.f32 %v4145, %v4497
        %v4996 = vadd.f32 %v4146, %v4502
        %v4997 = vadd.f32 %v4147, %v4507
        %v4998 = vadd.f32 %v4148, %v4512
        %v4999 = vadd.f32 %v4149, %v4517
        %v5000 = vadd.f32 %v4150, %v4522
        %v5001 = vadd.f32 %v4151, %v4527
        %v5002 = vadd.f32 %v4152, %v4532
        %v5003 = vadd.f32 %v4153, %v4537
        %v5004 = vadd.f32 %v4154, %v4542
        %v5005 = vadd.f32 %v4155, %v4547
        %v5006 = vadd.f32 %v4156, %v4552
        %v5007 = vadd.f32 %v4157, %v4557
        %v5008 = vadd.f32 %v4158, %v4562
        %v5009 = vadd.f32 %v4159, %v4567
        %v5010 = vadd.f32 %v4160, %v4572
        %v5011 = vadd.f32 %v4161, %v4577
        %v5012 = vadd.f32 %v4162, %v4582
        %v5013 = vadd.f32 %v4163, %v4587
        %v5014 = vadd.f32 %v4164, %v4592
        %v5015 = vadd.f32 %v4165, %v4597
        %v5016 = vadd.f32 %v4166, %v4602
        %v5017 = vadd.f32 %v4167, %v4607
        %v5018 = vadd.f32 %v4168, %v4612
        %v5019 = vadd.f32 %v4169, %v4617
        %v5020 = vadd.f32 %v4170, %v4622
        %v5021 = vadd.f32 %v4171, %v4627
        %v5022 = vadd.f32 %v4172, %v4632
        %v5023 = vadd.f32 %v4173, %v4637
        %v5024 = vadd.f32 %v4174, %v4642
        %v5025 = vadd.f32 %v4175, %v4647
        %v5026 = vadd.f32 %v4176, %v4652
        %v5027 = vadd.f32 %v4177, %v4657
        %v5028 = vadd.f32 %v4178, %v4662
        %v5029 = vadd.f32 %v4179, %v4667
        %v5030 = vadd.f32 %v4180, %v4672
        %v5031 = vadd.f32 %v4181, %v4677
        %v5032 = vadd.f32 %v4182, %v4682
        %v5033 = vadd.f32 %v4183, %v4687
        %v5034 = vadd.f32 %v4184, %v4692
        %v5035 = vadd.f32 %v4185, %v4697
        %v5036 = vadd.f32 %v4186, %v4702
        %v5037 = vadd.f32 %v4187, %v4707
        %v5038 = vadd.f32 %v4188, %v4712
        %v5039 = vadd.f32 %v4189, %v4717
        %v5040 = vadd.f32 %v4190, %v4722
        %v5041 = vadd.f32 %v4191, %v4727
        %v5042 = vadd.f32 %v4192, %v4732
        %v5043 = vadd.f32 %v4193, %v4737
        %v5044 = vadd.f32 %v4194, %v4742
        %v5045 = vadd.f32 %v4195, %v4747
        %v5046 = vadd.f32 %v4196, %v4752
        %v5047 = vadd.f32 %v4197, %v4757
        %v5048 = vadd.f32 %v4198, %v4762
        %v5049 = vadd.f32 %v4199, %v4767
        %v5050 = vadd.f32 %v4200, %v4772
        %v5051 = vadd.f32 %v4201, %v4777
        %v5052 = vadd.f32 %v4202, %v4782
        %v5053 = vadd.f32 %v4203, %v4787
        %v5054 = vadd.f32 %v4204, %v4792
        %v5055 = vadd.f32 %v4205, %v4797
        %v5056 = vadd.f32 %v4206, %v4802
        %v5057 = vadd.f32 %v4207, %v4807
        %v5058 = vadd.f32 %v4208, %v4812
        %v5059 = vadd.f32 %v4209, %v4817
        %v5060 = vadd.f32 %v4210, %v4822
        %v5061 = vadd.f32 %v4211, %v4827
        %v5062 = vadd.f32 %v4212, %v4832
        %v5063 = vadd.f32 %v4213, %v4837
        %v5064 = vadd.f32 %v4214, %v4842
        %v5065 = vadd.f32 %v4215, %v4847
        %v5066 = vadd.f32 %v4216, %v4852
        %v5067 = vadd.f32 %v4217, %v4857
        %v5068 = vadd.f32 %v4218, %v4862
        %v5069 = vadd.f32 %v4219, %v4867
        %v5070 = vadd.f32 %v4220, %v4872
        %v5071 = vadd.f32 %v4221, %v4877
        %v5072 = vadd.f32 %v4222, %v4882
        %v5073 = vadd.f32 %v4223, %v4887
        %v5074 = vadd.f32 %v4224, %v4892
        %v5075 = vadd.f32 %v4225, %v4897
        %v5076 = vadd.f32 %v4226, %v4902
        %v5077 = vadd.f32 %v4227, %v4907
        %v5078 = vadd.f32 %v4228, %v4912
        %v5079 = vadd.f32 %v4229, %v4917
        %v5080 = vadd.f32 %v4230, %v4922
        %v5081 = vadd.f32 %v4231, %v4927
        %v5082 = vadd.f32 %v4232, %v4932
        %v5083 = vadd.f32 %v4233, %v4937
        %v5084 = vadd.f32 %v4234, %v4942
        %v5085 = vadd.f32 %v4235, %v4947
        %v5086 = vadd.f32 %v4236, %v4952
        %v5087 = vadd.f32 %v4237, %v4957
        %v5089 = vrot.slane %v463, 1
        %v5090 = vrot.slane %v464, 1
        %v5091 = vsel %vm634, %v5089, %v5090
        %v5092 = vrot.slane %v465, 1
        %v5093 = vsel %vm634, %v5090, %v5092
        %v5094 = vrot.slane %v466, 1
        %v5095 = vsel %vm634, %v5092, %v5094
        %v5096 = vrot.slane %v467, 1
        %v5097 = vsel %vm634, %v5094, %v5096
        %s5098 = scalar_lea.vmem %s1, 16
        %v5099 = vld [vmem:[%s5098] sm:$0x7]
        %v5100 = vsel %vm925, %v5091, 0
        %v5102 = vsel %vm925, %v5093, 0
        %v5104 = vsel %vm925, %v5095, 0
        %v5106 = vsel %vm925, %v5097, 0
        %v5109 = vsel %vm1182, %v5099, 0
        %5111 = vmatprep.subr.mxu0 0.0
        %5112 = vmatpush1.msra.mxu0 0.0
        %5113 = vmatprep.subr.mxu0 0.0
        %5114 = vmatpush1.msra.mxu0 0.0
        %5115 = vmatprep.subr.mxu0 0.0
        %5116 = vmatpush1.msra.mxu0 0.0
        %5117 = vmatprep.subr.mxu0 0.0
        %5118 = vmatpush1.msra.mxu0 0.0
        %5119 = vmatprep.subr.mxu0 0.0
        %5120 = vmatpush1.msra.mxu0 0.0
        %5121 = vmatprep.subr.mxu0 0.0
        %5122 = vmatpush1.msra.mxu0 0.0
        %5123 = vmatprep.subr.mxu0 0.0
        %5124 = vmatpush1.msra.mxu0 0.0
        %5125 = vmatprep.subr.mxu0 0.0
        %5126 = vmatpush1.msra.mxu0 0.0
        %5127 = vmatprep.subr.mxu0 0.0
        %5128 = vmatpush1.msra.mxu0 0.0
        %5129 = vmatprep.subr.mxu0 0.0
        %5130 = vmatpush1.msra.mxu0 0.0
        %5131 = vmatprep.subr.mxu0 0.0
        %5132 = vmatpush1.msra.mxu0 0.0
        %5133 = vmatprep.subr.mxu0 0.0
        %5134 = vmatpush1.msra.mxu0 0.0
        %5135 = vmatprep.subr.mxu0 0.0
        %5136 = vmatpush1.msra.mxu0 0.0
        %5137 = vmatprep.subr.mxu0 0.0
        %5138 = vmatpush1.msra.mxu0 0.0
        %5139 = vmatprep.subr.mxu0 0.0
        %5140 = vmatpush1.msra.mxu0 0.0
        %5141 = vmatprep.subr.mxu0 0.0
        %5142 = vmatpush1.msra.mxu0 %v5109
        %5143 = vmatprep.subr.mxu0 0.0
        %5144 = vmatpush2.msra.mxu0 0.0
        %5145 = vmatprep.subr.mxu0 0.0
        %5146 = vmatpush2.msra.mxu0 0.0
        %5147 = vmatprep.subr.mxu0 0.0
        %5148 = vmatpush2.msra.mxu0 0.0
        %5149 = vmatprep.subr.mxu0 0.0
        %5150 = vmatpush2.msra.mxu0 0.0
        %5151 = vmatprep.subr.mxu0 0.0
        %5152 = vmatpush2.msra.mxu0 0.0
        %5153 = vmatprep.subr.mxu0 0.0
        %5154 = vmatpush2.msra.mxu0 0.0
        %5155 = vmatprep.subr.mxu0 0.0
        %5156 = vmatpush2.msra.mxu0 0.0
        %5157 = vmatprep.subr.mxu0 0.0
        %5158 = vmatpush2.msra.mxu0 0.0
        %5159 = vmatprep.subr.mxu0 0.0
        %5160 = vmatpush2.msra.mxu0 0.0
        %5161 = vmatprep.subr.mxu0 0.0
        %5162 = vmatpush2.msra.mxu0 0.0
        %5163 = vmatprep.subr.mxu0 0.0
        %5164 = vmatpush2.msra.mxu0 0.0
        %5165 = vmatprep.subr.mxu0 0.0
        %5166 = vmatpush2.msra.mxu0 0.0
        %5167 = vmatprep.subr.mxu0 0.0
        %5168 = vmatpush2.msra.mxu0 0.0
        %5169 = vmatprep.subr.mxu0 0.0
        %5170 = vmatpush2.msra.mxu0 0.0
        %5171 = vmatprep.subr.mxu0 0.0
        %5172 = vmatpush2.msra.mxu0 0.0
        %5173 = vmatprep.subr.mxu0 0.0
        %5174 = vmatpush2.msra.mxu0 0.0
        %5175 = vmatprep.mubr.f32.mxu0 0.0
        %5176 = vmatmul.mubr.f32.gmra.mxu0 %v934
        %v5177 = vpop.f32.mrf.mxu0
        %v5178 = vadd.f32 0.0, %v5177
        %v5179 = vpop.f32.mrf.mxu0
        %5180 = vmatprep.mubr.f32.mxu0 0.0
        %5181 = vmatmul.mubr.f32.gmra.mxu0 %v936
        %v5182 = vpop.f32.mrf.mxu0
        %v5183 = vadd.f32 0.0, %v5182
        %v5184 = vpop.f32.mrf.mxu0
        %5185 = vmatprep.mubr.f32.mxu0 0.0
        %5186 = vmatmul.mubr.f32.gmra.mxu0 %v938
        %v5187 = vpop.f32.mrf.mxu0
        %v5188 = vadd.f32 0.0, %v5187
        %v5189 = vpop.f32.mrf.mxu0
        %5190 = vmatprep.mubr.f32.mxu0 0.0
        %5191 = vmatmul.mubr.f32.gmra.mxu0 %v940
        %v5192 = vpop.f32.mrf.mxu0
        %v5193 = vadd.f32 0.0, %v5192
        %v5194 = vpop.f32.mrf.mxu0
        %5195 = vmatprep.mubr.f32.mxu0 0.0
        %5196 = vmatmul.mubr.f32.gmra.mxu0 %v942
        %v5197 = vpop.f32.mrf.mxu0
        %v5198 = vadd.f32 0.0, %v5197
        %v5199 = vpop.f32.mrf.mxu0
        %5200 = vmatprep.mubr.f32.mxu0 0.0
        %5201 = vmatmul.mubr.f32.gmra.mxu0 %v944
        %v5202 = vpop.f32.mrf.mxu0
        %v5203 = vadd.f32 0.0, %v5202
        %v5204 = vpop.f32.mrf.mxu0
        %5205 = vmatprep.mubr.f32.mxu0 0.0
        %5206 = vmatmul.mubr.f32.gmra.mxu0 %v946
        %v5207 = vpop.f32.mrf.mxu0
        %v5208 = vadd.f32 0.0, %v5207
        %v5209 = vpop.f32.mrf.mxu0
        %5210 = vmatprep.mubr.f32.mxu0 0.0
        %5211 = vmatmul.mubr.f32.gmra.mxu0 %v948
        %v5212 = vpop.f32.mrf.mxu0
        %v5213 = vadd.f32 0.0, %v5212
        %v5214 = vpop.f32.mrf.mxu0
        %5215 = vmatprep.mubr.f32.mxu0 0.0
        %5216 = vmatmul.mubr.f32.gmra.mxu0 %v950
        %v5217 = vpop.f32.mrf.mxu0
        %v5218 = vadd.f32 0.0, %v5217
        %v5219 = vpop.f32.mrf.mxu0
        %5220 = vmatprep.mubr.f32.mxu0 0.0
        %5221 = vmatmul.mubr.f32.gmra.mxu0 %v952
        %v5222 = vpop.f32.mrf.mxu0
        %v5223 = vadd.f32 0.0, %v5222
        %v5224 = vpop.f32.mrf.mxu0
        %5225 = vmatprep.mubr.f32.mxu0 0.0
        %5226 = vmatmul.mubr.f32.gmra.mxu0 %v954
        %v5227 = vpop.f32.mrf.mxu0
        %v5228 = vadd.f32 0.0, %v5227
        %v5229 = vpop.f32.mrf.mxu0
        %5230 = vmatprep.mubr.f32.mxu0 0.0
        %5231 = vmatmul.mubr.f32.gmra.mxu0 %v956
        %v5232 = vpop.f32.mrf.mxu0
        %v5233 = vadd.f32 0.0, %v5232
        %v5234 = vpop.f32.mrf.mxu0
        %5235 = vmatprep.mubr.f32.mxu0 0.0
        %5236 = vmatmul.mubr.f32.gmra.mxu0 %v958
        %v5237 = vpop.f32.mrf.mxu0
        %v5238 = vadd.f32 0.0, %v5237
        %v5239 = vpop.f32.mrf.mxu0
        %5240 = vmatprep.mubr.f32.mxu0 0.0
        %5241 = vmatmul.mubr.f32.gmra.mxu0 %v960
        %v5242 = vpop.f32.mrf.mxu0
        %v5243 = vadd.f32 0.0, %v5242
        %v5244 = vpop.f32.mrf.mxu0
        %5245 = vmatprep.mubr.f32.mxu0 0.0
        %5246 = vmatmul.mubr.f32.gmra.mxu0 %v962
        %v5247 = vpop.f32.mrf.mxu0
        %v5248 = vadd.f32 0.0, %v5247
        %v5249 = vpop.f32.mrf.mxu0
        %5250 = vmatprep.mubr.f32.mxu0 0.0
        %5251 = vmatmul.mubr.f32.gmra.mxu0 %v964
        %v5252 = vpop.f32.mrf.mxu0
        %v5253 = vadd.f32 0.0, %v5252
        %v5254 = vpop.f32.mrf.mxu0
        %5255 = vmatprep.mubr.f32.mxu0 0.0
        %5256 = vmatmul.mubr.f32.gmra.mxu0 %v966
        %v5257 = vpop.f32.mrf.mxu0
        %v5258 = vadd.f32 0.0, %v5257
        %v5259 = vpop.f32.mrf.mxu0
        %5260 = vmatprep.mubr.f32.mxu0 0.0
        %5261 = vmatmul.mubr.f32.gmra.mxu0 %v968
        %v5262 = vpop.f32.mrf.mxu0
        %v5263 = vadd.f32 0.0, %v5262
        %v5264 = vpop.f32.mrf.mxu0
        %5265 = vmatprep.mubr.f32.mxu0 0.0
        %5266 = vmatmul.mubr.f32.gmra.mxu0 %v970
        %v5267 = vpop.f32.mrf.mxu0
        %v5268 = vadd.f32 0.0, %v5267
        %v5269 = vpop.f32.mrf.mxu0
        %5270 = vmatprep.mubr.f32.mxu0 0.0
        %5271 = vmatmul.mubr.f32.gmra.mxu0 %v972
        %v5272 = vpop.f32.mrf.mxu0
        %v5273 = vadd.f32 0.0, %v5272
        %v5274 = vpop.f32.mrf.mxu0
        %5275 = vmatprep.mubr.f32.mxu0 0.0
        %5276 = vmatmul.mubr.f32.gmra.mxu0 %v974
        %v5277 = vpop.f32.mrf.mxu0
        %v5278 = vadd.f32 0.0, %v5277
        %v5279 = vpop.f32.mrf.mxu0
        %5280 = vmatprep.mubr.f32.mxu0 0.0
        %5281 = vmatmul.mubr.f32.gmra.mxu0 %v976
        %v5282 = vpop.f32.mrf.mxu0
        %v5283 = vadd.f32 0.0, %v5282
        %v5284 = vpop.f32.mrf.mxu0
        %5285 = vmatprep.mubr.f32.mxu0 0.0
        %5286 = vmatmul.mubr.f32.gmra.mxu0 %v978
        %v5287 = vpop.f32.mrf.mxu0
        %v5288 = vadd.f32 0.0, %v5287
        %v5289 = vpop.f32.mrf.mxu0
        %5290 = vmatprep.mubr.f32.mxu0 0.0
        %5291 = vmatmul.mubr.f32.gmra.mxu0 %v980
        %v5292 = vpop.f32.mrf.mxu0
        %v5293 = vadd.f32 0.0, %v5292
        %v5294 = vpop.f32.mrf.mxu0
        %5295 = vmatprep.mubr.f32.mxu0 0.0
        %5296 = vmatmul.mubr.f32.gmra.mxu0 %v982
        %v5297 = vpop.f32.mrf.mxu0
        %v5298 = vadd.f32 0.0, %v5297
        %v5299 = vpop.f32.mrf.mxu0
        %5300 = vmatprep.mubr.f32.mxu0 0.0
        %5301 = vmatmul.mubr.f32.gmra.mxu0 %v984
        %v5302 = vpop.f32.mrf.mxu0
        %v5303 = vadd.f32 0.0, %v5302
        %v5304 = vpop.f32.mrf.mxu0
        %5305 = vmatprep.mubr.f32.mxu0 0.0
        %5306 = vmatmul.mubr.f32.gmra.mxu0 %v986
        %v5307 = vpop.f32.mrf.mxu0
        %v5308 = vadd.f32 0.0, %v5307
        %v5309 = vpop.f32.mrf.mxu0
        %5310 = vmatprep.mubr.f32.mxu0 0.0
        %5311 = vmatmul.mubr.f32.gmra.mxu0 %v988
        %v5312 = vpop.f32.mrf.mxu0
        %v5313 = vadd.f32 0.0, %v5312
        %v5314 = vpop.f32.mrf.mxu0
        %5315 = vmatprep.mubr.f32.mxu0 0.0
        %5316 = vmatmul.mubr.f32.gmra.mxu0 %v990
        %v5317 = vpop.f32.mrf.mxu0
        %v5318 = vadd.f32 0.0, %v5317
        %v5319 = vpop.f32.mrf.mxu0
        %5320 = vmatprep.mubr.f32.mxu0 0.0
        %5321 = vmatmul.mubr.f32.gmra.mxu0 %v992
        %v5322 = vpop.f32.mrf.mxu0
        %v5323 = vadd.f32 0.0, %v5322
        %v5324 = vpop.f32.mrf.mxu0
        %5325 = vmatprep.mubr.f32.mxu0 0.0
        %5326 = vmatmul.mubr.f32.gmra.mxu0 %v994
        %v5327 = vpop.f32.mrf.mxu0
        %v5328 = vadd.f32 0.0, %v5327
        %v5329 = vpop.f32.mrf.mxu0
        %5330 = vmatprep.mubr.f32.mxu0 0.0
        %5331 = vmatmul.mubr.f32.gmra.mxu0 %v996
        %v5332 = vpop.f32.mrf.mxu0
        %v5333 = vadd.f32 0.0, %v5332
        %v5334 = vpop.f32.mrf.mxu0
        %5335 = vmatprep.mubr.f32.mxu0 0.0
        %5336 = vmatmul.mubr.f32.gmra.mxu0 %v998
        %v5337 = vpop.f32.mrf.mxu0
        %v5338 = vadd.f32 0.0, %v5337
        %v5339 = vpop.f32.mrf.mxu0
        %5340 = vmatprep.mubr.f32.mxu0 0.0
        %5341 = vmatmul.mubr.f32.gmra.mxu0 %v1000
        %v5342 = vpop.f32.mrf.mxu0
        %v5343 = vadd.f32 0.0, %v5342
        %v5344 = vpop.f32.mrf.mxu0
        %5345 = vmatprep.mubr.f32.mxu0 0.0
        %5346 = vmatmul.mubr.f32.gmra.mxu0 %v1002
        %v5347 = vpop.f32.mrf.mxu0
        %v5348 = vadd.f32 0.0, %v5347
        %v5349 = vpop.f32.mrf.mxu0
        %5350 = vmatprep.mubr.f32.mxu0 0.0
        %5351 = vmatmul.mubr.f32.gmra.mxu0 %v1004
        %v5352 = vpop.f32.mrf.mxu0
        %v5353 = vadd.f32 0.0, %v5352
        %v5354 = vpop.f32.mrf.mxu0
        %5355 = vmatprep.mubr.f32.mxu0 0.0
        %5356 = vmatmul.mubr.f32.gmra.mxu0 %v1006
        %v5357 = vpop.f32.mrf.mxu0
        %v5358 = vadd.f32 0.0, %v5357
        %v5359 = vpop.f32.mrf.mxu0
        %5360 = vmatprep.mubr.f32.mxu0 0.0
        %5361 = vmatmul.mubr.f32.gmra.mxu0 %v1008
        %v5362 = vpop.f32.mrf.mxu0
        %v5363 = vadd.f32 0.0, %v5362
        %v5364 = vpop.f32.mrf.mxu0
        %5365 = vmatprep.mubr.f32.mxu0 0.0
        %5366 = vmatmul.mubr.f32.gmra.mxu0 %v1010
        %v5367 = vpop.f32.mrf.mxu0
        %v5368 = vadd.f32 0.0, %v5367
        %v5369 = vpop.f32.mrf.mxu0
        %5370 = vmatprep.mubr.f32.mxu0 0.0
        %5371 = vmatmul.mubr.f32.gmra.mxu0 %v1012
        %v5372 = vpop.f32.mrf.mxu0
        %v5373 = vadd.f32 0.0, %v5372
        %v5374 = vpop.f32.mrf.mxu0
        %5375 = vmatprep.mubr.f32.mxu0 0.0
        %5376 = vmatmul.mubr.f32.gmra.mxu0 %v1014
        %v5377 = vpop.f32.mrf.mxu0
        %v5378 = vadd.f32 0.0, %v5377
        %v5379 = vpop.f32.mrf.mxu0
        %5380 = vmatprep.mubr.f32.mxu0 0.0
        %5381 = vmatmul.mubr.f32.gmra.mxu0 %v1016
        %v5382 = vpop.f32.mrf.mxu0
        %v5383 = vadd.f32 0.0, %v5382
        %v5384 = vpop.f32.mrf.mxu0
        %5385 = vmatprep.mubr.f32.mxu0 0.0
        %5386 = vmatmul.mubr.f32.gmra.mxu0 %v1018
        %v5387 = vpop.f32.mrf.mxu0
        %v5388 = vadd.f32 0.0, %v5387
        %v5389 = vpop.f32.mrf.mxu0
        %5390 = vmatprep.mubr.f32.mxu0 0.0
        %5391 = vmatmul.mubr.f32.gmra.mxu0 %v1020
        %v5392 = vpop.f32.mrf.mxu0
        %v5393 = vadd.f32 0.0, %v5392
        %v5394 = vpop.f32.mrf.mxu0
        %5395 = vmatprep.mubr.f32.mxu0 0.0
        %5396 = vmatmul.mubr.f32.gmra.mxu0 %v1022
        %v5397 = vpop.f32.mrf.mxu0
        %v5398 = vadd.f32 0.0, %v5397
        %v5399 = vpop.f32.mrf.mxu0
        %5400 = vmatprep.mubr.f32.mxu0 0.0
        %5401 = vmatmul.mubr.f32.gmra.mxu0 %v1024
        %v5402 = vpop.f32.mrf.mxu0
        %v5403 = vadd.f32 0.0, %v5402
        %v5404 = vpop.f32.mrf.mxu0
        %5405 = vmatprep.mubr.f32.mxu0 0.0
        %5406 = vmatmul.mubr.f32.gmra.mxu0 %v1026
        %v5407 = vpop.f32.mrf.mxu0
        %v5408 = vadd.f32 0.0, %v5407
        %v5409 = vpop.f32.mrf.mxu0
        %5410 = vmatprep.mubr.f32.mxu0 0.0
        %5411 = vmatmul.mubr.f32.gmra.mxu0 %v1028
        %v5412 = vpop.f32.mrf.mxu0
        %v5413 = vadd.f32 0.0, %v5412
        %v5414 = vpop.f32.mrf.mxu0
        %5415 = vmatprep.mubr.f32.mxu0 0.0
        %5416 = vmatmul.mubr.f32.gmra.mxu0 %v1030
        %v5417 = vpop.f32.mrf.mxu0
        %v5418 = vadd.f32 0.0, %v5417
        %v5419 = vpop.f32.mrf.mxu0
        %5420 = vmatprep.mubr.f32.mxu0 0.0
        %5421 = vmatmul.mubr.f32.gmra.mxu0 %v1032
        %v5422 = vpop.f32.mrf.mxu0
        %v5423 = vadd.f32 0.0, %v5422
        %v5424 = vpop.f32.mrf.mxu0
        %5425 = vmatprep.mubr.f32.mxu0 0.0
        %5426 = vmatmul.mubr.f32.gmra.mxu0 %v1034
        %v5427 = vpop.f32.mrf.mxu0
        %v5428 = vadd.f32 0.0, %v5427
        %v5429 = vpop.f32.mrf.mxu0
        %5430 = vmatprep.mubr.f32.mxu0 0.0
        %5431 = vmatmul.mubr.f32.gmra.mxu0 %v1036
        %v5432 = vpop.f32.mrf.mxu0
        %v5433 = vadd.f32 0.0, %v5432
        %v5434 = vpop.f32.mrf.mxu0
        %5435 = vmatprep.mubr.f32.mxu0 0.0
        %5436 = vmatmul.mubr.f32.gmra.mxu0 %v1038
        %v5437 = vpop.f32.mrf.mxu0
        %v5438 = vadd.f32 0.0, %v5437
        %v5439 = vpop.f32.mrf.mxu0
        %5440 = vmatprep.mubr.f32.mxu0 0.0
        %5441 = vmatmul.mubr.f32.gmra.mxu0 %v1040
        %v5442 = vpop.f32.mrf.mxu0
        %v5443 = vadd.f32 0.0, %v5442
        %v5444 = vpop.f32.mrf.mxu0
        %5445 = vmatprep.mubr.f32.mxu0 0.0
        %5446 = vmatmul.mubr.f32.gmra.mxu0 %v1042
        %v5447 = vpop.f32.mrf.mxu0
        %v5448 = vadd.f32 0.0, %v5447
        %v5449 = vpop.f32.mrf.mxu0
        %5450 = vmatprep.mubr.f32.mxu0 0.0
        %5451 = vmatmul.mubr.f32.gmra.mxu0 %v1044
        %v5452 = vpop.f32.mrf.mxu0
        %v5453 = vadd.f32 0.0, %v5452
        %v5454 = vpop.f32.mrf.mxu0
        %5455 = vmatprep.mubr.f32.mxu0 0.0
        %5456 = vmatmul.mubr.f32.gmra.mxu0 %v1046
        %v5457 = vpop.f32.mrf.mxu0
        %v5458 = vadd.f32 0.0, %v5457
        %v5459 = vpop.f32.mrf.mxu0
        %5460 = vmatprep.mubr.f32.mxu0 0.0
        %5461 = vmatmul.mubr.f32.gmra.mxu0 %v1048
        %v5462 = vpop.f32.mrf.mxu0
        %v5463 = vadd.f32 0.0, %v5462
        %v5464 = vpop.f32.mrf.mxu0
        %5465 = vmatprep.mubr.f32.mxu0 0.0
        %5466 = vmatmul.mubr.f32.gmra.mxu0 %v1050
        %v5467 = vpop.f32.mrf.mxu0
        %v5468 = vadd.f32 0.0, %v5467
        %v5469 = vpop.f32.mrf.mxu0
        %5470 = vmatprep.mubr.f32.mxu0 0.0
        %5471 = vmatmul.mubr.f32.gmra.mxu0 %v1052
        %v5472 = vpop.f32.mrf.mxu0
        %v5473 = vadd.f32 0.0, %v5472
        %v5474 = vpop.f32.mrf.mxu0
        %5475 = vmatprep.mubr.f32.mxu0 0.0
        %5476 = vmatmul.mubr.f32.gmra.mxu0 %v1054
        %v5477 = vpop.f32.mrf.mxu0
        %v5478 = vadd.f32 0.0, %v5477
        %v5479 = vpop.f32.mrf.mxu0
        %5480 = vmatprep.mubr.f32.mxu0 0.0
        %5481 = vmatmul.mubr.f32.gmra.mxu0 %v1056
        %v5482 = vpop.f32.mrf.mxu0
        %v5483 = vadd.f32 0.0, %v5482
        %v5484 = vpop.f32.mrf.mxu0
        %5485 = vmatprep.mubr.f32.mxu0 0.0
        %5486 = vmatmul.mubr.f32.gmra.mxu0 %v1058
        %v5487 = vpop.f32.mrf.mxu0
        %v5488 = vadd.f32 0.0, %v5487
        %v5489 = vpop.f32.mrf.mxu0
        %5490 = vmatprep.mubr.f32.mxu0 0.0
        %5491 = vmatmul.mubr.f32.gmra.mxu0 %v1060
        %v5492 = vpop.f32.mrf.mxu0
        %v5493 = vadd.f32 0.0, %v5492
        %v5494 = vpop.f32.mrf.mxu0
        %5495 = vmatprep.mubr.f32.mxu0 0.0
        %5496 = vmatmul.mubr.f32.gmra.mxu0 %v1062
        %v5497 = vpop.f32.mrf.mxu0
        %v5498 = vadd.f32 0.0, %v5497
        %v5499 = vpop.f32.mrf.mxu0
        %5500 = vmatprep.mubr.f32.mxu0 0.0
        %5501 = vmatmul.mubr.f32.gmra.mxu0 %v1064
        %v5502 = vpop.f32.mrf.mxu0
        %v5503 = vadd.f32 0.0, %v5502
        %v5504 = vpop.f32.mrf.mxu0
        %5505 = vmatprep.mubr.f32.mxu0 0.0
        %5506 = vmatmul.mubr.f32.gmra.mxu0 %v1066
        %v5507 = vpop.f32.mrf.mxu0
        %v5508 = vadd.f32 0.0, %v5507
        %v5509 = vpop.f32.mrf.mxu0
        %5510 = vmatprep.mubr.f32.mxu0 0.0
        %5511 = vmatmul.mubr.f32.gmra.mxu0 %v1068
        %v5512 = vpop.f32.mrf.mxu0
        %v5513 = vadd.f32 0.0, %v5512
        %v5514 = vpop.f32.mrf.mxu0
        %5515 = vmatprep.mubr.f32.mxu0 0.0
        %5516 = vmatmul.mubr.f32.gmra.mxu0 %v1070
        %v5517 = vpop.f32.mrf.mxu0
        %v5518 = vadd.f32 0.0, %v5517
        %v5519 = vpop.f32.mrf.mxu0
        %5520 = vmatprep.mubr.f32.mxu0 0.0
        %5521 = vmatmul.mubr.f32.gmra.mxu0 %v1072
        %v5522 = vpop.f32.mrf.mxu0
        %v5523 = vadd.f32 0.0, %v5522
        %v5524 = vpop.f32.mrf.mxu0
        %5525 = vmatprep.mubr.f32.mxu0 0.0
        %5526 = vmatmul.mubr.f32.gmra.mxu0 %v1074
        %v5527 = vpop.f32.mrf.mxu0
        %v5528 = vadd.f32 0.0, %v5527
        %v5529 = vpop.f32.mrf.mxu0
        %5530 = vmatprep.mubr.f32.mxu0 0.0
        %5531 = vmatmul.mubr.f32.gmra.mxu0 %v1076
        %v5532 = vpop.f32.mrf.mxu0
        %v5533 = vadd.f32 0.0, %v5532
        %v5534 = vpop.f32.mrf.mxu0
        %5535 = vmatprep.mubr.f32.mxu0 0.0
        %5536 = vmatmul.mubr.f32.gmra.mxu0 %v1078
        %v5537 = vpop.f32.mrf.mxu0
        %v5538 = vadd.f32 0.0, %v5537
        %v5539 = vpop.f32.mrf.mxu0
        %5540 = vmatprep.mubr.f32.mxu0 0.0
        %5541 = vmatmul.mubr.f32.gmra.mxu0 %v1080
        %v5542 = vpop.f32.mrf.mxu0
        %v5543 = vadd.f32 0.0, %v5542
        %v5544 = vpop.f32.mrf.mxu0
        %5545 = vmatprep.mubr.f32.mxu0 0.0
        %5546 = vmatmul.mubr.f32.gmra.mxu0 %v1082
        %v5547 = vpop.f32.mrf.mxu0
        %v5548 = vadd.f32 0.0, %v5547
        %v5549 = vpop.f32.mrf.mxu0
        %5550 = vmatprep.mubr.f32.mxu0 0.0
        %5551 = vmatmul.mubr.f32.gmra.mxu0 %v1084
        %v5552 = vpop.f32.mrf.mxu0
        %v5553 = vadd.f32 0.0, %v5552
        %v5554 = vpop.f32.mrf.mxu0
        %5555 = vmatprep.mubr.f32.mxu0 0.0
        %5556 = vmatmul.mubr.f32.gmra.mxu0 %v1086
        %v5557 = vpop.f32.mrf.mxu0
        %v5558 = vadd.f32 0.0, %v5557
        %v5559 = vpop.f32.mrf.mxu0
        %5560 = vmatprep.mubr.f32.mxu0 0.0
        %5561 = vmatmul.mubr.f32.gmra.mxu0 %v1088
        %v5562 = vpop.f32.mrf.mxu0
        %v5563 = vadd.f32 0.0, %v5562
        %v5564 = vpop.f32.mrf.mxu0
        %5565 = vmatprep.mubr.f32.mxu0 0.0
        %5566 = vmatmul.mubr.f32.gmra.mxu0 %v1090
        %v5567 = vpop.f32.mrf.mxu0
        %v5568 = vadd.f32 0.0, %v5567
        %v5569 = vpop.f32.mrf.mxu0
        %5570 = vmatprep.mubr.f32.mxu0 0.0
        %5571 = vmatmul.mubr.f32.gmra.mxu0 %v1092
        %v5572 = vpop.f32.mrf.mxu0
        %v5573 = vadd.f32 0.0, %v5572
        %v5574 = vpop.f32.mrf.mxu0
        %5575 = vmatprep.mubr.f32.mxu0 0.0
        %5576 = vmatmul.mubr.f32.gmra.mxu0 %v1094
        %v5577 = vpop.f32.mrf.mxu0
        %v5578 = vadd.f32 0.0, %v5577
        %v5579 = vpop.f32.mrf.mxu0
        %5580 = vmatprep.mubr.f32.mxu0 0.0
        %5581 = vmatmul.mubr.f32.gmra.mxu0 %v1096
        %v5582 = vpop.f32.mrf.mxu0
        %v5583 = vadd.f32 0.0, %v5582
        %v5584 = vpop.f32.mrf.mxu0
        %5585 = vmatprep.mubr.f32.mxu0 0.0
        %5586 = vmatmul.mubr.f32.gmra.mxu0 %v1098
        %v5587 = vpop.f32.mrf.mxu0
        %v5588 = vadd.f32 0.0, %v5587
        %v5589 = vpop.f32.mrf.mxu0
        %5590 = vmatprep.mubr.f32.mxu0 0.0
        %5591 = vmatmul.mubr.f32.gmra.mxu0 %v1100
        %v5592 = vpop.f32.mrf.mxu0
        %v5593 = vadd.f32 0.0, %v5592
        %v5594 = vpop.f32.mrf.mxu0
        %5595 = vmatprep.mubr.f32.mxu0 0.0
        %5596 = vmatmul.mubr.f32.gmra.mxu0 %v1102
        %v5597 = vpop.f32.mrf.mxu0
        %v5598 = vadd.f32 0.0, %v5597
        %v5599 = vpop.f32.mrf.mxu0
        %5600 = vmatprep.mubr.f32.mxu0 0.0
        %5601 = vmatmul.mubr.f32.gmra.mxu0 %v1104
        %v5602 = vpop.f32.mrf.mxu0
        %v5603 = vadd.f32 0.0, %v5602
        %v5604 = vpop.f32.mrf.mxu0
        %5605 = vmatprep.mubr.f32.mxu0 0.0
        %5606 = vmatmul.mubr.f32.gmra.mxu0 %v1106
        %v5607 = vpop.f32.mrf.mxu0
        %v5608 = vadd.f32 0.0, %v5607
        %v5609 = vpop.f32.mrf.mxu0
        %5610 = vmatprep.mubr.f32.mxu0 0.0
        %5611 = vmatmul.mubr.f32.gmra.mxu0 %v1108
        %v5612 = vpop.f32.mrf.mxu0
        %v5613 = vadd.f32 0.0, %v5612
        %v5614 = vpop.f32.mrf.mxu0
        %5615 = vmatprep.mubr.f32.mxu0 0.0
        %5616 = vmatmul.mubr.f32.gmra.mxu0 %v1110
        %v5617 = vpop.f32.mrf.mxu0
        %v5618 = vadd.f32 0.0, %v5617
        %v5619 = vpop.f32.mrf.mxu0
        %5620 = vmatprep.mubr.f32.mxu0 0.0
        %5621 = vmatmul.mubr.f32.gmra.mxu0 %v1112
        %v5622 = vpop.f32.mrf.mxu0
        %v5623 = vadd.f32 0.0, %v5622
        %v5624 = vpop.f32.mrf.mxu0
        %5625 = vmatprep.mubr.f32.mxu0 0.0
        %5626 = vmatmul.mubr.f32.gmra.mxu0 %v1114
        %v5627 = vpop.f32.mrf.mxu0
        %v5628 = vadd.f32 0.0, %v5627
        %v5629 = vpop.f32.mrf.mxu0
        %5630 = vmatprep.mubr.f32.mxu0 0.0
        %5631 = vmatmul.mubr.f32.gmra.mxu0 %v1116
        %v5632 = vpop.f32.mrf.mxu0
        %v5633 = vadd.f32 0.0, %v5632
        %v5634 = vpop.f32.mrf.mxu0
        %5635 = vmatprep.mubr.f32.mxu0 0.0
        %5636 = vmatmul.mubr.f32.gmra.mxu0 %v1118
        %v5637 = vpop.f32.mrf.mxu0
        %v5638 = vadd.f32 0.0, %v5637
        %v5639 = vpop.f32.mrf.mxu0
        %5640 = vmatprep.mubr.f32.mxu0 0.0
        %5641 = vmatmul.mubr.f32.gmra.mxu0 %v1120
        %v5642 = vpop.f32.mrf.mxu0
        %v5643 = vadd.f32 0.0, %v5642
        %v5644 = vpop.f32.mrf.mxu0
        %5645 = vmatprep.mubr.f32.mxu0 0.0
        %5646 = vmatmul.mubr.f32.gmra.mxu0 %v1122
        %v5647 = vpop.f32.mrf.mxu0
        %v5648 = vadd.f32 0.0, %v5647
        %v5649 = vpop.f32.mrf.mxu0
        %5650 = vmatprep.mubr.f32.mxu0 0.0
        %5651 = vmatmul.mubr.f32.gmra.mxu0 %v1124
        %v5652 = vpop.f32.mrf.mxu0
        %v5653 = vadd.f32 0.0, %v5652
        %v5654 = vpop.f32.mrf.mxu0
        %5655 = vmatprep.mubr.f32.mxu0 0.0
        %5656 = vmatmul.mubr.f32.gmra.mxu0 %v1126
        %v5657 = vpop.f32.mrf.mxu0
        %v5658 = vadd.f32 0.0, %v5657
        %v5659 = vpop.f32.mrf.mxu0
        %5660 = vmatprep.mubr.f32.mxu0 0.0
        %5661 = vmatmul.mubr.f32.gmra.mxu0 %v1128
        %v5662 = vpop.f32.mrf.mxu0
        %v5663 = vadd.f32 0.0, %v5662
        %v5664 = vpop.f32.mrf.mxu0
        %5665 = vmatprep.mubr.f32.mxu0 0.0
        %5666 = vmatmul.mubr.f32.gmra.mxu0 %v1130
        %v5667 = vpop.f32.mrf.mxu0
        %v5668 = vadd.f32 0.0, %v5667
        %v5669 = vpop.f32.mrf.mxu0
        %5670 = vmatprep.mubr.f32.mxu0 0.0
        %5671 = vmatmul.mubr.f32.gmra.mxu0 %v1132
        %v5672 = vpop.f32.mrf.mxu0
        %v5673 = vadd.f32 0.0, %v5672
        %v5674 = vpop.f32.mrf.mxu0
        %5675 = vmatprep.mubr.f32.mxu0 0.0
        %5676 = vmatmul.mubr.f32.gmra.mxu0 %v1134
        %v5677 = vpop.f32.mrf.mxu0
        %v5678 = vadd.f32 0.0, %v5677
        %v5679 = vpop.f32.mrf.mxu0
        %5680 = vmatprep.mubr.f32.mxu0 0.0
        %5681 = vmatmul.mubr.f32.gmra.mxu0 %v1136
        %v5682 = vpop.f32.mrf.mxu0
        %v5683 = vadd.f32 0.0, %v5682
        %v5684 = vpop.f32.mrf.mxu0
        %5685 = vmatprep.mubr.f32.mxu0 0.0
        %5686 = vmatmul.mubr.f32.gmra.mxu0 %v1138
        %v5687 = vpop.f32.mrf.mxu0
        %v5688 = vadd.f32 0.0, %v5687
        %v5689 = vpop.f32.mrf.mxu0
        %5690 = vmatprep.mubr.f32.mxu0 0.0
        %5691 = vmatmul.mubr.f32.gmra.mxu0 %v1140
        %v5692 = vpop.f32.mrf.mxu0
        %v5693 = vadd.f32 0.0, %v5692
        %v5694 = vpop.f32.mrf.mxu0
        %5695 = vmatprep.mubr.f32.mxu0 0.0
        %5696 = vmatmul.mubr.f32.gmra.mxu0 %v1142
        %v5697 = vpop.f32.mrf.mxu0
        %v5698 = vadd.f32 0.0, %v5697
        %v5699 = vpop.f32.mrf.mxu0
        %5700 = vmatprep.mubr.f32.mxu0 0.0
        %5701 = vmatmul.mubr.f32.gmra.mxu0 %v1144
        %v5702 = vpop.f32.mrf.mxu0
        %v5703 = vadd.f32 0.0, %v5702
        %v5704 = vpop.f32.mrf.mxu0
        %5705 = vmatprep.mubr.f32.mxu0 0.0
        %5706 = vmatmul.mubr.f32.gmra.mxu0 %v1146
        %v5707 = vpop.f32.mrf.mxu0
        %v5708 = vadd.f32 0.0, %v5707
        %v5709 = vpop.f32.mrf.mxu0
        %5710 = vmatprep.mubr.f32.mxu0 0.0
        %5711 = vmatmul.mubr.f32.gmra.mxu0 %v1148
        %v5712 = vpop.f32.mrf.mxu0
        %v5713 = vadd.f32 0.0, %v5712
        %v5714 = vpop.f32.mrf.mxu0
        %5715 = vmatprep.mubr.f32.mxu0 0.0
        %5716 = vmatmul.mubr.f32.gmra.mxu0 %v1150
        %v5717 = vpop.f32.mrf.mxu0
        %v5718 = vadd.f32 0.0, %v5717
        %v5719 = vpop.f32.mrf.mxu0
        %5720 = vmatprep.mubr.f32.mxu0 0.0
        %5721 = vmatmul.mubr.f32.gmra.mxu0 %v1152
        %v5722 = vpop.f32.mrf.mxu0
        %v5723 = vadd.f32 0.0, %v5722
        %v5724 = vpop.f32.mrf.mxu0
        %5725 = vmatprep.mubr.f32.mxu0 0.0
        %5726 = vmatmul.mubr.f32.gmra.mxu0 %v1154
        %v5727 = vpop.f32.mrf.mxu0
        %v5728 = vadd.f32 0.0, %v5727
        %v5729 = vpop.f32.mrf.mxu0
        %5730 = vmatprep.mubr.f32.mxu0 0.0
        %5731 = vmatmul.mubr.f32.gmra.mxu0 %v1156
        %v5732 = vpop.f32.mrf.mxu0
        %v5733 = vadd.f32 0.0, %v5732
        %v5734 = vpop.f32.mrf.mxu0
        %5735 = vmatprep.mubr.f32.mxu0 0.0
        %5736 = vmatmul.mubr.f32.gmra.mxu0 %v1158
        %v5737 = vpop.f32.mrf.mxu0
        %v5738 = vadd.f32 0.0, %v5737
        %v5739 = vpop.f32.mrf.mxu0
        %5740 = vmatprep.mubr.f32.mxu0 0.0
        %5741 = vmatmul.mubr.f32.gmra.mxu0 %v1160
        %v5742 = vpop.f32.mrf.mxu0
        %v5743 = vadd.f32 0.0, %v5742
        %v5744 = vpop.f32.mrf.mxu0
        %5745 = vmatprep.mubr.f32.mxu0 0.0
        %5746 = vmatmul.mubr.f32.gmra.mxu0 %v1162
        %v5747 = vpop.f32.mrf.mxu0
        %v5748 = vadd.f32 0.0, %v5747
        %v5749 = vpop.f32.mrf.mxu0
        %5750 = vmatprep.mubr.f32.mxu0 0.0
        %5751 = vmatmul.mubr.f32.gmra.mxu0 %v1164
        %v5752 = vpop.f32.mrf.mxu0
        %v5753 = vadd.f32 0.0, %v5752
        %v5754 = vpop.f32.mrf.mxu0
        %5755 = vmatprep.mubr.f32.mxu0 0.0
        %5756 = vmatmul.mubr.f32.gmra.mxu0 %v1166
        %v5757 = vpop.f32.mrf.mxu0
        %v5758 = vadd.f32 0.0, %v5757
        %v5759 = vpop.f32.mrf.mxu0
        %5760 = vmatprep.mubr.f32.mxu0 0.0
        %5761 = vmatmul.mubr.f32.gmra.mxu0 %v1168
        %v5762 = vpop.f32.mrf.mxu0
        %v5763 = vadd.f32 0.0, %v5762
        %v5764 = vpop.f32.mrf.mxu0
        %5765 = vmatprep.mubr.f32.mxu0 0.0
        %5766 = vmatmul.mubr.f32.gmra.mxu0 %v1170
        %v5767 = vpop.f32.mrf.mxu0
        %v5768 = vadd.f32 0.0, %v5767
        %v5769 = vpop.f32.mrf.mxu0
        %5770 = vmatprep.mubr.f32.mxu0 0.0
        %5771 = vmatmul.mubr.f32.gmra.mxu0 %v1172
        %v5772 = vpop.f32.mrf.mxu0
        %v5773 = vadd.f32 0.0, %v5772
        %v5774 = vpop.f32.mrf.mxu0
        %5775 = vmatprep.mubr.f32.mxu0 0.0
        %5776 = vmatmul.mubr.f32.gmra.mxu0 %v1174
        %v5777 = vpop.f32.mrf.mxu0
        %v5778 = vadd.f32 0.0, %v5777
        %v5779 = vpop.f32.mrf.mxu0
        %5780 = vmatprep.mubr.f32.mxu0 0.0
        %5781 = vmatmul.mubr.f32.gmra.mxu0 %v1176
        %v5782 = vpop.f32.mrf.mxu0
        %v5783 = vadd.f32 0.0, %v5782
        %v5784 = vpop.f32.mrf.mxu0
        %5785 = vmatprep.mubr.f32.mxu0 0.0
        %5786 = vmatmul.mubr.f32.gmra.mxu0 %v1178
        %v5787 = vpop.f32.mrf.mxu0
        %v5788 = vadd.f32 0.0, %v5787
        %v5789 = vpop.f32.mrf.mxu0
        %5790 = vmatprep.mubr.f32.mxu0 0.0
        %5791 = vmatmul.mubr.f32.gmra.mxu0 %v1180
        %v5792 = vpop.f32.mrf.mxu0
        %v5793 = vadd.f32 0.0, %v5792
        %v5794 = vpop.f32.mrf.mxu0
        %5795 = vmatprep.mubr.f32.mxu0 0.0
        %5796 = vmatmul.mubr.f32.gmra.mxu0 %v5100
        %v5797 = vpop.f32.mrf.mxu0
        %v5798 = vadd.f32 0.0, %v5797
        %v5799 = vpop.f32.mrf.mxu0
        %5800 = vmatprep.mubr.f32.mxu0 0.0
        %5801 = vmatmul.mubr.f32.gmra.mxu0 %v5102
        %v5802 = vpop.f32.mrf.mxu0
        %v5803 = vadd.f32 0.0, %v5802
        %v5804 = vpop.f32.mrf.mxu0
        %5805 = vmatprep.mubr.f32.mxu0 0.0
        %5806 = vmatmul.mubr.f32.gmra.mxu0 %v5104
        %v5807 = vpop.f32.mrf.mxu0
        %v5808 = vadd.f32 0.0, %v5807
        %v5809 = vpop.f32.mrf.mxu0
        %5810 = vmatprep.mubr.f32.mxu0 0.0
        %5811 = vmatmul.mubr.f32.gmra.mxu0 %v5106
        %v5812 = vpop.f32.mrf.mxu0
        %v5813 = vadd.f32 0.0, %v5812
        %v5814 = vpop.f32.mrf.mxu0
        %5815 = vdwg.mxu0
        %v5816 = vadd.f32 %v4960, %v5178
        %v5817 = vadd.f32 %v4961, %v5183
        %v5818 = vadd.f32 %v4962, %v5188
        %v5819 = vadd.f32 %v4963, %v5193
        %v5820 = vadd.f32 %v4964, %v5198
        %v5821 = vadd.f32 %v4965, %v5203
        %v5822 = vadd.f32 %v4966, %v5208
        %v5823 = vadd.f32 %v4967, %v5213
        %v5824 = vadd.f32 %v4968, %v5218
        %v5825 = vadd.f32 %v4969, %v5223
        %v5826 = vadd.f32 %v4970, %v5228
        %v5827 = vadd.f32 %v4971, %v5233
        %v5828 = vadd.f32 %v4972, %v5238
        %v5829 = vadd.f32 %v4973, %v5243
        %v5830 = vadd.f32 %v4974, %v5248
        %v5831 = vadd.f32 %v4975, %v5253
        %v5832 = vadd.f32 %v4976, %v5258
        %v5833 = vadd.f32 %v4977, %v5263
        %v5834 = vadd.f32 %v4978, %v5268
        %v5835 = vadd.f32 %v4979, %v5273
        %v5836 = vadd.f32 %v4980, %v5278
        %v5837 = vadd.f32 %v4981, %v5283
        %v5838 = vadd.f32 %v4982, %v5288
        %v5839 = vadd.f32 %v4983, %v5293
        %v5840 = vadd.f32 %v4984, %v5298
        %v5841 = vadd.f32 %v4985, %v5303
        %v5842 = vadd.f32 %v4986, %v5308
        %v5843 = vadd.f32 %v4987, %v5313
        %v5844 = vadd.f32 %v4988, %v5318
        %v5845 = vadd.f32 %v4989, %v5323
        %v5846 = vadd.f32 %v4990, %v5328
        %v5847 = vadd.f32 %v4991, %v5333
        %v5848 = vadd.f32 %v4992, %v5338
        %v5849 = vadd.f32 %v4993, %v5343
        %v5850 = vadd.f32 %v4994, %v5348
        %v5851 = vadd.f32 %v4995, %v5353
        %v5852 = vadd.f32 %v4996, %v5358
        %v5853 = vadd.f32 %v4997, %v5363
        %v5854 = vadd.f32 %v4998, %v5368
        %v5855 = vadd.f32 %v4999, %v5373
        %v5856 = vadd.f32 %v5000, %v5378
        %v5857 = vadd.f32 %v5001, %v5383
        %v5858 = vadd.f32 %v5002, %v5388
        %v5859 = vadd.f32 %v5003, %v5393
        %v5860 = vadd.f32 %v5004, %v5398
        %v5861 = vadd.f32 %v5005, %v5403
        %v5862 = vadd.f32 %v5006, %v5408
        %v5863 = vadd.f32 %v5007, %v5413
        %v5864 = vadd.f32 %v5008, %v5418
        %v5865 = vadd.f32 %v5009, %v5423
        %v5866 = vadd.f32 %v5010, %v5428
        %v5867 = vadd.f32 %v5011, %v5433
        %v5868 = vadd.f32 %v5012, %v5438
        %v5869 = vadd.f32 %v5013, %v5443
        %v5870 = vadd.f32 %v5014, %v5448
        %v5871 = vadd.f32 %v5015, %v5453
        %v5872 = vadd.f32 %v5016, %v5458
        %v5873 = vadd.f32 %v5017, %v5463
        %v5874 = vadd.f32 %v5018, %v5468
        %v5875 = vadd.f32 %v5019, %v5473
        %v5876 = vadd.f32 %v5020, %v5478
        %v5877 = vadd.f32 %v5021, %v5483
        %v5878 = vadd.f32 %v5022, %v5488
        %v5879 = vadd.f32 %v5023, %v5493
        %v5880 = vadd.f32 %v5024, %v5498
        %v5881 = vadd.f32 %v5025, %v5503
        %v5882 = vadd.f32 %v5026, %v5508
        %v5883 = vadd.f32 %v5027, %v5513
        %v5884 = vadd.f32 %v5028, %v5518
        %v5885 = vadd.f32 %v5029, %v5523
        %v5886 = vadd.f32 %v5030, %v5528
        %v5887 = vadd.f32 %v5031, %v5533
        %v5888 = vadd.f32 %v5032, %v5538
        %v5889 = vadd.f32 %v5033, %v5543
        %v5890 = vadd.f32 %v5034, %v5548
        %v5891 = vadd.f32 %v5035, %v5553
        %v5892 = vadd.f32 %v5036, %v5558
        %v5893 = vadd.f32 %v5037, %v5563
        %v5894 = vadd.f32 %v5038, %v5568
        %v5895 = vadd.f32 %v5039, %v5573
        %v5896 = vadd.f32 %v5040, %v5578
        %v5897 = vadd.f32 %v5041, %v5583
        %v5898 = vadd.f32 %v5042, %v5588
        %v5899 = vadd.f32 %v5043, %v5593
        %v5900 = vadd.f32 %v5044, %v5598
        %v5901 = vadd.f32 %v5045, %v5603
        %v5902 = vadd.f32 %v5046, %v5608
        %v5903 = vadd.f32 %v5047, %v5613
        %v5904 = vadd.f32 %v5048, %v5618
        %v5905 = vadd.f32 %v5049, %v5623
        %v5906 = vadd.f32 %v5050, %v5628
        %v5907 = vadd.f32 %v5051, %v5633
        %v5908 = vadd.f32 %v5052, %v5638
        %v5909 = vadd.f32 %v5053, %v5643
        %v5910 = vadd.f32 %v5054, %v5648
        %v5911 = vadd.f32 %v5055, %v5653
        %v5912 = vadd.f32 %v5056, %v5658
        %v5913 = vadd.f32 %v5057, %v5663
        %v5914 = vadd.f32 %v5058, %v5668
        %v5915 = vadd.f32 %v5059, %v5673
        %v5916 = vadd.f32 %v5060, %v5678
        %v5917 = vadd.f32 %v5061, %v5683
        %v5918 = vadd.f32 %v5062, %v5688
        %v5919 = vadd.f32 %v5063, %v5693
        %v5920 = vadd.f32 %v5064, %v5698
        %v5921 = vadd.f32 %v5065, %v5703
        %v5922 = vadd.f32 %v5066, %v5708
        %v5923 = vadd.f32 %v5067, %v5713
        %v5924 = vadd.f32 %v5068, %v5718
        %v5925 = vadd.f32 %v5069, %v5723
        %v5926 = vadd.f32 %v5070, %v5728
        %v5927 = vadd.f32 %v5071, %v5733
        %v5928 = vadd.f32 %v5072, %v5738
        %v5929 = vadd.f32 %v5073, %v5743
        %v5930 = vadd.f32 %v5074, %v5748
        %v5931 = vadd.f32 %v5075, %v5753
        %v5932 = vadd.f32 %v5076, %v5758
        %v5933 = vadd.f32 %v5077, %v5763
        %v5934 = vadd.f32 %v5078, %v5768
        %v5935 = vadd.f32 %v5079, %v5773
        %v5936 = vadd.f32 %v5080, %v5778
        %v5937 = vadd.f32 %v5081, %v5783
        %v5938 = vadd.f32 %v5082, %v5788
        %v5939 = vadd.f32 %v5083, %v5793
        %v5940 = vadd.f32 %v5084, %v5798
        %v5941 = vadd.f32 %v5085, %v5803
        %v5942 = vadd.f32 %v5086, %v5808
        %v5943 = vadd.f32 %v5087, %v5813
        %v5944 = vrot.slane %v463, 2
        %v5945 = vrot.slane %v464, 2
        %v5946 = vsel %vm2855, %v5944, %v5945
        %v5947 = vrot.slane %v465, 2
        %v5948 = vsel %vm2855, %v5945, %v5947
        %v5949 = vrot.slane %v466, 2
        %v5950 = vsel %vm2855, %v5947, %v5949
        %v5951 = vrot.slane %v467, 2
        %v5952 = vsel %vm2855, %v5949, %v5951
        %s5953 = scalar_lea.vmem %s1, 20
        %v5954 = vld [vmem:[%s5953] sm:$0x7]
        %v5955 = vsel %vm925, %v5946, 0
        %v5957 = vsel %vm925, %v5948, 0
        %v5959 = vsel %vm925, %v5950, 0
        %v5961 = vsel %vm925, %v5952, 0
        %v5964 = vsel %vm1182, %v5954, 0
        %5966 = vmatprep.subr.mxu0 0.0
        %5967 = vmatpush1.msra.mxu0 0.0
        %5968 = vmatprep.subr.mxu0 0.0
        %5969 = vmatpush1.msra.mxu0 0.0
        %5970 = vmatprep.subr.mxu0 0.0
        %5971 = vmatpush1.msra.mxu0 0.0
        %5972 = vmatprep.subr.mxu0 0.0
        %5973 = vmatpush1.msra.mxu0 0.0
        %5974 = vmatprep.subr.mxu0 0.0
        %5975 = vmatpush1.msra.mxu0 0.0
        %5976 = vmatprep.subr.mxu0 0.0
        %5977 = vmatpush1.msra.mxu0 0.0
        %5978 = vmatprep.subr.mxu0 0.0
        %5979 = vmatpush1.msra.mxu0 0.0
        %5980 = vmatprep.subr.mxu0 0.0
        %5981 = vmatpush1.msra.mxu0 0.0
        %5982 = vmatprep.subr.mxu0 0.0
        %5983 = vmatpush1.msra.mxu0 0.0
        %5984 = vmatprep.subr.mxu0 0.0
        %5985 = vmatpush1.msra.mxu0 0.0
        %5986 = vmatprep.subr.mxu0 0.0
        %5987 = vmatpush1.msra.mxu0 0.0
        %5988 = vmatprep.subr.mxu0 0.0
        %5989 = vmatpush1.msra.mxu0 0.0
        %5990 = vmatprep.subr.mxu0 0.0
        %5991 = vmatpush1.msra.mxu0 0.0
        %5992 = vmatprep.subr.mxu0 0.0
        %5993 = vmatpush1.msra.mxu0 0.0
        %5994 = vmatprep.subr.mxu0 0.0
        %5995 = vmatpush1.msra.mxu0 0.0
        %5996 = vmatprep.subr.mxu0 0.0
        %5997 = vmatpush1.msra.mxu0 %v5964
        %5998 = vmatprep.subr.mxu0 0.0
        %5999 = vmatpush2.msra.mxu0 0.0
        %6000 = vmatprep.subr.mxu0 0.0
        %6001 = vmatpush2.msra.mxu0 0.0
        %6002 = vmatprep.subr.mxu0 0.0
        %6003 = vmatpush2.msra.mxu0 0.0
        %6004 = vmatprep.subr.mxu0 0.0
        %6005 = vmatpush2.msra.mxu0 0.0
        %6006 = vmatprep.subr.mxu0 0.0
        %6007 = vmatpush2.msra.mxu0 0.0
        %6008 = vmatprep.subr.mxu0 0.0
        %6009 = vmatpush2.msra.mxu0 0.0
        %6010 = vmatprep.subr.mxu0 0.0
        %6011 = vmatpush2.msra.mxu0 0.0
        %6012 = vmatprep.subr.mxu0 0.0
        %6013 = vmatpush2.msra.mxu0 0.0
        %6014 = vmatprep.subr.mxu0 0.0
        %6015 = vmatpush2.msra.mxu0 0.0
        %6016 = vmatprep.subr.mxu0 0.0
        %6017 = vmatpush2.msra.mxu0 0.0
        %6018 = vmatprep.subr.mxu0 0.0
        %6019 = vmatpush2.msra.mxu0 0.0
        %6020 = vmatprep.subr.mxu0 0.0
        %6021 = vmatpush2.msra.mxu0 0.0
        %6022 = vmatprep.subr.mxu0 0.0
        %6023 = vmatpush2.msra.mxu0 0.0
        %6024 = vmatprep.subr.mxu0 0.0
        %6025 = vmatpush2.msra.mxu0 0.0
        %6026 = vmatprep.subr.mxu0 0.0
        %6027 = vmatpush2.msra.mxu0 0.0
        %6028 = vmatprep.subr.mxu0 0.0
        %6029 = vmatpush2.msra.mxu0 0.0
        %6030 = vmatprep.mubr.f32.mxu0 0.0
        %6031 = vmatmul.mubr.f32.gmra.mxu0 %v3154
        %v6032 = vpop.f32.mrf.mxu0
        %v6033 = vadd.f32 0.0, %v6032
        %v6034 = vpop.f32.mrf.mxu0
        %6035 = vmatprep.mubr.f32.mxu0 0.0
        %6036 = vmatmul.mubr.f32.gmra.mxu0 %v3156
        %v6037 = vpop.f32.mrf.mxu0
        %v6038 = vadd.f32 0.0, %v6037
        %v6039 = vpop.f32.mrf.mxu0
        %6040 = vmatprep.mubr.f32.mxu0 0.0
        %6041 = vmatmul.mubr.f32.gmra.mxu0 %v3158
        %v6042 = vpop.f32.mrf.mxu0
        %v6043 = vadd.f32 0.0, %v6042
        %v6044 = vpop.f32.mrf.mxu0
        %6045 = vmatprep.mubr.f32.mxu0 0.0
        %6046 = vmatmul.mubr.f32.gmra.mxu0 %v3160
        %v6047 = vpop.f32.mrf.mxu0
        %v6048 = vadd.f32 0.0, %v6047
        %v6049 = vpop.f32.mrf.mxu0
        %6050 = vmatprep.mubr.f32.mxu0 0.0
        %6051 = vmatmul.mubr.f32.gmra.mxu0 %v3162
        %v6052 = vpop.f32.mrf.mxu0
        %v6053 = vadd.f32 0.0, %v6052
        %v6054 = vpop.f32.mrf.mxu0
        %6055 = vmatprep.mubr.f32.mxu0 0.0
        %6056 = vmatmul.mubr.f32.gmra.mxu0 %v3164
        %v6057 = vpop.f32.mrf.mxu0
        %v6058 = vadd.f32 0.0, %v6057
        %v6059 = vpop.f32.mrf.mxu0
        %6060 = vmatprep.mubr.f32.mxu0 0.0
        %6061 = vmatmul.mubr.f32.gmra.mxu0 %v3166
        %v6062 = vpop.f32.mrf.mxu0
        %v6063 = vadd.f32 0.0, %v6062
        %v6064 = vpop.f32.mrf.mxu0
        %6065 = vmatprep.mubr.f32.mxu0 0.0
        %6066 = vmatmul.mubr.f32.gmra.mxu0 %v3168
        %v6067 = vpop.f32.mrf.mxu0
        %v6068 = vadd.f32 0.0, %v6067
        %v6069 = vpop.f32.mrf.mxu0
        %6070 = vmatprep.mubr.f32.mxu0 0.0
        %6071 = vmatmul.mubr.f32.gmra.mxu0 %v3170
        %v6072 = vpop.f32.mrf.mxu0
        %v6073 = vadd.f32 0.0, %v6072
        %v6074 = vpop.f32.mrf.mxu0
        %6075 = vmatprep.mubr.f32.mxu0 0.0
        %6076 = vmatmul.mubr.f32.gmra.mxu0 %v3172
        %v6077 = vpop.f32.mrf.mxu0
        %v6078 = vadd.f32 0.0, %v6077
        %v6079 = vpop.f32.mrf.mxu0
        %6080 = vmatprep.mubr.f32.mxu0 0.0
        %6081 = vmatmul.mubr.f32.gmra.mxu0 %v3174
        %v6082 = vpop.f32.mrf.mxu0
        %v6083 = vadd.f32 0.0, %v6082
        %v6084 = vpop.f32.mrf.mxu0
        %6085 = vmatprep.mubr.f32.mxu0 0.0
        %6086 = vmatmul.mubr.f32.gmra.mxu0 %v3176
        %v6087 = vpop.f32.mrf.mxu0
        %v6088 = vadd.f32 0.0, %v6087
        %v6089 = vpop.f32.mrf.mxu0
        %6090 = vmatprep.mubr.f32.mxu0 0.0
        %6091 = vmatmul.mubr.f32.gmra.mxu0 %v3178
        %v6092 = vpop.f32.mrf.mxu0
        %v6093 = vadd.f32 0.0, %v6092
        %v6094 = vpop.f32.mrf.mxu0
        %6095 = vmatprep.mubr.f32.mxu0 0.0
        %6096 = vmatmul.mubr.f32.gmra.mxu0 %v3180
        %v6097 = vpop.f32.mrf.mxu0
        %v6098 = vadd.f32 0.0, %v6097
        %v6099 = vpop.f32.mrf.mxu0
        %6100 = vmatprep.mubr.f32.mxu0 0.0
        %6101 = vmatmul.mubr.f32.gmra.mxu0 %v3182
        %v6102 = vpop.f32.mrf.mxu0
        %v6103 = vadd.f32 0.0, %v6102
        %v6104 = vpop.f32.mrf.mxu0
        %6105 = vmatprep.mubr.f32.mxu0 0.0
        %6106 = vmatmul.mubr.f32.gmra.mxu0 %v3184
        %v6107 = vpop.f32.mrf.mxu0
        %v6108 = vadd.f32 0.0, %v6107
        %v6109 = vpop.f32.mrf.mxu0
        %6110 = vmatprep.mubr.f32.mxu0 0.0
        %6111 = vmatmul.mubr.f32.gmra.mxu0 %v3186
        %v6112 = vpop.f32.mrf.mxu0
        %v6113 = vadd.f32 0.0, %v6112
        %v6114 = vpop.f32.mrf.mxu0
        %6115 = vmatprep.mubr.f32.mxu0 0.0
        %6116 = vmatmul.mubr.f32.gmra.mxu0 %v3188
        %v6117 = vpop.f32.mrf.mxu0
        %v6118 = vadd.f32 0.0, %v6117
        %v6119 = vpop.f32.mrf.mxu0
        %6120 = vmatprep.mubr.f32.mxu0 0.0
        %6121 = vmatmul.mubr.f32.gmra.mxu0 %v3190
        %v6122 = vpop.f32.mrf.mxu0
        %v6123 = vadd.f32 0.0, %v6122
        %v6124 = vpop.f32.mrf.mxu0
        %6125 = vmatprep.mubr.f32.mxu0 0.0
        %6126 = vmatmul.mubr.f32.gmra.mxu0 %v3192
        %v6127 = vpop.f32.mrf.mxu0
        %v6128 = vadd.f32 0.0, %v6127
        %v6129 = vpop.f32.mrf.mxu0
        %6130 = vmatprep.mubr.f32.mxu0 0.0
        %6131 = vmatmul.mubr.f32.gmra.mxu0 %v3194
        %v6132 = vpop.f32.mrf.mxu0
        %v6133 = vadd.f32 0.0, %v6132
        %v6134 = vpop.f32.mrf.mxu0
        %6135 = vmatprep.mubr.f32.mxu0 0.0
        %6136 = vmatmul.mubr.f32.gmra.mxu0 %v3196
        %v6137 = vpop.f32.mrf.mxu0
        %v6138 = vadd.f32 0.0, %v6137
        %v6139 = vpop.f32.mrf.mxu0
        %6140 = vmatprep.mubr.f32.mxu0 0.0
        %6141 = vmatmul.mubr.f32.gmra.mxu0 %v3198
        %v6142 = vpop.f32.mrf.mxu0
        %v6143 = vadd.f32 0.0, %v6142
        %v6144 = vpop.f32.mrf.mxu0
        %6145 = vmatprep.mubr.f32.mxu0 0.0
        %6146 = vmatmul.mubr.f32.gmra.mxu0 %v3200
        %v6147 = vpop.f32.mrf.mxu0
        %v6148 = vadd.f32 0.0, %v6147
        %v6149 = vpop.f32.mrf.mxu0
        %6150 = vmatprep.mubr.f32.mxu0 0.0
        %6151 = vmatmul.mubr.f32.gmra.mxu0 %v3202
        %v6152 = vpop.f32.mrf.mxu0
        %v6153 = vadd.f32 0.0, %v6152
        %v6154 = vpop.f32.mrf.mxu0
        %6155 = vmatprep.mubr.f32.mxu0 0.0
        %6156 = vmatmul.mubr.f32.gmra.mxu0 %v3204
        %v6157 = vpop.f32.mrf.mxu0
        %v6158 = vadd.f32 0.0, %v6157
        %v6159 = vpop.f32.mrf.mxu0
        %6160 = vmatprep.mubr.f32.mxu0 0.0
        %6161 = vmatmul.mubr.f32.gmra.mxu0 %v3206
        %v6162 = vpop.f32.mrf.mxu0
        %v6163 = vadd.f32 0.0, %v6162
        %v6164 = vpop.f32.mrf.mxu0
        %6165 = vmatprep.mubr.f32.mxu0 0.0
        %6166 = vmatmul.mubr.f32.gmra.mxu0 %v3208
        %v6167 = vpop.f32.mrf.mxu0
        %v6168 = vadd.f32 0.0, %v6167
        %v6169 = vpop.f32.mrf.mxu0
        %6170 = vmatprep.mubr.f32.mxu0 0.0
        %6171 = vmatmul.mubr.f32.gmra.mxu0 %v3210
        %v6172 = vpop.f32.mrf.mxu0
        %v6173 = vadd.f32 0.0, %v6172
        %v6174 = vpop.f32.mrf.mxu0
        %6175 = vmatprep.mubr.f32.mxu0 0.0
        %6176 = vmatmul.mubr.f32.gmra.mxu0 %v3212
        %v6177 = vpop.f32.mrf.mxu0
        %v6178 = vadd.f32 0.0, %v6177
        %v6179 = vpop.f32.mrf.mxu0
        %6180 = vmatprep.mubr.f32.mxu0 0.0
        %6181 = vmatmul.mubr.f32.gmra.mxu0 %v3214
        %v6182 = vpop.f32.mrf.mxu0
        %v6183 = vadd.f32 0.0, %v6182
        %v6184 = vpop.f32.mrf.mxu0
        %6185 = vmatprep.mubr.f32.mxu0 0.0
        %6186 = vmatmul.mubr.f32.gmra.mxu0 %v3216
        %v6187 = vpop.f32.mrf.mxu0
        %v6188 = vadd.f32 0.0, %v6187
        %v6189 = vpop.f32.mrf.mxu0
        %6190 = vmatprep.mubr.f32.mxu0 0.0
        %6191 = vmatmul.mubr.f32.gmra.mxu0 %v3218
        %v6192 = vpop.f32.mrf.mxu0
        %v6193 = vadd.f32 0.0, %v6192
        %v6194 = vpop.f32.mrf.mxu0
        %6195 = vmatprep.mubr.f32.mxu0 0.0
        %6196 = vmatmul.mubr.f32.gmra.mxu0 %v3220
        %v6197 = vpop.f32.mrf.mxu0
        %v6198 = vadd.f32 0.0, %v6197
        %v6199 = vpop.f32.mrf.mxu0
        %6200 = vmatprep.mubr.f32.mxu0 0.0
        %6201 = vmatmul.mubr.f32.gmra.mxu0 %v3222
        %v6202 = vpop.f32.mrf.mxu0
        %v6203 = vadd.f32 0.0, %v6202
        %v6204 = vpop.f32.mrf.mxu0
        %6205 = vmatprep.mubr.f32.mxu0 0.0
        %6206 = vmatmul.mubr.f32.gmra.mxu0 %v3224
        %v6207 = vpop.f32.mrf.mxu0
        %v6208 = vadd.f32 0.0, %v6207
        %v6209 = vpop.f32.mrf.mxu0
        %6210 = vmatprep.mubr.f32.mxu0 0.0
        %6211 = vmatmul.mubr.f32.gmra.mxu0 %v3226
        %v6212 = vpop.f32.mrf.mxu0
        %v6213 = vadd.f32 0.0, %v6212
        %v6214 = vpop.f32.mrf.mxu0
        %6215 = vmatprep.mubr.f32.mxu0 0.0
        %6216 = vmatmul.mubr.f32.gmra.mxu0 %v3228
        %v6217 = vpop.f32.mrf.mxu0
        %v6218 = vadd.f32 0.0, %v6217
        %v6219 = vpop.f32.mrf.mxu0
        %6220 = vmatprep.mubr.f32.mxu0 0.0
        %6221 = vmatmul.mubr.f32.gmra.mxu0 %v3230
        %v6222 = vpop.f32.mrf.mxu0
        %v6223 = vadd.f32 0.0, %v6222
        %v6224 = vpop.f32.mrf.mxu0
        %6225 = vmatprep.mubr.f32.mxu0 0.0
        %6226 = vmatmul.mubr.f32.gmra.mxu0 %v3232
        %v6227 = vpop.f32.mrf.mxu0
        %v6228 = vadd.f32 0.0, %v6227
        %v6229 = vpop.f32.mrf.mxu0
        %6230 = vmatprep.mubr.f32.mxu0 0.0
        %6231 = vmatmul.mubr.f32.gmra.mxu0 %v3234
        %v6232 = vpop.f32.mrf.mxu0
        %v6233 = vadd.f32 0.0, %v6232
        %v6234 = vpop.f32.mrf.mxu0
        %6235 = vmatprep.mubr.f32.mxu0 0.0
        %6236 = vmatmul.mubr.f32.gmra.mxu0 %v3236
        %v6237 = vpop.f32.mrf.mxu0
        %v6238 = vadd.f32 0.0, %v6237
        %v6239 = vpop.f32.mrf.mxu0
        %6240 = vmatprep.mubr.f32.mxu0 0.0
        %6241 = vmatmul.mubr.f32.gmra.mxu0 %v3238
        %v6242 = vpop.f32.mrf.mxu0
        %v6243 = vadd.f32 0.0, %v6242
        %v6244 = vpop.f32.mrf.mxu0
        %6245 = vmatprep.mubr.f32.mxu0 0.0
        %6246 = vmatmul.mubr.f32.gmra.mxu0 %v3240
        %v6247 = vpop.f32.mrf.mxu0
        %v6248 = vadd.f32 0.0, %v6247
        %v6249 = vpop.f32.mrf.mxu0
        %6250 = vmatprep.mubr.f32.mxu0 0.0
        %6251 = vmatmul.mubr.f32.gmra.mxu0 %v3242
        %v6252 = vpop.f32.mrf.mxu0
        %v6253 = vadd.f32 0.0, %v6252
        %v6254 = vpop.f32.mrf.mxu0
        %6255 = vmatprep.mubr.f32.mxu0 0.0
        %6256 = vmatmul.mubr.f32.gmra.mxu0 %v3244
        %v6257 = vpop.f32.mrf.mxu0
        %v6258 = vadd.f32 0.0, %v6257
        %v6259 = vpop.f32.mrf.mxu0
        %6260 = vmatprep.mubr.f32.mxu0 0.0
        %6261 = vmatmul.mubr.f32.gmra.mxu0 %v3246
        %v6262 = vpop.f32.mrf.mxu0
        %v6263 = vadd.f32 0.0, %v6262
        %v6264 = vpop.f32.mrf.mxu0
        %6265 = vmatprep.mubr.f32.mxu0 0.0
        %6266 = vmatmul.mubr.f32.gmra.mxu0 %v3248
        %v6267 = vpop.f32.mrf.mxu0
        %v6268 = vadd.f32 0.0, %v6267
        %v6269 = vpop.f32.mrf.mxu0
        %6270 = vmatprep.mubr.f32.mxu0 0.0
        %6271 = vmatmul.mubr.f32.gmra.mxu0 %v3250
        %v6272 = vpop.f32.mrf.mxu0
        %v6273 = vadd.f32 0.0, %v6272
        %v6274 = vpop.f32.mrf.mxu0
        %6275 = vmatprep.mubr.f32.mxu0 0.0
        %6276 = vmatmul.mubr.f32.gmra.mxu0 %v3252
        %v6277 = vpop.f32.mrf.mxu0
        %v6278 = vadd.f32 0.0, %v6277
        %v6279 = vpop.f32.mrf.mxu0
        %6280 = vmatprep.mubr.f32.mxu0 0.0
        %6281 = vmatmul.mubr.f32.gmra.mxu0 %v3254
        %v6282 = vpop.f32.mrf.mxu0
        %v6283 = vadd.f32 0.0, %v6282
        %v6284 = vpop.f32.mrf.mxu0
        %6285 = vmatprep.mubr.f32.mxu0 0.0
        %6286 = vmatmul.mubr.f32.gmra.mxu0 %v3256
        %v6287 = vpop.f32.mrf.mxu0
        %v6288 = vadd.f32 0.0, %v6287
        %v6289 = vpop.f32.mrf.mxu0
        %6290 = vmatprep.mubr.f32.mxu0 0.0
        %6291 = vmatmul.mubr.f32.gmra.mxu0 %v3258
        %v6292 = vpop.f32.mrf.mxu0
        %v6293 = vadd.f32 0.0, %v6292
        %v6294 = vpop.f32.mrf.mxu0
        %6295 = vmatprep.mubr.f32.mxu0 0.0
        %6296 = vmatmul.mubr.f32.gmra.mxu0 %v3260
        %v6297 = vpop.f32.mrf.mxu0
        %v6298 = vadd.f32 0.0, %v6297
        %v6299 = vpop.f32.mrf.mxu0
        %6300 = vmatprep.mubr.f32.mxu0 0.0
        %6301 = vmatmul.mubr.f32.gmra.mxu0 %v3262
        %v6302 = vpop.f32.mrf.mxu0
        %v6303 = vadd.f32 0.0, %v6302
        %v6304 = vpop.f32.mrf.mxu0
        %6305 = vmatprep.mubr.f32.mxu0 0.0
        %6306 = vmatmul.mubr.f32.gmra.mxu0 %v3264
        %v6307 = vpop.f32.mrf.mxu0
        %v6308 = vadd.f32 0.0, %v6307
        %v6309 = vpop.f32.mrf.mxu0
        %6310 = vmatprep.mubr.f32.mxu0 0.0
        %6311 = vmatmul.mubr.f32.gmra.mxu0 %v3266
        %v6312 = vpop.f32.mrf.mxu0
        %v6313 = vadd.f32 0.0, %v6312
        %v6314 = vpop.f32.mrf.mxu0
        %6315 = vmatprep.mubr.f32.mxu0 0.0
        %6316 = vmatmul.mubr.f32.gmra.mxu0 %v3268
        %v6317 = vpop.f32.mrf.mxu0
        %v6318 = vadd.f32 0.0, %v6317
        %v6319 = vpop.f32.mrf.mxu0
        %6320 = vmatprep.mubr.f32.mxu0 0.0
        %6321 = vmatmul.mubr.f32.gmra.mxu0 %v3270
        %v6322 = vpop.f32.mrf.mxu0
        %v6323 = vadd.f32 0.0, %v6322
        %v6324 = vpop.f32.mrf.mxu0
        %6325 = vmatprep.mubr.f32.mxu0 0.0
        %6326 = vmatmul.mubr.f32.gmra.mxu0 %v3272
        %v6327 = vpop.f32.mrf.mxu0
        %v6328 = vadd.f32 0.0, %v6327
        %v6329 = vpop.f32.mrf.mxu0
        %6330 = vmatprep.mubr.f32.mxu0 0.0
        %6331 = vmatmul.mubr.f32.gmra.mxu0 %v3274
        %v6332 = vpop.f32.mrf.mxu0
        %v6333 = vadd.f32 0.0, %v6332
        %v6334 = vpop.f32.mrf.mxu0
        %6335 = vmatprep.mubr.f32.mxu0 0.0
        %6336 = vmatmul.mubr.f32.gmra.mxu0 %v3276
        %v6337 = vpop.f32.mrf.mxu0
        %v6338 = vadd.f32 0.0, %v6337
        %v6339 = vpop.f32.mrf.mxu0
        %6340 = vmatprep.mubr.f32.mxu0 0.0
        %6341 = vmatmul.mubr.f32.gmra.mxu0 %v3278
        %v6342 = vpop.f32.mrf.mxu0
        %v6343 = vadd.f32 0.0, %v6342
        %v6344 = vpop.f32.mrf.mxu0
        %6345 = vmatprep.mubr.f32.mxu0 0.0
        %6346 = vmatmul.mubr.f32.gmra.mxu0 %v3280
        %v6347 = vpop.f32.mrf.mxu0
        %v6348 = vadd.f32 0.0, %v6347
        %v6349 = vpop.f32.mrf.mxu0
        %6350 = vmatprep.mubr.f32.mxu0 0.0
        %6351 = vmatmul.mubr.f32.gmra.mxu0 %v3282
        %v6352 = vpop.f32.mrf.mxu0
        %v6353 = vadd.f32 0.0, %v6352
        %v6354 = vpop.f32.mrf.mxu0
        %6355 = vmatprep.mubr.f32.mxu0 0.0
        %6356 = vmatmul.mubr.f32.gmra.mxu0 %v3284
        %v6357 = vpop.f32.mrf.mxu0
        %v6358 = vadd.f32 0.0, %v6357
        %v6359 = vpop.f32.mrf.mxu0
        %6360 = vmatprep.mubr.f32.mxu0 0.0
        %6361 = vmatmul.mubr.f32.gmra.mxu0 %v3286
        %v6362 = vpop.f32.mrf.mxu0
        %v6363 = vadd.f32 0.0, %v6362
        %v6364 = vpop.f32.mrf.mxu0
        %6365 = vmatprep.mubr.f32.mxu0 0.0
        %6366 = vmatmul.mubr.f32.gmra.mxu0 %v3288
        %v6367 = vpop.f32.mrf.mxu0
        %v6368 = vadd.f32 0.0, %v6367
        %v6369 = vpop.f32.mrf.mxu0
        %6370 = vmatprep.mubr.f32.mxu0 0.0
        %6371 = vmatmul.mubr.f32.gmra.mxu0 %v3290
        %v6372 = vpop.f32.mrf.mxu0
        %v6373 = vadd.f32 0.0, %v6372
        %v6374 = vpop.f32.mrf.mxu0
        %6375 = vmatprep.mubr.f32.mxu0 0.0
        %6376 = vmatmul.mubr.f32.gmra.mxu0 %v3292
        %v6377 = vpop.f32.mrf.mxu0
        %v6378 = vadd.f32 0.0, %v6377
        %v6379 = vpop.f32.mrf.mxu0
        %6380 = vmatprep.mubr.f32.mxu0 0.0
        %6381 = vmatmul.mubr.f32.gmra.mxu0 %v3294
        %v6382 = vpop.f32.mrf.mxu0
        %v6383 = vadd.f32 0.0, %v6382
        %v6384 = vpop.f32.mrf.mxu0
        %6385 = vmatprep.mubr.f32.mxu0 0.0
        %6386 = vmatmul.mubr.f32.gmra.mxu0 %v3296
        %v6387 = vpop.f32.mrf.mxu0
        %v6388 = vadd.f32 0.0, %v6387
        %v6389 = vpop.f32.mrf.mxu0
        %6390 = vmatprep.mubr.f32.mxu0 0.0
        %6391 = vmatmul.mubr.f32.gmra.mxu0 %v3298
        %v6392 = vpop.f32.mrf.mxu0
        %v6393 = vadd.f32 0.0, %v6392
        %v6394 = vpop.f32.mrf.mxu0
        %6395 = vmatprep.mubr.f32.mxu0 0.0
        %6396 = vmatmul.mubr.f32.gmra.mxu0 %v3300
        %v6397 = vpop.f32.mrf.mxu0
        %v6398 = vadd.f32 0.0, %v6397
        %v6399 = vpop.f32.mrf.mxu0
        %6400 = vmatprep.mubr.f32.mxu0 0.0
        %6401 = vmatmul.mubr.f32.gmra.mxu0 %v3302
        %v6402 = vpop.f32.mrf.mxu0
        %v6403 = vadd.f32 0.0, %v6402
        %v6404 = vpop.f32.mrf.mxu0
        %6405 = vmatprep.mubr.f32.mxu0 0.0
        %6406 = vmatmul.mubr.f32.gmra.mxu0 %v3304
        %v6407 = vpop.f32.mrf.mxu0
        %v6408 = vadd.f32 0.0, %v6407
        %v6409 = vpop.f32.mrf.mxu0
        %6410 = vmatprep.mubr.f32.mxu0 0.0
        %6411 = vmatmul.mubr.f32.gmra.mxu0 %v3306
        %v6412 = vpop.f32.mrf.mxu0
        %v6413 = vadd.f32 0.0, %v6412
        %v6414 = vpop.f32.mrf.mxu0
        %6415 = vmatprep.mubr.f32.mxu0 0.0
        %6416 = vmatmul.mubr.f32.gmra.mxu0 %v3308
        %v6417 = vpop.f32.mrf.mxu0
        %v6418 = vadd.f32 0.0, %v6417
        %v6419 = vpop.f32.mrf.mxu0
        %6420 = vmatprep.mubr.f32.mxu0 0.0
        %6421 = vmatmul.mubr.f32.gmra.mxu0 %v3310
        %v6422 = vpop.f32.mrf.mxu0
        %v6423 = vadd.f32 0.0, %v6422
        %v6424 = vpop.f32.mrf.mxu0
        %6425 = vmatprep.mubr.f32.mxu0 0.0
        %6426 = vmatmul.mubr.f32.gmra.mxu0 %v3312
        %v6427 = vpop.f32.mrf.mxu0
        %v6428 = vadd.f32 0.0, %v6427
        %v6429 = vpop.f32.mrf.mxu0
        %6430 = vmatprep.mubr.f32.mxu0 0.0
        %6431 = vmatmul.mubr.f32.gmra.mxu0 %v3314
        %v6432 = vpop.f32.mrf.mxu0
        %v6433 = vadd.f32 0.0, %v6432
        %v6434 = vpop.f32.mrf.mxu0
        %6435 = vmatprep.mubr.f32.mxu0 0.0
        %6436 = vmatmul.mubr.f32.gmra.mxu0 %v3316
        %v6437 = vpop.f32.mrf.mxu0
        %v6438 = vadd.f32 0.0, %v6437
        %v6439 = vpop.f32.mrf.mxu0
        %6440 = vmatprep.mubr.f32.mxu0 0.0
        %6441 = vmatmul.mubr.f32.gmra.mxu0 %v3318
        %v6442 = vpop.f32.mrf.mxu0
        %v6443 = vadd.f32 0.0, %v6442
        %v6444 = vpop.f32.mrf.mxu0
        %6445 = vmatprep.mubr.f32.mxu0 0.0
        %6446 = vmatmul.mubr.f32.gmra.mxu0 %v3320
        %v6447 = vpop.f32.mrf.mxu0
        %v6448 = vadd.f32 0.0, %v6447
        %v6449 = vpop.f32.mrf.mxu0
        %6450 = vmatprep.mubr.f32.mxu0 0.0
        %6451 = vmatmul.mubr.f32.gmra.mxu0 %v3322
        %v6452 = vpop.f32.mrf.mxu0
        %v6453 = vadd.f32 0.0, %v6452
        %v6454 = vpop.f32.mrf.mxu0
        %6455 = vmatprep.mubr.f32.mxu0 0.0
        %6456 = vmatmul.mubr.f32.gmra.mxu0 %v3324
        %v6457 = vpop.f32.mrf.mxu0
        %v6458 = vadd.f32 0.0, %v6457
        %v6459 = vpop.f32.mrf.mxu0
        %6460 = vmatprep.mubr.f32.mxu0 0.0
        %6461 = vmatmul.mubr.f32.gmra.mxu0 %v3326
        %v6462 = vpop.f32.mrf.mxu0
        %v6463 = vadd.f32 0.0, %v6462
        %v6464 = vpop.f32.mrf.mxu0
        %6465 = vmatprep.mubr.f32.mxu0 0.0
        %6466 = vmatmul.mubr.f32.gmra.mxu0 %v3328
        %v6467 = vpop.f32.mrf.mxu0
        %v6468 = vadd.f32 0.0, %v6467
        %v6469 = vpop.f32.mrf.mxu0
        %6470 = vmatprep.mubr.f32.mxu0 0.0
        %6471 = vmatmul.mubr.f32.gmra.mxu0 %v3330
        %v6472 = vpop.f32.mrf.mxu0
        %v6473 = vadd.f32 0.0, %v6472
        %v6474 = vpop.f32.mrf.mxu0
        %6475 = vmatprep.mubr.f32.mxu0 0.0
        %6476 = vmatmul.mubr.f32.gmra.mxu0 %v3332
        %v6477 = vpop.f32.mrf.mxu0
        %v6478 = vadd.f32 0.0, %v6477
        %v6479 = vpop.f32.mrf.mxu0
        %6480 = vmatprep.mubr.f32.mxu0 0.0
        %6481 = vmatmul.mubr.f32.gmra.mxu0 %v3334
        %v6482 = vpop.f32.mrf.mxu0
        %v6483 = vadd.f32 0.0, %v6482
        %v6484 = vpop.f32.mrf.mxu0
        %6485 = vmatprep.mubr.f32.mxu0 0.0
        %6486 = vmatmul.mubr.f32.gmra.mxu0 %v3336
        %v6487 = vpop.f32.mrf.mxu0
        %v6488 = vadd.f32 0.0, %v6487
        %v6489 = vpop.f32.mrf.mxu0
        %6490 = vmatprep.mubr.f32.mxu0 0.0
        %6491 = vmatmul.mubr.f32.gmra.mxu0 %v3338
        %v6492 = vpop.f32.mrf.mxu0
        %v6493 = vadd.f32 0.0, %v6492
        %v6494 = vpop.f32.mrf.mxu0
        %6495 = vmatprep.mubr.f32.mxu0 0.0
        %6496 = vmatmul.mubr.f32.gmra.mxu0 %v3340
        %v6497 = vpop.f32.mrf.mxu0
        %v6498 = vadd.f32 0.0, %v6497
        %v6499 = vpop.f32.mrf.mxu0
        %6500 = vmatprep.mubr.f32.mxu0 0.0
        %6501 = vmatmul.mubr.f32.gmra.mxu0 %v3342
        %v6502 = vpop.f32.mrf.mxu0
        %v6503 = vadd.f32 0.0, %v6502
        %v6504 = vpop.f32.mrf.mxu0
        %6505 = vmatprep.mubr.f32.mxu0 0.0
        %6506 = vmatmul.mubr.f32.gmra.mxu0 %v3344
        %v6507 = vpop.f32.mrf.mxu0
        %v6508 = vadd.f32 0.0, %v6507
        %v6509 = vpop.f32.mrf.mxu0
        %6510 = vmatprep.mubr.f32.mxu0 0.0
        %6511 = vmatmul.mubr.f32.gmra.mxu0 %v3346
        %v6512 = vpop.f32.mrf.mxu0
        %v6513 = vadd.f32 0.0, %v6512
        %v6514 = vpop.f32.mrf.mxu0
        %6515 = vmatprep.mubr.f32.mxu0 0.0
        %6516 = vmatmul.mubr.f32.gmra.mxu0 %v3348
        %v6517 = vpop.f32.mrf.mxu0
        %v6518 = vadd.f32 0.0, %v6517
        %v6519 = vpop.f32.mrf.mxu0
        %6520 = vmatprep.mubr.f32.mxu0 0.0
        %6521 = vmatmul.mubr.f32.gmra.mxu0 %v3350
        %v6522 = vpop.f32.mrf.mxu0
        %v6523 = vadd.f32 0.0, %v6522
        %v6524 = vpop.f32.mrf.mxu0
        %6525 = vmatprep.mubr.f32.mxu0 0.0
        %6526 = vmatmul.mubr.f32.gmra.mxu0 %v3352
        %v6527 = vpop.f32.mrf.mxu0
        %v6528 = vadd.f32 0.0, %v6527
        %v6529 = vpop.f32.mrf.mxu0
        %6530 = vmatprep.mubr.f32.mxu0 0.0
        %6531 = vmatmul.mubr.f32.gmra.mxu0 %v3354
        %v6532 = vpop.f32.mrf.mxu0
        %v6533 = vadd.f32 0.0, %v6532
        %v6534 = vpop.f32.mrf.mxu0
        %6535 = vmatprep.mubr.f32.mxu0 0.0
        %6536 = vmatmul.mubr.f32.gmra.mxu0 %v3356
        %v6537 = vpop.f32.mrf.mxu0
        %v6538 = vadd.f32 0.0, %v6537
        %v6539 = vpop.f32.mrf.mxu0
        %6540 = vmatprep.mubr.f32.mxu0 0.0
        %6541 = vmatmul.mubr.f32.gmra.mxu0 %v3358
        %v6542 = vpop.f32.mrf.mxu0
        %v6543 = vadd.f32 0.0, %v6542
        %v6544 = vpop.f32.mrf.mxu0
        %6545 = vmatprep.mubr.f32.mxu0 0.0
        %6546 = vmatmul.mubr.f32.gmra.mxu0 %v3360
        %v6547 = vpop.f32.mrf.mxu0
        %v6548 = vadd.f32 0.0, %v6547
        %v6549 = vpop.f32.mrf.mxu0
        %6550 = vmatprep.mubr.f32.mxu0 0.0
        %6551 = vmatmul.mubr.f32.gmra.mxu0 %v3362
        %v6552 = vpop.f32.mrf.mxu0
        %v6553 = vadd.f32 0.0, %v6552
        %v6554 = vpop.f32.mrf.mxu0
        %6555 = vmatprep.mubr.f32.mxu0 0.0
        %6556 = vmatmul.mubr.f32.gmra.mxu0 %v3364
        %v6557 = vpop.f32.mrf.mxu0
        %v6558 = vadd.f32 0.0, %v6557
        %v6559 = vpop.f32.mrf.mxu0
        %6560 = vmatprep.mubr.f32.mxu0 0.0
        %6561 = vmatmul.mubr.f32.gmra.mxu0 %v3366
        %v6562 = vpop.f32.mrf.mxu0
        %v6563 = vadd.f32 0.0, %v6562
        %v6564 = vpop.f32.mrf.mxu0
        %6565 = vmatprep.mubr.f32.mxu0 0.0
        %6566 = vmatmul.mubr.f32.gmra.mxu0 %v3368
        %v6567 = vpop.f32.mrf.mxu0
        %v6568 = vadd.f32 0.0, %v6567
        %v6569 = vpop.f32.mrf.mxu0
        %6570 = vmatprep.mubr.f32.mxu0 0.0
        %6571 = vmatmul.mubr.f32.gmra.mxu0 %v3370
        %v6572 = vpop.f32.mrf.mxu0
        %v6573 = vadd.f32 0.0, %v6572
        %v6574 = vpop.f32.mrf.mxu0
        %6575 = vmatprep.mubr.f32.mxu0 0.0
        %6576 = vmatmul.mubr.f32.gmra.mxu0 %v3372
        %v6577 = vpop.f32.mrf.mxu0
        %v6578 = vadd.f32 0.0, %v6577
        %v6579 = vpop.f32.mrf.mxu0
        %6580 = vmatprep.mubr.f32.mxu0 0.0
        %6581 = vmatmul.mubr.f32.gmra.mxu0 %v3374
        %v6582 = vpop.f32.mrf.mxu0
        %v6583 = vadd.f32 0.0, %v6582
        %v6584 = vpop.f32.mrf.mxu0
        %6585 = vmatprep.mubr.f32.mxu0 0.0
        %6586 = vmatmul.mubr.f32.gmra.mxu0 %v3376
        %v6587 = vpop.f32.mrf.mxu0
        %v6588 = vadd.f32 0.0, %v6587
        %v6589 = vpop.f32.mrf.mxu0
        %6590 = vmatprep.mubr.f32.mxu0 0.0
        %6591 = vmatmul.mubr.f32.gmra.mxu0 %v3378
        %v6592 = vpop.f32.mrf.mxu0
        %v6593 = vadd.f32 0.0, %v6592
        %v6594 = vpop.f32.mrf.mxu0
        %6595 = vmatprep.mubr.f32.mxu0 0.0
        %6596 = vmatmul.mubr.f32.gmra.mxu0 %v3380
        %v6597 = vpop.f32.mrf.mxu0
        %v6598 = vadd.f32 0.0, %v6597
        %v6599 = vpop.f32.mrf.mxu0
        %6600 = vmatprep.mubr.f32.mxu0 0.0
        %6601 = vmatmul.mubr.f32.gmra.mxu0 %v3382
        %v6602 = vpop.f32.mrf.mxu0
        %v6603 = vadd.f32 0.0, %v6602
        %v6604 = vpop.f32.mrf.mxu0
        %6605 = vmatprep.mubr.f32.mxu0 0.0
        %6606 = vmatmul.mubr.f32.gmra.mxu0 %v3384
        %v6607 = vpop.f32.mrf.mxu0
        %v6608 = vadd.f32 0.0, %v6607
        %v6609 = vpop.f32.mrf.mxu0
        %6610 = vmatprep.mubr.f32.mxu0 0.0
        %6611 = vmatmul.mubr.f32.gmra.mxu0 %v3386
        %v6612 = vpop.f32.mrf.mxu0
        %v6613 = vadd.f32 0.0, %v6612
        %v6614 = vpop.f32.mrf.mxu0
        %6615 = vmatprep.mubr.f32.mxu0 0.0
        %6616 = vmatmul.mubr.f32.gmra.mxu0 %v3388
        %v6617 = vpop.f32.mrf.mxu0
        %v6618 = vadd.f32 0.0, %v6617
        %v6619 = vpop.f32.mrf.mxu0
        %6620 = vmatprep.mubr.f32.mxu0 0.0
        %6621 = vmatmul.mubr.f32.gmra.mxu0 %v3390
        %v6622 = vpop.f32.mrf.mxu0
        %v6623 = vadd.f32 0.0, %v6622
        %v6624 = vpop.f32.mrf.mxu0
        %6625 = vmatprep.mubr.f32.mxu0 0.0
        %6626 = vmatmul.mubr.f32.gmra.mxu0 %v3392
        %v6627 = vpop.f32.mrf.mxu0
        %v6628 = vadd.f32 0.0, %v6627
        %v6629 = vpop.f32.mrf.mxu0
        %6630 = vmatprep.mubr.f32.mxu0 0.0
        %6631 = vmatmul.mubr.f32.gmra.mxu0 %v3394
        %v6632 = vpop.f32.mrf.mxu0
        %v6633 = vadd.f32 0.0, %v6632
        %v6634 = vpop.f32.mrf.mxu0
        %6635 = vmatprep.mubr.f32.mxu0 0.0
        %6636 = vmatmul.mubr.f32.gmra.mxu0 %v3396
        %v6637 = vpop.f32.mrf.mxu0
        %v6638 = vadd.f32 0.0, %v6637
        %v6639 = vpop.f32.mrf.mxu0
        %6640 = vmatprep.mubr.f32.mxu0 0.0
        %6641 = vmatmul.mubr.f32.gmra.mxu0 %v3398
        %v6642 = vpop.f32.mrf.mxu0
        %v6643 = vadd.f32 0.0, %v6642
        %v6644 = vpop.f32.mrf.mxu0
        %6645 = vmatprep.mubr.f32.mxu0 0.0
        %6646 = vmatmul.mubr.f32.gmra.mxu0 %v3400
        %v6647 = vpop.f32.mrf.mxu0
        %v6648 = vadd.f32 0.0, %v6647
        %v6649 = vpop.f32.mrf.mxu0
        %6650 = vmatprep.mubr.f32.mxu0 0.0
        %6651 = vmatmul.mubr.f32.gmra.mxu0 %v5955
        %v6652 = vpop.f32.mrf.mxu0
        %v6653 = vadd.f32 0.0, %v6652
        %v6654 = vpop.f32.mrf.mxu0
        %6655 = vmatprep.mubr.f32.mxu0 0.0
        %6656 = vmatmul.mubr.f32.gmra.mxu0 %v5957
        %v6657 = vpop.f32.mrf.mxu0
        %v6658 = vadd.f32 0.0, %v6657
        %v6659 = vpop.f32.mrf.mxu0
        %6660 = vmatprep.mubr.f32.mxu0 0.0
        %6661 = vmatmul.mubr.f32.gmra.mxu0 %v5959
        %v6662 = vpop.f32.mrf.mxu0
        %v6663 = vadd.f32 0.0, %v6662
        %v6664 = vpop.f32.mrf.mxu0
        %6665 = vmatprep.mubr.f32.mxu0 0.0
        %6666 = vmatmul.mubr.f32.gmra.mxu0 %v5961
        %v6667 = vpop.f32.mrf.mxu0
        %v6668 = vadd.f32 0.0, %v6667
        %v6669 = vpop.f32.mrf.mxu0
        %6670 = vdwg.mxu0
        %v6671 = vadd.f32 %v5816, %v6033
        %v6672 = vadd.f32 %v5817, %v6038
        %v6673 = vadd.f32 %v5818, %v6043
        %v6674 = vadd.f32 %v5819, %v6048
        %v6675 = vadd.f32 %v5820, %v6053
        %v6676 = vadd.f32 %v5821, %v6058
        %v6677 = vadd.f32 %v5822, %v6063
        %v6678 = vadd.f32 %v5823, %v6068
        %v6679 = vadd.f32 %v5824, %v6073
        %v6680 = vadd.f32 %v5825, %v6078
        %v6681 = vadd.f32 %v5826, %v6083
        %v6682 = vadd.f32 %v5827, %v6088
        %v6683 = vadd.f32 %v5828, %v6093
        %v6684 = vadd.f32 %v5829, %v6098
        %v6685 = vadd.f32 %v5830, %v6103
        %v6686 = vadd.f32 %v5831, %v6108
        %v6687 = vadd.f32 %v5832, %v6113
        %v6688 = vadd.f32 %v5833, %v6118
        %v6689 = vadd.f32 %v5834, %v6123
        %v6690 = vadd.f32 %v5835, %v6128
        %v6691 = vadd.f32 %v5836, %v6133
        %v6692 = vadd.f32 %v5837, %v6138
        %v6693 = vadd.f32 %v5838, %v6143
        %v6694 = vadd.f32 %v5839, %v6148
        %v6695 = vadd.f32 %v5840, %v6153
        %v6696 = vadd.f32 %v5841, %v6158
        %v6697 = vadd.f32 %v5842, %v6163
        %v6698 = vadd.f32 %v5843, %v6168
        %v6699 = vadd.f32 %v5844, %v6173
        %v6700 = vadd.f32 %v5845, %v6178
        %v6701 = vadd.f32 %v5846, %v6183
        %v6702 = vadd.f32 %v5847, %v6188
        %v6703 = vadd.f32 %v5848, %v6193
        %v6704 = vadd.f32 %v5849, %v6198
        %v6705 = vadd.f32 %v5850, %v6203
        %v6706 = vadd.f32 %v5851, %v6208
        %v6707 = vadd.f32 %v5852, %v6213
        %v6708 = vadd.f32 %v5853, %v6218
        %v6709 = vadd.f32 %v5854, %v6223
        %v6710 = vadd.f32 %v5855, %v6228
        %v6711 = vadd.f32 %v5856, %v6233
        %v6712 = vadd.f32 %v5857, %v6238
        %v6713 = vadd.f32 %v5858, %v6243
        %v6714 = vadd.f32 %v5859, %v6248
        %v6715 = vadd.f32 %v5860, %v6253
        %v6716 = vadd.f32 %v5861, %v6258
        %v6717 = vadd.f32 %v5862, %v6263
        %v6718 = vadd.f32 %v5863, %v6268
        %v6719 = vadd.f32 %v5864, %v6273
        %v6720 = vadd.f32 %v5865, %v6278
        %v6721 = vadd.f32 %v5866, %v6283
        %v6722 = vadd.f32 %v5867, %v6288
        %v6723 = vadd.f32 %v5868, %v6293
        %v6724 = vadd.f32 %v5869, %v6298
        %v6725 = vadd.f32 %v5870, %v6303
        %v6726 = vadd.f32 %v5871, %v6308
        %v6727 = vadd.f32 %v5872, %v6313
        %v6728 = vadd.f32 %v5873, %v6318
        %v6729 = vadd.f32 %v5874, %v6323
        %v6730 = vadd.f32 %v5875, %v6328
        %v6731 = vadd.f32 %v5876, %v6333
        %v6732 = vadd.f32 %v5877, %v6338
        %v6733 = vadd.f32 %v5878, %v6343
        %v6734 = vadd.f32 %v5879, %v6348
        %v6735 = vadd.f32 %v5880, %v6353
        %v6736 = vadd.f32 %v5881, %v6358
        %v6737 = vadd.f32 %v5882, %v6363
        %v6738 = vadd.f32 %v5883, %v6368
        %v6739 = vadd.f32 %v5884, %v6373
        %v6740 = vadd.f32 %v5885, %v6378
        %v6741 = vadd.f32 %v5886, %v6383
        %v6742 = vadd.f32 %v5887, %v6388
        %v6743 = vadd.f32 %v5888, %v6393
        %v6744 = vadd.f32 %v5889, %v6398
        %v6745 = vadd.f32 %v5890, %v6403
        %v6746 = vadd.f32 %v5891, %v6408
        %v6747 = vadd.f32 %v5892, %v6413
        %v6748 = vadd.f32 %v5893, %v6418
        %v6749 = vadd.f32 %v5894, %v6423
        %v6750 = vadd.f32 %v5895, %v6428
        %v6751 = vadd.f32 %v5896, %v6433
        %v6752 = vadd.f32 %v5897, %v6438
        %v6753 = vadd.f32 %v5898, %v6443
        %v6754 = vadd.f32 %v5899, %v6448
        %v6755 = vadd.f32 %v5900, %v6453
        %v6756 = vadd.f32 %v5901, %v6458
        %v6757 = vadd.f32 %v5902, %v6463
        %v6758 = vadd.f32 %v5903, %v6468
        %v6759 = vadd.f32 %v5904, %v6473
        %v6760 = vadd.f32 %v5905, %v6478
        %v6761 = vadd.f32 %v5906, %v6483
        %v6762 = vadd.f32 %v5907, %v6488
        %v6763 = vadd.f32 %v5908, %v6493
        %v6764 = vadd.f32 %v5909, %v6498
        %v6765 = vadd.f32 %v5910, %v6503
        %v6766 = vadd.f32 %v5911, %v6508
        %v6767 = vadd.f32 %v5912, %v6513
        %v6768 = vadd.f32 %v5913, %v6518
        %v6769 = vadd.f32 %v5914, %v6523
        %v6770 = vadd.f32 %v5915, %v6528
        %v6771 = vadd.f32 %v5916, %v6533
        %v6772 = vadd.f32 %v5917, %v6538
        %v6773 = vadd.f32 %v5918, %v6543
        %v6774 = vadd.f32 %v5919, %v6548
        %v6775 = vadd.f32 %v5920, %v6553
        %v6776 = vadd.f32 %v5921, %v6558
        %v6777 = vadd.f32 %v5922, %v6563
        %v6778 = vadd.f32 %v5923, %v6568
        %v6779 = vadd.f32 %v5924, %v6573
        %v6780 = vadd.f32 %v5925, %v6578
        %v6781 = vadd.f32 %v5926, %v6583
        %v6782 = vadd.f32 %v5927, %v6588
        %v6783 = vadd.f32 %v5928, %v6593
        %v6784 = vadd.f32 %v5929, %v6598
        %v6785 = vadd.f32 %v5930, %v6603
        %v6786 = vadd.f32 %v5931, %v6608
        %v6787 = vadd.f32 %v5932, %v6613
        %v6788 = vadd.f32 %v5933, %v6618
        %v6789 = vadd.f32 %v5934, %v6623
        %v6790 = vadd.f32 %v5935, %v6628
        %v6791 = vadd.f32 %v5936, %v6633
        %v6792 = vadd.f32 %v5937, %v6638
        %v6793 = vadd.f32 %v5938, %v6643
        %v6794 = vadd.f32 %v5939, %v6648
        %v6795 = vadd.f32 %v5940, %v6653
        %v6796 = vadd.f32 %v5941, %v6658
        %v6797 = vadd.f32 %v5942, %v6663
        %v6798 = vadd.f32 %v5943, %v6668
        %s6799 = scalar_lea.vmem %s1, 24
        %v6800 = vld [vmem:[%s6799] sm:$0x7]
        %v6802 = vsel %vm925, %v468, 0
        %v6805 = vsel %vm925, %v469, 0
        %v6808 = vsel %vm925, %v470, 0
        %v6811 = vsel %vm925, %v471, 0
        %v6814 = vsel %vm1182, %v6800, 0
        %6816 = vmatprep.subr.mxu0 0.0
        %6817 = vmatpush1.msra.mxu0 0.0
        %6818 = vmatprep.subr.mxu0 0.0
        %6819 = vmatpush1.msra.mxu0 0.0
        %6820 = vmatprep.subr.mxu0 0.0
        %6821 = vmatpush1.msra.mxu0 0.0
        %6822 = vmatprep.subr.mxu0 0.0
        %6823 = vmatpush1.msra.mxu0 0.0
        %6824 = vmatprep.subr.mxu0 0.0
        %6825 = vmatpush1.msra.mxu0 0.0
        %6826 = vmatprep.subr.mxu0 0.0
        %6827 = vmatpush1.msra.mxu0 0.0
        %6828 = vmatprep.subr.mxu0 0.0
        %6829 = vmatpush1.msra.mxu0 0.0
        %6830 = vmatprep.subr.mxu0 0.0
        %6831 = vmatpush1.msra.mxu0 0.0
        %6832 = vmatprep.subr.mxu0 0.0
        %6833 = vmatpush1.msra.mxu0 0.0
        %6834 = vmatprep.subr.mxu0 0.0
        %6835 = vmatpush1.msra.mxu0 0.0
        %6836 = vmatprep.subr.mxu0 0.0
        %6837 = vmatpush1.msra.mxu0 0.0
        %6838 = vmatprep.subr.mxu0 0.0
        %6839 = vmatpush1.msra.mxu0 0.0
        %6840 = vmatprep.subr.mxu0 0.0
        %6841 = vmatpush1.msra.mxu0 0.0
        %6842 = vmatprep.subr.mxu0 0.0
        %6843 = vmatpush1.msra.mxu0 0.0
        %6844 = vmatprep.subr.mxu0 0.0
        %6845 = vmatpush1.msra.mxu0 0.0
        %6846 = vmatprep.subr.mxu0 0.0
        %6847 = vmatpush1.msra.mxu0 %v6814
        %6848 = vmatprep.subr.mxu0 0.0
        %6849 = vmatpush2.msra.mxu0 0.0
        %6850 = vmatprep.subr.mxu0 0.0
        %6851 = vmatpush2.msra.mxu0 0.0
        %6852 = vmatprep.subr.mxu0 0.0
        %6853 = vmatpush2.msra.mxu0 0.0
        %6854 = vmatprep.subr.mxu0 0.0
        %6855 = vmatpush2.msra.mxu0 0.0
        %6856 = vmatprep.subr.mxu0 0.0
        %6857 = vmatpush2.msra.mxu0 0.0
        %6858 = vmatprep.subr.mxu0 0.0
        %6859 = vmatpush2.msra.mxu0 0.0
        %6860 = vmatprep.subr.mxu0 0.0
        %6861 = vmatpush2.msra.mxu0 0.0
        %6862 = vmatprep.subr.mxu0 0.0
        %6863 = vmatpush2.msra.mxu0 0.0
        %6864 = vmatprep.subr.mxu0 0.0
        %6865 = vmatpush2.msra.mxu0 0.0
        %6866 = vmatprep.subr.mxu0 0.0
        %6867 = vmatpush2.msra.mxu0 0.0
        %6868 = vmatprep.subr.mxu0 0.0
        %6869 = vmatpush2.msra.mxu0 0.0
        %6870 = vmatprep.subr.mxu0 0.0
        %6871 = vmatpush2.msra.mxu0 0.0
        %6872 = vmatprep.subr.mxu0 0.0
        %6873 = vmatpush2.msra.mxu0 0.0
        %6874 = vmatprep.subr.mxu0 0.0
        %6875 = vmatpush2.msra.mxu0 0.0
        %6876 = vmatprep.subr.mxu0 0.0
        %6877 = vmatpush2.msra.mxu0 0.0
        %6878 = vmatprep.subr.mxu0 0.0
        %6879 = vmatpush2.msra.mxu0 0.0
        %6880 = vmatprep.mubr.f32.mxu0 0.0
        %6881 = vmatmul.mubr.f32.gmra.mxu0 %v1907
        %v6882 = vpop.f32.mrf.mxu0
        %v6883 = vadd.f32 0.0, %v6882
        %v6884 = vpop.f32.mrf.mxu0
        %6885 = vmatprep.mubr.f32.mxu0 0.0
        %6886 = vmatmul.mubr.f32.gmra.mxu0 %v1909
        %v6887 = vpop.f32.mrf.mxu0
        %v6888 = vadd.f32 0.0, %v6887
        %v6889 = vpop.f32.mrf.mxu0
        %6890 = vmatprep.mubr.f32.mxu0 0.0
        %6891 = vmatmul.mubr.f32.gmra.mxu0 %v1911
        %v6892 = vpop.f32.mrf.mxu0
        %v6893 = vadd.f32 0.0, %v6892
        %v6894 = vpop.f32.mrf.mxu0
        %6895 = vmatprep.mubr.f32.mxu0 0.0
        %6896 = vmatmul.mubr.f32.gmra.mxu0 %v1913
        %v6897 = vpop.f32.mrf.mxu0
        %v6898 = vadd.f32 0.0, %v6897
        %v6899 = vpop.f32.mrf.mxu0
        %6900 = vmatprep.mubr.f32.mxu0 0.0
        %6901 = vmatmul.mubr.f32.gmra.mxu0 %v1915
        %v6902 = vpop.f32.mrf.mxu0
        %v6903 = vadd.f32 0.0, %v6902
        %v6904 = vpop.f32.mrf.mxu0
        %6905 = vmatprep.mubr.f32.mxu0 0.0
        %6906 = vmatmul.mubr.f32.gmra.mxu0 %v1917
        %v6907 = vpop.f32.mrf.mxu0
        %v6908 = vadd.f32 0.0, %v6907
        %v6909 = vpop.f32.mrf.mxu0
        %6910 = vmatprep.mubr.f32.mxu0 0.0
        %6911 = vmatmul.mubr.f32.gmra.mxu0 %v1919
        %v6912 = vpop.f32.mrf.mxu0
        %v6913 = vadd.f32 0.0, %v6912
        %v6914 = vpop.f32.mrf.mxu0
        %6915 = vmatprep.mubr.f32.mxu0 0.0
        %6916 = vmatmul.mubr.f32.gmra.mxu0 %v1921
        %v6917 = vpop.f32.mrf.mxu0
        %v6918 = vadd.f32 0.0, %v6917
        %v6919 = vpop.f32.mrf.mxu0
        %6920 = vmatprep.mubr.f32.mxu0 0.0
        %6921 = vmatmul.mubr.f32.gmra.mxu0 %v1923
        %v6922 = vpop.f32.mrf.mxu0
        %v6923 = vadd.f32 0.0, %v6922
        %v6924 = vpop.f32.mrf.mxu0
        %6925 = vmatprep.mubr.f32.mxu0 0.0
        %6926 = vmatmul.mubr.f32.gmra.mxu0 %v1925
        %v6927 = vpop.f32.mrf.mxu0
        %v6928 = vadd.f32 0.0, %v6927
        %v6929 = vpop.f32.mrf.mxu0
        %6930 = vmatprep.mubr.f32.mxu0 0.0
        %6931 = vmatmul.mubr.f32.gmra.mxu0 %v1927
        %v6932 = vpop.f32.mrf.mxu0
        %v6933 = vadd.f32 0.0, %v6932
        %v6934 = vpop.f32.mrf.mxu0
        %6935 = vmatprep.mubr.f32.mxu0 0.0
        %6936 = vmatmul.mubr.f32.gmra.mxu0 %v1929
        %v6937 = vpop.f32.mrf.mxu0
        %v6938 = vadd.f32 0.0, %v6937
        %v6939 = vpop.f32.mrf.mxu0
        %6940 = vmatprep.mubr.f32.mxu0 0.0
        %6941 = vmatmul.mubr.f32.gmra.mxu0 %v1931
        %v6942 = vpop.f32.mrf.mxu0
        %v6943 = vadd.f32 0.0, %v6942
        %v6944 = vpop.f32.mrf.mxu0
        %6945 = vmatprep.mubr.f32.mxu0 0.0
        %6946 = vmatmul.mubr.f32.gmra.mxu0 %v1933
        %v6947 = vpop.f32.mrf.mxu0
        %v6948 = vadd.f32 0.0, %v6947
        %v6949 = vpop.f32.mrf.mxu0
        %6950 = vmatprep.mubr.f32.mxu0 0.0
        %6951 = vmatmul.mubr.f32.gmra.mxu0 %v1935
        %v6952 = vpop.f32.mrf.mxu0
        %v6953 = vadd.f32 0.0, %v6952
        %v6954 = vpop.f32.mrf.mxu0
        %6955 = vmatprep.mubr.f32.mxu0 0.0
        %6956 = vmatmul.mubr.f32.gmra.mxu0 %v1937
        %v6957 = vpop.f32.mrf.mxu0
        %v6958 = vadd.f32 0.0, %v6957
        %v6959 = vpop.f32.mrf.mxu0
        %6960 = vmatprep.mubr.f32.mxu0 0.0
        %6961 = vmatmul.mubr.f32.gmra.mxu0 %v1939
        %v6962 = vpop.f32.mrf.mxu0
        %v6963 = vadd.f32 0.0, %v6962
        %v6964 = vpop.f32.mrf.mxu0
        %6965 = vmatprep.mubr.f32.mxu0 0.0
        %6966 = vmatmul.mubr.f32.gmra.mxu0 %v1941
        %v6967 = vpop.f32.mrf.mxu0
        %v6968 = vadd.f32 0.0, %v6967
        %v6969 = vpop.f32.mrf.mxu0
        %6970 = vmatprep.mubr.f32.mxu0 0.0
        %6971 = vmatmul.mubr.f32.gmra.mxu0 %v1943
        %v6972 = vpop.f32.mrf.mxu0
        %v6973 = vadd.f32 0.0, %v6972
        %v6974 = vpop.f32.mrf.mxu0
        %6975 = vmatprep.mubr.f32.mxu0 0.0
        %6976 = vmatmul.mubr.f32.gmra.mxu0 %v1945
        %v6977 = vpop.f32.mrf.mxu0
        %v6978 = vadd.f32 0.0, %v6977
        %v6979 = vpop.f32.mrf.mxu0
        %6980 = vmatprep.mubr.f32.mxu0 0.0
        %6981 = vmatmul.mubr.f32.gmra.mxu0 %v1947
        %v6982 = vpop.f32.mrf.mxu0
        %v6983 = vadd.f32 0.0, %v6982
        %v6984 = vpop.f32.mrf.mxu0
        %6985 = vmatprep.mubr.f32.mxu0 0.0
        %6986 = vmatmul.mubr.f32.gmra.mxu0 %v1949
        %v6987 = vpop.f32.mrf.mxu0
        %v6988 = vadd.f32 0.0, %v6987
        %v6989 = vpop.f32.mrf.mxu0
        %6990 = vmatprep.mubr.f32.mxu0 0.0
        %6991 = vmatmul.mubr.f32.gmra.mxu0 %v1951
        %v6992 = vpop.f32.mrf.mxu0
        %v6993 = vadd.f32 0.0, %v6992
        %v6994 = vpop.f32.mrf.mxu0
        %6995 = vmatprep.mubr.f32.mxu0 0.0
        %6996 = vmatmul.mubr.f32.gmra.mxu0 %v1953
        %v6997 = vpop.f32.mrf.mxu0
        %v6998 = vadd.f32 0.0, %v6997
        %v6999 = vpop.f32.mrf.mxu0
        %7000 = vmatprep.mubr.f32.mxu0 0.0
        %7001 = vmatmul.mubr.f32.gmra.mxu0 %v1955
        %v7002 = vpop.f32.mrf.mxu0
        %v7003 = vadd.f32 0.0, %v7002
        %v7004 = vpop.f32.mrf.mxu0
        %7005 = vmatprep.mubr.f32.mxu0 0.0
        %7006 = vmatmul.mubr.f32.gmra.mxu0 %v1957
        %v7007 = vpop.f32.mrf.mxu0
        %v7008 = vadd.f32 0.0, %v7007
        %v7009 = vpop.f32.mrf.mxu0
        %7010 = vmatprep.mubr.f32.mxu0 0.0
        %7011 = vmatmul.mubr.f32.gmra.mxu0 %v1959
        %v7012 = vpop.f32.mrf.mxu0
        %v7013 = vadd.f32 0.0, %v7012
        %v7014 = vpop.f32.mrf.mxu0
        %7015 = vmatprep.mubr.f32.mxu0 0.0
        %7016 = vmatmul.mubr.f32.gmra.mxu0 %v1961
        %v7017 = vpop.f32.mrf.mxu0
        %v7018 = vadd.f32 0.0, %v7017
        %v7019 = vpop.f32.mrf.mxu0
        %7020 = vmatprep.mubr.f32.mxu0 0.0
        %7021 = vmatmul.mubr.f32.gmra.mxu0 %v1963
        %v7022 = vpop.f32.mrf.mxu0
        %v7023 = vadd.f32 0.0, %v7022
        %v7024 = vpop.f32.mrf.mxu0
        %7025 = vmatprep.mubr.f32.mxu0 0.0
        %7026 = vmatmul.mubr.f32.gmra.mxu0 %v1965
        %v7027 = vpop.f32.mrf.mxu0
        %v7028 = vadd.f32 0.0, %v7027
        %v7029 = vpop.f32.mrf.mxu0
        %7030 = vmatprep.mubr.f32.mxu0 0.0
        %7031 = vmatmul.mubr.f32.gmra.mxu0 %v1967
        %v7032 = vpop.f32.mrf.mxu0
        %v7033 = vadd.f32 0.0, %v7032
        %v7034 = vpop.f32.mrf.mxu0
        %7035 = vmatprep.mubr.f32.mxu0 0.0
        %7036 = vmatmul.mubr.f32.gmra.mxu0 %v1969
        %v7037 = vpop.f32.mrf.mxu0
        %v7038 = vadd.f32 0.0, %v7037
        %v7039 = vpop.f32.mrf.mxu0
        %7040 = vmatprep.mubr.f32.mxu0 0.0
        %7041 = vmatmul.mubr.f32.gmra.mxu0 %v1971
        %v7042 = vpop.f32.mrf.mxu0
        %v7043 = vadd.f32 0.0, %v7042
        %v7044 = vpop.f32.mrf.mxu0
        %7045 = vmatprep.mubr.f32.mxu0 0.0
        %7046 = vmatmul.mubr.f32.gmra.mxu0 %v1973
        %v7047 = vpop.f32.mrf.mxu0
        %v7048 = vadd.f32 0.0, %v7047
        %v7049 = vpop.f32.mrf.mxu0
        %7050 = vmatprep.mubr.f32.mxu0 0.0
        %7051 = vmatmul.mubr.f32.gmra.mxu0 %v1975
        %v7052 = vpop.f32.mrf.mxu0
        %v7053 = vadd.f32 0.0, %v7052
        %v7054 = vpop.f32.mrf.mxu0
        %7055 = vmatprep.mubr.f32.mxu0 0.0
        %7056 = vmatmul.mubr.f32.gmra.mxu0 %v1977
        %v7057 = vpop.f32.mrf.mxu0
        %v7058 = vadd.f32 0.0, %v7057
        %v7059 = vpop.f32.mrf.mxu0
        %7060 = vmatprep.mubr.f32.mxu0 0.0
        %7061 = vmatmul.mubr.f32.gmra.mxu0 %v1979
        %v7062 = vpop.f32.mrf.mxu0
        %v7063 = vadd.f32 0.0, %v7062
        %v7064 = vpop.f32.mrf.mxu0
        %7065 = vmatprep.mubr.f32.mxu0 0.0
        %7066 = vmatmul.mubr.f32.gmra.mxu0 %v1981
        %v7067 = vpop.f32.mrf.mxu0
        %v7068 = vadd.f32 0.0, %v7067
        %v7069 = vpop.f32.mrf.mxu0
        %7070 = vmatprep.mubr.f32.mxu0 0.0
        %7071 = vmatmul.mubr.f32.gmra.mxu0 %v1983
        %v7072 = vpop.f32.mrf.mxu0
        %v7073 = vadd.f32 0.0, %v7072
        %v7074 = vpop.f32.mrf.mxu0
        %7075 = vmatprep.mubr.f32.mxu0 0.0
        %7076 = vmatmul.mubr.f32.gmra.mxu0 %v1985
        %v7077 = vpop.f32.mrf.mxu0
        %v7078 = vadd.f32 0.0, %v7077
        %v7079 = vpop.f32.mrf.mxu0
        %7080 = vmatprep.mubr.f32.mxu0 0.0
        %7081 = vmatmul.mubr.f32.gmra.mxu0 %v1987
        %v7082 = vpop.f32.mrf.mxu0
        %v7083 = vadd.f32 0.0, %v7082
        %v7084 = vpop.f32.mrf.mxu0
        %7085 = vmatprep.mubr.f32.mxu0 0.0
        %7086 = vmatmul.mubr.f32.gmra.mxu0 %v1989
        %v7087 = vpop.f32.mrf.mxu0
        %v7088 = vadd.f32 0.0, %v7087
        %v7089 = vpop.f32.mrf.mxu0
        %7090 = vmatprep.mubr.f32.mxu0 0.0
        %7091 = vmatmul.mubr.f32.gmra.mxu0 %v1991
        %v7092 = vpop.f32.mrf.mxu0
        %v7093 = vadd.f32 0.0, %v7092
        %v7094 = vpop.f32.mrf.mxu0
        %7095 = vmatprep.mubr.f32.mxu0 0.0
        %7096 = vmatmul.mubr.f32.gmra.mxu0 %v1993
        %v7097 = vpop.f32.mrf.mxu0
        %v7098 = vadd.f32 0.0, %v7097
        %v7099 = vpop.f32.mrf.mxu0
        %7100 = vmatprep.mubr.f32.mxu0 0.0
        %7101 = vmatmul.mubr.f32.gmra.mxu0 %v1995
        %v7102 = vpop.f32.mrf.mxu0
        %v7103 = vadd.f32 0.0, %v7102
        %v7104 = vpop.f32.mrf.mxu0
        %7105 = vmatprep.mubr.f32.mxu0 0.0
        %7106 = vmatmul.mubr.f32.gmra.mxu0 %v1997
        %v7107 = vpop.f32.mrf.mxu0
        %v7108 = vadd.f32 0.0, %v7107
        %v7109 = vpop.f32.mrf.mxu0
        %7110 = vmatprep.mubr.f32.mxu0 0.0
        %7111 = vmatmul.mubr.f32.gmra.mxu0 %v1999
        %v7112 = vpop.f32.mrf.mxu0
        %v7113 = vadd.f32 0.0, %v7112
        %v7114 = vpop.f32.mrf.mxu0
        %7115 = vmatprep.mubr.f32.mxu0 0.0
        %7116 = vmatmul.mubr.f32.gmra.mxu0 %v2001
        %v7117 = vpop.f32.mrf.mxu0
        %v7118 = vadd.f32 0.0, %v7117
        %v7119 = vpop.f32.mrf.mxu0
        %7120 = vmatprep.mubr.f32.mxu0 0.0
        %7121 = vmatmul.mubr.f32.gmra.mxu0 %v2003
        %v7122 = vpop.f32.mrf.mxu0
        %v7123 = vadd.f32 0.0, %v7122
        %v7124 = vpop.f32.mrf.mxu0
        %7125 = vmatprep.mubr.f32.mxu0 0.0
        %7126 = vmatmul.mubr.f32.gmra.mxu0 %v2005
        %v7127 = vpop.f32.mrf.mxu0
        %v7128 = vadd.f32 0.0, %v7127
        %v7129 = vpop.f32.mrf.mxu0
        %7130 = vmatprep.mubr.f32.mxu0 0.0
        %7131 = vmatmul.mubr.f32.gmra.mxu0 %v2007
        %v7132 = vpop.f32.mrf.mxu0
        %v7133 = vadd.f32 0.0, %v7132
        %v7134 = vpop.f32.mrf.mxu0
        %7135 = vmatprep.mubr.f32.mxu0 0.0
        %7136 = vmatmul.mubr.f32.gmra.mxu0 %v2009
        %v7137 = vpop.f32.mrf.mxu0
        %v7138 = vadd.f32 0.0, %v7137
        %v7139 = vpop.f32.mrf.mxu0
        %7140 = vmatprep.mubr.f32.mxu0 0.0
        %7141 = vmatmul.mubr.f32.gmra.mxu0 %v2011
        %v7142 = vpop.f32.mrf.mxu0
        %v7143 = vadd.f32 0.0, %v7142
        %v7144 = vpop.f32.mrf.mxu0
        %7145 = vmatprep.mubr.f32.mxu0 0.0
        %7146 = vmatmul.mubr.f32.gmra.mxu0 %v2013
        %v7147 = vpop.f32.mrf.mxu0
        %v7148 = vadd.f32 0.0, %v7147
        %v7149 = vpop.f32.mrf.mxu0
        %7150 = vmatprep.mubr.f32.mxu0 0.0
        %7151 = vmatmul.mubr.f32.gmra.mxu0 %v2015
        %v7152 = vpop.f32.mrf.mxu0
        %v7153 = vadd.f32 0.0, %v7152
        %v7154 = vpop.f32.mrf.mxu0
        %7155 = vmatprep.mubr.f32.mxu0 0.0
        %7156 = vmatmul.mubr.f32.gmra.mxu0 %v2017
        %v7157 = vpop.f32.mrf.mxu0
        %v7158 = vadd.f32 0.0, %v7157
        %v7159 = vpop.f32.mrf.mxu0
        %7160 = vmatprep.mubr.f32.mxu0 0.0
        %7161 = vmatmul.mubr.f32.gmra.mxu0 %v2019
        %v7162 = vpop.f32.mrf.mxu0
        %v7163 = vadd.f32 0.0, %v7162
        %v7164 = vpop.f32.mrf.mxu0
        %7165 = vmatprep.mubr.f32.mxu0 0.0
        %7166 = vmatmul.mubr.f32.gmra.mxu0 %v2021
        %v7167 = vpop.f32.mrf.mxu0
        %v7168 = vadd.f32 0.0, %v7167
        %v7169 = vpop.f32.mrf.mxu0
        %7170 = vmatprep.mubr.f32.mxu0 0.0
        %7171 = vmatmul.mubr.f32.gmra.mxu0 %v2023
        %v7172 = vpop.f32.mrf.mxu0
        %v7173 = vadd.f32 0.0, %v7172
        %v7174 = vpop.f32.mrf.mxu0
        %7175 = vmatprep.mubr.f32.mxu0 0.0
        %7176 = vmatmul.mubr.f32.gmra.mxu0 %v2025
        %v7177 = vpop.f32.mrf.mxu0
        %v7178 = vadd.f32 0.0, %v7177
        %v7179 = vpop.f32.mrf.mxu0
        %7180 = vmatprep.mubr.f32.mxu0 0.0
        %7181 = vmatmul.mubr.f32.gmra.mxu0 %v2027
        %v7182 = vpop.f32.mrf.mxu0
        %v7183 = vadd.f32 0.0, %v7182
        %v7184 = vpop.f32.mrf.mxu0
        %7185 = vmatprep.mubr.f32.mxu0 0.0
        %7186 = vmatmul.mubr.f32.gmra.mxu0 %v2029
        %v7187 = vpop.f32.mrf.mxu0
        %v7188 = vadd.f32 0.0, %v7187
        %v7189 = vpop.f32.mrf.mxu0
        %7190 = vmatprep.mubr.f32.mxu0 0.0
        %7191 = vmatmul.mubr.f32.gmra.mxu0 %v2031
        %v7192 = vpop.f32.mrf.mxu0
        %v7193 = vadd.f32 0.0, %v7192
        %v7194 = vpop.f32.mrf.mxu0
        %7195 = vmatprep.mubr.f32.mxu0 0.0
        %7196 = vmatmul.mubr.f32.gmra.mxu0 %v2033
        %v7197 = vpop.f32.mrf.mxu0
        %v7198 = vadd.f32 0.0, %v7197
        %v7199 = vpop.f32.mrf.mxu0
        %7200 = vmatprep.mubr.f32.mxu0 0.0
        %7201 = vmatmul.mubr.f32.gmra.mxu0 %v2035
        %v7202 = vpop.f32.mrf.mxu0
        %v7203 = vadd.f32 0.0, %v7202
        %v7204 = vpop.f32.mrf.mxu0
        %7205 = vmatprep.mubr.f32.mxu0 0.0
        %7206 = vmatmul.mubr.f32.gmra.mxu0 %v2037
        %v7207 = vpop.f32.mrf.mxu0
        %v7208 = vadd.f32 0.0, %v7207
        %v7209 = vpop.f32.mrf.mxu0
        %7210 = vmatprep.mubr.f32.mxu0 0.0
        %7211 = vmatmul.mubr.f32.gmra.mxu0 %v2039
        %v7212 = vpop.f32.mrf.mxu0
        %v7213 = vadd.f32 0.0, %v7212
        %v7214 = vpop.f32.mrf.mxu0
        %7215 = vmatprep.mubr.f32.mxu0 0.0
        %7216 = vmatmul.mubr.f32.gmra.mxu0 %v2041
        %v7217 = vpop.f32.mrf.mxu0
        %v7218 = vadd.f32 0.0, %v7217
        %v7219 = vpop.f32.mrf.mxu0
        %7220 = vmatprep.mubr.f32.mxu0 0.0
        %7221 = vmatmul.mubr.f32.gmra.mxu0 %v2043
        %v7222 = vpop.f32.mrf.mxu0
        %v7223 = vadd.f32 0.0, %v7222
        %v7224 = vpop.f32.mrf.mxu0
        %7225 = vmatprep.mubr.f32.mxu0 0.0
        %7226 = vmatmul.mubr.f32.gmra.mxu0 %v2045
        %v7227 = vpop.f32.mrf.mxu0
        %v7228 = vadd.f32 0.0, %v7227
        %v7229 = vpop.f32.mrf.mxu0
        %7230 = vmatprep.mubr.f32.mxu0 0.0
        %7231 = vmatmul.mubr.f32.gmra.mxu0 %v2047
        %v7232 = vpop.f32.mrf.mxu0
        %v7233 = vadd.f32 0.0, %v7232
        %v7234 = vpop.f32.mrf.mxu0
        %7235 = vmatprep.mubr.f32.mxu0 0.0
        %7236 = vmatmul.mubr.f32.gmra.mxu0 %v2049
        %v7237 = vpop.f32.mrf.mxu0
        %v7238 = vadd.f32 0.0, %v7237
        %v7239 = vpop.f32.mrf.mxu0
        %7240 = vmatprep.mubr.f32.mxu0 0.0
        %7241 = vmatmul.mubr.f32.gmra.mxu0 %v2051
        %v7242 = vpop.f32.mrf.mxu0
        %v7243 = vadd.f32 0.0, %v7242
        %v7244 = vpop.f32.mrf.mxu0
        %7245 = vmatprep.mubr.f32.mxu0 0.0
        %7246 = vmatmul.mubr.f32.gmra.mxu0 %v2053
        %v7247 = vpop.f32.mrf.mxu0
        %v7248 = vadd.f32 0.0, %v7247
        %v7249 = vpop.f32.mrf.mxu0
        %7250 = vmatprep.mubr.f32.mxu0 0.0
        %7251 = vmatmul.mubr.f32.gmra.mxu0 %v2055
        %v7252 = vpop.f32.mrf.mxu0
        %v7253 = vadd.f32 0.0, %v7252
        %v7254 = vpop.f32.mrf.mxu0
        %7255 = vmatprep.mubr.f32.mxu0 0.0
        %7256 = vmatmul.mubr.f32.gmra.mxu0 %v2057
        %v7257 = vpop.f32.mrf.mxu0
        %v7258 = vadd.f32 0.0, %v7257
        %v7259 = vpop.f32.mrf.mxu0
        %7260 = vmatprep.mubr.f32.mxu0 0.0
        %7261 = vmatmul.mubr.f32.gmra.mxu0 %v2059
        %v7262 = vpop.f32.mrf.mxu0
        %v7263 = vadd.f32 0.0, %v7262
        %v7264 = vpop.f32.mrf.mxu0
        %7265 = vmatprep.mubr.f32.mxu0 0.0
        %7266 = vmatmul.mubr.f32.gmra.mxu0 %v2061
        %v7267 = vpop.f32.mrf.mxu0
        %v7268 = vadd.f32 0.0, %v7267
        %v7269 = vpop.f32.mrf.mxu0
        %7270 = vmatprep.mubr.f32.mxu0 0.0
        %7271 = vmatmul.mubr.f32.gmra.mxu0 %v2063
        %v7272 = vpop.f32.mrf.mxu0
        %v7273 = vadd.f32 0.0, %v7272
        %v7274 = vpop.f32.mrf.mxu0
        %7275 = vmatprep.mubr.f32.mxu0 0.0
        %7276 = vmatmul.mubr.f32.gmra.mxu0 %v2065
        %v7277 = vpop.f32.mrf.mxu0
        %v7278 = vadd.f32 0.0, %v7277
        %v7279 = vpop.f32.mrf.mxu0
        %7280 = vmatprep.mubr.f32.mxu0 0.0
        %7281 = vmatmul.mubr.f32.gmra.mxu0 %v2067
        %v7282 = vpop.f32.mrf.mxu0
        %v7283 = vadd.f32 0.0, %v7282
        %v7284 = vpop.f32.mrf.mxu0
        %7285 = vmatprep.mubr.f32.mxu0 0.0
        %7286 = vmatmul.mubr.f32.gmra.mxu0 %v2069
        %v7287 = vpop.f32.mrf.mxu0
        %v7288 = vadd.f32 0.0, %v7287
        %v7289 = vpop.f32.mrf.mxu0
        %7290 = vmatprep.mubr.f32.mxu0 0.0
        %7291 = vmatmul.mubr.f32.gmra.mxu0 %v2071
        %v7292 = vpop.f32.mrf.mxu0
        %v7293 = vadd.f32 0.0, %v7292
        %v7294 = vpop.f32.mrf.mxu0
        %7295 = vmatprep.mubr.f32.mxu0 0.0
        %7296 = vmatmul.mubr.f32.gmra.mxu0 %v2073
        %v7297 = vpop.f32.mrf.mxu0
        %v7298 = vadd.f32 0.0, %v7297
        %v7299 = vpop.f32.mrf.mxu0
        %7300 = vmatprep.mubr.f32.mxu0 0.0
        %7301 = vmatmul.mubr.f32.gmra.mxu0 %v2075
        %v7302 = vpop.f32.mrf.mxu0
        %v7303 = vadd.f32 0.0, %v7302
        %v7304 = vpop.f32.mrf.mxu0
        %7305 = vmatprep.mubr.f32.mxu0 0.0
        %7306 = vmatmul.mubr.f32.gmra.mxu0 %v2077
        %v7307 = vpop.f32.mrf.mxu0
        %v7308 = vadd.f32 0.0, %v7307
        %v7309 = vpop.f32.mrf.mxu0
        %7310 = vmatprep.mubr.f32.mxu0 0.0
        %7311 = vmatmul.mubr.f32.gmra.mxu0 %v2079
        %v7312 = vpop.f32.mrf.mxu0
        %v7313 = vadd.f32 0.0, %v7312
        %v7314 = vpop.f32.mrf.mxu0
        %7315 = vmatprep.mubr.f32.mxu0 0.0
        %7316 = vmatmul.mubr.f32.gmra.mxu0 %v2081
        %v7317 = vpop.f32.mrf.mxu0
        %v7318 = vadd.f32 0.0, %v7317
        %v7319 = vpop.f32.mrf.mxu0
        %7320 = vmatprep.mubr.f32.mxu0 0.0
        %7321 = vmatmul.mubr.f32.gmra.mxu0 %v2083
        %v7322 = vpop.f32.mrf.mxu0
        %v7323 = vadd.f32 0.0, %v7322
        %v7324 = vpop.f32.mrf.mxu0
        %7325 = vmatprep.mubr.f32.mxu0 0.0
        %7326 = vmatmul.mubr.f32.gmra.mxu0 %v2085
        %v7327 = vpop.f32.mrf.mxu0
        %v7328 = vadd.f32 0.0, %v7327
        %v7329 = vpop.f32.mrf.mxu0
        %7330 = vmatprep.mubr.f32.mxu0 0.0
        %7331 = vmatmul.mubr.f32.gmra.mxu0 %v2087
        %v7332 = vpop.f32.mrf.mxu0
        %v7333 = vadd.f32 0.0, %v7332
        %v7334 = vpop.f32.mrf.mxu0
        %7335 = vmatprep.mubr.f32.mxu0 0.0
        %7336 = vmatmul.mubr.f32.gmra.mxu0 %v2089
        %v7337 = vpop.f32.mrf.mxu0
        %v7338 = vadd.f32 0.0, %v7337
        %v7339 = vpop.f32.mrf.mxu0
        %7340 = vmatprep.mubr.f32.mxu0 0.0
        %7341 = vmatmul.mubr.f32.gmra.mxu0 %v2091
        %v7342 = vpop.f32.mrf.mxu0
        %v7343 = vadd.f32 0.0, %v7342
        %v7344 = vpop.f32.mrf.mxu0
        %7345 = vmatprep.mubr.f32.mxu0 0.0
        %7346 = vmatmul.mubr.f32.gmra.mxu0 %v2093
        %v7347 = vpop.f32.mrf.mxu0
        %v7348 = vadd.f32 0.0, %v7347
        %v7349 = vpop.f32.mrf.mxu0
        %7350 = vmatprep.mubr.f32.mxu0 0.0
        %7351 = vmatmul.mubr.f32.gmra.mxu0 %v2095
        %v7352 = vpop.f32.mrf.mxu0
        %v7353 = vadd.f32 0.0, %v7352
        %v7354 = vpop.f32.mrf.mxu0
        %7355 = vmatprep.mubr.f32.mxu0 0.0
        %7356 = vmatmul.mubr.f32.gmra.mxu0 %v2097
        %v7357 = vpop.f32.mrf.mxu0
        %v7358 = vadd.f32 0.0, %v7357
        %v7359 = vpop.f32.mrf.mxu0
        %7360 = vmatprep.mubr.f32.mxu0 0.0
        %7361 = vmatmul.mubr.f32.gmra.mxu0 %v2099
        %v7362 = vpop.f32.mrf.mxu0
        %v7363 = vadd.f32 0.0, %v7362
        %v7364 = vpop.f32.mrf.mxu0
        %7365 = vmatprep.mubr.f32.mxu0 0.0
        %7366 = vmatmul.mubr.f32.gmra.mxu0 %v2101
        %v7367 = vpop.f32.mrf.mxu0
        %v7368 = vadd.f32 0.0, %v7367
        %v7369 = vpop.f32.mrf.mxu0
        %7370 = vmatprep.mubr.f32.mxu0 0.0
        %7371 = vmatmul.mubr.f32.gmra.mxu0 %v2103
        %v7372 = vpop.f32.mrf.mxu0
        %v7373 = vadd.f32 0.0, %v7372
        %v7374 = vpop.f32.mrf.mxu0
        %7375 = vmatprep.mubr.f32.mxu0 0.0
        %7376 = vmatmul.mubr.f32.gmra.mxu0 %v2105
        %v7377 = vpop.f32.mrf.mxu0
        %v7378 = vadd.f32 0.0, %v7377
        %v7379 = vpop.f32.mrf.mxu0
        %7380 = vmatprep.mubr.f32.mxu0 0.0
        %7381 = vmatmul.mubr.f32.gmra.mxu0 %v2107
        %v7382 = vpop.f32.mrf.mxu0
        %v7383 = vadd.f32 0.0, %v7382
        %v7384 = vpop.f32.mrf.mxu0
        %7385 = vmatprep.mubr.f32.mxu0 0.0
        %7386 = vmatmul.mubr.f32.gmra.mxu0 %v2109
        %v7387 = vpop.f32.mrf.mxu0
        %v7388 = vadd.f32 0.0, %v7387
        %v7389 = vpop.f32.mrf.mxu0
        %7390 = vmatprep.mubr.f32.mxu0 0.0
        %7391 = vmatmul.mubr.f32.gmra.mxu0 %v2111
        %v7392 = vpop.f32.mrf.mxu0
        %v7393 = vadd.f32 0.0, %v7392
        %v7394 = vpop.f32.mrf.mxu0
        %7395 = vmatprep.mubr.f32.mxu0 0.0
        %7396 = vmatmul.mubr.f32.gmra.mxu0 %v2113
        %v7397 = vpop.f32.mrf.mxu0
        %v7398 = vadd.f32 0.0, %v7397
        %v7399 = vpop.f32.mrf.mxu0
        %7400 = vmatprep.mubr.f32.mxu0 0.0
        %7401 = vmatmul.mubr.f32.gmra.mxu0 %v2115
        %v7402 = vpop.f32.mrf.mxu0
        %v7403 = vadd.f32 0.0, %v7402
        %v7404 = vpop.f32.mrf.mxu0
        %7405 = vmatprep.mubr.f32.mxu0 0.0
        %7406 = vmatmul.mubr.f32.gmra.mxu0 %v2117
        %v7407 = vpop.f32.mrf.mxu0
        %v7408 = vadd.f32 0.0, %v7407
        %v7409 = vpop.f32.mrf.mxu0
        %7410 = vmatprep.mubr.f32.mxu0 0.0
        %7411 = vmatmul.mubr.f32.gmra.mxu0 %v2119
        %v7412 = vpop.f32.mrf.mxu0
        %v7413 = vadd.f32 0.0, %v7412
        %v7414 = vpop.f32.mrf.mxu0
        %7415 = vmatprep.mubr.f32.mxu0 0.0
        %7416 = vmatmul.mubr.f32.gmra.mxu0 %v2121
        %v7417 = vpop.f32.mrf.mxu0
        %v7418 = vadd.f32 0.0, %v7417
        %v7419 = vpop.f32.mrf.mxu0
        %7420 = vmatprep.mubr.f32.mxu0 0.0
        %7421 = vmatmul.mubr.f32.gmra.mxu0 %v2123
        %v7422 = vpop.f32.mrf.mxu0
        %v7423 = vadd.f32 0.0, %v7422
        %v7424 = vpop.f32.mrf.mxu0
        %7425 = vmatprep.mubr.f32.mxu0 0.0
        %7426 = vmatmul.mubr.f32.gmra.mxu0 %v2125
        %v7427 = vpop.f32.mrf.mxu0
        %v7428 = vadd.f32 0.0, %v7427
        %v7429 = vpop.f32.mrf.mxu0
        %7430 = vmatprep.mubr.f32.mxu0 0.0
        %7431 = vmatmul.mubr.f32.gmra.mxu0 %v2127
        %v7432 = vpop.f32.mrf.mxu0
        %v7433 = vadd.f32 0.0, %v7432
        %v7434 = vpop.f32.mrf.mxu0
        %7435 = vmatprep.mubr.f32.mxu0 0.0
        %7436 = vmatmul.mubr.f32.gmra.mxu0 %v2129
        %v7437 = vpop.f32.mrf.mxu0
        %v7438 = vadd.f32 0.0, %v7437
        %v7439 = vpop.f32.mrf.mxu0
        %7440 = vmatprep.mubr.f32.mxu0 0.0
        %7441 = vmatmul.mubr.f32.gmra.mxu0 %v2131
        %v7442 = vpop.f32.mrf.mxu0
        %v7443 = vadd.f32 0.0, %v7442
        %v7444 = vpop.f32.mrf.mxu0
        %7445 = vmatprep.mubr.f32.mxu0 0.0
        %7446 = vmatmul.mubr.f32.gmra.mxu0 %v2133
        %v7447 = vpop.f32.mrf.mxu0
        %v7448 = vadd.f32 0.0, %v7447
        %v7449 = vpop.f32.mrf.mxu0
        %7450 = vmatprep.mubr.f32.mxu0 0.0
        %7451 = vmatmul.mubr.f32.gmra.mxu0 %v2135
        %v7452 = vpop.f32.mrf.mxu0
        %v7453 = vadd.f32 0.0, %v7452
        %v7454 = vpop.f32.mrf.mxu0
        %7455 = vmatprep.mubr.f32.mxu0 0.0
        %7456 = vmatmul.mubr.f32.gmra.mxu0 %v2137
        %v7457 = vpop.f32.mrf.mxu0
        %v7458 = vadd.f32 0.0, %v7457
        %v7459 = vpop.f32.mrf.mxu0
        %7460 = vmatprep.mubr.f32.mxu0 0.0
        %7461 = vmatmul.mubr.f32.gmra.mxu0 %v2139
        %v7462 = vpop.f32.mrf.mxu0
        %v7463 = vadd.f32 0.0, %v7462
        %v7464 = vpop.f32.mrf.mxu0
        %7465 = vmatprep.mubr.f32.mxu0 0.0
        %7466 = vmatmul.mubr.f32.gmra.mxu0 %v2141
        %v7467 = vpop.f32.mrf.mxu0
        %v7468 = vadd.f32 0.0, %v7467
        %v7469 = vpop.f32.mrf.mxu0
        %7470 = vmatprep.mubr.f32.mxu0 0.0
        %7471 = vmatmul.mubr.f32.gmra.mxu0 %v2143
        %v7472 = vpop.f32.mrf.mxu0
        %v7473 = vadd.f32 0.0, %v7472
        %v7474 = vpop.f32.mrf.mxu0
        %7475 = vmatprep.mubr.f32.mxu0 0.0
        %7476 = vmatmul.mubr.f32.gmra.mxu0 %v2145
        %v7477 = vpop.f32.mrf.mxu0
        %v7478 = vadd.f32 0.0, %v7477
        %v7479 = vpop.f32.mrf.mxu0
        %7480 = vmatprep.mubr.f32.mxu0 0.0
        %7481 = vmatmul.mubr.f32.gmra.mxu0 %v4241
        %v7482 = vpop.f32.mrf.mxu0
        %v7483 = vadd.f32 0.0, %v7482
        %v7484 = vpop.f32.mrf.mxu0
        %7485 = vmatprep.mubr.f32.mxu0 0.0
        %7486 = vmatmul.mubr.f32.gmra.mxu0 %v4244
        %v7487 = vpop.f32.mrf.mxu0
        %v7488 = vadd.f32 0.0, %v7487
        %v7489 = vpop.f32.mrf.mxu0
        %7490 = vmatprep.mubr.f32.mxu0 0.0
        %7491 = vmatmul.mubr.f32.gmra.mxu0 %v4247
        %v7492 = vpop.f32.mrf.mxu0
        %v7493 = vadd.f32 0.0, %v7492
        %v7494 = vpop.f32.mrf.mxu0
        %7495 = vmatprep.mubr.f32.mxu0 0.0
        %7496 = vmatmul.mubr.f32.gmra.mxu0 %v4250
        %v7497 = vpop.f32.mrf.mxu0
        %v7498 = vadd.f32 0.0, %v7497
        %v7499 = vpop.f32.mrf.mxu0
        %7500 = vmatprep.mubr.f32.mxu0 0.0
        %7501 = vmatmul.mubr.f32.gmra.mxu0 %v6802
        %v7502 = vpop.f32.mrf.mxu0
        %v7503 = vadd.f32 0.0, %v7502
        %v7504 = vpop.f32.mrf.mxu0
        %7505 = vmatprep.mubr.f32.mxu0 0.0
        %7506 = vmatmul.mubr.f32.gmra.mxu0 %v6805
        %v7507 = vpop.f32.mrf.mxu0
        %v7508 = vadd.f32 0.0, %v7507
        %v7509 = vpop.f32.mrf.mxu0
        %7510 = vmatprep.mubr.f32.mxu0 0.0
        %7511 = vmatmul.mubr.f32.gmra.mxu0 %v6808
        %v7512 = vpop.f32.mrf.mxu0
        %v7513 = vadd.f32 0.0, %v7512
        %v7514 = vpop.f32.mrf.mxu0
        %7515 = vmatprep.mubr.f32.mxu0 0.0
        %7516 = vmatmul.mubr.f32.gmra.mxu0 %v6811
        %v7517 = vpop.f32.mrf.mxu0
        %v7518 = vadd.f32 0.0, %v7517
        %v7519 = vpop.f32.mrf.mxu0
        %7520 = vdwg.mxu0
        %v7521 = vadd.f32 %v6671, %v6883
        %v7522 = vadd.f32 %v6672, %v6888
        %v7523 = vadd.f32 %v6673, %v6893
        %v7524 = vadd.f32 %v6674, %v6898
        %v7525 = vadd.f32 %v6675, %v6903
        %v7526 = vadd.f32 %v6676, %v6908
        %v7527 = vadd.f32 %v6677, %v6913
        %v7528 = vadd.f32 %v6678, %v6918
        %v7529 = vadd.f32 %v6679, %v6923
        %v7530 = vadd.f32 %v6680, %v6928
        %v7531 = vadd.f32 %v6681, %v6933
        %v7532 = vadd.f32 %v6682, %v6938
        %v7533 = vadd.f32 %v6683, %v6943
        %v7534 = vadd.f32 %v6684, %v6948
        %v7535 = vadd.f32 %v6685, %v6953
        %v7536 = vadd.f32 %v6686, %v6958
        %v7537 = vadd.f32 %v6687, %v6963
        %v7538 = vadd.f32 %v6688, %v6968
        %v7539 = vadd.f32 %v6689, %v6973
        %v7540 = vadd.f32 %v6690, %v6978
        %v7541 = vadd.f32 %v6691, %v6983
        %v7542 = vadd.f32 %v6692, %v6988
        %v7543 = vadd.f32 %v6693, %v6993
        %v7544 = vadd.f32 %v6694, %v6998
        %v7545 = vadd.f32 %v6695, %v7003
        %v7546 = vadd.f32 %v6696, %v7008
        %v7547 = vadd.f32 %v6697, %v7013
        %v7548 = vadd.f32 %v6698, %v7018
        %v7549 = vadd.f32 %v6699, %v7023
        %v7550 = vadd.f32 %v6700, %v7028
        %v7551 = vadd.f32 %v6701, %v7033
        %v7552 = vadd.f32 %v6702, %v7038
        %v7553 = vadd.f32 %v6703, %v7043
        %v7554 = vadd.f32 %v6704, %v7048
        %v7555 = vadd.f32 %v6705, %v7053
        %v7556 = vadd.f32 %v6706, %v7058
        %v7557 = vadd.f32 %v6707, %v7063
        %v7558 = vadd.f32 %v6708, %v7068
        %v7559 = vadd.f32 %v6709, %v7073
        %v7560 = vadd.f32 %v6710, %v7078
        %v7561 = vadd.f32 %v6711, %v7083
        %v7562 = vadd.f32 %v6712, %v7088
        %v7563 = vadd.f32 %v6713, %v7093
        %v7564 = vadd.f32 %v6714, %v7098
        %v7565 = vadd.f32 %v6715, %v7103
        %v7566 = vadd.f32 %v6716, %v7108
        %v7567 = vadd.f32 %v6717, %v7113
        %v7568 = vadd.f32 %v6718, %v7118
        %v7569 = vadd.f32 %v6719, %v7123
        %v7570 = vadd.f32 %v6720, %v7128
        %v7571 = vadd.f32 %v6721, %v7133
        %v7572 = vadd.f32 %v6722, %v7138
        %v7573 = vadd.f32 %v6723, %v7143
        %v7574 = vadd.f32 %v6724, %v7148
        %v7575 = vadd.f32 %v6725, %v7153
        %v7576 = vadd.f32 %v6726, %v7158
        %v7577 = vadd.f32 %v6727, %v7163
        %v7578 = vadd.f32 %v6728, %v7168
        %v7579 = vadd.f32 %v6729, %v7173
        %v7580 = vadd.f32 %v6730, %v7178
        %v7581 = vadd.f32 %v6731, %v7183
        %v7582 = vadd.f32 %v6732, %v7188
        %v7583 = vadd.f32 %v6733, %v7193
        %v7584 = vadd.f32 %v6734, %v7198
        %v7585 = vadd.f32 %v6735, %v7203
        %v7586 = vadd.f32 %v6736, %v7208
        %v7587 = vadd.f32 %v6737, %v7213
        %v7588 = vadd.f32 %v6738, %v7218
        %v7589 = vadd.f32 %v6739, %v7223
        %v7590 = vadd.f32 %v6740, %v7228
        %v7591 = vadd.f32 %v6741, %v7233
        %v7592 = vadd.f32 %v6742, %v7238
        %v7593 = vadd.f32 %v6743, %v7243
        %v7594 = vadd.f32 %v6744, %v7248
        %v7595 = vadd.f32 %v6745, %v7253
        %v7596 = vadd.f32 %v6746, %v7258
        %v7597 = vadd.f32 %v6747, %v7263
        %v7598 = vadd.f32 %v6748, %v7268
        %v7599 = vadd.f32 %v6749, %v7273
        %v7600 = vadd.f32 %v6750, %v7278
        %v7601 = vadd.f32 %v6751, %v7283
        %v7602 = vadd.f32 %v6752, %v7288
        %v7603 = vadd.f32 %v6753, %v7293
        %v7604 = vadd.f32 %v6754, %v7298
        %v7605 = vadd.f32 %v6755, %v7303
        %v7606 = vadd.f32 %v6756, %v7308
        %v7607 = vadd.f32 %v6757, %v7313
        %v7608 = vadd.f32 %v6758, %v7318
        %v7609 = vadd.f32 %v6759, %v7323
        %v7610 = vadd.f32 %v6760, %v7328
        %v7611 = vadd.f32 %v6761, %v7333
        %v7612 = vadd.f32 %v6762, %v7338
        %v7613 = vadd.f32 %v6763, %v7343
        %v7614 = vadd.f32 %v6764, %v7348
        %v7615 = vadd.f32 %v6765, %v7353
        %v7616 = vadd.f32 %v6766, %v7358
        %v7617 = vadd.f32 %v6767, %v7363
        %v7618 = vadd.f32 %v6768, %v7368
        %v7619 = vadd.f32 %v6769, %v7373
        %v7620 = vadd.f32 %v6770, %v7378
        %v7621 = vadd.f32 %v6771, %v7383
        %v7622 = vadd.f32 %v6772, %v7388
        %v7623 = vadd.f32 %v6773, %v7393
        %v7624 = vadd.f32 %v6774, %v7398
        %v7625 = vadd.f32 %v6775, %v7403
        %v7626 = vadd.f32 %v6776, %v7408
        %v7627 = vadd.f32 %v6777, %v7413
        %v7628 = vadd.f32 %v6778, %v7418
        %v7629 = vadd.f32 %v6779, %v7423
        %v7630 = vadd.f32 %v6780, %v7428
        %v7631 = vadd.f32 %v6781, %v7433
        %v7632 = vadd.f32 %v6782, %v7438
        %v7633 = vadd.f32 %v6783, %v7443
        %v7634 = vadd.f32 %v6784, %v7448
        %v7635 = vadd.f32 %v6785, %v7453
        %v7636 = vadd.f32 %v6786, %v7458
        %v7637 = vadd.f32 %v6787, %v7463
        %v7638 = vadd.f32 %v6788, %v7468
        %v7639 = vadd.f32 %v6789, %v7473
        %v7640 = vadd.f32 %v6790, %v7478
        %v7641 = vadd.f32 %v6791, %v7483
        %v7642 = vadd.f32 %v6792, %v7488
        %v7643 = vadd.f32 %v6793, %v7493
        %v7644 = vadd.f32 %v6794, %v7498
        %v7645 = vadd.f32 %v6795, %v7503
        %v7646 = vadd.f32 %v6796, %v7508
        %v7647 = vadd.f32 %v6797, %v7513
        %v7648 = vadd.f32 %v6798, %v7518
        %v7650 = vrot.slane %v468, 1
        %v7651 = vrot.slane %v469, 1
        %v7652 = vsel %vm634, %v7650, %v7651
        %v7653 = vrot.slane %v470, 1
        %v7654 = vsel %vm634, %v7651, %v7653
        %v7655 = vrot.slane %v471, 1
        %v7656 = vsel %vm634, %v7653, %v7655
        %v7657 = vrot.slane %v472, 1
        %v7658 = vsel %vm634, %v7655, %v7657
        %s7659 = scalar_lea.vmem %s1, 28
        %v7660 = vld [vmem:[%s7659] sm:$0x7]
        %v7661 = vsel %vm925, %v7652, 0
        %v7663 = vsel %vm925, %v7654, 0
        %v7665 = vsel %vm925, %v7656, 0
        %v7667 = vsel %vm925, %v7658, 0
        %v7670 = vsel %vm1182, %v7660, 0
        %7672 = vmatprep.subr.mxu0 0.0
        %7673 = vmatpush1.msra.mxu0 0.0
        %7674 = vmatprep.subr.mxu0 0.0
        %7675 = vmatpush1.msra.mxu0 0.0
        %7676 = vmatprep.subr.mxu0 0.0
        %7677 = vmatpush1.msra.mxu0 0.0
        %7678 = vmatprep.subr.mxu0 0.0
        %7679 = vmatpush1.msra.mxu0 0.0
        %7680 = vmatprep.subr.mxu0 0.0
        %7681 = vmatpush1.msra.mxu0 0.0
        %7682 = vmatprep.subr.mxu0 0.0
        %7683 = vmatpush1.msra.mxu0 0.0
        %7684 = vmatprep.subr.mxu0 0.0
        %7685 = vmatpush1.msra.mxu0 0.0
        %7686 = vmatprep.subr.mxu0 0.0
        %7687 = vmatpush1.msra.mxu0 0.0
        %7688 = vmatprep.subr.mxu0 0.0
        %7689 = vmatpush1.msra.mxu0 0.0
        %7690 = vmatprep.subr.mxu0 0.0
        %7691 = vmatpush1.msra.mxu0 0.0
        %7692 = vmatprep.subr.mxu0 0.0
        %7693 = vmatpush1.msra.mxu0 0.0
        %7694 = vmatprep.subr.mxu0 0.0
        %7695 = vmatpush1.msra.mxu0 0.0
        %7696 = vmatprep.subr.mxu0 0.0
        %7697 = vmatpush1.msra.mxu0 0.0
        %7698 = vmatprep.subr.mxu0 0.0
        %7699 = vmatpush1.msra.mxu0 0.0
        %7700 = vmatprep.subr.mxu0 0.0
        %7701 = vmatpush1.msra.mxu0 0.0
        %7702 = vmatprep.subr.mxu0 0.0
        %7703 = vmatpush1.msra.mxu0 %v7670
        %7704 = vmatprep.subr.mxu0 0.0
        %7705 = vmatpush2.msra.mxu0 0.0
        %7706 = vmatprep.subr.mxu0 0.0
        %7707 = vmatpush2.msra.mxu0 0.0
        %7708 = vmatprep.subr.mxu0 0.0
        %7709 = vmatpush2.msra.mxu0 0.0
        %7710 = vmatprep.subr.mxu0 0.0
        %7711 = vmatpush2.msra.mxu0 0.0
        %7712 = vmatprep.subr.mxu0 0.0
        %7713 = vmatpush2.msra.mxu0 0.0
        %7714 = vmatprep.subr.mxu0 0.0
        %7715 = vmatpush2.msra.mxu0 0.0
        %7716 = vmatprep.subr.mxu0 0.0
        %7717 = vmatpush2.msra.mxu0 0.0
        %7718 = vmatprep.subr.mxu0 0.0
        %7719 = vmatpush2.msra.mxu0 0.0
        %7720 = vmatprep.subr.mxu0 0.0
        %7721 = vmatpush2.msra.mxu0 0.0
        %7722 = vmatprep.subr.mxu0 0.0
        %7723 = vmatpush2.msra.mxu0 0.0
        %7724 = vmatprep.subr.mxu0 0.0
        %7725 = vmatpush2.msra.mxu0 0.0
        %7726 = vmatprep.subr.mxu0 0.0
        %7727 = vmatpush2.msra.mxu0 0.0
        %7728 = vmatprep.subr.mxu0 0.0
        %7729 = vmatpush2.msra.mxu0 0.0
        %7730 = vmatprep.subr.mxu0 0.0
        %7731 = vmatpush2.msra.mxu0 0.0
        %7732 = vmatprep.subr.mxu0 0.0
        %7733 = vmatpush2.msra.mxu0 0.0
        %7734 = vmatprep.subr.mxu0 0.0
        %7735 = vmatpush2.msra.mxu0 0.0
        %7736 = vmatprep.mubr.f32.mxu0 0.0
        %7737 = vmatmul.mubr.f32.gmra.mxu0 %v942
        %v7738 = vpop.f32.mrf.mxu0
        %v7739 = vadd.f32 0.0, %v7738
        %v7740 = vpop.f32.mrf.mxu0
        %7741 = vmatprep.mubr.f32.mxu0 0.0
        %7742 = vmatmul.mubr.f32.gmra.mxu0 %v944
        %v7743 = vpop.f32.mrf.mxu0
        %v7744 = vadd.f32 0.0, %v7743
        %v7745 = vpop.f32.mrf.mxu0
        %7746 = vmatprep.mubr.f32.mxu0 0.0
        %7747 = vmatmul.mubr.f32.gmra.mxu0 %v946
        %v7748 = vpop.f32.mrf.mxu0
        %v7749 = vadd.f32 0.0, %v7748
        %v7750 = vpop.f32.mrf.mxu0
        %7751 = vmatprep.mubr.f32.mxu0 0.0
        %7752 = vmatmul.mubr.f32.gmra.mxu0 %v948
        %v7753 = vpop.f32.mrf.mxu0
        %v7754 = vadd.f32 0.0, %v7753
        %v7755 = vpop.f32.mrf.mxu0
        %7756 = vmatprep.mubr.f32.mxu0 0.0
        %7757 = vmatmul.mubr.f32.gmra.mxu0 %v950
        %v7758 = vpop.f32.mrf.mxu0
        %v7759 = vadd.f32 0.0, %v7758
        %v7760 = vpop.f32.mrf.mxu0
        %7761 = vmatprep.mubr.f32.mxu0 0.0
        %7762 = vmatmul.mubr.f32.gmra.mxu0 %v952
        %v7763 = vpop.f32.mrf.mxu0
        %v7764 = vadd.f32 0.0, %v7763
        %v7765 = vpop.f32.mrf.mxu0
        %7766 = vmatprep.mubr.f32.mxu0 0.0
        %7767 = vmatmul.mubr.f32.gmra.mxu0 %v954
        %v7768 = vpop.f32.mrf.mxu0
        %v7769 = vadd.f32 0.0, %v7768
        %v7770 = vpop.f32.mrf.mxu0
        %7771 = vmatprep.mubr.f32.mxu0 0.0
        %7772 = vmatmul.mubr.f32.gmra.mxu0 %v956
        %v7773 = vpop.f32.mrf.mxu0
        %v7774 = vadd.f32 0.0, %v7773
        %v7775 = vpop.f32.mrf.mxu0
        %7776 = vmatprep.mubr.f32.mxu0 0.0
        %7777 = vmatmul.mubr.f32.gmra.mxu0 %v958
        %v7778 = vpop.f32.mrf.mxu0
        %v7779 = vadd.f32 0.0, %v7778
        %v7780 = vpop.f32.mrf.mxu0
        %7781 = vmatprep.mubr.f32.mxu0 0.0
        %7782 = vmatmul.mubr.f32.gmra.mxu0 %v960
        %v7783 = vpop.f32.mrf.mxu0
        %v7784 = vadd.f32 0.0, %v7783
        %v7785 = vpop.f32.mrf.mxu0
        %7786 = vmatprep.mubr.f32.mxu0 0.0
        %7787 = vmatmul.mubr.f32.gmra.mxu0 %v962
        %v7788 = vpop.f32.mrf.mxu0
        %v7789 = vadd.f32 0.0, %v7788
        %v7790 = vpop.f32.mrf.mxu0
        %7791 = vmatprep.mubr.f32.mxu0 0.0
        %7792 = vmatmul.mubr.f32.gmra.mxu0 %v964
        %v7793 = vpop.f32.mrf.mxu0
        %v7794 = vadd.f32 0.0, %v7793
        %v7795 = vpop.f32.mrf.mxu0
        %7796 = vmatprep.mubr.f32.mxu0 0.0
        %7797 = vmatmul.mubr.f32.gmra.mxu0 %v966
        %v7798 = vpop.f32.mrf.mxu0
        %v7799 = vadd.f32 0.0, %v7798
        %v7800 = vpop.f32.mrf.mxu0
        %7801 = vmatprep.mubr.f32.mxu0 0.0
        %7802 = vmatmul.mubr.f32.gmra.mxu0 %v968
        %v7803 = vpop.f32.mrf.mxu0
        %v7804 = vadd.f32 0.0, %v7803
        %v7805 = vpop.f32.mrf.mxu0
        %7806 = vmatprep.mubr.f32.mxu0 0.0
        %7807 = vmatmul.mubr.f32.gmra.mxu0 %v970
        %v7808 = vpop.f32.mrf.mxu0
        %v7809 = vadd.f32 0.0, %v7808
        %v7810 = vpop.f32.mrf.mxu0
        %7811 = vmatprep.mubr.f32.mxu0 0.0
        %7812 = vmatmul.mubr.f32.gmra.mxu0 %v972
        %v7813 = vpop.f32.mrf.mxu0
        %v7814 = vadd.f32 0.0, %v7813
        %v7815 = vpop.f32.mrf.mxu0
        %7816 = vmatprep.mubr.f32.mxu0 0.0
        %7817 = vmatmul.mubr.f32.gmra.mxu0 %v974
        %v7818 = vpop.f32.mrf.mxu0
        %v7819 = vadd.f32 0.0, %v7818
        %v7820 = vpop.f32.mrf.mxu0
        %7821 = vmatprep.mubr.f32.mxu0 0.0
        %7822 = vmatmul.mubr.f32.gmra.mxu0 %v976
        %v7823 = vpop.f32.mrf.mxu0
        %v7824 = vadd.f32 0.0, %v7823
        %v7825 = vpop.f32.mrf.mxu0
        %7826 = vmatprep.mubr.f32.mxu0 0.0
        %7827 = vmatmul.mubr.f32.gmra.mxu0 %v978
        %v7828 = vpop.f32.mrf.mxu0
        %v7829 = vadd.f32 0.0, %v7828
        %v7830 = vpop.f32.mrf.mxu0
        %7831 = vmatprep.mubr.f32.mxu0 0.0
        %7832 = vmatmul.mubr.f32.gmra.mxu0 %v980
        %v7833 = vpop.f32.mrf.mxu0
        %v7834 = vadd.f32 0.0, %v7833
        %v7835 = vpop.f32.mrf.mxu0
        %7836 = vmatprep.mubr.f32.mxu0 0.0
        %7837 = vmatmul.mubr.f32.gmra.mxu0 %v982
        %v7838 = vpop.f32.mrf.mxu0
        %v7839 = vadd.f32 0.0, %v7838
        %v7840 = vpop.f32.mrf.mxu0
        %7841 = vmatprep.mubr.f32.mxu0 0.0
        %7842 = vmatmul.mubr.f32.gmra.mxu0 %v984
        %v7843 = vpop.f32.mrf.mxu0
        %v7844 = vadd.f32 0.0, %v7843
        %v7845 = vpop.f32.mrf.mxu0
        %7846 = vmatprep.mubr.f32.mxu0 0.0
        %7847 = vmatmul.mubr.f32.gmra.mxu0 %v986
        %v7848 = vpop.f32.mrf.mxu0
        %v7849 = vadd.f32 0.0, %v7848
        %v7850 = vpop.f32.mrf.mxu0
        %7851 = vmatprep.mubr.f32.mxu0 0.0
        %7852 = vmatmul.mubr.f32.gmra.mxu0 %v988
        %v7853 = vpop.f32.mrf.mxu0
        %v7854 = vadd.f32 0.0, %v7853
        %v7855 = vpop.f32.mrf.mxu0
        %7856 = vmatprep.mubr.f32.mxu0 0.0
        %7857 = vmatmul.mubr.f32.gmra.mxu0 %v990
        %v7858 = vpop.f32.mrf.mxu0
        %v7859 = vadd.f32 0.0, %v7858
        %v7860 = vpop.f32.mrf.mxu0
        %7861 = vmatprep.mubr.f32.mxu0 0.0
        %7862 = vmatmul.mubr.f32.gmra.mxu0 %v992
        %v7863 = vpop.f32.mrf.mxu0
        %v7864 = vadd.f32 0.0, %v7863
        %v7865 = vpop.f32.mrf.mxu0
        %7866 = vmatprep.mubr.f32.mxu0 0.0
        %7867 = vmatmul.mubr.f32.gmra.mxu0 %v994
        %v7868 = vpop.f32.mrf.mxu0
        %v7869 = vadd.f32 0.0, %v7868
        %v7870 = vpop.f32.mrf.mxu0
        %7871 = vmatprep.mubr.f32.mxu0 0.0
        %7872 = vmatmul.mubr.f32.gmra.mxu0 %v996
        %v7873 = vpop.f32.mrf.mxu0
        %v7874 = vadd.f32 0.0, %v7873
        %v7875 = vpop.f32.mrf.mxu0
        %7876 = vmatprep.mubr.f32.mxu0 0.0
        %7877 = vmatmul.mubr.f32.gmra.mxu0 %v998
        %v7878 = vpop.f32.mrf.mxu0
        %v7879 = vadd.f32 0.0, %v7878
        %v7880 = vpop.f32.mrf.mxu0
        %7881 = vmatprep.mubr.f32.mxu0 0.0
        %7882 = vmatmul.mubr.f32.gmra.mxu0 %v1000
        %v7883 = vpop.f32.mrf.mxu0
        %v7884 = vadd.f32 0.0, %v7883
        %v7885 = vpop.f32.mrf.mxu0
        %7886 = vmatprep.mubr.f32.mxu0 0.0
        %7887 = vmatmul.mubr.f32.gmra.mxu0 %v1002
        %v7888 = vpop.f32.mrf.mxu0
        %v7889 = vadd.f32 0.0, %v7888
        %v7890 = vpop.f32.mrf.mxu0
        %7891 = vmatprep.mubr.f32.mxu0 0.0
        %7892 = vmatmul.mubr.f32.gmra.mxu0 %v1004
        %v7893 = vpop.f32.mrf.mxu0
        %v7894 = vadd.f32 0.0, %v7893
        %v7895 = vpop.f32.mrf.mxu0
        %7896 = vmatprep.mubr.f32.mxu0 0.0
        %7897 = vmatmul.mubr.f32.gmra.mxu0 %v1006
        %v7898 = vpop.f32.mrf.mxu0
        %v7899 = vadd.f32 0.0, %v7898
        %v7900 = vpop.f32.mrf.mxu0
        %7901 = vmatprep.mubr.f32.mxu0 0.0
        %7902 = vmatmul.mubr.f32.gmra.mxu0 %v1008
        %v7903 = vpop.f32.mrf.mxu0
        %v7904 = vadd.f32 0.0, %v7903
        %v7905 = vpop.f32.mrf.mxu0
        %7906 = vmatprep.mubr.f32.mxu0 0.0
        %7907 = vmatmul.mubr.f32.gmra.mxu0 %v1010
        %v7908 = vpop.f32.mrf.mxu0
        %v7909 = vadd.f32 0.0, %v7908
        %v7910 = vpop.f32.mrf.mxu0
        %7911 = vmatprep.mubr.f32.mxu0 0.0
        %7912 = vmatmul.mubr.f32.gmra.mxu0 %v1012
        %v7913 = vpop.f32.mrf.mxu0
        %v7914 = vadd.f32 0.0, %v7913
        %v7915 = vpop.f32.mrf.mxu0
        %7916 = vmatprep.mubr.f32.mxu0 0.0
        %7917 = vmatmul.mubr.f32.gmra.mxu0 %v1014
        %v7918 = vpop.f32.mrf.mxu0
        %v7919 = vadd.f32 0.0, %v7918
        %v7920 = vpop.f32.mrf.mxu0
        %7921 = vmatprep.mubr.f32.mxu0 0.0
        %7922 = vmatmul.mubr.f32.gmra.mxu0 %v1016
        %v7923 = vpop.f32.mrf.mxu0
        %v7924 = vadd.f32 0.0, %v7923
        %v7925 = vpop.f32.mrf.mxu0
        %7926 = vmatprep.mubr.f32.mxu0 0.0
        %7927 = vmatmul.mubr.f32.gmra.mxu0 %v1018
        %v7928 = vpop.f32.mrf.mxu0
        %v7929 = vadd.f32 0.0, %v7928
        %v7930 = vpop.f32.mrf.mxu0
        %7931 = vmatprep.mubr.f32.mxu0 0.0
        %7932 = vmatmul.mubr.f32.gmra.mxu0 %v1020
        %v7933 = vpop.f32.mrf.mxu0
        %v7934 = vadd.f32 0.0, %v7933
        %v7935 = vpop.f32.mrf.mxu0
        %7936 = vmatprep.mubr.f32.mxu0 0.0
        %7937 = vmatmul.mubr.f32.gmra.mxu0 %v1022
        %v7938 = vpop.f32.mrf.mxu0
        %v7939 = vadd.f32 0.0, %v7938
        %v7940 = vpop.f32.mrf.mxu0
        %7941 = vmatprep.mubr.f32.mxu0 0.0
        %7942 = vmatmul.mubr.f32.gmra.mxu0 %v1024
        %v7943 = vpop.f32.mrf.mxu0
        %v7944 = vadd.f32 0.0, %v7943
        %v7945 = vpop.f32.mrf.mxu0
        %7946 = vmatprep.mubr.f32.mxu0 0.0
        %7947 = vmatmul.mubr.f32.gmra.mxu0 %v1026
        %v7948 = vpop.f32.mrf.mxu0
        %v7949 = vadd.f32 0.0, %v7948
        %v7950 = vpop.f32.mrf.mxu0
        %7951 = vmatprep.mubr.f32.mxu0 0.0
        %7952 = vmatmul.mubr.f32.gmra.mxu0 %v1028
        %v7953 = vpop.f32.mrf.mxu0
        %v7954 = vadd.f32 0.0, %v7953
        %v7955 = vpop.f32.mrf.mxu0
        %7956 = vmatprep.mubr.f32.mxu0 0.0
        %7957 = vmatmul.mubr.f32.gmra.mxu0 %v1030
        %v7958 = vpop.f32.mrf.mxu0
        %v7959 = vadd.f32 0.0, %v7958
        %v7960 = vpop.f32.mrf.mxu0
        %7961 = vmatprep.mubr.f32.mxu0 0.0
        %7962 = vmatmul.mubr.f32.gmra.mxu0 %v1032
        %v7963 = vpop.f32.mrf.mxu0
        %v7964 = vadd.f32 0.0, %v7963
        %v7965 = vpop.f32.mrf.mxu0
        %7966 = vmatprep.mubr.f32.mxu0 0.0
        %7967 = vmatmul.mubr.f32.gmra.mxu0 %v1034
        %v7968 = vpop.f32.mrf.mxu0
        %v7969 = vadd.f32 0.0, %v7968
        %v7970 = vpop.f32.mrf.mxu0
        %7971 = vmatprep.mubr.f32.mxu0 0.0
        %7972 = vmatmul.mubr.f32.gmra.mxu0 %v1036
        %v7973 = vpop.f32.mrf.mxu0
        %v7974 = vadd.f32 0.0, %v7973
        %v7975 = vpop.f32.mrf.mxu0
        %7976 = vmatprep.mubr.f32.mxu0 0.0
        %7977 = vmatmul.mubr.f32.gmra.mxu0 %v1038
        %v7978 = vpop.f32.mrf.mxu0
        %v7979 = vadd.f32 0.0, %v7978
        %v7980 = vpop.f32.mrf.mxu0
        %7981 = vmatprep.mubr.f32.mxu0 0.0
        %7982 = vmatmul.mubr.f32.gmra.mxu0 %v1040
        %v7983 = vpop.f32.mrf.mxu0
        %v7984 = vadd.f32 0.0, %v7983
        %v7985 = vpop.f32.mrf.mxu0
        %7986 = vmatprep.mubr.f32.mxu0 0.0
        %7987 = vmatmul.mubr.f32.gmra.mxu0 %v1042
        %v7988 = vpop.f32.mrf.mxu0
        %v7989 = vadd.f32 0.0, %v7988
        %v7990 = vpop.f32.mrf.mxu0
        %7991 = vmatprep.mubr.f32.mxu0 0.0
        %7992 = vmatmul.mubr.f32.gmra.mxu0 %v1044
        %v7993 = vpop.f32.mrf.mxu0
        %v7994 = vadd.f32 0.0, %v7993
        %v7995 = vpop.f32.mrf.mxu0
        %7996 = vmatprep.mubr.f32.mxu0 0.0
        %7997 = vmatmul.mubr.f32.gmra.mxu0 %v1046
        %v7998 = vpop.f32.mrf.mxu0
        %v7999 = vadd.f32 0.0, %v7998
        %v8000 = vpop.f32.mrf.mxu0
        %8001 = vmatprep.mubr.f32.mxu0 0.0
        %8002 = vmatmul.mubr.f32.gmra.mxu0 %v1048
        %v8003 = vpop.f32.mrf.mxu0
        %v8004 = vadd.f32 0.0, %v8003
        %v8005 = vpop.f32.mrf.mxu0
        %8006 = vmatprep.mubr.f32.mxu0 0.0
        %8007 = vmatmul.mubr.f32.gmra.mxu0 %v1050
        %v8008 = vpop.f32.mrf.mxu0
        %v8009 = vadd.f32 0.0, %v8008
        %v8010 = vpop.f32.mrf.mxu0
        %8011 = vmatprep.mubr.f32.mxu0 0.0
        %8012 = vmatmul.mubr.f32.gmra.mxu0 %v1052
        %v8013 = vpop.f32.mrf.mxu0
        %v8014 = vadd.f32 0.0, %v8013
        %v8015 = vpop.f32.mrf.mxu0
        %8016 = vmatprep.mubr.f32.mxu0 0.0
        %8017 = vmatmul.mubr.f32.gmra.mxu0 %v1054
        %v8018 = vpop.f32.mrf.mxu0
        %v8019 = vadd.f32 0.0, %v8018
        %v8020 = vpop.f32.mrf.mxu0
        %8021 = vmatprep.mubr.f32.mxu0 0.0
        %8022 = vmatmul.mubr.f32.gmra.mxu0 %v1056
        %v8023 = vpop.f32.mrf.mxu0
        %v8024 = vadd.f32 0.0, %v8023
        %v8025 = vpop.f32.mrf.mxu0
        %8026 = vmatprep.mubr.f32.mxu0 0.0
        %8027 = vmatmul.mubr.f32.gmra.mxu0 %v1058
        %v8028 = vpop.f32.mrf.mxu0
        %v8029 = vadd.f32 0.0, %v8028
        %v8030 = vpop.f32.mrf.mxu0
        %8031 = vmatprep.mubr.f32.mxu0 0.0
        %8032 = vmatmul.mubr.f32.gmra.mxu0 %v1060
        %v8033 = vpop.f32.mrf.mxu0
        %v8034 = vadd.f32 0.0, %v8033
        %v8035 = vpop.f32.mrf.mxu0
        %8036 = vmatprep.mubr.f32.mxu0 0.0
        %8037 = vmatmul.mubr.f32.gmra.mxu0 %v1062
        %v8038 = vpop.f32.mrf.mxu0
        %v8039 = vadd.f32 0.0, %v8038
        %v8040 = vpop.f32.mrf.mxu0
        %8041 = vmatprep.mubr.f32.mxu0 0.0
        %8042 = vmatmul.mubr.f32.gmra.mxu0 %v1064
        %v8043 = vpop.f32.mrf.mxu0
        %v8044 = vadd.f32 0.0, %v8043
        %v8045 = vpop.f32.mrf.mxu0
        %8046 = vmatprep.mubr.f32.mxu0 0.0
        %8047 = vmatmul.mubr.f32.gmra.mxu0 %v1066
        %v8048 = vpop.f32.mrf.mxu0
        %v8049 = vadd.f32 0.0, %v8048
        %v8050 = vpop.f32.mrf.mxu0
        %8051 = vmatprep.mubr.f32.mxu0 0.0
        %8052 = vmatmul.mubr.f32.gmra.mxu0 %v1068
        %v8053 = vpop.f32.mrf.mxu0
        %v8054 = vadd.f32 0.0, %v8053
        %v8055 = vpop.f32.mrf.mxu0
        %8056 = vmatprep.mubr.f32.mxu0 0.0
        %8057 = vmatmul.mubr.f32.gmra.mxu0 %v1070
        %v8058 = vpop.f32.mrf.mxu0
        %v8059 = vadd.f32 0.0, %v8058
        %v8060 = vpop.f32.mrf.mxu0
        %8061 = vmatprep.mubr.f32.mxu0 0.0
        %8062 = vmatmul.mubr.f32.gmra.mxu0 %v1072
        %v8063 = vpop.f32.mrf.mxu0
        %v8064 = vadd.f32 0.0, %v8063
        %v8065 = vpop.f32.mrf.mxu0
        %8066 = vmatprep.mubr.f32.mxu0 0.0
        %8067 = vmatmul.mubr.f32.gmra.mxu0 %v1074
        %v8068 = vpop.f32.mrf.mxu0
        %v8069 = vadd.f32 0.0, %v8068
        %v8070 = vpop.f32.mrf.mxu0
        %8071 = vmatprep.mubr.f32.mxu0 0.0
        %8072 = vmatmul.mubr.f32.gmra.mxu0 %v1076
        %v8073 = vpop.f32.mrf.mxu0
        %v8074 = vadd.f32 0.0, %v8073
        %v8075 = vpop.f32.mrf.mxu0
        %8076 = vmatprep.mubr.f32.mxu0 0.0
        %8077 = vmatmul.mubr.f32.gmra.mxu0 %v1078
        %v8078 = vpop.f32.mrf.mxu0
        %v8079 = vadd.f32 0.0, %v8078
        %v8080 = vpop.f32.mrf.mxu0
        %8081 = vmatprep.mubr.f32.mxu0 0.0
        %8082 = vmatmul.mubr.f32.gmra.mxu0 %v1080
        %v8083 = vpop.f32.mrf.mxu0
        %v8084 = vadd.f32 0.0, %v8083
        %v8085 = vpop.f32.mrf.mxu0
        %8086 = vmatprep.mubr.f32.mxu0 0.0
        %8087 = vmatmul.mubr.f32.gmra.mxu0 %v1082
        %v8088 = vpop.f32.mrf.mxu0
        %v8089 = vadd.f32 0.0, %v8088
        %v8090 = vpop.f32.mrf.mxu0
        %8091 = vmatprep.mubr.f32.mxu0 0.0
        %8092 = vmatmul.mubr.f32.gmra.mxu0 %v1084
        %v8093 = vpop.f32.mrf.mxu0
        %v8094 = vadd.f32 0.0, %v8093
        %v8095 = vpop.f32.mrf.mxu0
        %8096 = vmatprep.mubr.f32.mxu0 0.0
        %8097 = vmatmul.mubr.f32.gmra.mxu0 %v1086
        %v8098 = vpop.f32.mrf.mxu0
        %v8099 = vadd.f32 0.0, %v8098
        %v8100 = vpop.f32.mrf.mxu0
        %8101 = vmatprep.mubr.f32.mxu0 0.0
        %8102 = vmatmul.mubr.f32.gmra.mxu0 %v1088
        %v8103 = vpop.f32.mrf.mxu0
        %v8104 = vadd.f32 0.0, %v8103
        %v8105 = vpop.f32.mrf.mxu0
        %8106 = vmatprep.mubr.f32.mxu0 0.0
        %8107 = vmatmul.mubr.f32.gmra.mxu0 %v1090
        %v8108 = vpop.f32.mrf.mxu0
        %v8109 = vadd.f32 0.0, %v8108
        %v8110 = vpop.f32.mrf.mxu0
        %8111 = vmatprep.mubr.f32.mxu0 0.0
        %8112 = vmatmul.mubr.f32.gmra.mxu0 %v1092
        %v8113 = vpop.f32.mrf.mxu0
        %v8114 = vadd.f32 0.0, %v8113
        %v8115 = vpop.f32.mrf.mxu0
        %8116 = vmatprep.mubr.f32.mxu0 0.0
        %8117 = vmatmul.mubr.f32.gmra.mxu0 %v1094
        %v8118 = vpop.f32.mrf.mxu0
        %v8119 = vadd.f32 0.0, %v8118
        %v8120 = vpop.f32.mrf.mxu0
        %8121 = vmatprep.mubr.f32.mxu0 0.0
        %8122 = vmatmul.mubr.f32.gmra.mxu0 %v1096
        %v8123 = vpop.f32.mrf.mxu0
        %v8124 = vadd.f32 0.0, %v8123
        %v8125 = vpop.f32.mrf.mxu0
        %8126 = vmatprep.mubr.f32.mxu0 0.0
        %8127 = vmatmul.mubr.f32.gmra.mxu0 %v1098
        %v8128 = vpop.f32.mrf.mxu0
        %v8129 = vadd.f32 0.0, %v8128
        %v8130 = vpop.f32.mrf.mxu0
        %8131 = vmatprep.mubr.f32.mxu0 0.0
        %8132 = vmatmul.mubr.f32.gmra.mxu0 %v1100
        %v8133 = vpop.f32.mrf.mxu0
        %v8134 = vadd.f32 0.0, %v8133
        %v8135 = vpop.f32.mrf.mxu0
        %8136 = vmatprep.mubr.f32.mxu0 0.0
        %8137 = vmatmul.mubr.f32.gmra.mxu0 %v1102
        %v8138 = vpop.f32.mrf.mxu0
        %v8139 = vadd.f32 0.0, %v8138
        %v8140 = vpop.f32.mrf.mxu0
        %8141 = vmatprep.mubr.f32.mxu0 0.0
        %8142 = vmatmul.mubr.f32.gmra.mxu0 %v1104
        %v8143 = vpop.f32.mrf.mxu0
        %v8144 = vadd.f32 0.0, %v8143
        %v8145 = vpop.f32.mrf.mxu0
        %8146 = vmatprep.mubr.f32.mxu0 0.0
        %8147 = vmatmul.mubr.f32.gmra.mxu0 %v1106
        %v8148 = vpop.f32.mrf.mxu0
        %v8149 = vadd.f32 0.0, %v8148
        %v8150 = vpop.f32.mrf.mxu0
        %8151 = vmatprep.mubr.f32.mxu0 0.0
        %8152 = vmatmul.mubr.f32.gmra.mxu0 %v1108
        %v8153 = vpop.f32.mrf.mxu0
        %v8154 = vadd.f32 0.0, %v8153
        %v8155 = vpop.f32.mrf.mxu0
        %8156 = vmatprep.mubr.f32.mxu0 0.0
        %8157 = vmatmul.mubr.f32.gmra.mxu0 %v1110
        %v8158 = vpop.f32.mrf.mxu0
        %v8159 = vadd.f32 0.0, %v8158
        %v8160 = vpop.f32.mrf.mxu0
        %8161 = vmatprep.mubr.f32.mxu0 0.0
        %8162 = vmatmul.mubr.f32.gmra.mxu0 %v1112
        %v8163 = vpop.f32.mrf.mxu0
        %v8164 = vadd.f32 0.0, %v8163
        %v8165 = vpop.f32.mrf.mxu0
        %8166 = vmatprep.mubr.f32.mxu0 0.0
        %8167 = vmatmul.mubr.f32.gmra.mxu0 %v1114
        %v8168 = vpop.f32.mrf.mxu0
        %v8169 = vadd.f32 0.0, %v8168
        %v8170 = vpop.f32.mrf.mxu0
        %8171 = vmatprep.mubr.f32.mxu0 0.0
        %8172 = vmatmul.mubr.f32.gmra.mxu0 %v1116
        %v8173 = vpop.f32.mrf.mxu0
        %v8174 = vadd.f32 0.0, %v8173
        %v8175 = vpop.f32.mrf.mxu0
        %8176 = vmatprep.mubr.f32.mxu0 0.0
        %8177 = vmatmul.mubr.f32.gmra.mxu0 %v1118
        %v8178 = vpop.f32.mrf.mxu0
        %v8179 = vadd.f32 0.0, %v8178
        %v8180 = vpop.f32.mrf.mxu0
        %8181 = vmatprep.mubr.f32.mxu0 0.0
        %8182 = vmatmul.mubr.f32.gmra.mxu0 %v1120
        %v8183 = vpop.f32.mrf.mxu0
        %v8184 = vadd.f32 0.0, %v8183
        %v8185 = vpop.f32.mrf.mxu0
        %8186 = vmatprep.mubr.f32.mxu0 0.0
        %8187 = vmatmul.mubr.f32.gmra.mxu0 %v1122
        %v8188 = vpop.f32.mrf.mxu0
        %v8189 = vadd.f32 0.0, %v8188
        %v8190 = vpop.f32.mrf.mxu0
        %8191 = vmatprep.mubr.f32.mxu0 0.0
        %8192 = vmatmul.mubr.f32.gmra.mxu0 %v1124
        %v8193 = vpop.f32.mrf.mxu0
        %v8194 = vadd.f32 0.0, %v8193
        %v8195 = vpop.f32.mrf.mxu0
        %8196 = vmatprep.mubr.f32.mxu0 0.0
        %8197 = vmatmul.mubr.f32.gmra.mxu0 %v1126
        %v8198 = vpop.f32.mrf.mxu0
        %v8199 = vadd.f32 0.0, %v8198
        %v8200 = vpop.f32.mrf.mxu0
        %8201 = vmatprep.mubr.f32.mxu0 0.0
        %8202 = vmatmul.mubr.f32.gmra.mxu0 %v1128
        %v8203 = vpop.f32.mrf.mxu0
        %v8204 = vadd.f32 0.0, %v8203
        %v8205 = vpop.f32.mrf.mxu0
        %8206 = vmatprep.mubr.f32.mxu0 0.0
        %8207 = vmatmul.mubr.f32.gmra.mxu0 %v1130
        %v8208 = vpop.f32.mrf.mxu0
        %v8209 = vadd.f32 0.0, %v8208
        %v8210 = vpop.f32.mrf.mxu0
        %8211 = vmatprep.mubr.f32.mxu0 0.0
        %8212 = vmatmul.mubr.f32.gmra.mxu0 %v1132
        %v8213 = vpop.f32.mrf.mxu0
        %v8214 = vadd.f32 0.0, %v8213
        %v8215 = vpop.f32.mrf.mxu0
        %8216 = vmatprep.mubr.f32.mxu0 0.0
        %8217 = vmatmul.mubr.f32.gmra.mxu0 %v1134
        %v8218 = vpop.f32.mrf.mxu0
        %v8219 = vadd.f32 0.0, %v8218
        %v8220 = vpop.f32.mrf.mxu0
        %8221 = vmatprep.mubr.f32.mxu0 0.0
        %8222 = vmatmul.mubr.f32.gmra.mxu0 %v1136
        %v8223 = vpop.f32.mrf.mxu0
        %v8224 = vadd.f32 0.0, %v8223
        %v8225 = vpop.f32.mrf.mxu0
        %8226 = vmatprep.mubr.f32.mxu0 0.0
        %8227 = vmatmul.mubr.f32.gmra.mxu0 %v1138
        %v8228 = vpop.f32.mrf.mxu0
        %v8229 = vadd.f32 0.0, %v8228
        %v8230 = vpop.f32.mrf.mxu0
        %8231 = vmatprep.mubr.f32.mxu0 0.0
        %8232 = vmatmul.mubr.f32.gmra.mxu0 %v1140
        %v8233 = vpop.f32.mrf.mxu0
        %v8234 = vadd.f32 0.0, %v8233
        %v8235 = vpop.f32.mrf.mxu0
        %8236 = vmatprep.mubr.f32.mxu0 0.0
        %8237 = vmatmul.mubr.f32.gmra.mxu0 %v1142
        %v8238 = vpop.f32.mrf.mxu0
        %v8239 = vadd.f32 0.0, %v8238
        %v8240 = vpop.f32.mrf.mxu0
        %8241 = vmatprep.mubr.f32.mxu0 0.0
        %8242 = vmatmul.mubr.f32.gmra.mxu0 %v1144
        %v8243 = vpop.f32.mrf.mxu0
        %v8244 = vadd.f32 0.0, %v8243
        %v8245 = vpop.f32.mrf.mxu0
        %8246 = vmatprep.mubr.f32.mxu0 0.0
        %8247 = vmatmul.mubr.f32.gmra.mxu0 %v1146
        %v8248 = vpop.f32.mrf.mxu0
        %v8249 = vadd.f32 0.0, %v8248
        %v8250 = vpop.f32.mrf.mxu0
        %8251 = vmatprep.mubr.f32.mxu0 0.0
        %8252 = vmatmul.mubr.f32.gmra.mxu0 %v1148
        %v8253 = vpop.f32.mrf.mxu0
        %v8254 = vadd.f32 0.0, %v8253
        %v8255 = vpop.f32.mrf.mxu0
        %8256 = vmatprep.mubr.f32.mxu0 0.0
        %8257 = vmatmul.mubr.f32.gmra.mxu0 %v1150
        %v8258 = vpop.f32.mrf.mxu0
        %v8259 = vadd.f32 0.0, %v8258
        %v8260 = vpop.f32.mrf.mxu0
        %8261 = vmatprep.mubr.f32.mxu0 0.0
        %8262 = vmatmul.mubr.f32.gmra.mxu0 %v1152
        %v8263 = vpop.f32.mrf.mxu0
        %v8264 = vadd.f32 0.0, %v8263
        %v8265 = vpop.f32.mrf.mxu0
        %8266 = vmatprep.mubr.f32.mxu0 0.0
        %8267 = vmatmul.mubr.f32.gmra.mxu0 %v1154
        %v8268 = vpop.f32.mrf.mxu0
        %v8269 = vadd.f32 0.0, %v8268
        %v8270 = vpop.f32.mrf.mxu0
        %8271 = vmatprep.mubr.f32.mxu0 0.0
        %8272 = vmatmul.mubr.f32.gmra.mxu0 %v1156
        %v8273 = vpop.f32.mrf.mxu0
        %v8274 = vadd.f32 0.0, %v8273
        %v8275 = vpop.f32.mrf.mxu0
        %8276 = vmatprep.mubr.f32.mxu0 0.0
        %8277 = vmatmul.mubr.f32.gmra.mxu0 %v1158
        %v8278 = vpop.f32.mrf.mxu0
        %v8279 = vadd.f32 0.0, %v8278
        %v8280 = vpop.f32.mrf.mxu0
        %8281 = vmatprep.mubr.f32.mxu0 0.0
        %8282 = vmatmul.mubr.f32.gmra.mxu0 %v1160
        %v8283 = vpop.f32.mrf.mxu0
        %v8284 = vadd.f32 0.0, %v8283
        %v8285 = vpop.f32.mrf.mxu0
        %8286 = vmatprep.mubr.f32.mxu0 0.0
        %8287 = vmatmul.mubr.f32.gmra.mxu0 %v1162
        %v8288 = vpop.f32.mrf.mxu0
        %v8289 = vadd.f32 0.0, %v8288
        %v8290 = vpop.f32.mrf.mxu0
        %8291 = vmatprep.mubr.f32.mxu0 0.0
        %8292 = vmatmul.mubr.f32.gmra.mxu0 %v1164
        %v8293 = vpop.f32.mrf.mxu0
        %v8294 = vadd.f32 0.0, %v8293
        %v8295 = vpop.f32.mrf.mxu0
        %8296 = vmatprep.mubr.f32.mxu0 0.0
        %8297 = vmatmul.mubr.f32.gmra.mxu0 %v1166
        %v8298 = vpop.f32.mrf.mxu0
        %v8299 = vadd.f32 0.0, %v8298
        %v8300 = vpop.f32.mrf.mxu0
        %8301 = vmatprep.mubr.f32.mxu0 0.0
        %8302 = vmatmul.mubr.f32.gmra.mxu0 %v1168
        %v8303 = vpop.f32.mrf.mxu0
        %v8304 = vadd.f32 0.0, %v8303
        %v8305 = vpop.f32.mrf.mxu0
        %8306 = vmatprep.mubr.f32.mxu0 0.0
        %8307 = vmatmul.mubr.f32.gmra.mxu0 %v1170
        %v8308 = vpop.f32.mrf.mxu0
        %v8309 = vadd.f32 0.0, %v8308
        %v8310 = vpop.f32.mrf.mxu0
        %8311 = vmatprep.mubr.f32.mxu0 0.0
        %8312 = vmatmul.mubr.f32.gmra.mxu0 %v1172
        %v8313 = vpop.f32.mrf.mxu0
        %v8314 = vadd.f32 0.0, %v8313
        %v8315 = vpop.f32.mrf.mxu0
        %8316 = vmatprep.mubr.f32.mxu0 0.0
        %8317 = vmatmul.mubr.f32.gmra.mxu0 %v1174
        %v8318 = vpop.f32.mrf.mxu0
        %v8319 = vadd.f32 0.0, %v8318
        %v8320 = vpop.f32.mrf.mxu0
        %8321 = vmatprep.mubr.f32.mxu0 0.0
        %8322 = vmatmul.mubr.f32.gmra.mxu0 %v1176
        %v8323 = vpop.f32.mrf.mxu0
        %v8324 = vadd.f32 0.0, %v8323
        %v8325 = vpop.f32.mrf.mxu0
        %8326 = vmatprep.mubr.f32.mxu0 0.0
        %8327 = vmatmul.mubr.f32.gmra.mxu0 %v1178
        %v8328 = vpop.f32.mrf.mxu0
        %v8329 = vadd.f32 0.0, %v8328
        %v8330 = vpop.f32.mrf.mxu0
        %8331 = vmatprep.mubr.f32.mxu0 0.0
        %8332 = vmatmul.mubr.f32.gmra.mxu0 %v1180
        %v8333 = vpop.f32.mrf.mxu0
        %v8334 = vadd.f32 0.0, %v8333
        %v8335 = vpop.f32.mrf.mxu0
        %8336 = vmatprep.mubr.f32.mxu0 0.0
        %8337 = vmatmul.mubr.f32.gmra.mxu0 %v5100
        %v8338 = vpop.f32.mrf.mxu0
        %v8339 = vadd.f32 0.0, %v8338
        %v8340 = vpop.f32.mrf.mxu0
        %8341 = vmatprep.mubr.f32.mxu0 0.0
        %8342 = vmatmul.mubr.f32.gmra.mxu0 %v5102
        %v8343 = vpop.f32.mrf.mxu0
        %v8344 = vadd.f32 0.0, %v8343
        %v8345 = vpop.f32.mrf.mxu0
        %8346 = vmatprep.mubr.f32.mxu0 0.0
        %8347 = vmatmul.mubr.f32.gmra.mxu0 %v5104
        %v8348 = vpop.f32.mrf.mxu0
        %v8349 = vadd.f32 0.0, %v8348
        %v8350 = vpop.f32.mrf.mxu0
        %8351 = vmatprep.mubr.f32.mxu0 0.0
        %8352 = vmatmul.mubr.f32.gmra.mxu0 %v5106
        %v8353 = vpop.f32.mrf.mxu0
        %v8354 = vadd.f32 0.0, %v8353
        %v8355 = vpop.f32.mrf.mxu0
        %8356 = vmatprep.mubr.f32.mxu0 0.0
        %8357 = vmatmul.mubr.f32.gmra.mxu0 %v7661
        %v8358 = vpop.f32.mrf.mxu0
        %v8359 = vadd.f32 0.0, %v8358
        %v8360 = vpop.f32.mrf.mxu0
        %8361 = vmatprep.mubr.f32.mxu0 0.0
        %8362 = vmatmul.mubr.f32.gmra.mxu0 %v7663
        %v8363 = vpop.f32.mrf.mxu0
        %v8364 = vadd.f32 0.0, %v8363
        %v8365 = vpop.f32.mrf.mxu0
        %8366 = vmatprep.mubr.f32.mxu0 0.0
        %8367 = vmatmul.mubr.f32.gmra.mxu0 %v7665
        %v8368 = vpop.f32.mrf.mxu0
        %v8369 = vadd.f32 0.0, %v8368
        %v8370 = vpop.f32.mrf.mxu0
        %8371 = vmatprep.mubr.f32.mxu0 0.0
        %8372 = vmatmul.mubr.f32.gmra.mxu0 %v7667
        %v8373 = vpop.f32.mrf.mxu0
        %v8374 = vadd.f32 0.0, %v8373
        %v8375 = vpop.f32.mrf.mxu0
        %8376 = vdwg.mxu0
        %v8377 = vadd.f32 %v7521, %v7739
        %v8378 = vadd.f32 %v7522, %v7744
        %v8379 = vadd.f32 %v7523, %v7749
        %v8380 = vadd.f32 %v7524, %v7754
        %v8381 = vadd.f32 %v7525, %v7759
        %v8382 = vadd.f32 %v7526, %v7764
        %v8383 = vadd.f32 %v7527, %v7769
        %v8384 = vadd.f32 %v7528, %v7774
        %v8385 = vadd.f32 %v7529, %v7779
        %v8386 = vadd.f32 %v7530, %v7784
        %v8387 = vadd.f32 %v7531, %v7789
        %v8388 = vadd.f32 %v7532, %v7794
        %v8389 = vadd.f32 %v7533, %v7799
        %v8390 = vadd.f32 %v7534, %v7804
        %v8391 = vadd.f32 %v7535, %v7809
        %v8392 = vadd.f32 %v7536, %v7814
        %v8393 = vadd.f32 %v7537, %v7819
        %v8394 = vadd.f32 %v7538, %v7824
        %v8395 = vadd.f32 %v7539, %v7829
        %v8396 = vadd.f32 %v7540, %v7834
        %v8397 = vadd.f32 %v7541, %v7839
        %v8398 = vadd.f32 %v7542, %v7844
        %v8399 = vadd.f32 %v7543, %v7849
        %v8400 = vadd.f32 %v7544, %v7854
        %v8401 = vadd.f32 %v7545, %v7859
        %v8402 = vadd.f32 %v7546, %v7864
        %v8403 = vadd.f32 %v7547, %v7869
        %v8404 = vadd.f32 %v7548, %v7874
        %v8405 = vadd.f32 %v7549, %v7879
        %v8406 = vadd.f32 %v7550, %v7884
        %v8407 = vadd.f32 %v7551, %v7889
        %v8408 = vadd.f32 %v7552, %v7894
        %v8409 = vadd.f32 %v7553, %v7899
        %v8410 = vadd.f32 %v7554, %v7904
        %v8411 = vadd.f32 %v7555, %v7909
        %v8412 = vadd.f32 %v7556, %v7914
        %v8413 = vadd.f32 %v7557, %v7919
        %v8414 = vadd.f32 %v7558, %v7924
        %v8415 = vadd.f32 %v7559, %v7929
        %v8416 = vadd.f32 %v7560, %v7934
        %v8417 = vadd.f32 %v7561, %v7939
        %v8418 = vadd.f32 %v7562, %v7944
        %v8419 = vadd.f32 %v7563, %v7949
        %v8420 = vadd.f32 %v7564, %v7954
        %v8421 = vadd.f32 %v7565, %v7959
        %v8422 = vadd.f32 %v7566, %v7964
        %v8423 = vadd.f32 %v7567, %v7969
        %v8424 = vadd.f32 %v7568, %v7974
        %v8425 = vadd.f32 %v7569, %v7979
        %v8426 = vadd.f32 %v7570, %v7984
        %v8427 = vadd.f32 %v7571, %v7989
        %v8428 = vadd.f32 %v7572, %v7994
        %v8429 = vadd.f32 %v7573, %v7999
        %v8430 = vadd.f32 %v7574, %v8004
        %v8431 = vadd.f32 %v7575, %v8009
        %v8432 = vadd.f32 %v7576, %v8014
        %v8433 = vadd.f32 %v7577, %v8019
        %v8434 = vadd.f32 %v7578, %v8024
        %v8435 = vadd.f32 %v7579, %v8029
        %v8436 = vadd.f32 %v7580, %v8034
        %v8437 = vadd.f32 %v7581, %v8039
        %v8438 = vadd.f32 %v7582, %v8044
        %v8439 = vadd.f32 %v7583, %v8049
        %v8440 = vadd.f32 %v7584, %v8054
        %v8441 = vadd.f32 %v7585, %v8059
        %v8442 = vadd.f32 %v7586, %v8064
        %v8443 = vadd.f32 %v7587, %v8069
        %v8444 = vadd.f32 %v7588, %v8074
        %v8445 = vadd.f32 %v7589, %v8079
        %v8446 = vadd.f32 %v7590, %v8084
        %v8447 = vadd.f32 %v7591, %v8089
        %v8448 = vadd.f32 %v7592, %v8094
        %v8449 = vadd.f32 %v7593, %v8099
        %v8450 = vadd.f32 %v7594, %v8104
        %v8451 = vadd.f32 %v7595, %v8109
        %v8452 = vadd.f32 %v7596, %v8114
        %v8453 = vadd.f32 %v7597, %v8119
        %v8454 = vadd.f32 %v7598, %v8124
        %v8455 = vadd.f32 %v7599, %v8129
        %v8456 = vadd.f32 %v7600, %v8134
        %v8457 = vadd.f32 %v7601, %v8139
        %v8458 = vadd.f32 %v7602, %v8144
        %v8459 = vadd.f32 %v7603, %v8149
        %v8460 = vadd.f32 %v7604, %v8154
        %v8461 = vadd.f32 %v7605, %v8159
        %v8462 = vadd.f32 %v7606, %v8164
        %v8463 = vadd.f32 %v7607, %v8169
        %v8464 = vadd.f32 %v7608, %v8174
        %v8465 = vadd.f32 %v7609, %v8179
        %v8466 = vadd.f32 %v7610, %v8184
        %v8467 = vadd.f32 %v7611, %v8189
        %v8468 = vadd.f32 %v7612, %v8194
        %v8469 = vadd.f32 %v7613, %v8199
        %v8470 = vadd.f32 %v7614, %v8204
        %v8471 = vadd.f32 %v7615, %v8209
        %v8472 = vadd.f32 %v7616, %v8214
        %v8473 = vadd.f32 %v7617, %v8219
        %v8474 = vadd.f32 %v7618, %v8224
        %v8475 = vadd.f32 %v7619, %v8229
        %v8476 = vadd.f32 %v7620, %v8234
        %v8477 = vadd.f32 %v7621, %v8239
        %v8478 = vadd.f32 %v7622, %v8244
        %v8479 = vadd.f32 %v7623, %v8249
        %v8480 = vadd.f32 %v7624, %v8254
        %v8481 = vadd.f32 %v7625, %v8259
        %v8482 = vadd.f32 %v7626, %v8264
        %v8483 = vadd.f32 %v7627, %v8269
        %v8484 = vadd.f32 %v7628, %v8274
        %v8485 = vadd.f32 %v7629, %v8279
        %v8486 = vadd.f32 %v7630, %v8284
        %v8487 = vadd.f32 %v7631, %v8289
        %v8488 = vadd.f32 %v7632, %v8294
        %v8489 = vadd.f32 %v7633, %v8299
        %v8490 = vadd.f32 %v7634, %v8304
        %v8491 = vadd.f32 %v7635, %v8309
        %v8492 = vadd.f32 %v7636, %v8314
        %v8493 = vadd.f32 %v7637, %v8319
        %v8494 = vadd.f32 %v7638, %v8324
        %v8495 = vadd.f32 %v7639, %v8329
        %v8496 = vadd.f32 %v7640, %v8334
        %v8497 = vadd.f32 %v7641, %v8339
        %v8498 = vadd.f32 %v7642, %v8344
        %v8499 = vadd.f32 %v7643, %v8349
        %v8500 = vadd.f32 %v7644, %v8354
        %v8501 = vadd.f32 %v7645, %v8359
        %v8502 = vadd.f32 %v7646, %v8364
        %v8503 = vadd.f32 %v7647, %v8369
        %v8504 = vadd.f32 %v7648, %v8374
        %v8505 = vrot.slane %v468, 2
        %v8506 = vrot.slane %v469, 2
        %v8507 = vsel %vm2855, %v8505, %v8506
        %v8508 = vrot.slane %v470, 2
        %v8509 = vsel %vm2855, %v8506, %v8508
        %v8510 = vrot.slane %v471, 2
        %v8511 = vsel %vm2855, %v8508, %v8510
        %v8512 = vrot.slane %v472, 2
        %v8513 = vsel %vm2855, %v8510, %v8512
        %s8514 = scalar_lea.vmem %s1, 32
        %v8515 = vld [vmem:[%s8514] sm:$0x7]
        %v8516 = vsel %vm925, %v8507, 0
        %v8518 = vsel %vm925, %v8509, 0
        %v8520 = vsel %vm925, %v8511, 0
        %v8522 = vsel %vm925, %v8513, 0
        %v8525 = vsel %vm1182, %v8515, 0
        %8527 = vmatprep.subr.mxu0 0.0
        %8528 = vmatpush1.msra.mxu0 0.0
        %8529 = vmatprep.subr.mxu0 0.0
        %8530 = vmatpush1.msra.mxu0 0.0
        %8531 = vmatprep.subr.mxu0 0.0
        %8532 = vmatpush1.msra.mxu0 0.0
        %8533 = vmatprep.subr.mxu0 0.0
        %8534 = vmatpush1.msra.mxu0 0.0
        %8535 = vmatprep.subr.mxu0 0.0
        %8536 = vmatpush1.msra.mxu0 0.0
        %8537 = vmatprep.subr.mxu0 0.0
        %8538 = vmatpush1.msra.mxu0 0.0
        %8539 = vmatprep.subr.mxu0 0.0
        %8540 = vmatpush1.msra.mxu0 0.0
        %8541 = vmatprep.subr.mxu0 0.0
        %8542 = vmatpush1.msra.mxu0 0.0
        %8543 = vmatprep.subr.mxu0 0.0
        %8544 = vmatpush1.msra.mxu0 0.0
        %8545 = vmatprep.subr.mxu0 0.0
        %8546 = vmatpush1.msra.mxu0 0.0
        %8547 = vmatprep.subr.mxu0 0.0
        %8548 = vmatpush1.msra.mxu0 0.0
        %8549 = vmatprep.subr.mxu0 0.0
        %8550 = vmatpush1.msra.mxu0 0.0
        %8551 = vmatprep.subr.mxu0 0.0
        %8552 = vmatpush1.msra.mxu0 0.0
        %8553 = vmatprep.subr.mxu0 0.0
        %8554 = vmatpush1.msra.mxu0 0.0
        %8555 = vmatprep.subr.mxu0 0.0
        %8556 = vmatpush1.msra.mxu0 0.0
        %8557 = vmatprep.subr.mxu0 0.0
        %8558 = vmatpush1.msra.mxu0 %v8525
        %8559 = vmatprep.subr.mxu0 0.0
        %8560 = vmatpush2.msra.mxu0 0.0
        %8561 = vmatprep.subr.mxu0 0.0
        %8562 = vmatpush2.msra.mxu0 0.0
        %8563 = vmatprep.subr.mxu0 0.0
        %8564 = vmatpush2.msra.mxu0 0.0
        %8565 = vmatprep.subr.mxu0 0.0
        %8566 = vmatpush2.msra.mxu0 0.0
        %8567 = vmatprep.subr.mxu0 0.0
        %8568 = vmatpush2.msra.mxu0 0.0
        %8569 = vmatprep.subr.mxu0 0.0
        %8570 = vmatpush2.msra.mxu0 0.0
        %8571 = vmatprep.subr.mxu0 0.0
        %8572 = vmatpush2.msra.mxu0 0.0
        %8573 = vmatprep.subr.mxu0 0.0
        %8574 = vmatpush2.msra.mxu0 0.0
        %8575 = vmatprep.subr.mxu0 0.0
        %8576 = vmatpush2.msra.mxu0 0.0
        %8577 = vmatprep.subr.mxu0 0.0
        %8578 = vmatpush2.msra.mxu0 0.0
        %8579 = vmatprep.subr.mxu0 0.0
        %8580 = vmatpush2.msra.mxu0 0.0
        %8581 = vmatprep.subr.mxu0 0.0
        %8582 = vmatpush2.msra.mxu0 0.0
        %8583 = vmatprep.subr.mxu0 0.0
        %8584 = vmatpush2.msra.mxu0 0.0
        %8585 = vmatprep.subr.mxu0 0.0
        %8586 = vmatpush2.msra.mxu0 0.0
        %8587 = vmatprep.subr.mxu0 0.0
        %8588 = vmatpush2.msra.mxu0 0.0
        %8589 = vmatprep.subr.mxu0 0.0
        %8590 = vmatpush2.msra.mxu0 0.0
        %8591 = vmatprep.mubr.f32.mxu0 0.0
        %8592 = vmatmul.mubr.f32.gmra.mxu0 %v3162
        %v8593 = vpop.f32.mrf.mxu0
        %v8594 = vadd.f32 0.0, %v8593
        %v8595 = vpop.f32.mrf.mxu0
        %8596 = vmatprep.mubr.f32.mxu0 0.0
        %8597 = vmatmul.mubr.f32.gmra.mxu0 %v3164
        %v8598 = vpop.f32.mrf.mxu0
        %v8599 = vadd.f32 0.0, %v8598
        %v8600 = vpop.f32.mrf.mxu0
        %8601 = vmatprep.mubr.f32.mxu0 0.0
        %8602 = vmatmul.mubr.f32.gmra.mxu0 %v3166
        %v8603 = vpop.f32.mrf.mxu0
        %v8604 = vadd.f32 0.0, %v8603
        %v8605 = vpop.f32.mrf.mxu0
        %8606 = vmatprep.mubr.f32.mxu0 0.0
        %8607 = vmatmul.mubr.f32.gmra.mxu0 %v3168
        %v8608 = vpop.f32.mrf.mxu0
        %v8609 = vadd.f32 0.0, %v8608
        %v8610 = vpop.f32.mrf.mxu0
        %8611 = vmatprep.mubr.f32.mxu0 0.0
        %8612 = vmatmul.mubr.f32.gmra.mxu0 %v3170
        %v8613 = vpop.f32.mrf.mxu0
        %v8614 = vadd.f32 0.0, %v8613
        %v8615 = vpop.f32.mrf.mxu0
        %8616 = vmatprep.mubr.f32.mxu0 0.0
        %8617 = vmatmul.mubr.f32.gmra.mxu0 %v3172
        %v8618 = vpop.f32.mrf.mxu0
        %v8619 = vadd.f32 0.0, %v8618
        %v8620 = vpop.f32.mrf.mxu0
        %8621 = vmatprep.mubr.f32.mxu0 0.0
        %8622 = vmatmul.mubr.f32.gmra.mxu0 %v3174
        %v8623 = vpop.f32.mrf.mxu0
        %v8624 = vadd.f32 0.0, %v8623
        %v8625 = vpop.f32.mrf.mxu0
        %8626 = vmatprep.mubr.f32.mxu0 0.0
        %8627 = vmatmul.mubr.f32.gmra.mxu0 %v3176
        %v8628 = vpop.f32.mrf.mxu0
        %v8629 = vadd.f32 0.0, %v8628
        %v8630 = vpop.f32.mrf.mxu0
        %8631 = vmatprep.mubr.f32.mxu0 0.0
        %8632 = vmatmul.mubr.f32.gmra.mxu0 %v3178
        %v8633 = vpop.f32.mrf.mxu0
        %v8634 = vadd.f32 0.0, %v8633
        %v8635 = vpop.f32.mrf.mxu0
        %8636 = vmatprep.mubr.f32.mxu0 0.0
        %8637 = vmatmul.mubr.f32.gmra.mxu0 %v3180
        %v8638 = vpop.f32.mrf.mxu0
        %v8639 = vadd.f32 0.0, %v8638
        %v8640 = vpop.f32.mrf.mxu0
        %8641 = vmatprep.mubr.f32.mxu0 0.0
        %8642 = vmatmul.mubr.f32.gmra.mxu0 %v3182
        %v8643 = vpop.f32.mrf.mxu0
        %v8644 = vadd.f32 0.0, %v8643
        %v8645 = vpop.f32.mrf.mxu0
        %8646 = vmatprep.mubr.f32.mxu0 0.0
        %8647 = vmatmul.mubr.f32.gmra.mxu0 %v3184
        %v8648 = vpop.f32.mrf.mxu0
        %v8649 = vadd.f32 0.0, %v8648
        %v8650 = vpop.f32.mrf.mxu0
        %8651 = vmatprep.mubr.f32.mxu0 0.0
        %8652 = vmatmul.mubr.f32.gmra.mxu0 %v3186
        %v8653 = vpop.f32.mrf.mxu0
        %v8654 = vadd.f32 0.0, %v8653
        %v8655 = vpop.f32.mrf.mxu0
        %8656 = vmatprep.mubr.f32.mxu0 0.0
        %8657 = vmatmul.mubr.f32.gmra.mxu0 %v3188
        %v8658 = vpop.f32.mrf.mxu0
        %v8659 = vadd.f32 0.0, %v8658
        %v8660 = vpop.f32.mrf.mxu0
        %8661 = vmatprep.mubr.f32.mxu0 0.0
        %8662 = vmatmul.mubr.f32.gmra.mxu0 %v3190
        %v8663 = vpop.f32.mrf.mxu0
        %v8664 = vadd.f32 0.0, %v8663
        %v8665 = vpop.f32.mrf.mxu0
        %8666 = vmatprep.mubr.f32.mxu0 0.0
        %8667 = vmatmul.mubr.f32.gmra.mxu0 %v3192
        %v8668 = vpop.f32.mrf.mxu0
        %v8669 = vadd.f32 0.0, %v8668
        %v8670 = vpop.f32.mrf.mxu0
        %8671 = vmatprep.mubr.f32.mxu0 0.0
        %8672 = vmatmul.mubr.f32.gmra.mxu0 %v3194
        %v8673 = vpop.f32.mrf.mxu0
        %v8674 = vadd.f32 0.0, %v8673
        %v8675 = vpop.f32.mrf.mxu0
        %8676 = vmatprep.mubr.f32.mxu0 0.0
        %8677 = vmatmul.mubr.f32.gmra.mxu0 %v3196
        %v8678 = vpop.f32.mrf.mxu0
        %v8679 = vadd.f32 0.0, %v8678
        %v8680 = vpop.f32.mrf.mxu0
        %8681 = vmatprep.mubr.f32.mxu0 0.0
        %8682 = vmatmul.mubr.f32.gmra.mxu0 %v3198
        %v8683 = vpop.f32.mrf.mxu0
        %v8684 = vadd.f32 0.0, %v8683
        %v8685 = vpop.f32.mrf.mxu0
        %8686 = vmatprep.mubr.f32.mxu0 0.0
        %8687 = vmatmul.mubr.f32.gmra.mxu0 %v3200
        %v8688 = vpop.f32.mrf.mxu0
        %v8689 = vadd.f32 0.0, %v8688
        %v8690 = vpop.f32.mrf.mxu0
        %8691 = vmatprep.mubr.f32.mxu0 0.0
        %8692 = vmatmul.mubr.f32.gmra.mxu0 %v3202
        %v8693 = vpop.f32.mrf.mxu0
        %v8694 = vadd.f32 0.0, %v8693
        %v8695 = vpop.f32.mrf.mxu0
        %8696 = vmatprep.mubr.f32.mxu0 0.0
        %8697 = vmatmul.mubr.f32.gmra.mxu0 %v3204
        %v8698 = vpop.f32.mrf.mxu0
        %v8699 = vadd.f32 0.0, %v8698
        %v8700 = vpop.f32.mrf.mxu0
        %8701 = vmatprep.mubr.f32.mxu0 0.0
        %8702 = vmatmul.mubr.f32.gmra.mxu0 %v3206
        %v8703 = vpop.f32.mrf.mxu0
        %v8704 = vadd.f32 0.0, %v8703
        %v8705 = vpop.f32.mrf.mxu0
        %8706 = vmatprep.mubr.f32.mxu0 0.0
        %8707 = vmatmul.mubr.f32.gmra.mxu0 %v3208
        %v8708 = vpop.f32.mrf.mxu0
        %v8709 = vadd.f32 0.0, %v8708
        %v8710 = vpop.f32.mrf.mxu0
        %8711 = vmatprep.mubr.f32.mxu0 0.0
        %8712 = vmatmul.mubr.f32.gmra.mxu0 %v3210
        %v8713 = vpop.f32.mrf.mxu0
        %v8714 = vadd.f32 0.0, %v8713
        %v8715 = vpop.f32.mrf.mxu0
        %8716 = vmatprep.mubr.f32.mxu0 0.0
        %8717 = vmatmul.mubr.f32.gmra.mxu0 %v3212
        %v8718 = vpop.f32.mrf.mxu0
        %v8719 = vadd.f32 0.0, %v8718
        %v8720 = vpop.f32.mrf.mxu0
        %8721 = vmatprep.mubr.f32.mxu0 0.0
        %8722 = vmatmul.mubr.f32.gmra.mxu0 %v3214
        %v8723 = vpop.f32.mrf.mxu0
        %v8724 = vadd.f32 0.0, %v8723
        %v8725 = vpop.f32.mrf.mxu0
        %8726 = vmatprep.mubr.f32.mxu0 0.0
        %8727 = vmatmul.mubr.f32.gmra.mxu0 %v3216
        %v8728 = vpop.f32.mrf.mxu0
        %v8729 = vadd.f32 0.0, %v8728
        %v8730 = vpop.f32.mrf.mxu0
        %8731 = vmatprep.mubr.f32.mxu0 0.0
        %8732 = vmatmul.mubr.f32.gmra.mxu0 %v3218
        %v8733 = vpop.f32.mrf.mxu0
        %v8734 = vadd.f32 0.0, %v8733
        %v8735 = vpop.f32.mrf.mxu0
        %8736 = vmatprep.mubr.f32.mxu0 0.0
        %8737 = vmatmul.mubr.f32.gmra.mxu0 %v3220
        %v8738 = vpop.f32.mrf.mxu0
        %v8739 = vadd.f32 0.0, %v8738
        %v8740 = vpop.f32.mrf.mxu0
        %8741 = vmatprep.mubr.f32.mxu0 0.0
        %8742 = vmatmul.mubr.f32.gmra.mxu0 %v3222
        %v8743 = vpop.f32.mrf.mxu0
        %v8744 = vadd.f32 0.0, %v8743
        %v8745 = vpop.f32.mrf.mxu0
        %8746 = vmatprep.mubr.f32.mxu0 0.0
        %8747 = vmatmul.mubr.f32.gmra.mxu0 %v3224
        %v8748 = vpop.f32.mrf.mxu0
        %v8749 = vadd.f32 0.0, %v8748
        %v8750 = vpop.f32.mrf.mxu0
        %8751 = vmatprep.mubr.f32.mxu0 0.0
        %8752 = vmatmul.mubr.f32.gmra.mxu0 %v3226
        %v8753 = vpop.f32.mrf.mxu0
        %v8754 = vadd.f32 0.0, %v8753
        %v8755 = vpop.f32.mrf.mxu0
        %8756 = vmatprep.mubr.f32.mxu0 0.0
        %8757 = vmatmul.mubr.f32.gmra.mxu0 %v3228
        %v8758 = vpop.f32.mrf.mxu0
        %v8759 = vadd.f32 0.0, %v8758
        %v8760 = vpop.f32.mrf.mxu0
        %8761 = vmatprep.mubr.f32.mxu0 0.0
        %8762 = vmatmul.mubr.f32.gmra.mxu0 %v3230
        %v8763 = vpop.f32.mrf.mxu0
        %v8764 = vadd.f32 0.0, %v8763
        %v8765 = vpop.f32.mrf.mxu0
        %8766 = vmatprep.mubr.f32.mxu0 0.0
        %8767 = vmatmul.mubr.f32.gmra.mxu0 %v3232
        %v8768 = vpop.f32.mrf.mxu0
        %v8769 = vadd.f32 0.0, %v8768
        %v8770 = vpop.f32.mrf.mxu0
        %8771 = vmatprep.mubr.f32.mxu0 0.0
        %8772 = vmatmul.mubr.f32.gmra.mxu0 %v3234
        %v8773 = vpop.f32.mrf.mxu0
        %v8774 = vadd.f32 0.0, %v8773
        %v8775 = vpop.f32.mrf.mxu0
        %8776 = vmatprep.mubr.f32.mxu0 0.0
        %8777 = vmatmul.mubr.f32.gmra.mxu0 %v3236
        %v8778 = vpop.f32.mrf.mxu0
        %v8779 = vadd.f32 0.0, %v8778
        %v8780 = vpop.f32.mrf.mxu0
        %8781 = vmatprep.mubr.f32.mxu0 0.0
        %8782 = vmatmul.mubr.f32.gmra.mxu0 %v3238
        %v8783 = vpop.f32.mrf.mxu0
        %v8784 = vadd.f32 0.0, %v8783
        %v8785 = vpop.f32.mrf.mxu0
        %8786 = vmatprep.mubr.f32.mxu0 0.0
        %8787 = vmatmul.mubr.f32.gmra.mxu0 %v3240
        %v8788 = vpop.f32.mrf.mxu0
        %v8789 = vadd.f32 0.0, %v8788
        %v8790 = vpop.f32.mrf.mxu0
        %8791 = vmatprep.mubr.f32.mxu0 0.0
        %8792 = vmatmul.mubr.f32.gmra.mxu0 %v3242
        %v8793 = vpop.f32.mrf.mxu0
        %v8794 = vadd.f32 0.0, %v8793
        %v8795 = vpop.f32.mrf.mxu0
        %8796 = vmatprep.mubr.f32.mxu0 0.0
        %8797 = vmatmul.mubr.f32.gmra.mxu0 %v3244
        %v8798 = vpop.f32.mrf.mxu0
        %v8799 = vadd.f32 0.0, %v8798
        %v8800 = vpop.f32.mrf.mxu0
        %8801 = vmatprep.mubr.f32.mxu0 0.0
        %8802 = vmatmul.mubr.f32.gmra.mxu0 %v3246
        %v8803 = vpop.f32.mrf.mxu0
        %v8804 = vadd.f32 0.0, %v8803
        %v8805 = vpop.f32.mrf.mxu0
        %8806 = vmatprep.mubr.f32.mxu0 0.0
        %8807 = vmatmul.mubr.f32.gmra.mxu0 %v3248
        %v8808 = vpop.f32.mrf.mxu0
        %v8809 = vadd.f32 0.0, %v8808
        %v8810 = vpop.f32.mrf.mxu0
        %8811 = vmatprep.mubr.f32.mxu0 0.0
        %8812 = vmatmul.mubr.f32.gmra.mxu0 %v3250
        %v8813 = vpop.f32.mrf.mxu0
        %v8814 = vadd.f32 0.0, %v8813
        %v8815 = vpop.f32.mrf.mxu0
        %8816 = vmatprep.mubr.f32.mxu0 0.0
        %8817 = vmatmul.mubr.f32.gmra.mxu0 %v3252
        %v8818 = vpop.f32.mrf.mxu0
        %v8819 = vadd.f32 0.0, %v8818
        %v8820 = vpop.f32.mrf.mxu0
        %8821 = vmatprep.mubr.f32.mxu0 0.0
        %8822 = vmatmul.mubr.f32.gmra.mxu0 %v3254
        %v8823 = vpop.f32.mrf.mxu0
        %v8824 = vadd.f32 0.0, %v8823
        %v8825 = vpop.f32.mrf.mxu0
        %8826 = vmatprep.mubr.f32.mxu0 0.0
        %8827 = vmatmul.mubr.f32.gmra.mxu0 %v3256
        %v8828 = vpop.f32.mrf.mxu0
        %v8829 = vadd.f32 0.0, %v8828
        %v8830 = vpop.f32.mrf.mxu0
        %8831 = vmatprep.mubr.f32.mxu0 0.0
        %8832 = vmatmul.mubr.f32.gmra.mxu0 %v3258
        %v8833 = vpop.f32.mrf.mxu0
        %v8834 = vadd.f32 0.0, %v8833
        %v8835 = vpop.f32.mrf.mxu0
        %8836 = vmatprep.mubr.f32.mxu0 0.0
        %8837 = vmatmul.mubr.f32.gmra.mxu0 %v3260
        %v8838 = vpop.f32.mrf.mxu0
        %v8839 = vadd.f32 0.0, %v8838
        %v8840 = vpop.f32.mrf.mxu0
        %8841 = vmatprep.mubr.f32.mxu0 0.0
        %8842 = vmatmul.mubr.f32.gmra.mxu0 %v3262
        %v8843 = vpop.f32.mrf.mxu0
        %v8844 = vadd.f32 0.0, %v8843
        %v8845 = vpop.f32.mrf.mxu0
        %8846 = vmatprep.mubr.f32.mxu0 0.0
        %8847 = vmatmul.mubr.f32.gmra.mxu0 %v3264
        %v8848 = vpop.f32.mrf.mxu0
        %v8849 = vadd.f32 0.0, %v8848
        %v8850 = vpop.f32.mrf.mxu0
        %8851 = vmatprep.mubr.f32.mxu0 0.0
        %8852 = vmatmul.mubr.f32.gmra.mxu0 %v3266
        %v8853 = vpop.f32.mrf.mxu0
        %v8854 = vadd.f32 0.0, %v8853
        %v8855 = vpop.f32.mrf.mxu0
        %8856 = vmatprep.mubr.f32.mxu0 0.0
        %8857 = vmatmul.mubr.f32.gmra.mxu0 %v3268
        %v8858 = vpop.f32.mrf.mxu0
        %v8859 = vadd.f32 0.0, %v8858
        %v8860 = vpop.f32.mrf.mxu0
        %8861 = vmatprep.mubr.f32.mxu0 0.0
        %8862 = vmatmul.mubr.f32.gmra.mxu0 %v3270
        %v8863 = vpop.f32.mrf.mxu0
        %v8864 = vadd.f32 0.0, %v8863
        %v8865 = vpop.f32.mrf.mxu0
        %8866 = vmatprep.mubr.f32.mxu0 0.0
        %8867 = vmatmul.mubr.f32.gmra.mxu0 %v3272
        %v8868 = vpop.f32.mrf.mxu0
        %v8869 = vadd.f32 0.0, %v8868
        %v8870 = vpop.f32.mrf.mxu0
        %8871 = vmatprep.mubr.f32.mxu0 0.0
        %8872 = vmatmul.mubr.f32.gmra.mxu0 %v3274
        %v8873 = vpop.f32.mrf.mxu0
        %v8874 = vadd.f32 0.0, %v8873
        %v8875 = vpop.f32.mrf.mxu0
        %8876 = vmatprep.mubr.f32.mxu0 0.0
        %8877 = vmatmul.mubr.f32.gmra.mxu0 %v3276
        %v8878 = vpop.f32.mrf.mxu0
        %v8879 = vadd.f32 0.0, %v8878
        %v8880 = vpop.f32.mrf.mxu0
        %8881 = vmatprep.mubr.f32.mxu0 0.0
        %8882 = vmatmul.mubr.f32.gmra.mxu0 %v3278
        %v8883 = vpop.f32.mrf.mxu0
        %v8884 = vadd.f32 0.0, %v8883
        %v8885 = vpop.f32.mrf.mxu0
        %8886 = vmatprep.mubr.f32.mxu0 0.0
        %8887 = vmatmul.mubr.f32.gmra.mxu0 %v3280
        %v8888 = vpop.f32.mrf.mxu0
        %v8889 = vadd.f32 0.0, %v8888
        %v8890 = vpop.f32.mrf.mxu0
        %8891 = vmatprep.mubr.f32.mxu0 0.0
        %8892 = vmatmul.mubr.f32.gmra.mxu0 %v3282
        %v8893 = vpop.f32.mrf.mxu0
        %v8894 = vadd.f32 0.0, %v8893
        %v8895 = vpop.f32.mrf.mxu0
        %8896 = vmatprep.mubr.f32.mxu0 0.0
        %8897 = vmatmul.mubr.f32.gmra.mxu0 %v3284
        %v8898 = vpop.f32.mrf.mxu0
        %v8899 = vadd.f32 0.0, %v8898
        %v8900 = vpop.f32.mrf.mxu0
        %8901 = vmatprep.mubr.f32.mxu0 0.0
        %8902 = vmatmul.mubr.f32.gmra.mxu0 %v3286
        %v8903 = vpop.f32.mrf.mxu0
        %v8904 = vadd.f32 0.0, %v8903
        %v8905 = vpop.f32.mrf.mxu0
        %8906 = vmatprep.mubr.f32.mxu0 0.0
        %8907 = vmatmul.mubr.f32.gmra.mxu0 %v3288
        %v8908 = vpop.f32.mrf.mxu0
        %v8909 = vadd.f32 0.0, %v8908
        %v8910 = vpop.f32.mrf.mxu0
        %8911 = vmatprep.mubr.f32.mxu0 0.0
        %8912 = vmatmul.mubr.f32.gmra.mxu0 %v3290
        %v8913 = vpop.f32.mrf.mxu0
        %v8914 = vadd.f32 0.0, %v8913
        %v8915 = vpop.f32.mrf.mxu0
        %8916 = vmatprep.mubr.f32.mxu0 0.0
        %8917 = vmatmul.mubr.f32.gmra.mxu0 %v3292
        %v8918 = vpop.f32.mrf.mxu0
        %v8919 = vadd.f32 0.0, %v8918
        %v8920 = vpop.f32.mrf.mxu0
        %8921 = vmatprep.mubr.f32.mxu0 0.0
        %8922 = vmatmul.mubr.f32.gmra.mxu0 %v3294
        %v8923 = vpop.f32.mrf.mxu0
        %v8924 = vadd.f32 0.0, %v8923
        %v8925 = vpop.f32.mrf.mxu0
        %8926 = vmatprep.mubr.f32.mxu0 0.0
        %8927 = vmatmul.mubr.f32.gmra.mxu0 %v3296
        %v8928 = vpop.f32.mrf.mxu0
        %v8929 = vadd.f32 0.0, %v8928
        %v8930 = vpop.f32.mrf.mxu0
        %8931 = vmatprep.mubr.f32.mxu0 0.0
        %8932 = vmatmul.mubr.f32.gmra.mxu0 %v3298
        %v8933 = vpop.f32.mrf.mxu0
        %v8934 = vadd.f32 0.0, %v8933
        %v8935 = vpop.f32.mrf.mxu0
        %8936 = vmatprep.mubr.f32.mxu0 0.0
        %8937 = vmatmul.mubr.f32.gmra.mxu0 %v3300
        %v8938 = vpop.f32.mrf.mxu0
        %v8939 = vadd.f32 0.0, %v8938
        %v8940 = vpop.f32.mrf.mxu0
        %8941 = vmatprep.mubr.f32.mxu0 0.0
        %8942 = vmatmul.mubr.f32.gmra.mxu0 %v3302
        %v8943 = vpop.f32.mrf.mxu0
        %v8944 = vadd.f32 0.0, %v8943
        %v8945 = vpop.f32.mrf.mxu0
        %8946 = vmatprep.mubr.f32.mxu0 0.0
        %8947 = vmatmul.mubr.f32.gmra.mxu0 %v3304
        %v8948 = vpop.f32.mrf.mxu0
        %v8949 = vadd.f32 0.0, %v8948
        %v8950 = vpop.f32.mrf.mxu0
        %8951 = vmatprep.mubr.f32.mxu0 0.0
        %8952 = vmatmul.mubr.f32.gmra.mxu0 %v3306
        %v8953 = vpop.f32.mrf.mxu0
        %v8954 = vadd.f32 0.0, %v8953
        %v8955 = vpop.f32.mrf.mxu0
        %8956 = vmatprep.mubr.f32.mxu0 0.0
        %8957 = vmatmul.mubr.f32.gmra.mxu0 %v3308
        %v8958 = vpop.f32.mrf.mxu0
        %v8959 = vadd.f32 0.0, %v8958
        %v8960 = vpop.f32.mrf.mxu0
        %8961 = vmatprep.mubr.f32.mxu0 0.0
        %8962 = vmatmul.mubr.f32.gmra.mxu0 %v3310
        %v8963 = vpop.f32.mrf.mxu0
        %v8964 = vadd.f32 0.0, %v8963
        %v8965 = vpop.f32.mrf.mxu0
        %8966 = vmatprep.mubr.f32.mxu0 0.0
        %8967 = vmatmul.mubr.f32.gmra.mxu0 %v3312
        %v8968 = vpop.f32.mrf.mxu0
        %v8969 = vadd.f32 0.0, %v8968
        %v8970 = vpop.f32.mrf.mxu0
        %8971 = vmatprep.mubr.f32.mxu0 0.0
        %8972 = vmatmul.mubr.f32.gmra.mxu0 %v3314
        %v8973 = vpop.f32.mrf.mxu0
        %v8974 = vadd.f32 0.0, %v8973
        %v8975 = vpop.f32.mrf.mxu0
        %8976 = vmatprep.mubr.f32.mxu0 0.0
        %8977 = vmatmul.mubr.f32.gmra.mxu0 %v3316
        %v8978 = vpop.f32.mrf.mxu0
        %v8979 = vadd.f32 0.0, %v8978
        %v8980 = vpop.f32.mrf.mxu0
        %8981 = vmatprep.mubr.f32.mxu0 0.0
        %8982 = vmatmul.mubr.f32.gmra.mxu0 %v3318
        %v8983 = vpop.f32.mrf.mxu0
        %v8984 = vadd.f32 0.0, %v8983
        %v8985 = vpop.f32.mrf.mxu0
        %8986 = vmatprep.mubr.f32.mxu0 0.0
        %8987 = vmatmul.mubr.f32.gmra.mxu0 %v3320
        %v8988 = vpop.f32.mrf.mxu0
        %v8989 = vadd.f32 0.0, %v8988
        %v8990 = vpop.f32.mrf.mxu0
        %8991 = vmatprep.mubr.f32.mxu0 0.0
        %8992 = vmatmul.mubr.f32.gmra.mxu0 %v3322
        %v8993 = vpop.f32.mrf.mxu0
        %v8994 = vadd.f32 0.0, %v8993
        %v8995 = vpop.f32.mrf.mxu0
        %8996 = vmatprep.mubr.f32.mxu0 0.0
        %8997 = vmatmul.mubr.f32.gmra.mxu0 %v3324
        %v8998 = vpop.f32.mrf.mxu0
        %v8999 = vadd.f32 0.0, %v8998
        %v9000 = vpop.f32.mrf.mxu0
        %9001 = vmatprep.mubr.f32.mxu0 0.0
        %9002 = vmatmul.mubr.f32.gmra.mxu0 %v3326
        %v9003 = vpop.f32.mrf.mxu0
        %v9004 = vadd.f32 0.0, %v9003
        %v9005 = vpop.f32.mrf.mxu0
        %9006 = vmatprep.mubr.f32.mxu0 0.0
        %9007 = vmatmul.mubr.f32.gmra.mxu0 %v3328
        %v9008 = vpop.f32.mrf.mxu0
        %v9009 = vadd.f32 0.0, %v9008
        %v9010 = vpop.f32.mrf.mxu0
        %9011 = vmatprep.mubr.f32.mxu0 0.0
        %9012 = vmatmul.mubr.f32.gmra.mxu0 %v3330
        %v9013 = vpop.f32.mrf.mxu0
        %v9014 = vadd.f32 0.0, %v9013
        %v9015 = vpop.f32.mrf.mxu0
        %9016 = vmatprep.mubr.f32.mxu0 0.0
        %9017 = vmatmul.mubr.f32.gmra.mxu0 %v3332
        %v9018 = vpop.f32.mrf.mxu0
        %v9019 = vadd.f32 0.0, %v9018
        %v9020 = vpop.f32.mrf.mxu0
        %9021 = vmatprep.mubr.f32.mxu0 0.0
        %9022 = vmatmul.mubr.f32.gmra.mxu0 %v3334
        %v9023 = vpop.f32.mrf.mxu0
        %v9024 = vadd.f32 0.0, %v9023
        %v9025 = vpop.f32.mrf.mxu0
        %9026 = vmatprep.mubr.f32.mxu0 0.0
        %9027 = vmatmul.mubr.f32.gmra.mxu0 %v3336
        %v9028 = vpop.f32.mrf.mxu0
        %v9029 = vadd.f32 0.0, %v9028
        %v9030 = vpop.f32.mrf.mxu0
        %9031 = vmatprep.mubr.f32.mxu0 0.0
        %9032 = vmatmul.mubr.f32.gmra.mxu0 %v3338
        %v9033 = vpop.f32.mrf.mxu0
        %v9034 = vadd.f32 0.0, %v9033
        %v9035 = vpop.f32.mrf.mxu0
        %9036 = vmatprep.mubr.f32.mxu0 0.0
        %9037 = vmatmul.mubr.f32.gmra.mxu0 %v3340
        %v9038 = vpop.f32.mrf.mxu0
        %v9039 = vadd.f32 0.0, %v9038
        %v9040 = vpop.f32.mrf.mxu0
        %9041 = vmatprep.mubr.f32.mxu0 0.0
        %9042 = vmatmul.mubr.f32.gmra.mxu0 %v3342
        %v9043 = vpop.f32.mrf.mxu0
        %v9044 = vadd.f32 0.0, %v9043
        %v9045 = vpop.f32.mrf.mxu0
        %9046 = vmatprep.mubr.f32.mxu0 0.0
        %9047 = vmatmul.mubr.f32.gmra.mxu0 %v3344
        %v9048 = vpop.f32.mrf.mxu0
        %v9049 = vadd.f32 0.0, %v9048
        %v9050 = vpop.f32.mrf.mxu0
        %9051 = vmatprep.mubr.f32.mxu0 0.0
        %9052 = vmatmul.mubr.f32.gmra.mxu0 %v3346
        %v9053 = vpop.f32.mrf.mxu0
        %v9054 = vadd.f32 0.0, %v9053
        %v9055 = vpop.f32.mrf.mxu0
        %9056 = vmatprep.mubr.f32.mxu0 0.0
        %9057 = vmatmul.mubr.f32.gmra.mxu0 %v3348
        %v9058 = vpop.f32.mrf.mxu0
        %v9059 = vadd.f32 0.0, %v9058
        %v9060 = vpop.f32.mrf.mxu0
        %9061 = vmatprep.mubr.f32.mxu0 0.0
        %9062 = vmatmul.mubr.f32.gmra.mxu0 %v3350
        %v9063 = vpop.f32.mrf.mxu0
        %v9064 = vadd.f32 0.0, %v9063
        %v9065 = vpop.f32.mrf.mxu0
        %9066 = vmatprep.mubr.f32.mxu0 0.0
        %9067 = vmatmul.mubr.f32.gmra.mxu0 %v3352
        %v9068 = vpop.f32.mrf.mxu0
        %v9069 = vadd.f32 0.0, %v9068
        %v9070 = vpop.f32.mrf.mxu0
        %9071 = vmatprep.mubr.f32.mxu0 0.0
        %9072 = vmatmul.mubr.f32.gmra.mxu0 %v3354
        %v9073 = vpop.f32.mrf.mxu0
        %v9074 = vadd.f32 0.0, %v9073
        %v9075 = vpop.f32.mrf.mxu0
        %9076 = vmatprep.mubr.f32.mxu0 0.0
        %9077 = vmatmul.mubr.f32.gmra.mxu0 %v3356
        %v9078 = vpop.f32.mrf.mxu0
        %v9079 = vadd.f32 0.0, %v9078
        %v9080 = vpop.f32.mrf.mxu0
        %9081 = vmatprep.mubr.f32.mxu0 0.0
        %9082 = vmatmul.mubr.f32.gmra.mxu0 %v3358
        %v9083 = vpop.f32.mrf.mxu0
        %v9084 = vadd.f32 0.0, %v9083
        %v9085 = vpop.f32.mrf.mxu0
        %9086 = vmatprep.mubr.f32.mxu0 0.0
        %9087 = vmatmul.mubr.f32.gmra.mxu0 %v3360
        %v9088 = vpop.f32.mrf.mxu0
        %v9089 = vadd.f32 0.0, %v9088
        %v9090 = vpop.f32.mrf.mxu0
        %9091 = vmatprep.mubr.f32.mxu0 0.0
        %9092 = vmatmul.mubr.f32.gmra.mxu0 %v3362
        %v9093 = vpop.f32.mrf.mxu0
        %v9094 = vadd.f32 0.0, %v9093
        %v9095 = vpop.f32.mrf.mxu0
        %9096 = vmatprep.mubr.f32.mxu0 0.0
        %9097 = vmatmul.mubr.f32.gmra.mxu0 %v3364
        %v9098 = vpop.f32.mrf.mxu0
        %v9099 = vadd.f32 0.0, %v9098
        %v9100 = vpop.f32.mrf.mxu0
        %9101 = vmatprep.mubr.f32.mxu0 0.0
        %9102 = vmatmul.mubr.f32.gmra.mxu0 %v3366
        %v9103 = vpop.f32.mrf.mxu0
        %v9104 = vadd.f32 0.0, %v9103
        %v9105 = vpop.f32.mrf.mxu0
        %9106 = vmatprep.mubr.f32.mxu0 0.0
        %9107 = vmatmul.mubr.f32.gmra.mxu0 %v3368
        %v9108 = vpop.f32.mrf.mxu0
        %v9109 = vadd.f32 0.0, %v9108
        %v9110 = vpop.f32.mrf.mxu0
        %9111 = vmatprep.mubr.f32.mxu0 0.0
        %9112 = vmatmul.mubr.f32.gmra.mxu0 %v3370
        %v9113 = vpop.f32.mrf.mxu0
        %v9114 = vadd.f32 0.0, %v9113
        %v9115 = vpop.f32.mrf.mxu0
        %9116 = vmatprep.mubr.f32.mxu0 0.0
        %9117 = vmatmul.mubr.f32.gmra.mxu0 %v3372
        %v9118 = vpop.f32.mrf.mxu0
        %v9119 = vadd.f32 0.0, %v9118
        %v9120 = vpop.f32.mrf.mxu0
        %9121 = vmatprep.mubr.f32.mxu0 0.0
        %9122 = vmatmul.mubr.f32.gmra.mxu0 %v3374
        %v9123 = vpop.f32.mrf.mxu0
        %v9124 = vadd.f32 0.0, %v9123
        %v9125 = vpop.f32.mrf.mxu0
        %9126 = vmatprep.mubr.f32.mxu0 0.0
        %9127 = vmatmul.mubr.f32.gmra.mxu0 %v3376
        %v9128 = vpop.f32.mrf.mxu0
        %v9129 = vadd.f32 0.0, %v9128
        %v9130 = vpop.f32.mrf.mxu0
        %9131 = vmatprep.mubr.f32.mxu0 0.0
        %9132 = vmatmul.mubr.f32.gmra.mxu0 %v3378
        %v9133 = vpop.f32.mrf.mxu0
        %v9134 = vadd.f32 0.0, %v9133
        %v9135 = vpop.f32.mrf.mxu0
        %9136 = vmatprep.mubr.f32.mxu0 0.0
        %9137 = vmatmul.mubr.f32.gmra.mxu0 %v3380
        %v9138 = vpop.f32.mrf.mxu0
        %v9139 = vadd.f32 0.0, %v9138
        %v9140 = vpop.f32.mrf.mxu0
        %9141 = vmatprep.mubr.f32.mxu0 0.0
        %9142 = vmatmul.mubr.f32.gmra.mxu0 %v3382
        %v9143 = vpop.f32.mrf.mxu0
        %v9144 = vadd.f32 0.0, %v9143
        %v9145 = vpop.f32.mrf.mxu0
        %9146 = vmatprep.mubr.f32.mxu0 0.0
        %9147 = vmatmul.mubr.f32.gmra.mxu0 %v3384
        %v9148 = vpop.f32.mrf.mxu0
        %v9149 = vadd.f32 0.0, %v9148
        %v9150 = vpop.f32.mrf.mxu0
        %9151 = vmatprep.mubr.f32.mxu0 0.0
        %9152 = vmatmul.mubr.f32.gmra.mxu0 %v3386
        %v9153 = vpop.f32.mrf.mxu0
        %v9154 = vadd.f32 0.0, %v9153
        %v9155 = vpop.f32.mrf.mxu0
        %9156 = vmatprep.mubr.f32.mxu0 0.0
        %9157 = vmatmul.mubr.f32.gmra.mxu0 %v3388
        %v9158 = vpop.f32.mrf.mxu0
        %v9159 = vadd.f32 0.0, %v9158
        %v9160 = vpop.f32.mrf.mxu0
        %9161 = vmatprep.mubr.f32.mxu0 0.0
        %9162 = vmatmul.mubr.f32.gmra.mxu0 %v3390
        %v9163 = vpop.f32.mrf.mxu0
        %v9164 = vadd.f32 0.0, %v9163
        %v9165 = vpop.f32.mrf.mxu0
        %9166 = vmatprep.mubr.f32.mxu0 0.0
        %9167 = vmatmul.mubr.f32.gmra.mxu0 %v3392
        %v9168 = vpop.f32.mrf.mxu0
        %v9169 = vadd.f32 0.0, %v9168
        %v9170 = vpop.f32.mrf.mxu0
        %9171 = vmatprep.mubr.f32.mxu0 0.0
        %9172 = vmatmul.mubr.f32.gmra.mxu0 %v3394
        %v9173 = vpop.f32.mrf.mxu0
        %v9174 = vadd.f32 0.0, %v9173
        %v9175 = vpop.f32.mrf.mxu0
        %9176 = vmatprep.mubr.f32.mxu0 0.0
        %9177 = vmatmul.mubr.f32.gmra.mxu0 %v3396
        %v9178 = vpop.f32.mrf.mxu0
        %v9179 = vadd.f32 0.0, %v9178
        %v9180 = vpop.f32.mrf.mxu0
        %9181 = vmatprep.mubr.f32.mxu0 0.0
        %9182 = vmatmul.mubr.f32.gmra.mxu0 %v3398
        %v9183 = vpop.f32.mrf.mxu0
        %v9184 = vadd.f32 0.0, %v9183
        %v9185 = vpop.f32.mrf.mxu0
        %9186 = vmatprep.mubr.f32.mxu0 0.0
        %9187 = vmatmul.mubr.f32.gmra.mxu0 %v3400
        %v9188 = vpop.f32.mrf.mxu0
        %v9189 = vadd.f32 0.0, %v9188
        %v9190 = vpop.f32.mrf.mxu0
        %9191 = vmatprep.mubr.f32.mxu0 0.0
        %9192 = vmatmul.mubr.f32.gmra.mxu0 %v5955
        %v9193 = vpop.f32.mrf.mxu0
        %v9194 = vadd.f32 0.0, %v9193
        %v9195 = vpop.f32.mrf.mxu0
        %9196 = vmatprep.mubr.f32.mxu0 0.0
        %9197 = vmatmul.mubr.f32.gmra.mxu0 %v5957
        %v9198 = vpop.f32.mrf.mxu0
        %v9199 = vadd.f32 0.0, %v9198
        %v9200 = vpop.f32.mrf.mxu0
        %9201 = vmatprep.mubr.f32.mxu0 0.0
        %9202 = vmatmul.mubr.f32.gmra.mxu0 %v5959
        %v9203 = vpop.f32.mrf.mxu0
        %v9204 = vadd.f32 0.0, %v9203
        %v9205 = vpop.f32.mrf.mxu0
        %9206 = vmatprep.mubr.f32.mxu0 0.0
        %9207 = vmatmul.mubr.f32.gmra.mxu0 %v5961
        %v9208 = vpop.f32.mrf.mxu0
        %v9209 = vadd.f32 0.0, %v9208
        %v9210 = vpop.f32.mrf.mxu0
        %9211 = vmatprep.mubr.f32.mxu0 0.0
        %9212 = vmatmul.mubr.f32.gmra.mxu0 %v8516
        %v9213 = vpop.f32.mrf.mxu0
        %v9214 = vadd.f32 0.0, %v9213
        %v9215 = vpop.f32.mrf.mxu0
        %9216 = vmatprep.mubr.f32.mxu0 0.0
        %9217 = vmatmul.mubr.f32.gmra.mxu0 %v8518
        %v9218 = vpop.f32.mrf.mxu0
        %v9219 = vadd.f32 0.0, %v9218
        %v9220 = vpop.f32.mrf.mxu0
        %9221 = vmatprep.mubr.f32.mxu0 0.0
        %9222 = vmatmul.mubr.f32.gmra.mxu0 %v8520
        %v9223 = vpop.f32.mrf.mxu0
        %v9224 = vadd.f32 0.0, %v9223
        %v9225 = vpop.f32.mrf.mxu0
        %9226 = vmatprep.mubr.f32.mxu0 0.0
        %9227 = vmatmul.mubr.f32.gmra.mxu0 %v8522
        %v9228 = vpop.f32.mrf.mxu0
        %v9229 = vadd.f32 0.0, %v9228
        %v9230 = vpop.f32.mrf.mxu0
        %9231 = vdwg.mxu0
        %v9232 = vadd.f32 %v8377, %v8594
        %v9233 = vadd.f32 %v8378, %v8599
        %v9234 = vadd.f32 %v8379, %v8604
        %v9235 = vadd.f32 %v8380, %v8609
        %v9236 = vadd.f32 %v8381, %v8614
        %v9237 = vadd.f32 %v8382, %v8619
        %v9238 = vadd.f32 %v8383, %v8624
        %v9239 = vadd.f32 %v8384, %v8629
        %v9240 = vadd.f32 %v8385, %v8634
        %v9241 = vadd.f32 %v8386, %v8639
        %v9242 = vadd.f32 %v8387, %v8644
        %v9243 = vadd.f32 %v8388, %v8649
        %v9244 = vadd.f32 %v8389, %v8654
        %v9245 = vadd.f32 %v8390, %v8659
        %v9246 = vadd.f32 %v8391, %v8664
        %v9247 = vadd.f32 %v8392, %v8669
        %v9248 = vadd.f32 %v8393, %v8674
        %v9249 = vadd.f32 %v8394, %v8679
        %v9250 = vadd.f32 %v8395, %v8684
        %v9251 = vadd.f32 %v8396, %v8689
        %v9252 = vadd.f32 %v8397, %v8694
        %v9253 = vadd.f32 %v8398, %v8699
        %v9254 = vadd.f32 %v8399, %v8704
        %v9255 = vadd.f32 %v8400, %v8709
        %v9256 = vadd.f32 %v8401, %v8714
        %v9257 = vadd.f32 %v8402, %v8719
        %v9258 = vadd.f32 %v8403, %v8724
        %v9259 = vadd.f32 %v8404, %v8729
        %v9260 = vadd.f32 %v8405, %v8734
        %v9261 = vadd.f32 %v8406, %v8739
        %v9262 = vadd.f32 %v8407, %v8744
        %v9263 = vadd.f32 %v8408, %v8749
        %v9264 = vadd.f32 %v8409, %v8754
        %v9265 = vadd.f32 %v8410, %v8759
        %v9266 = vadd.f32 %v8411, %v8764
        %v9267 = vadd.f32 %v8412, %v8769
        %v9268 = vadd.f32 %v8413, %v8774
        %v9269 = vadd.f32 %v8414, %v8779
        %v9270 = vadd.f32 %v8415, %v8784
        %v9271 = vadd.f32 %v8416, %v8789
        %v9272 = vadd.f32 %v8417, %v8794
        %v9273 = vadd.f32 %v8418, %v8799
        %v9274 = vadd.f32 %v8419, %v8804
        %v9275 = vadd.f32 %v8420, %v8809
        %v9276 = vadd.f32 %v8421, %v8814
        %v9277 = vadd.f32 %v8422, %v8819
        %v9278 = vadd.f32 %v8423, %v8824
        %v9279 = vadd.f32 %v8424, %v8829
        %v9280 = vadd.f32 %v8425, %v8834
        %v9281 = vadd.f32 %v8426, %v8839
        %v9282 = vadd.f32 %v8427, %v8844
        %v9283 = vadd.f32 %v8428, %v8849
        %v9284 = vadd.f32 %v8429, %v8854
        %v9285 = vadd.f32 %v8430, %v8859
        %v9286 = vadd.f32 %v8431, %v8864
        %v9287 = vadd.f32 %v8432, %v8869
        %v9288 = vadd.f32 %v8433, %v8874
        %v9289 = vadd.f32 %v8434, %v8879
        %v9290 = vadd.f32 %v8435, %v8884
        %v9291 = vadd.f32 %v8436, %v8889
        %v9292 = vadd.f32 %v8437, %v8894
        %v9293 = vadd.f32 %v8438, %v8899
        %v9294 = vadd.f32 %v8439, %v8904
        %v9295 = vadd.f32 %v8440, %v8909
        %v9296 = vadd.f32 %v8441, %v8914
        %v9297 = vadd.f32 %v8442, %v8919
        %v9298 = vadd.f32 %v8443, %v8924
        %v9299 = vadd.f32 %v8444, %v8929
        %v9300 = vadd.f32 %v8445, %v8934
        %v9301 = vadd.f32 %v8446, %v8939
        %v9302 = vadd.f32 %v8447, %v8944
        %v9303 = vadd.f32 %v8448, %v8949
        %v9304 = vadd.f32 %v8449, %v8954
        %v9305 = vadd.f32 %v8450, %v8959
        %v9306 = vadd.f32 %v8451, %v8964
        %v9307 = vadd.f32 %v8452, %v8969
        %v9308 = vadd.f32 %v8453, %v8974
        %v9309 = vadd.f32 %v8454, %v8979
        %v9310 = vadd.f32 %v8455, %v8984
        %v9311 = vadd.f32 %v8456, %v8989
        %v9312 = vadd.f32 %v8457, %v8994
        %v9313 = vadd.f32 %v8458, %v8999
        %v9314 = vadd.f32 %v8459, %v9004
        %v9315 = vadd.f32 %v8460, %v9009
        %v9316 = vadd.f32 %v8461, %v9014
        %v9317 = vadd.f32 %v8462, %v9019
        %v9318 = vadd.f32 %v8463, %v9024
        %v9319 = vadd.f32 %v8464, %v9029
        %v9320 = vadd.f32 %v8465, %v9034
        %v9321 = vadd.f32 %v8466, %v9039
        %v9322 = vadd.f32 %v8467, %v9044
        %v9323 = vadd.f32 %v8468, %v9049
        %v9324 = vadd.f32 %v8469, %v9054
        %v9325 = vadd.f32 %v8470, %v9059
        %v9326 = vadd.f32 %v8471, %v9064
        %v9327 = vadd.f32 %v8472, %v9069
        %v9328 = vadd.f32 %v8473, %v9074
        %v9329 = vadd.f32 %v8474, %v9079
        %v9330 = vadd.f32 %v8475, %v9084
        %v9331 = vadd.f32 %v8476, %v9089
        %v9332 = vadd.f32 %v8477, %v9094
        %v9333 = vadd.f32 %v8478, %v9099
        %v9334 = vadd.f32 %v8479, %v9104
        %v9335 = vadd.f32 %v8480, %v9109
        %v9336 = vadd.f32 %v8481, %v9114
        %v9337 = vadd.f32 %v8482, %v9119
        %v9338 = vadd.f32 %v8483, %v9124
        %v9339 = vadd.f32 %v8484, %v9129
        %v9340 = vadd.f32 %v8485, %v9134
        %v9341 = vadd.f32 %v8486, %v9139
        %v9342 = vadd.f32 %v8487, %v9144
        %v9343 = vadd.f32 %v8488, %v9149
        %v9344 = vadd.f32 %v8489, %v9154
        %v9345 = vadd.f32 %v8490, %v9159
        %v9346 = vadd.f32 %v8491, %v9164
        %v9347 = vadd.f32 %v8492, %v9169
        %v9348 = vadd.f32 %v8493, %v9174
        %v9349 = vadd.f32 %v8494, %v9179
        %v9350 = vadd.f32 %v8495, %v9184
        %v9351 = vadd.f32 %v8496, %v9189
        %v9352 = vadd.f32 %v8497, %v9194
        %v9353 = vadd.f32 %v8498, %v9199
        %v9354 = vadd.f32 %v8499, %v9204
        %v9355 = vadd.f32 %v8500, %v9209
        %v9356 = vadd.f32 %v8501, %v9214
        %v9357 = vadd.f32 %v8502, %v9219
        %v9358 = vadd.f32 %v8503, %v9224
        %v9359 = vadd.f32 %v8504, %v9229
        %v9360 = vld [vmem:[%s2] sm:$0x1]
        %v9362 = vlaneseq
        %v9363 = vshrl.u32 %v9362, 7
        %v9364 = vsub.s32 0, %v9363
        %v9365 = vrot.slane %v9360, %v9364
        %v9367 = vmul.f32 %v9232, %v9365
        %v9368 = vmul.f32 %v9233, %v9365
        %v9369 = vmul.f32 %v9234, %v9365
        %v9370 = vmul.f32 %v9235, %v9365
        %v9371 = vmul.f32 %v9236, %v9365
        %v9372 = vmul.f32 %v9237, %v9365
        %v9373 = vmul.f32 %v9238, %v9365
        %v9374 = vmul.f32 %v9239, %v9365
        %v9375 = vmul.f32 %v9240, %v9365
        %v9376 = vmul.f32 %v9241, %v9365
        %v9377 = vmul.f32 %v9242, %v9365
        %v9378 = vmul.f32 %v9243, %v9365
        %v9379 = vmul.f32 %v9244, %v9365
        %v9380 = vmul.f32 %v9245, %v9365
        %v9381 = vmul.f32 %v9246, %v9365
        %v9382 = vmul.f32 %v9247, %v9365
        %v9383 = vmul.f32 %v9248, %v9365
        %v9384 = vmul.f32 %v9249, %v9365
        %v9385 = vmul.f32 %v9250, %v9365
        %v9386 = vmul.f32 %v9251, %v9365
        %v9387 = vmul.f32 %v9252, %v9365
        %v9388 = vmul.f32 %v9253, %v9365
        %v9389 = vmul.f32 %v9254, %v9365
        %v9390 = vmul.f32 %v9255, %v9365
        %v9391 = vmul.f32 %v9256, %v9365
        %v9392 = vmul.f32 %v9257, %v9365
        %v9393 = vmul.f32 %v9258, %v9365
        %v9394 = vmul.f32 %v9259, %v9365
        %v9395 = vmul.f32 %v9260, %v9365
        %v9396 = vmul.f32 %v9261, %v9365
        %v9397 = vmul.f32 %v9262, %v9365
        %v9398 = vmul.f32 %v9263, %v9365
        %v9399 = vmul.f32 %v9264, %v9365
        %v9400 = vmul.f32 %v9265, %v9365
        %v9401 = vmul.f32 %v9266, %v9365
        %v9402 = vmul.f32 %v9267, %v9365
        %v9403 = vmul.f32 %v9268, %v9365
        %v9404 = vmul.f32 %v9269, %v9365
        %v9405 = vmul.f32 %v9270, %v9365
        %v9406 = vmul.f32 %v9271, %v9365
        %v9407 = vmul.f32 %v9272, %v9365
        %v9408 = vmul.f32 %v9273, %v9365
        %v9409 = vmul.f32 %v9274, %v9365
        %v9410 = vmul.f32 %v9275, %v9365
        %v9411 = vmul.f32 %v9276, %v9365
        %v9412 = vmul.f32 %v9277, %v9365
        %v9413 = vmul.f32 %v9278, %v9365
        %v9414 = vmul.f32 %v9279, %v9365
        %v9415 = vmul.f32 %v9280, %v9365
        %v9416 = vmul.f32 %v9281, %v9365
        %v9417 = vmul.f32 %v9282, %v9365
        %v9418 = vmul.f32 %v9283, %v9365
        %v9419 = vmul.f32 %v9284, %v9365
        %v9420 = vmul.f32 %v9285, %v9365
        %v9421 = vmul.f32 %v9286, %v9365
        %v9422 = vmul.f32 %v9287, %v9365
        %v9423 = vmul.f32 %v9288, %v9365
        %v9424 = vmul.f32 %v9289, %v9365
        %v9425 = vmul.f32 %v9290, %v9365
        %v9426 = vmul.f32 %v9291, %v9365
        %v9427 = vmul.f32 %v9292, %v9365
        %v9428 = vmul.f32 %v9293, %v9365
        %v9429 = vmul.f32 %v9294, %v9365
        %v9430 = vmul.f32 %v9295, %v9365
        %v9431 = vmul.f32 %v9296, %v9365
        %v9432 = vmul.f32 %v9297, %v9365
        %v9433 = vmul.f32 %v9298, %v9365
        %v9434 = vmul.f32 %v9299, %v9365
        %v9435 = vmul.f32 %v9300, %v9365
        %v9436 = vmul.f32 %v9301, %v9365
        %v9437 = vmul.f32 %v9302, %v9365
        %v9438 = vmul.f32 %v9303, %v9365
        %v9439 = vmul.f32 %v9304, %v9365
        %v9440 = vmul.f32 %v9305, %v9365
        %v9441 = vmul.f32 %v9306, %v9365
        %v9442 = vmul.f32 %v9307, %v9365
        %v9443 = vmul.f32 %v9308, %v9365
        %v9444 = vmul.f32 %v9309, %v9365
        %v9445 = vmul.f32 %v9310, %v9365
        %v9446 = vmul.f32 %v9311, %v9365
        %v9447 = vmul.f32 %v9312, %v9365
        %v9448 = vmul.f32 %v9313, %v9365
        %v9449 = vmul.f32 %v9314, %v9365
        %v9450 = vmul.f32 %v9315, %v9365
        %v9451 = vmul.f32 %v9316, %v9365
        %v9452 = vmul.f32 %v9317, %v9365
        %v9453 = vmul.f32 %v9318, %v9365
        %v9454 = vmul.f32 %v9319, %v9365
        %v9455 = vmul.f32 %v9320, %v9365
        %v9456 = vmul.f32 %v9321, %v9365
        %v9457 = vmul.f32 %v9322, %v9365
        %v9458 = vmul.f32 %v9323, %v9365
        %v9459 = vmul.f32 %v9324, %v9365
        %v9460 = vmul.f32 %v9325, %v9365
        %v9461 = vmul.f32 %v9326, %v9365
        %v9462 = vmul.f32 %v9327, %v9365
        %v9463 = vmul.f32 %v9328, %v9365
        %v9464 = vmul.f32 %v9329, %v9365
        %v9465 = vmul.f32 %v9330, %v9365
        %v9466 = vmul.f32 %v9331, %v9365
        %v9467 = vmul.f32 %v9332, %v9365
        %v9468 = vmul.f32 %v9333, %v9365
        %v9469 = vmul.f32 %v9334, %v9365
        %v9470 = vmul.f32 %v9335, %v9365
        %v9471 = vmul.f32 %v9336, %v9365
        %v9472 = vmul.f32 %v9337, %v9365
        %v9473 = vmul.f32 %v9338, %v9365
        %v9474 = vmul.f32 %v9339, %v9365
        %v9475 = vmul.f32 %v9340, %v9365
        %v9476 = vmul.f32 %v9341, %v9365
        %v9477 = vmul.f32 %v9342, %v9365
        %v9478 = vmul.f32 %v9343, %v9365
        %v9479 = vmul.f32 %v9344, %v9365
        %v9480 = vmul.f32 %v9345, %v9365
        %v9481 = vmul.f32 %v9346, %v9365
        %v9482 = vmul.f32 %v9347, %v9365
        %v9483 = vmul.f32 %v9348, %v9365
        %v9484 = vmul.f32 %v9349, %v9365
        %v9485 = vmul.f32 %v9350, %v9365
        %v9486 = vmul.f32 %v9351, %v9365
        %v9487 = vmul.f32 %v9352, %v9365
        %v9488 = vmul.f32 %v9353, %v9365
        %v9489 = vmul.f32 %v9354, %v9365
        %v9490 = vmul.f32 %v9355, %v9365
        %v9491 = vmul.f32 %v9356, %v9365
        %v9492 = vmul.f32 %v9357, %v9365
        %v9493 = vmul.f32 %v9358, %v9365
        %v9494 = vmul.f32 %v9359, %v9365
        %v9495 = vld [vmem:[%s3] sm:$0x1]
        %v9497 = vlaneseq
        %v9498 = vshrl.u32 %v9497, 7
        %v9499 = vsub.s32 0, %v9498
        %v9500 = vrot.slane %v9495, %v9499
        %v9502 = vadd.f32 %v9367, %v9500
        %v9503 = vadd.f32 %v9368, %v9500
        %v9504 = vadd.f32 %v9369, %v9500
        %v9505 = vadd.f32 %v9370, %v9500
        %v9506 = vadd.f32 %v9371, %v9500
        %v9507 = vadd.f32 %v9372, %v9500
        %v9508 = vadd.f32 %v9373, %v9500
        %v9509 = vadd.f32 %v9374, %v9500
        %v9510 = vadd.f32 %v9375, %v9500
        %v9511 = vadd.f32 %v9376, %v9500
        %v9512 = vadd.f32 %v9377, %v9500
        %v9513 = vadd.f32 %v9378, %v9500
        %v9514 = vadd.f32 %v9379, %v9500
        %v9515 = vadd.f32 %v9380, %v9500
        %v9516 = vadd.f32 %v9381, %v9500
        %v9517 = vadd.f32 %v9382, %v9500
        %v9518 = vadd.f32 %v9383, %v9500
        %v9519 = vadd.f32 %v9384, %v9500
        %v9520 = vadd.f32 %v9385, %v9500
        %v9521 = vadd.f32 %v9386, %v9500
        %v9522 = vadd.f32 %v9387, %v9500
        %v9523 = vadd.f32 %v9388, %v9500
        %v9524 = vadd.f32 %v9389, %v9500
        %v9525 = vadd.f32 %v9390, %v9500
        %v9526 = vadd.f32 %v9391, %v9500
        %v9527 = vadd.f32 %v9392, %v9500
        %v9528 = vadd.f32 %v9393, %v9500
        %v9529 = vadd.f32 %v9394, %v9500
        %v9530 = vadd.f32 %v9395, %v9500
        %v9531 = vadd.f32 %v9396, %v9500
        %v9532 = vadd.f32 %v9397, %v9500
        %v9533 = vadd.f32 %v9398, %v9500
        %v9534 = vadd.f32 %v9399, %v9500
        %v9535 = vadd.f32 %v9400, %v9500
        %v9536 = vadd.f32 %v9401, %v9500
        %v9537 = vadd.f32 %v9402, %v9500
        %v9538 = vadd.f32 %v9403, %v9500
        %v9539 = vadd.f32 %v9404, %v9500
        %v9540 = vadd.f32 %v9405, %v9500
        %v9541 = vadd.f32 %v9406, %v9500
        %v9542 = vadd.f32 %v9407, %v9500
        %v9543 = vadd.f32 %v9408, %v9500
        %v9544 = vadd.f32 %v9409, %v9500
        %v9545 = vadd.f32 %v9410, %v9500
        %v9546 = vadd.f32 %v9411, %v9500
        %v9547 = vadd.f32 %v9412, %v9500
        %v9548 = vadd.f32 %v9413, %v9500
        %v9549 = vadd.f32 %v9414, %v9500
        %v9550 = vadd.f32 %v9415, %v9500
        %v9551 = vadd.f32 %v9416, %v9500
        %v9552 = vadd.f32 %v9417, %v9500
        %v9553 = vadd.f32 %v9418, %v9500
        %v9554 = vadd.f32 %v9419, %v9500
        %v9555 = vadd.f32 %v9420, %v9500
        %v9556 = vadd.f32 %v9421, %v9500
        %v9557 = vadd.f32 %v9422, %v9500
        %v9558 = vadd.f32 %v9423, %v9500
        %v9559 = vadd.f32 %v9424, %v9500
        %v9560 = vadd.f32 %v9425, %v9500
        %v9561 = vadd.f32 %v9426, %v9500
        %v9562 = vadd.f32 %v9427, %v9500
        %v9563 = vadd.f32 %v9428, %v9500
        %v9564 = vadd.f32 %v9429, %v9500
        %v9565 = vadd.f32 %v9430, %v9500
        %v9566 = vadd.f32 %v9431, %v9500
        %v9567 = vadd.f32 %v9432, %v9500
        %v9568 = vadd.f32 %v9433, %v9500
        %v9569 = vadd.f32 %v9434, %v9500
        %v9570 = vadd.f32 %v9435, %v9500
        %v9571 = vadd.f32 %v9436, %v9500
        %v9572 = vadd.f32 %v9437, %v9500
        %v9573 = vadd.f32 %v9438, %v9500
        %v9574 = vadd.f32 %v9439, %v9500
        %v9575 = vadd.f32 %v9440, %v9500
        %v9576 = vadd.f32 %v9441, %v9500
        %v9577 = vadd.f32 %v9442, %v9500
        %v9578 = vadd.f32 %v9443, %v9500
        %v9579 = vadd.f32 %v9444, %v9500
        %v9580 = vadd.f32 %v9445, %v9500
        %v9581 = vadd.f32 %v9446, %v9500
        %v9582 = vadd.f32 %v9447, %v9500
        %v9583 = vadd.f32 %v9448, %v9500
        %v9584 = vadd.f32 %v9449, %v9500
        %v9585 = vadd.f32 %v9450, %v9500
        %v9586 = vadd.f32 %v9451, %v9500
        %v9587 = vadd.f32 %v9452, %v9500
        %v9588 = vadd.f32 %v9453, %v9500
        %v9589 = vadd.f32 %v9454, %v9500
        %v9590 = vadd.f32 %v9455, %v9500
        %v9591 = vadd.f32 %v9456, %v9500
        %v9592 = vadd.f32 %v9457, %v9500
        %v9593 = vadd.f32 %v9458, %v9500
        %v9594 = vadd.f32 %v9459, %v9500
        %v9595 = vadd.f32 %v9460, %v9500
        %v9596 = vadd.f32 %v9461, %v9500
        %v9597 = vadd.f32 %v9462, %v9500
        %v9598 = vadd.f32 %v9463, %v9500
        %v9599 = vadd.f32 %v9464, %v9500
        %v9600 = vadd.f32 %v9465, %v9500
        %v9601 = vadd.f32 %v9466, %v9500
        %v9602 = vadd.f32 %v9467, %v9500
        %v9603 = vadd.f32 %v9468, %v9500
        %v9604 = vadd.f32 %v9469, %v9500
        %v9605 = vadd.f32 %v9470, %v9500
        %v9606 = vadd.f32 %v9471, %v9500
        %v9607 = vadd.f32 %v9472, %v9500
        %v9608 = vadd.f32 %v9473, %v9500
        %v9609 = vadd.f32 %v9474, %v9500
        %v9610 = vadd.f32 %v9475, %v9500
        %v9611 = vadd.f32 %v9476, %v9500
        %v9612 = vadd.f32 %v9477, %v9500
        %v9613 = vadd.f32 %v9478, %v9500
        %v9614 = vadd.f32 %v9479, %v9500
        %v9615 = vadd.f32 %v9480, %v9500
        %v9616 = vadd.f32 %v9481, %v9500
        %v9617 = vadd.f32 %v9482, %v9500
        %v9618 = vadd.f32 %v9483, %v9500
        %v9619 = vadd.f32 %v9484, %v9500
        %v9620 = vadd.f32 %v9485, %v9500
        %v9621 = vadd.f32 %v9486, %v9500
        %v9622 = vadd.f32 %v9487, %v9500
        %v9623 = vadd.f32 %v9488, %v9500
        %v9624 = vadd.f32 %v9489, %v9500
        %v9625 = vadd.f32 %v9490, %v9500
        %v9626 = vadd.f32 %v9491, %v9500
        %v9627 = vadd.f32 %v9492, %v9500
        %v9628 = vadd.f32 %v9493, %v9500
        %v9629 = vadd.f32 %v9494, %v9500
        %v9630 = vmax.f32 %v9502, 0.0
        %v9631 = vmax.f32 %v9503, 0.0
        %v9632 = vmax.f32 %v9504, 0.0
        %v9633 = vmax.f32 %v9505, 0.0
        %v9634 = vmax.f32 %v9506, 0.0
        %v9635 = vmax.f32 %v9507, 0.0
        %v9636 = vmax.f32 %v9508, 0.0
        %v9637 = vmax.f32 %v9509, 0.0
        %v9638 = vmax.f32 %v9510, 0.0
        %v9639 = vmax.f32 %v9511, 0.0
        %v9640 = vmax.f32 %v9512, 0.0
        %v9641 = vmax.f32 %v9513, 0.0
        %v9642 = vmax.f32 %v9514, 0.0
        %v9643 = vmax.f32 %v9515, 0.0
        %v9644 = vmax.f32 %v9516, 0.0
        %v9645 = vmax.f32 %v9517, 0.0
        %v9646 = vmax.f32 %v9518, 0.0
        %v9647 = vmax.f32 %v9519, 0.0
        %v9648 = vmax.f32 %v9520, 0.0
        %v9649 = vmax.f32 %v9521, 0.0
        %v9650 = vmax.f32 %v9522, 0.0
        %v9651 = vmax.f32 %v9523, 0.0
        %v9652 = vmax.f32 %v9524, 0.0
        %v9653 = vmax.f32 %v9525, 0.0
        %v9654 = vmax.f32 %v9526, 0.0
        %v9655 = vmax.f32 %v9527, 0.0
        %v9656 = vmax.f32 %v9528, 0.0
        %v9657 = vmax.f32 %v9529, 0.0
        %v9658 = vmax.f32 %v9530, 0.0
        %v9659 = vmax.f32 %v9531, 0.0
        %v9660 = vmax.f32 %v9532, 0.0
        %v9661 = vmax.f32 %v9533, 0.0
        %v9662 = vmax.f32 %v9534, 0.0
        %v9663 = vmax.f32 %v9535, 0.0
        %v9664 = vmax.f32 %v9536, 0.0
        %v9665 = vmax.f32 %v9537, 0.0
        %v9666 = vmax.f32 %v9538, 0.0
        %v9667 = vmax.f32 %v9539, 0.0
        %v9668 = vmax.f32 %v9540, 0.0
        %v9669 = vmax.f32 %v9541, 0.0
        %v9670 = vmax.f32 %v9542, 0.0
        %v9671 = vmax.f32 %v9543, 0.0
        %v9672 = vmax.f32 %v9544, 0.0
        %v9673 = vmax.f32 %v9545, 0.0
        %v9674 = vmax.f32 %v9546, 0.0
        %v9675 = vmax.f32 %v9547, 0.0
        %v9676 = vmax.f32 %v9548, 0.0
        %v9677 = vmax.f32 %v9549, 0.0
        %v9678 = vmax.f32 %v9550, 0.0
        %v9679 = vmax.f32 %v9551, 0.0
        %v9680 = vmax.f32 %v9552, 0.0
        %v9681 = vmax.f32 %v9553, 0.0
        %v9682 = vmax.f32 %v9554, 0.0
        %v9683 = vmax.f32 %v9555, 0.0
        %v9684 = vmax.f32 %v9556, 0.0
        %v9685 = vmax.f32 %v9557, 0.0
        %v9686 = vmax.f32 %v9558, 0.0
        %v9687 = vmax.f32 %v9559, 0.0
        %v9688 = vmax.f32 %v9560, 0.0
        %v9689 = vmax.f32 %v9561, 0.0
        %v9690 = vmax.f32 %v9562, 0.0
        %v9691 = vmax.f32 %v9563, 0.0
        %v9692 = vmax.f32 %v9564, 0.0
        %v9693 = vmax.f32 %v9565, 0.0
        %v9694 = vmax.f32 %v9566, 0.0
        %v9695 = vmax.f32 %v9567, 0.0
        %v9696 = vmax.f32 %v9568, 0.0
        %v9697 = vmax.f32 %v9569, 0.0
        %v9698 = vmax.f32 %v9570, 0.0
        %v9699 = vmax.f32 %v9571, 0.0
        %v9700 = vmax.f32 %v9572, 0.0
        %v9701 = vmax.f32 %v9573, 0.0
        %v9702 = vmax.f32 %v9574, 0.0
        %v9703 = vmax.f32 %v9575, 0.0
        %v9704 = vmax.f32 %v9576, 0.0
        %v9705 = vmax.f32 %v9577, 0.0
        %v9706 = vmax.f32 %v9578, 0.0
        %v9707 = vmax.f32 %v9579, 0.0
        %v9708 = vmax.f32 %v9580, 0.0
        %v9709 = vmax.f32 %v9581, 0.0
        %v9710 = vmax.f32 %v9582, 0.0
        %v9711 = vmax.f32 %v9583, 0.0
        %v9712 = vmax.f32 %v9584, 0.0
        %v9713 = vmax.f32 %v9585, 0.0
        %v9714 = vmax.f32 %v9586, 0.0
        %v9715 = vmax.f32 %v9587, 0.0
        %v9716 = vmax.f32 %v9588, 0.0
        %v9717 = vmax.f32 %v9589, 0.0
        %v9718 = vmax.f32 %v9590, 0.0
        %v9719 = vmax.f32 %v9591, 0.0
        %v9720 = vmax.f32 %v9592, 0.0
        %v9721 = vmax.f32 %v9593, 0.0
        %v9722 = vmax.f32 %v9594, 0.0
        %v9723 = vmax.f32 %v9595, 0.0
        %v9724 = vmax.f32 %v9596, 0.0
        %v9725 = vmax.f32 %v9597, 0.0
        %v9726 = vmax.f32 %v9598, 0.0
        %v9727 = vmax.f32 %v9599, 0.0
        %v9728 = vmax.f32 %v9600, 0.0
        %v9729 = vmax.f32 %v9601, 0.0
        %v9730 = vmax.f32 %v9602, 0.0
        %v9731 = vmax.f32 %v9603, 0.0
        %v9732 = vmax.f32 %v9604, 0.0
        %v9733 = vmax.f32 %v9605, 0.0
        %v9734 = vmax.f32 %v9606, 0.0
        %v9735 = vmax.f32 %v9607, 0.0
        %v9736 = vmax.f32 %v9608, 0.0
        %v9737 = vmax.f32 %v9609, 0.0
        %v9738 = vmax.f32 %v9610, 0.0
        %v9739 = vmax.f32 %v9611, 0.0
        %v9740 = vmax.f32 %v9612, 0.0
        %v9741 = vmax.f32 %v9613, 0.0
        %v9742 = vmax.f32 %v9614, 0.0
        %v9743 = vmax.f32 %v9615, 0.0
        %v9744 = vmax.f32 %v9616, 0.0
        %v9745 = vmax.f32 %v9617, 0.0
        %v9746 = vmax.f32 %v9618, 0.0
        %v9747 = vmax.f32 %v9619, 0.0
        %v9748 = vmax.f32 %v9620, 0.0
        %v9749 = vmax.f32 %v9621, 0.0
        %v9750 = vmax.f32 %v9622, 0.0
        %v9751 = vmax.f32 %v9623, 0.0
        %v9752 = vmax.f32 %v9624, 0.0
        %v9753 = vmax.f32 %v9625, 0.0
        %v9754 = vmax.f32 %v9626, 0.0
        %v9755 = vmax.f32 %v9627, 0.0
        %v9756 = vmax.f32 %v9628, 0.0
        %v9757 = vmax.f32 %v9629, 0.0
        %vm9758 = vcmask 64512
        %v9759 = vsel %vm9758, %v9630, -inf
        %v9760 = vsel %vm9758, %v9631, -inf
        %v9761 = vsel %vm9758, %v9634, -inf
        %v9762 = vsel %vm9758, %v9635, -inf
        %v9763 = vsel %vm9758, %v9638, -inf
        %v9764 = vmax.f32 %v9759, %v9763
        %v9765 = vsel %vm9758, %v9639, -inf
        %v9766 = vmax.f32 %v9760, %v9765
        %v9767 = vsel %vm9758, %v9642, -inf
        %v9768 = vmax.f32 %v9761, %v9767
        %v9769 = vsel %vm9758, %v9643, -inf
        %v9770 = vmax.f32 %v9762, %v9769
        %v9771 = vsel %vm9758, %v9646, -inf
        %v9772 = vmax.f32 %v9764, %v9771
        %v9773 = vsel %vm9758, %v9647, -inf
        %v9774 = vmax.f32 %v9766, %v9773
        %v9775 = vsel %vm9758, %v9650, -inf
        %v9776 = vmax.f32 %v9768, %v9775
        %v9777 = vsel %vm9758, %v9651, -inf
        %v9778 = vmax.f32 %v9770, %v9777
        %v9779 = vsel %vm9758, %v9654, -inf
        %v9780 = vmax.f32 %v9772, %v9779
        %v9781 = vsel %vm9758, %v9655, -inf
        %v9782 = vmax.f32 %v9774, %v9781
        %v9783 = vsel %vm9758, %v9658, -inf
        %v9784 = vmax.f32 %v9776, %v9783
        %v9785 = vsel %vm9758, %v9659, -inf
        %v9786 = vmax.f32 %v9778, %v9785
        %v9787 = vsel %vm9758, %v9662, -inf
        %v9788 = vmax.f32 %v9780, %v9787
        %v9789 = vsel %vm9758, %v9663, -inf
        %v9790 = vmax.f32 %v9782, %v9789
        %v9791 = vsel %vm9758, %v9666, -inf
        %v9792 = vmax.f32 %v9784, %v9791
        %v9793 = vsel %vm9758, %v9667, -inf
        %v9794 = vmax.f32 %v9786, %v9793
        %v9795 = vsel %vm9758, %v9670, -inf
        %v9796 = vmax.f32 %v9788, %v9795
        %v9797 = vsel %vm9758, %v9671, -inf
        %v9798 = vmax.f32 %v9790, %v9797
        %v9799 = vsel %vm9758, %v9674, -inf
        %v9800 = vmax.f32 %v9792, %v9799
        %v9801 = vsel %vm9758, %v9675, -inf
        %v9802 = vmax.f32 %v9794, %v9801
        %v9803 = vsel %vm9758, %v9678, -inf
        %v9804 = vmax.f32 %v9796, %v9803
        %v9805 = vsel %vm9758, %v9679, -inf
        %v9806 = vmax.f32 %v9798, %v9805
        %v9807 = vsel %vm9758, %v9682, -inf
        %v9808 = vmax.f32 %v9800, %v9807
        %v9809 = vsel %vm9758, %v9683, -inf
        %v9810 = vmax.f32 %v9802, %v9809
        %v9811 = vsel %vm9758, %v9686, -inf
        %v9812 = vmax.f32 %v9804, %v9811
        %v9813 = vsel %vm9758, %v9687, -inf
        %v9814 = vmax.f32 %v9806, %v9813
        %v9815 = vsel %vm9758, %v9690, -inf
        %v9816 = vmax.f32 %v9808, %v9815
        %v9817 = vsel %vm9758, %v9691, -inf
        %v9818 = vmax.f32 %v9810, %v9817
        %v9819 = vmax.f32 %v9812, %v9814
        %v9820 = vmax.f32 %v9816, %v9818
        %v9821 = vmax.f32 %v9819, %v9820
        %v9822 = vrot.slane %v9821, 4
        %v9823 = vmax.f32 %v9821, %v9822
        %v9824 = vrot.slane %v9823, 2
        %v9825 = vmax.f32 %v9823, %v9824
        %v9826 = vrot.slane %v9825, 1
        %v9827 = vmax.f32 %v9825, %v9826
        %v9828 = vld [vmem:[%s4] sm:$0xff]
        %v9829 = vsel %vm9758, %v9632, -inf
        %v9830 = vsel %vm9758, %v9633, -inf
        %v9831 = vsel %vm9758, %v9636, -inf
        %v9832 = vsel %vm9758, %v9637, -inf
        %v9833 = vsel %vm9758, %v9640, -inf
        %v9834 = vmax.f32 %v9829, %v9833
        %v9835 = vsel %vm9758, %v9641, -inf
        %v9836 = vmax.f32 %v9830, %v9835
        %v9837 = vsel %vm9758, %v9644, -inf
        %v9838 = vmax.f32 %v9831, %v9837
        %v9839 = vsel %vm9758, %v9645, -inf
        %v9840 = vmax.f32 %v9832, %v9839
        %v9841 = vsel %vm9758, %v9648, -inf
        %v9842 = vmax.f32 %v9834, %v9841
        %v9843 = vsel %vm9758, %v9649, -inf
        %v9844 = vmax.f32 %v9836, %v9843
        %v9845 = vsel %vm9758, %v9652, -inf
        %v9846 = vmax.f32 %v9838, %v9845
        %v9847 = vsel %vm9758, %v9653, -inf
        %v9848 = vmax.f32 %v9840, %v9847
        %v9849 = vsel %vm9758, %v9656, -inf
        %v9850 = vmax.f32 %v9842, %v9849
        %v9851 = vsel %vm9758, %v9657, -inf
        %v9852 = vmax.f32 %v9844, %v9851
        %v9853 = vsel %vm9758, %v9660, -inf
        %v9854 = vmax.f32 %v9846, %v9853
        %v9855 = vsel %vm9758, %v9661, -inf
        %v9856 = vmax.f32 %v9848, %v9855
        %v9857 = vsel %vm9758, %v9664, -inf
        %v9858 = vmax.f32 %v9850, %v9857
        %v9859 = vsel %vm9758, %v9665, -inf
        %v9860 = vmax.f32 %v9852, %v9859
        %v9861 = vsel %vm9758, %v9668, -inf
        %v9862 = vmax.f32 %v9854, %v9861
        %v9863 = vsel %vm9758, %v9669, -inf
        %v9864 = vmax.f32 %v9856, %v9863
        %v9865 = vsel %vm9758, %v9672, -inf
        %v9866 = vmax.f32 %v9858, %v9865
        %v9867 = vsel %vm9758, %v9673, -inf
        %v9868 = vmax.f32 %v9860, %v9867
        %v9869 = vsel %vm9758, %v9676, -inf
        %v9870 = vmax.f32 %v9862, %v9869
        %v9871 = vsel %vm9758, %v9677, -inf
        %v9872 = vmax.f32 %v9864, %v9871
        %v9873 = vsel %vm9758, %v9680, -inf
        %v9874 = vmax.f32 %v9866, %v9873
        %v9875 = vsel %vm9758, %v9681, -inf
        %v9876 = vmax.f32 %v9868, %v9875
        %v9877 = vsel %vm9758, %v9684, -inf
        %v9878 = vmax.f32 %v9870, %v9877
        %v9879 = vsel %vm9758, %v9685, -inf
        %v9880 = vmax.f32 %v9872, %v9879
        %v9881 = vsel %vm9758, %v9688, -inf
        %v9882 = vmax.f32 %v9874, %v9881
        %v9883 = vsel %vm9758, %v9689, -inf
        %v9884 = vmax.f32 %v9876, %v9883
        %v9885 = vsel %vm9758, %v9692, -inf
        %v9886 = vmax.f32 %v9878, %v9885
        %v9887 = vsel %vm9758, %v9693, -inf
        %v9888 = vmax.f32 %v9880, %v9887
        %v9889 = vmax.f32 %v9882, %v9884
        %v9890 = vmax.f32 %v9886, %v9888
        %v9891 = vmax.f32 %v9889, %v9890
        %v9892 = vrot.slane %v9891, 4
        %v9893 = vmax.f32 %v9891, %v9892
        %v9894 = vrot.slane %v9893, 2
        %v9895 = vmax.f32 %v9893, %v9894
        %v9896 = vrot.slane %v9895, 1
        %v9897 = vmax.f32 %v9895, %v9896
        %v9898 = vld [vmem:[%s4 + $0x8] sm:$0xff]
        %v9900 = vsel %vm9758, %v9897, 0
        %9902 = vmatprep.subr.mxu0 0.0
        %9903 = vmatpush1.msra.mxu0 0.0
        %9904 = vmatprep.subr.mxu0 0.0
        %9905 = vmatpush1.msra.mxu0 0.0
        %9906 = vmatprep.subr.mxu0 0.0
        %9907 = vmatpush1.msra.mxu0 0.0
        %9908 = vmatprep.subr.mxu0 0.0
        %9909 = vmatpush1.msra.mxu0 0.0
        %9910 = vmatprep.subr.mxu0 0.0
        %9911 = vmatpush1.msra.mxu0 0.0
        %9912 = vmatprep.subr.mxu0 0.0
        %9913 = vmatpush1.msra.mxu0 0.0
        %9914 = vmatprep.subr.mxu0 0.0
        %9915 = vmatpush1.msra.mxu0 0.0
        %9916 = vmatprep.subr.mxu0 0.0
        %9917 = vmatpush1.msra.mxu0 0.0
        %9918 = vmatprep.subr.mxu0 0.0
        %9919 = vmatpush1.msra.mxu0 0.0
        %9920 = vmatprep.subr.mxu0 0.0
        %9921 = vmatpush1.msra.mxu0 0.0
        %9922 = vmatprep.subr.mxu0 0.0
        %9923 = vmatpush1.msra.mxu0 0.0
        %9924 = vmatprep.subr.mxu0 0.0
        %9925 = vmatpush1.msra.mxu0 0.0
        %9926 = vmatprep.subr.mxu0 0.0
        %9927 = vmatpush1.msra.mxu0 0.0
        %9928 = vmatprep.subr.mxu0 0.0
        %9929 = vmatpush1.msra.mxu0 0.0
        %9930 = vmatprep.subr.mxu0 0.0
        %9931 = vmatpush1.msra.mxu0 0.0
        %9932 = vmatprep.subr.mxu0 0.0
        %9933 = vmatpush1.msra.mxu0 %v9898
        %9934 = vmatprep.subr.mxu0 0.0
        %9935 = vmatpush2.msra.mxu0 0.0
        %9936 = vmatprep.subr.mxu0 0.0
        %9937 = vmatpush2.msra.mxu0 0.0
        %9938 = vmatprep.subr.mxu0 0.0
        %9939 = vmatpush2.msra.mxu0 0.0
        %9940 = vmatprep.subr.mxu0 0.0
        %9941 = vmatpush2.msra.mxu0 0.0
        %9942 = vmatprep.subr.mxu0 0.0
        %9943 = vmatpush2.msra.mxu0 0.0
        %9944 = vmatprep.subr.mxu0 0.0
        %9945 = vmatpush2.msra.mxu0 0.0
        %9946 = vmatprep.subr.mxu0 0.0
        %9947 = vmatpush2.msra.mxu0 0.0
        %9948 = vmatprep.subr.mxu0 0.0
        %9949 = vmatpush2.msra.mxu0 0.0
        %9950 = vmatprep.subr.mxu0 0.0
        %9951 = vmatpush2.msra.mxu0 0.0
        %9952 = vmatprep.subr.mxu0 0.0
        %9953 = vmatpush2.msra.mxu0 0.0
        %9954 = vmatprep.subr.mxu0 0.0
        %9955 = vmatpush2.msra.mxu0 0.0
        %9956 = vmatprep.subr.mxu0 0.0
        %9957 = vmatpush2.msra.mxu0 0.0
        %9958 = vmatprep.subr.mxu0 0.0
        %9959 = vmatpush2.msra.mxu0 0.0
        %9960 = vmatprep.subr.mxu0 0.0
        %9961 = vmatpush2.msra.mxu0 0.0
        %9962 = vmatprep.subr.mxu0 0.0
        %9963 = vmatpush2.msra.mxu0 0.0
        %9964 = vmatprep.subr.mxu0 0.0
        %9965 = vmatpush2.msra.mxu0 0.0
        %9966 = vmatprep.mubr.f32.mxu0 0.0
        %9967 = vmatmul.mubr.f32.gmra.mxu0 %v9900
        %v9968 = vpop.f32.mrf.mxu0
        %v9969 = vadd.f32 0.0, %v9968
        %v9970 = vpop.f32.mrf.mxu0
        %9971 = vdwg.mxu0
        %v9973 = vsel %vm9758, %v9827, 0
        %9975 = vmatprep.subr.mxu0 0.0
        %9976 = vmatpush1.msra.mxu0 0.0
        %9977 = vmatprep.subr.mxu0 0.0
        %9978 = vmatpush1.msra.mxu0 0.0
        %9979 = vmatprep.subr.mxu0 0.0
        %9980 = vmatpush1.msra.mxu0 0.0
        %9981 = vmatprep.subr.mxu0 0.0
        %9982 = vmatpush1.msra.mxu0 0.0
        %9983 = vmatprep.subr.mxu0 0.0
        %9984 = vmatpush1.msra.mxu0 0.0
        %9985 = vmatprep.subr.mxu0 0.0
        %9986 = vmatpush1.msra.mxu0 0.0
        %9987 = vmatprep.subr.mxu0 0.0
        %9988 = vmatpush1.msra.mxu0 0.0
        %9989 = vmatprep.subr.mxu0 0.0
        %9990 = vmatpush1.msra.mxu0 0.0
        %9991 = vmatprep.subr.mxu0 0.0
        %9992 = vmatpush1.msra.mxu0 0.0
        %9993 = vmatprep.subr.mxu0 0.0
        %9994 = vmatpush1.msra.mxu0 0.0
        %9995 = vmatprep.subr.mxu0 0.0
        %9996 = vmatpush1.msra.mxu0 0.0
        %9997 = vmatprep.subr.mxu0 0.0
        %9998 = vmatpush1.msra.mxu0 0.0
        %9999 = vmatprep.subr.mxu0 0.0
        %10000 = vmatpush1.msra.mxu0 0.0
        %10001 = vmatprep.subr.mxu0 0.0
        %10002 = vmatpush1.msra.mxu0 0.0
        %10003 = vmatprep.subr.mxu0 0.0
        %10004 = vmatpush1.msra.mxu0 0.0
        %10005 = vmatprep.subr.mxu0 0.0
        %10006 = vmatpush1.msra.mxu0 %v9828
        %10007 = vmatprep.subr.mxu0 0.0
        %10008 = vmatpush2.msra.mxu0 0.0
        %10009 = vmatprep.subr.mxu0 0.0
        %10010 = vmatpush2.msra.mxu0 0.0
        %10011 = vmatprep.subr.mxu0 0.0
        %10012 = vmatpush2.msra.mxu0 0.0
        %10013 = vmatprep.subr.mxu0 0.0
        %10014 = vmatpush2.msra.mxu0 0.0
        %10015 = vmatprep.subr.mxu0 0.0
        %10016 = vmatpush2.msra.mxu0 0.0
        %10017 = vmatprep.subr.mxu0 0.0
        %10018 = vmatpush2.msra.mxu0 0.0
        %10019 = vmatprep.subr.mxu0 0.0
        %10020 = vmatpush2.msra.mxu0 0.0
        %10021 = vmatprep.subr.mxu0 0.0
        %10022 = vmatpush2.msra.mxu0 0.0
        %10023 = vmatprep.subr.mxu0 0.0
        %10024 = vmatpush2.msra.mxu0 0.0
        %10025 = vmatprep.subr.mxu0 0.0
        %10026 = vmatpush2.msra.mxu0 0.0
        %10027 = vmatprep.subr.mxu0 0.0
        %10028 = vmatpush2.msra.mxu0 0.0
        %10029 = vmatprep.subr.mxu0 0.0
        %10030 = vmatpush2.msra.mxu0 0.0
        %10031 = vmatprep.subr.mxu0 0.0
        %10032 = vmatpush2.msra.mxu0 0.0
        %10033 = vmatprep.subr.mxu0 0.0
        %10034 = vmatpush2.msra.mxu0 0.0
        %10035 = vmatprep.subr.mxu0 0.0
        %10036 = vmatpush2.msra.mxu0 0.0
        %10037 = vmatprep.subr.mxu0 0.0
        %10038 = vmatpush2.msra.mxu0 0.0
        %10039 = vmatprep.mubr.f32.mxu0 0.0
        %10040 = vmatmul.mubr.f32.gmra.mxu0 %v9973
        %v10041 = vpop.f32.mrf.mxu0
        %v10042 = vadd.f32 %v9969, %v10041
        %v10043 = vpop.f32.mrf.mxu0
        %10044 = vdwg.mxu0
        %v10045 = vsel %vm9758, %v9694, -inf
        %v10046 = vsel %vm9758, %v9695, -inf
        %v10047 = vsel %vm9758, %v9698, -inf
        %v10048 = vsel %vm9758, %v9699, -inf
        %v10049 = vsel %vm9758, %v9702, -inf
        %v10050 = vmax.f32 %v10045, %v10049
        %v10051 = vsel %vm9758, %v9703, -inf
        %v10052 = vmax.f32 %v10046, %v10051
        %v10053 = vsel %vm9758, %v9706, -inf
        %v10054 = vmax.f32 %v10047, %v10053
        %v10055 = vsel %vm9758, %v9707, -inf
        %v10056 = vmax.f32 %v10048, %v10055
        %v10057 = vsel %vm9758, %v9710, -inf
        %v10058 = vmax.f32 %v10050, %v10057
        %v10059 = vsel %vm9758, %v9711, -inf
        %v10060 = vmax.f32 %v10052, %v10059
        %v10061 = vsel %vm9758, %v9714, -inf
        %v10062 = vmax.f32 %v10054, %v10061
        %v10063 = vsel %vm9758, %v9715, -inf
        %v10064 = vmax.f32 %v10056, %v10063
        %v10065 = vsel %vm9758, %v9718, -inf
        %v10066 = vmax.f32 %v10058, %v10065
        %v10067 = vsel %vm9758, %v9719, -inf
        %v10068 = vmax.f32 %v10060, %v10067
        %v10069 = vsel %vm9758, %v9722, -inf
        %v10070 = vmax.f32 %v10062, %v10069
        %v10071 = vsel %vm9758, %v9723, -inf
        %v10072 = vmax.f32 %v10064, %v10071
        %v10073 = vsel %vm9758, %v9726, -inf
        %v10074 = vmax.f32 %v10066, %v10073
        %v10075 = vsel %vm9758, %v9727, -inf
        %v10076 = vmax.f32 %v10068, %v10075
        %v10077 = vsel %vm9758, %v9730, -inf
        %v10078 = vmax.f32 %v10070, %v10077
        %v10079 = vsel %vm9758, %v9731, -inf
        %v10080 = vmax.f32 %v10072, %v10079
        %v10081 = vsel %vm9758, %v9734, -inf
        %v10082 = vmax.f32 %v10074, %v10081
        %v10083 = vsel %vm9758, %v9735, -inf
        %v10084 = vmax.f32 %v10076, %v10083
        %v10085 = vsel %vm9758, %v9738, -inf
        %v10086 = vmax.f32 %v10078, %v10085
        %v10087 = vsel %vm9758, %v9739, -inf
        %v10088 = vmax.f32 %v10080, %v10087
        %v10089 = vsel %vm9758, %v9742, -inf
        %v10090 = vmax.f32 %v10082, %v10089
        %v10091 = vsel %vm9758, %v9743, -inf
        %v10092 = vmax.f32 %v10084, %v10091
        %v10093 = vsel %vm9758, %v9746, -inf
        %v10094 = vmax.f32 %v10086, %v10093
        %v10095 = vsel %vm9758, %v9747, -inf
        %v10096 = vmax.f32 %v10088, %v10095
        %v10097 = vsel %vm9758, %v9750, -inf
        %v10098 = vmax.f32 %v10090, %v10097
        %v10099 = vsel %vm9758, %v9751, -inf
        %v10100 = vmax.f32 %v10092, %v10099
        %v10101 = vsel %vm9758, %v9754, -inf
        %v10102 = vmax.f32 %v10094, %v10101
        %v10103 = vsel %vm9758, %v9755, -inf
        %v10104 = vmax.f32 %v10096, %v10103
        %v10105 = vmax.f32 %v10098, %v10100
        %v10106 = vmax.f32 %v10102, %v10104
        %v10107 = vmax.f32 %v10105, %v10106
        %v10108 = vrot.slane %v10107, 4
        %v10109 = vmax.f32 %v10107, %v10108
        %v10110 = vrot.slane %v10109, 2
        %v10111 = vmax.f32 %v10109, %v10110
        %v10112 = vrot.slane %v10111, 1
        %v10113 = vmax.f32 %v10111, %v10112
        %v10114 = vld [vmem:[%s4 + $0x10] sm:$0xff]
        %v10116 = vsel %vm9758, %v10113, 0
        %10118 = vmatprep.subr.mxu0 0.0
        %10119 = vmatpush1.msra.mxu0 0.0
        %10120 = vmatprep.subr.mxu0 0.0
        %10121 = vmatpush1.msra.mxu0 0.0
        %10122 = vmatprep.subr.mxu0 0.0
        %10123 = vmatpush1.msra.mxu0 0.0
        %10124 = vmatprep.subr.mxu0 0.0
        %10125 = vmatpush1.msra.mxu0 0.0
        %10126 = vmatprep.subr.mxu0 0.0
        %10127 = vmatpush1.msra.mxu0 0.0
        %10128 = vmatprep.subr.mxu0 0.0
        %10129 = vmatpush1.msra.mxu0 0.0
        %10130 = vmatprep.subr.mxu0 0.0
        %10131 = vmatpush1.msra.mxu0 0.0
        %10132 = vmatprep.subr.mxu0 0.0
        %10133 = vmatpush1.msra.mxu0 0.0
        %10134 = vmatprep.subr.mxu0 0.0
        %10135 = vmatpush1.msra.mxu0 0.0
        %10136 = vmatprep.subr.mxu0 0.0
        %10137 = vmatpush1.msra.mxu0 0.0
        %10138 = vmatprep.subr.mxu0 0.0
        %10139 = vmatpush1.msra.mxu0 0.0
        %10140 = vmatprep.subr.mxu0 0.0
        %10141 = vmatpush1.msra.mxu0 0.0
        %10142 = vmatprep.subr.mxu0 0.0
        %10143 = vmatpush1.msra.mxu0 0.0
        %10144 = vmatprep.subr.mxu0 0.0
        %10145 = vmatpush1.msra.mxu0 0.0
        %10146 = vmatprep.subr.mxu0 0.0
        %10147 = vmatpush1.msra.mxu0 0.0
        %10148 = vmatprep.subr.mxu0 0.0
        %10149 = vmatpush1.msra.mxu0 %v10114
        %10150 = vmatprep.subr.mxu0 0.0
        %10151 = vmatpush2.msra.mxu0 0.0
        %10152 = vmatprep.subr.mxu0 0.0
        %10153 = vmatpush2.msra.mxu0 0.0
        %10154 = vmatprep.subr.mxu0 0.0
        %10155 = vmatpush2.msra.mxu0 0.0
        %10156 = vmatprep.subr.mxu0 0.0
        %10157 = vmatpush2.msra.mxu0 0.0
        %10158 = vmatprep.subr.mxu0 0.0
        %10159 = vmatpush2.msra.mxu0 0.0
        %10160 = vmatprep.subr.mxu0 0.0
        %10161 = vmatpush2.msra.mxu0 0.0
        %10162 = vmatprep.subr.mxu0 0.0
        %10163 = vmatpush2.msra.mxu0 0.0
        %10164 = vmatprep.subr.mxu0 0.0
        %10165 = vmatpush2.msra.mxu0 0.0
        %10166 = vmatprep.subr.mxu0 0.0
        %10167 = vmatpush2.msra.mxu0 0.0
        %10168 = vmatprep.subr.mxu0 0.0
        %10169 = vmatpush2.msra.mxu0 0.0
        %10170 = vmatprep.subr.mxu0 0.0
        %10171 = vmatpush2.msra.mxu0 0.0
        %10172 = vmatprep.subr.mxu0 0.0
        %10173 = vmatpush2.msra.mxu0 0.0
        %10174 = vmatprep.subr.mxu0 0.0
        %10175 = vmatpush2.msra.mxu0 0.0
        %10176 = vmatprep.subr.mxu0 0.0
        %10177 = vmatpush2.msra.mxu0 0.0
        %10178 = vmatprep.subr.mxu0 0.0
        %10179 = vmatpush2.msra.mxu0 0.0
        %10180 = vmatprep.subr.mxu0 0.0
        %10181 = vmatpush2.msra.mxu0 0.0
        %10182 = vmatprep.mubr.f32.mxu0 0.0
        %10183 = vmatmul.mubr.f32.gmra.mxu0 %v10116
        %v10184 = vpop.f32.mrf.mxu0
        %v10185 = vadd.f32 0.0, %v10184
        %v10186 = vpop.f32.mrf.mxu0
        %10187 = vdwg.mxu0
        %v10188 = vadd.f32 %v10042, %v10185
        %v10189 = vsel %vm9758, %v9696, -inf
        %v10190 = vsel %vm9758, %v9697, -inf
        %v10191 = vsel %vm9758, %v9700, -inf
        %v10192 = vsel %vm9758, %v9701, -inf
        %v10193 = vsel %vm9758, %v9704, -inf
        %v10194 = vmax.f32 %v10189, %v10193
        %v10195 = vsel %vm9758, %v9705, -inf
        %v10196 = vmax.f32 %v10190, %v10195
        %v10197 = vsel %vm9758, %v9708, -inf
        %v10198 = vmax.f32 %v10191, %v10197
        %v10199 = vsel %vm9758, %v9709, -inf
        %v10200 = vmax.f32 %v10192, %v10199
        %v10201 = vsel %vm9758, %v9712, -inf
        %v10202 = vmax.f32 %v10194, %v10201
        %v10203 = vsel %vm9758, %v9713, -inf
        %v10204 = vmax.f32 %v10196, %v10203
        %v10205 = vsel %vm9758, %v9716, -inf
        %v10206 = vmax.f32 %v10198, %v10205
        %v10207 = vsel %vm9758, %v9717, -inf
        %v10208 = vmax.f32 %v10200, %v10207
        %v10209 = vsel %vm9758, %v9720, -inf
        %v10210 = vmax.f32 %v10202, %v10209
        %v10211 = vsel %vm9758, %v9721, -inf
        %v10212 = vmax.f32 %v10204, %v10211
        %v10213 = vsel %vm9758, %v9724, -inf
        %v10214 = vmax.f32 %v10206, %v10213
        %v10215 = vsel %vm9758, %v9725, -inf
        %v10216 = vmax.f32 %v10208, %v10215
        %v10217 = vsel %vm9758, %v9728, -inf
        %v10218 = vmax.f32 %v10210, %v10217
        %v10219 = vsel %vm9758, %v9729, -inf
        %v10220 = vmax.f32 %v10212, %v10219
        %v10221 = vsel %vm9758, %v9732, -inf
        %v10222 = vmax.f32 %v10214, %v10221
        %v10223 = vsel %vm9758, %v9733, -inf
        %v10224 = vmax.f32 %v10216, %v10223
        %v10225 = vsel %vm9758, %v9736, -inf
        %v10226 = vmax.f32 %v10218, %v10225
        %v10227 = vsel %vm9758, %v9737, -inf
        %v10228 = vmax.f32 %v10220, %v10227
        %v10229 = vsel %vm9758, %v9740, -inf
        %v10230 = vmax.f32 %v10222, %v10229
        %v10231 = vsel %vm9758, %v9741, -inf
        %v10232 = vmax.f32 %v10224, %v10231
        %v10233 = vsel %vm9758, %v9744, -inf
        %v10234 = vmax.f32 %v10226, %v10233
        %v10235 = vsel %vm9758, %v9745, -inf
        %v10236 = vmax.f32 %v10228, %v10235
        %v10237 = vsel %vm9758, %v9748, -inf
        %v10238 = vmax.f32 %v10230, %v10237
        %v10239 = vsel %vm9758, %v9749, -inf
        %v10240 = vmax.f32 %v10232, %v10239
        %v10241 = vsel %vm9758, %v9752, -inf
        %v10242 = vmax.f32 %v10234, %v10241
        %v10243 = vsel %vm9758, %v9753, -inf
        %v10244 = vmax.f32 %v10236, %v10243
        %v10245 = vsel %vm9758, %v9756, -inf
        %v10246 = vmax.f32 %v10238, %v10245
        %v10247 = vsel %vm9758, %v9757, -inf
        %v10248 = vmax.f32 %v10240, %v10247
        %v10249 = vmax.f32 %v10242, %v10244
        %v10250 = vmax.f32 %v10246, %v10248
        %v10251 = vmax.f32 %v10249, %v10250
        %v10252 = vrot.slane %v10251, 4
        %v10253 = vmax.f32 %v10251, %v10252
        %v10254 = vrot.slane %v10253, 2
        %v10255 = vmax.f32 %v10253, %v10254
        %v10256 = vrot.slane %v10255, 1
        %v10257 = vmax.f32 %v10255, %v10256
        %v10258 = vld [vmem:[%s4 + $0x18] sm:$0xff]
        %v10260 = vsel %vm9758, %v10257, 0
        %10262 = vmatprep.subr.mxu0 0.0
        %10263 = vmatpush1.msra.mxu0 0.0
        %10264 = vmatprep.subr.mxu0 0.0
        %10265 = vmatpush1.msra.mxu0 0.0
        %10266 = vmatprep.subr.mxu0 0.0
        %10267 = vmatpush1.msra.mxu0 0.0
        %10268 = vmatprep.subr.mxu0 0.0
        %10269 = vmatpush1.msra.mxu0 0.0
        %10270 = vmatprep.subr.mxu0 0.0
        %10271 = vmatpush1.msra.mxu0 0.0
        %10272 = vmatprep.subr.mxu0 0.0
        %10273 = vmatpush1.msra.mxu0 0.0
        %10274 = vmatprep.subr.mxu0 0.0
        %10275 = vmatpush1.msra.mxu0 0.0
        %10276 = vmatprep.subr.mxu0 0.0
        %10277 = vmatpush1.msra.mxu0 0.0
        %10278 = vmatprep.subr.mxu0 0.0
        %10279 = vmatpush1.msra.mxu0 0.0
        %10280 = vmatprep.subr.mxu0 0.0
        %10281 = vmatpush1.msra.mxu0 0.0
        %10282 = vmatprep.subr.mxu0 0.0
        %10283 = vmatpush1.msra.mxu0 0.0
        %10284 = vmatprep.subr.mxu0 0.0
        %10285 = vmatpush1.msra.mxu0 0.0
        %10286 = vmatprep.subr.mxu0 0.0
        %10287 = vmatpush1.msra.mxu0 0.0
        %10288 = vmatprep.subr.mxu0 0.0
        %10289 = vmatpush1.msra.mxu0 0.0
        %10290 = vmatprep.subr.mxu0 0.0
        %10291 = vmatpush1.msra.mxu0 0.0
        %10292 = vmatprep.subr.mxu0 0.0
        %10293 = vmatpush1.msra.mxu0 %v10258
        %10294 = vmatprep.subr.mxu0 0.0
        %10295 = vmatpush2.msra.mxu0 0.0
        %10296 = vmatprep.subr.mxu0 0.0
        %10297 = vmatpush2.msra.mxu0 0.0
        %10298 = vmatprep.subr.mxu0 0.0
        %10299 = vmatpush2.msra.mxu0 0.0
        %10300 = vmatprep.subr.mxu0 0.0
        %10301 = vmatpush2.msra.mxu0 0.0
        %10302 = vmatprep.subr.mxu0 0.0
        %10303 = vmatpush2.msra.mxu0 0.0
        %10304 = vmatprep.subr.mxu0 0.0
        %10305 = vmatpush2.msra.mxu0 0.0
        %10306 = vmatprep.subr.mxu0 0.0
        %10307 = vmatpush2.msra.mxu0 0.0
        %10308 = vmatprep.subr.mxu0 0.0
        %10309 = vmatpush2.msra.mxu0 0.0
        %10310 = vmatprep.subr.mxu0 0.0
        %10311 = vmatpush2.msra.mxu0 0.0
        %10312 = vmatprep.subr.mxu0 0.0
        %10313 = vmatpush2.msra.mxu0 0.0
        %10314 = vmatprep.subr.mxu0 0.0
        %10315 = vmatpush2.msra.mxu0 0.0
        %10316 = vmatprep.subr.mxu0 0.0
        %10317 = vmatpush2.msra.mxu0 0.0
        %10318 = vmatprep.subr.mxu0 0.0
        %10319 = vmatpush2.msra.mxu0 0.0
        %10320 = vmatprep.subr.mxu0 0.0
        %10321 = vmatpush2.msra.mxu0 0.0
        %10322 = vmatprep.subr.mxu0 0.0
        %10323 = vmatpush2.msra.mxu0 0.0
        %10324 = vmatprep.subr.mxu0 0.0
        %10325 = vmatpush2.msra.mxu0 0.0
        %10326 = vmatprep.mubr.f32.mxu0 0.0
        %10327 = vmatmul.mubr.f32.gmra.mxu0 %v10260
        %v10328 = vpop.f32.mrf.mxu0
        %v10329 = vadd.f32 0.0, %v10328
        %v10330 = vpop.f32.mrf.mxu0
        %10331 = vdwg.mxu0
        %v10332 = vadd.f32 %v10188, %v10329
        %v10333 = vld [vmem:[%s5] sm:$0x1]
        %v10334 = vadd.f32 %v10332, %v10333
        %v10335 = vmax.f32 %v10334, 0.0
        %v10336 = vld [vmem:[%s6] sm:$0xff]
        %v10337 = vld [vmem:[%s6 + $0x8] sm:$0xff]
        %v10338 = vld [vmem:[%s6 + $0x10] sm:$0xff]
        %v10339 = vld [vmem:[%s6 + $0x18] sm:$0xff]
        %v10340 = vld [vmem:[%s6 + $0x20] sm:$0xff]
        %v10341 = vld [vmem:[%s6 + $0x28] sm:$0xff]
        %v10342 = vld [vmem:[%s6 + $0x30] sm:$0xff]
        %v10343 = vld [vmem:[%s6 + $0x38] sm:$0xff]
        %v10344 = vld [vmem:[%s6 + $0x40] sm:$0xff]
        %v10345 = vld [vmem:[%s6 + $0x48] sm:$0xff]
        %v10346 = vld [vmem:[%s6 + $0x50] sm:$0xff]
        %v10347 = vld [vmem:[%s6 + $0x58] sm:$0xff]
        %v10348 = vld [vmem:[%s6 + $0x60] sm:$0xff]
        %v10349 = vld [vmem:[%s6 + $0x68] sm:$0xff]
        %v10350 = vld [vmem:[%s6 + $0x70] sm:$0xff]
        %v10351 = vld [vmem:[%s6 + $0x78] sm:$0xff]
        %v10352 = vld [vmem:[%s7] sm:$0x1]
        %10353 = vmatprep.subr.mxu0 0.0
        %10354 = vmatpush1.msra.mxu0 %v10351
        %10355 = vmatprep.subr.mxu0 0.0
        %10356 = vmatpush1.msra.mxu0 %v10350
        %10357 = vmatprep.subr.mxu0 0.0
        %10358 = vmatpush1.msra.mxu0 %v10349
        %10359 = vmatprep.subr.mxu0 0.0
        %10360 = vmatpush1.msra.mxu0 %v10348
        %10361 = vmatprep.subr.mxu0 0.0
        %10362 = vmatpush1.msra.mxu0 %v10347
        %10363 = vmatprep.subr.mxu0 0.0
        %10364 = vmatpush1.msra.mxu0 %v10346
        %10365 = vmatprep.subr.mxu0 0.0
        %10366 = vmatpush1.msra.mxu0 %v10345
        %10367 = vmatprep.subr.mxu0 0.0
        %10368 = vmatpush1.msra.mxu0 %v10344
        %10369 = vmatprep.subr.mxu0 0.0
        %10370 = vmatpush1.msra.mxu0 %v10343
        %10371 = vmatprep.subr.mxu0 0.0
        %10372 = vmatpush1.msra.mxu0 %v10342
        %10373 = vmatprep.subr.mxu0 0.0
        %10374 = vmatpush1.msra.mxu0 %v10341
        %10375 = vmatprep.subr.mxu0 0.0
        %10376 = vmatpush1.msra.mxu0 %v10340
        %10377 = vmatprep.subr.mxu0 0.0
        %10378 = vmatpush1.msra.mxu0 %v10339
        %10379 = vmatprep.subr.mxu0 0.0
        %10380 = vmatpush1.msra.mxu0 %v10338
        %10381 = vmatprep.subr.mxu0 0.0
        %10382 = vmatpush1.msra.mxu0 %v10337
        %10383 = vmatprep.subr.mxu0 0.0
        %10384 = vmatpush1.msra.mxu0 %v10336
        %10385 = vmatprep.subr.mxu0 0.0
        %10386 = vmatpush2.msra.mxu0 0.0
        %10387 = vmatprep.subr.mxu0 0.0
        %10388 = vmatpush2.msra.mxu0 0.0
        %10389 = vmatprep.subr.mxu0 0.0
        %10390 = vmatpush2.msra.mxu0 0.0
        %10391 = vmatprep.subr.mxu0 0.0
        %10392 = vmatpush2.msra.mxu0 0.0
        %10393 = vmatprep.subr.mxu0 0.0
        %10394 = vmatpush2.msra.mxu0 0.0
        %10395 = vmatprep.subr.mxu0 0.0
        %10396 = vmatpush2.msra.mxu0 0.0
        %10397 = vmatprep.subr.mxu0 0.0
        %10398 = vmatpush2.msra.mxu0 0.0
        %10399 = vmatprep.subr.mxu0 0.0
        %10400 = vmatpush2.msra.mxu0 0.0
        %10401 = vmatprep.subr.mxu0 0.0
        %10402 = vmatpush2.msra.mxu0 0.0
        %10403 = vmatprep.subr.mxu0 0.0
        %10404 = vmatpush2.msra.mxu0 0.0
        %10405 = vmatprep.subr.mxu0 0.0
        %10406 = vmatpush2.msra.mxu0 0.0
        %10407 = vmatprep.subr.mxu0 0.0
        %10408 = vmatpush2.msra.mxu0 0.0
        %10409 = vmatprep.subr.mxu0 0.0
        %10410 = vmatpush2.msra.mxu0 0.0
        %10411 = vmatprep.subr.mxu0 0.0
        %10412 = vmatpush2.msra.mxu0 0.0
        %10413 = vmatprep.subr.mxu0 0.0
        %10414 = vmatpush2.msra.mxu0 0.0
        %10415 = vmatprep.subr.mxu0 0.0
        %10416 = vmatpush2.msra.mxu0 0.0
        %10417 = vmatprep.mubr.f32.mxu0 0.0
        %10418 = vmatmul.mubr.f32.gmra.mxu0 %v10335
        %v10419 = vpop.f32.mrf.mxu0
        %v10420 = vadd.f32 %v10352, %v10419
        %v10421 = vpop.f32.mrf.mxu0
        %10422 = vdwg.mxu0
        %10423 = vst [vmem:[%s297] sm:$0x1] %v10420
        %s10424 = sand.u32 %s203, 1
        %s10425 = scalar_lea.sflag [#allocation3], %s10424
        %s10426 = sand.u32 %s203, 1
        %s10427 = scalar_lea.vmem [#allocation2], %s10426
        // Predicated region
        $region53: #{net3_forward.1} parent=51 // pred_check
          %p10428 = pneg %p213
        $region54: #{net3_forward.1} parent=51 // pred_check_branch
          %10430 = sbr.rel (%p10428) target = $region56
        $region55: #{net3_forward.1} parent=51 // pred_region
          %s10432 = ssub.s32 16, 16
          %10433 = vsyncadd %s10425, %s10432
          %s10434 = smul.addr %s22, 16
          %s10435 = scalar_lea.hbm %s8, %s10434
          %s10437 = sshll.u32 %s10427, 4
          %s10438 = int_to_ptr.vmem [resolvable:$true] %s10437
          %10440 = dma.vmem_to_hbm [thread:$0]  %s10438, 16, %s10435, %s10425
        $region56: #{net3_forward.1} parent=51 // pred_fallthru
          _
      $region52: #{net3_forward.1} parent=5 // pred_fallthru
        _
      %p10441 = scmp.le.s32.totalorder 2, %s17
      // Predicated region
      $region57: #{net3_forward.1} parent=5 // pred_check
        %p10442 = pneg %p10441
      $region58: #{net3_forward.1} parent=5 // pred_check_branch
        %10444 = sbr.rel (%p10442) target = $region60
      $region59: #{net3_forward.1} parent=5 // pred_region
        %s10445 = ssub.s32 %s17, 2
        // Predicated region
        $region61: #{net3_forward.1} parent=59 // pred_check
          %p10446 = pneg %p219
        $region62: #{net3_forward.1} parent=59 // pred_check_branch
          %10448 = sbr.rel (%p10446) target = $region64
        $region63: #{net3_forward.1} parent=59 // pred_region
          %s10449 = sand.u32 %s204, 1
          %s10450 = scalar_lea.sflag [#allocation3], %s10449
          %s10451 = sand.u32 %s204, 1
          %s10452 = scalar_lea.vmem [#allocation2], %s10451
          %10453 = dma.done %s10450, 16
        $region64: #{net3_forward.1} parent=59 // pred_fallthru
          _
      $region60: #{net3_forward.1} parent=5 // pred_fallthru
        _
    $region6: #{net3_forward.1} parent=1 // loop_footer
      %s21 = sadd.s32 1, %s17
    $region7: #{net3_forward.1} parent=1 // loop_footer_branch
      %16 = sbr.rel target = $region3
    $region8: #{net3_forward.1} parent=1 // loop_exit
      _
    %10454 = vsyncpa [#allocation3], 1
    %s10455 = scalar_lea.sflag [#allocation3], 1
    %10456 = vsyncpa %s10455, 1

</llo_original>
